<compile_context>
chip_gen: v6e
topology: v6e:2x2x1
jax: 0.10.0
libtpu: 0.0.40
codegen_flags: <defaults>
</compile_context>

<pallas_src>
import functools
import math

import numpy as np
import jax
import jax.numpy as jnp
from jax.experimental import pallas as pl
from jax.experimental.pallas import tpu as pltpu

_LANE = 128      # feature padding unit (lane-dense, native MXU width on v5e)
_SUBLANE = 8     # batch/row padding unit


def _round_up(x, m):
    return (x + m - 1) // m * m


def _pick_tile(rows, cap, min_steps=1):
    """Largest multiple of 8 <= cap that divides `rows` (rows % 8 == 0),
    preferring at least `min_steps` grid steps when rows allow it (v7x 2-TC)."""
    cap = min(cap, rows)
    if rows >= _SUBLANE * min_steps:
        cap = min(cap, rows // min_steps)
    cap = max(_SUBLANE, cap // _SUBLANE * _SUBLANE)
    for t in range(cap, _SUBLANE - 1, -_SUBLANE):
        if rows % t == 0:
            return t
    return _SUBLANE


# ------------------------------ Pallas kernels --------------------------------

def _avgpool_gemm_kernel(x_ref, p_ref, o_ref):
    """Exact adaptive average pooling as a GEMM: (tm, H*W) @ (H*W, K2p)."""
    o_ref[...] = jnp.dot(x_ref[...], p_ref[...],
                         preferred_element_type=jnp.float32)


def _mlp_chain_kernel(*refs, num_layers):
    """Fused Linear chain: h -> [h @ W_l + b_l (+ReLU)] for all layers.

    refs = (x, w_0, b_0, ..., w_{L-1}, b_{L-1}, out).  The activation never
    leaves the chip between layers; weights are bf16, accumulation is f32.
    Zero-padded feature lanes stay exactly zero through every Linear+ReLU
    (zero weight rows / zero bias columns), so padding is sliced off once
    outside the kernel.
    """
    x_ref = refs[0]
    o_ref = refs[1 + 2 * num_layers]
    h = x_ref[...]                                      # (tm, K0p) f32
    for layer in range(num_layers):
        w_ref = refs[1 + 2 * layer]                     # (Kp, Np) bf16, resident
        b_ref = refs[2 + 2 * layer]                     # (1, Np)  f32
        h = jnp.dot(h.astype(w_ref.dtype), w_ref[...],
                    preferred_element_type=jnp.float32) + b_ref[...]
        if layer < num_layers - 1:
            h = jnp.maximum(h, 0.0)
    o_ref[...] = h.astype(o_ref.dtype)


# ------------------------------ wrappers / glue --------------------------------

def _adaptive_pool_matrix(in_h, in_w, out_h, out_w):
    """Exact AdaptiveAvgPool2d as an (H*W, out_h*out_w) matrix (PyTorch binning)."""
    P = np.zeros((in_h * in_w, out_h * out_w), dtype=np.float32)
    for i in range(out_h):
        hs = (i * in_h) // out_h
        he = ((i + 1) * in_h + out_h - 1) // out_h
        for j in range(out_w):
            ws = (j * in_w) // out_w
            we = ((j + 1) * in_w + out_w - 1) // out_w
            val = 1.0 / ((he - hs) * (we - ws))
            for h in range(hs, he):
                for w in range(ws, we):
                    P[h * in_w + w, i * out_w + j] = val
    return P


def adaptive_avgpool_flatten(x_nchw, out_hw):
    """AdaptiveAvgPool2d(out_hw) + Flatten -> (N, C*out_hw*out_hw) via one GEMM."""
    N, C, H, W = x_nchw.shape
    HW, K2 = H * W, out_hw * out_hw
    K2p = _round_up(K2, _LANE)                       # lane-dense output columns
    P = np.zeros((HW, K2p), np.float32)
    P[:, :K2] = _adaptive_pool_matrix(H, W, out_hw, out_hw)
    P = jnp.asarray(P)

    M = N * C
    rows = _round_up(M, _SUBLANE)                    # minimal row padding
    # Cap the tile so the double-buffered (tm, HW) f32 strip stays ~<6 MiB
    # (v5e's scoped-VMEM default is 16 MiB); prefer >=2 grid steps for v7x.
    # NOTE: assumes the (HW, K2p) pooling matrix fits VMEM (decoder-head
    # feature maps are small).
    vmem_rows = max(_SUBLANE, (6 << 20) // (HW * 4 * 2))
    tm = _pick_tile(rows, min(512, vmem_rows), min_steps=2)

    x2d = x_nchw.reshape(M, HW)
    if rows != M:
        x2d = jnp.pad(x2d, ((0, rows - M), (0, 0)))

    pooled = pl.pallas_call(
        _avgpool_gemm_kernel,
        out_shape=jax.ShapeDtypeStruct((rows, K2p), jnp.float32),
        grid_spec=pltpu.PrefetchScalarGridSpec(
            num_scalar_prefetch=0,
            grid=(rows // tm,),
            in_specs=[pl.BlockSpec((tm, HW), lambda i: (i, 0)),
                      pl.BlockSpec((HW, K2p), lambda i: (0, 0))],
            out_specs=pl.BlockSpec((tm, K2p), lambda i: (i, 0)),
        ),
        compiler_params=pltpu.CompilerParams(
            dimension_semantics=("parallel",)),
        cost_estimate=pl.CostEstimate(
            flops=2 * rows * HW * K2p, transcendentals=0,
            bytes_accessed=4 * (rows * HW + HW * K2p + rows * K2p)),
    )(x2d, P)

    # Tiny layout glue: drop padding, flatten channel-major like torch.flatten.
    return pooled[:M, :K2].reshape(N, C * K2)


def mlp_chain(xp, weights_p, biases_p):
    """(((x @ W0 + b0).relu() @ W1 + b1).relu() ...) in ONE pallas_call.

    Rows pre-padded to 8, features to 128.  Weights (bf16) are resident in
    VMEM (constant index_map); the batch axis is tiled and marked 'parallel'.
    """
    num_layers = len(weights_p)
    mp, k0p = xp.shape
    nlp = weights_p[-1].shape[1]
    tm = _pick_tile(mp, 256, min_steps=2)

    in_specs = [pl.BlockSpec((tm, k0p), lambda i: (i, 0))]
    operands = [xp]
    for w, b in zip(weights_p, biases_p):
        in_specs.append(pl.BlockSpec(w.shape, lambda i: (0, 0)))   # resident
        in_specs.append(pl.BlockSpec(b.shape, lambda i: (0, 0)))
        operands += [w, b]

    flops = sum(2 * mp * w.shape[0] * w.shape[1] for w in weights_p)
    bytes_accessed = (xp.size * xp.dtype.itemsize
                      + sum(w.size * w.dtype.itemsize for w in weights_p)
                      + sum(b.size * b.dtype.itemsize for b in biases_p)
                      + mp * nlp * 4)

    return pl.pallas_call(
        functools.partial(_mlp_chain_kernel, num_layers=num_layers),
        out_shape=jax.ShapeDtypeStruct((mp, nlp), jnp.float32),
        grid_spec=pltpu.PrefetchScalarGridSpec(
            num_scalar_prefetch=0,
            grid=(mp // tm,),
            in_specs=in_specs,
            out_specs=pl.BlockSpec((tm, nlp), lambda i: (i, 0)),
        ),
        compiler_params=pltpu.CompilerParams(
            dimension_semantics=("parallel",)),
        cost_estimate=pl.CostEstimate(flops=flops, transcendentals=0,
                                      bytes_accessed=bytes_accessed),
    )(*operands)


# ------------------------------ CogDecoder -------------------------------------

def init_cogdecoder_params(key, in_channels, out_features, head_depth, head_width):
    """Mirrors CogDecoder.__init__ (out_features is unused by forward, as in PyTorch)."""
    head_sizes = tuple(int(s) for s in np.linspace(
        in_channels * head_width ** 2, 1000, head_depth + 1, dtype=int))
    keys = jax.random.split(key, 2 * head_depth)
    raw_w, raw_b, padded_w, padded_b = [], [], [], []
    for layer in range(head_depth):
        fan_in, fan_out = head_sizes[layer], head_sizes[layer + 1]
        bound = 1.0 / math.sqrt(fan_in)
        w = jax.random.uniform(keys[2 * layer], (fan_in, fan_out),
                               jnp.float32, -bound, bound)
        b = jax.random.uniform(keys[2 * layer + 1], (fan_out,),
                               jnp.float32, -bound, bound)
        raw_w.append(w)
        raw_b.append(b)
        kp, np_ = _round_up(fan_in, _LANE), _round_up(fan_out, _LANE)
        wp = jnp.zeros((kp, np_), jnp.bfloat16).at[:fan_in, :fan_out].set(
            w.astype(jnp.bfloat16))                       # bf16 weight streaming
        bp = jnp.zeros((1, np_), jnp.float32).at[0, :fan_out].set(b)
        padded_w.append(wp)
        padded_b.append(bp)
    return {"raw_w": raw_w, "raw_b": raw_b,
            "padded_w": padded_w, "padded_b": padded_b}, head_sizes


def cogdecoder_forward(params, x_nchw, *, head_width, head_sizes):
    """Mirrors CogDecoder.forward(inp). x_nchw: (N, C, H, W) float32."""
    N = x_nchw.shape[0]

    feat = adaptive_avgpool_flatten(x_nchw, head_width)       # (N, C*hw*hw) f32

    # One-time layout pad: batch -> sublane multiple, features -> layer-0
    # padded width (zero padding rides exactly through every Linear+ReLU).
    mp = _round_up(max(N, 1), _SUBLANE)
    k0p = params["padded_w"][0].shape[0]
    xp = jnp.zeros((mp, k0p), jnp.float32).at[:N, :feat.shape[1]].set(feat)

    y = mlp_chain(xp, params["padded_w"], params["padded_b"])  # one fused call
    return y[:N, :head_sizes[-1]]


def _reference_forward(raw_w, raw_b, x_nchw, head_width):
    """Pure-JAX f32 reference (no Pallas) for numerical sanity checking."""
    N, C, H, W = x_nchw.shape
    P = jnp.asarray(_adaptive_pool_matrix(H, W, head_width, head_width))
    h = jnp.matmul(x_nchw.reshape(N * C, H * W), P,
                   precision=jax.lax.Precision.HIGHEST).reshape(N, -1)
    for i, (w, b) in enumerate(zip(raw_w, raw_b)):
        h = jnp.matmul(h, w, precision=jax.lax.Precision.HIGHEST) + b
        if i < len(raw_w) - 1:
            h = jnp.maximum(h, 0.0)
    return h


# ------------------------------ demo --------------------------------------------

if __name__ == "__main__":
    N, C, H, W = 2, 32, 16, 16
    head_width, head_depth, out_features = 4, 3, 1000

    key = jax.random.PRNGKey(0)
    kparam, kx = jax.random.split(key)
    params, head_sizes = init_cogdecoder_params(kparam, C, out_features,
                                                head_depth, head_width)
    x = jax.random.normal(kx, (N, C, H, W), jnp.float32)

    fwd = jax.jit(functools.partial(cogdecoder_forward,
                                    head_width=head_width,
                                    head_sizes=head_sizes))
    run_params = {"padded_w": params["padded_w"], "padded_b": params["padded_b"]}
    out = jax.block_until_ready(fwd(run_params, x))

    assert out.shape == (N, head_sizes[-1]), out.shape

    ref = jax.block_until_ready(
        _reference_forward(params["raw_w"], params["raw_b"], x, head_width))
    # Documented tolerance: bf16 weight streaming + default-precision MXU vs.
    # the exact-f32 reference; observed errors are ~3e-4, bound set at 3e-3.
    np.testing.assert_allclose(np.asarray(out), np.asarray(ref),
                               rtol=1e-2, atol=3e-3)
    print("KERNEL_OK")
</pallas_src>

<mosaic_0001>
module attributes {stable_mosaic.version = 11 : i64} {
  func.func @_avgpool_gemm_kernel(%arg0: i32, %arg1: memref<32x256xf32, #tpu.memory_space<vmem>>, %arg2: memref<256x128xf32, #tpu.memory_space<vmem>>, %arg3: memref<32x128xf32, #tpu.memory_space<vmem>>) attributes {dimension_semantics = [#tpu.dimension_semantics<parallel>], iteration_bounds = array<i64: 2>, scalar_prefetch = 0 : i64, scratch_operands = 0 : i64, tpu.core_type = #tpu.core_type<tc>, window_params = [{transform_indices = @transform_0, window_bounds = array<i64: 32, 256>}, {pipeline_mode = #tpu.pipeline_mode<synchronous>, transform_indices = @transform_1, window_bounds = array<i64: 256, 128>}, {transform_indices = @transform_2, window_bounds = array<i64: 32, 128>}]} {
    %c0 = arith.constant 0 : index
    %c0_0 = arith.constant 0 : index
    %0 = vector.load %arg1[%c0, %c0_0] : memref<32x256xf32, #tpu.memory_space<vmem>>, vector<32x256xf32>
    %c0_1 = arith.constant 0 : index
    %c0_2 = arith.constant 0 : index
    %1 = vector.load %arg2[%c0_1, %c0_2] : memref<256x128xf32, #tpu.memory_space<vmem>>, vector<256x128xf32>
    %cst = arith.constant dense<0.000000e+00> : vector<32x128xf32>
    %2 = tpu.matmul %0, %1, %cst {dimension_numbers = #tpu.dot_dimension_numbers<[1], [0], [0], [1], [0, 0, 1, 1], [], []>} : vector<32x256xf32>, vector<256x128xf32>, vector<32x128xf32> -> vector<32x128xf32>
    %c0_3 = arith.constant 0 : index
    %c0_4 = arith.constant 0 : index
    %3 = vector.load %arg3[%c0_3, %c0_4] : memref<32x128xf32, #tpu.memory_space<vmem>>, vector<32x128xf32>
    tpu.vector_store %arg3[%c0_3, %c0_4], %2 {strides = array<i32>} : memref<32x128xf32, #tpu.memory_space<vmem>>, vector<32x128xf32>,
    return
  }
  func.func @transform_0(%arg0: i32) -> (i32, i32) {
    %c0_i32 = arith.constant 0 : i32
    %c0_i32_0 = arith.constant 0 : i32
    return %arg0, %c0_i32 : i32, i32
  }
  func.func @transform_1(%arg0: i32) -> (i32, i32) {
    %c0_i32 = arith.constant 0 : i32
    %c0_i32_0 = arith.constant 0 : i32
    %c0_i32_1 = arith.constant 0 : i32
    return %c0_i32, %c0_i32_0 : i32, i32
  }
  func.func @transform_2(%arg0: i32) -> (i32, i32) {
    %c0_i32 = arith.constant 0 : i32
    %c0_i32_0 = arith.constant 0 : i32
    return %arg0, %c0_i32 : i32, i32
  }
}

module attributes {stable_mosaic.version = 11 : i64} {
  func.func @_mlp_chain_kernel(%arg0: i32, %arg1: memref<8x512xf32, #tpu.memory_space<vmem>>, %arg2: memref<512x768xbf16, #tpu.memory_space<vmem>>, %arg3: memref<1x768xf32, #tpu.memory_space<vmem>>, %arg4: memref<768x896xbf16, #tpu.memory_space<vmem>>, %arg5: memref<1x896xf32, #tpu.memory_space<vmem>>, %arg6: memref<896x1024xbf16, #tpu.memory_space<vmem>>, %arg7: memref<1x1024xf32, #tpu.memory_space<vmem>>, %arg8: memref<8x1024xf32, #tpu.memory_space<vmem>>) attributes {dimension_semantics = [#tpu.dimension_semantics<parallel>], iteration_bounds = array<i64: 1>, scalar_prefetch = 0 : i64, scratch_operands = 0 : i64, tpu.core_type = #tpu.core_type<tc>, window_params = [{transform_indices = @transform_0, window_bounds = array<i64: 8, 512>}, {pipeline_mode = #tpu.pipeline_mode<synchronous>, transform_indices = @transform_1, window_bounds = array<i64: 512, 768>}, {pipeline_mode = #tpu.pipeline_mode<synchronous>, transform_indices = @transform_2, window_bounds = array<i64: 1, 768>}, {pipeline_mode = #tpu.pipeline_mode<synchronous>, transform_indices = @transform_3, window_bounds = array<i64: 768, 896>}, {pipeline_mode = #tpu.pipeline_mode<synchronous>, transform_indices = @transform_4, window_bounds = array<i64: 1, 896>}, {pipeline_mode = #tpu.pipeline_mode<synchronous>, transform_indices = @transform_5, window_bounds = array<i64: 896, 1024>}, {pipeline_mode = #tpu.pipeline_mode<synchronous>, transform_indices = @transform_6, window_bounds = array<i64: 1, 1024>}, {transform_indices = @transform_7, window_bounds = array<i64: 8, 1024>}]} {
    %c0 = arith.constant 0 : index
    %c0_0 = arith.constant 0 : index
    %0 = vector.load %arg1[%c0, %c0_0] : memref<8x512xf32, #tpu.memory_space<vmem>>, vector<8x512xf32>
    %1 = arith.truncf %0 : vector<8x512xf32> to vector<8x512xbf16>
    %c0_1 = arith.constant 0 : index
    %c0_2 = arith.constant 0 : index
    %2 = vector.load %arg2[%c0_1, %c0_2] : memref<512x768xbf16, #tpu.memory_space<vmem>>, vector<512x768xbf16>
    %cst = arith.constant dense<0.000000e+00> : vector<8x768xf32>
    %3 = tpu.matmul %1, %2, %cst {dimension_numbers = #tpu.dot_dimension_numbers<[1], [0], [0], [1], [0, 0, 1, 1], [], []>} : vector<8x512xbf16>, vector<512x768xbf16>, vector<8x768xf32> -> vector<8x768xf32>
    %c0_3 = arith.constant 0 : index
    %c0_4 = arith.constant 0 : index
    %4 = vector.load %arg3[%c0_3, %c0_4] : memref<1x768xf32, #tpu.memory_space<vmem>>, vector<1x768xf32>
    %5 = vector.broadcast %4 : vector<1x768xf32> to vector<8x768xf32>
    %6 = arith.addf %3, %5 : vector<8x768xf32>
    %cst_5 = arith.constant 0.000000e+00 : f32
    %7 = vector.broadcast %cst_5 : f32 to vector<8x768xf32>
    %8 = arith.maximumf %6, %7 : vector<8x768xf32>
    %9 = arith.truncf %8 : vector<8x768xf32> to vector<8x768xbf16>
    %c0_6 = arith.constant 0 : index
    %c0_7 = arith.constant 0 : index
    %10 = vector.load %arg4[%c0_6, %c0_7] : memref<768x896xbf16, #tpu.memory_space<vmem>>, vector<768x896xbf16>
    %cst_8 = arith.constant dense<0.000000e+00> : vector<8x896xf32>
    %11 = tpu.matmul %9, %10, %cst_8 {dimension_numbers = #tpu.dot_dimension_numbers<[1], [0], [0], [1], [0, 0, 1, 1], [], []>} : vector<8x768xbf16>, vector<768x896xbf16>, vector<8x896xf32> -> vector<8x896xf32>
    %c0_9 = arith.constant 0 : index
    %c0_10 = arith.constant 0 : index
    %12 = vector.load %arg5[%c0_9, %c0_10] : memref<1x896xf32, #tpu.memory_space<vmem>>, vector<1x896xf32>
    %13 = vector.broadcast %12 : vector<1x896xf32> to vector<8x896xf32>
    %14 = arith.addf %11, %13 : vector<8x896xf32>
    %cst_11 = arith.constant 0.000000e+00 : f32
    %15 = vector.broadcast %cst_11 : f32 to vector<8x896xf32>
    %16 = arith.maximumf %14, %15 : vector<8x896xf32>
    %17 = arith.truncf %16 : vector<8x896xf32> to vector<8x896xbf16>
    %c0_12 = arith.constant 0 : index
    %c0_13 = arith.constant 0 : index
    %18 = vector.load %arg6[%c0_12, %c0_13] : memref<896x1024xbf16, #tpu.memory_space<vmem>>, vector<896x1024xbf16>
    %cst_14 = arith.constant dense<0.000000e+00> : vector<8x1024xf32>
    %19 = tpu.matmul %17, %18, %cst_14 {dimension_numbers = #tpu.dot_dimension_numbers<[1], [0], [0], [1], [0, 0, 1, 1], [], []>} : vector<8x896xbf16>, vector<896x1024xbf16>, vector<8x1024xf32> -> vector<8x1024xf32>
    %c0_15 = arith.constant 0 : index
    %c0_16 = arith.constant 0 : index
    %20 = vector.load %arg7[%c0_15, %c0_16] : memref<1x1024xf32, #tpu.memory_space<vmem>>, vector<1x1024xf32>
    %21 = vector.broadcast %20 : vector<1x1024xf32> to vector<8x1024xf32>
    %22 = arith.addf %19, %21 : vector<8x1024xf32>
    %c0_17 = arith.constant 0 : index
    %c0_18 = arith.constant 0 : index
    %23 = vector.load %arg8[%c0_17, %c0_18] : memref<8x1024xf32, #tpu.memory_space<vmem>>, vector<8x1024xf32>
    tpu.vector_store %arg8[%c0_17, %c0_18], %22 {strides = array<i32>} : memref<8x1024xf32, #tpu.memory_space<vmem>>, vector<8x1024xf32>,
    return
  }
  func.func @transform_0(%arg0: i32) -> (i32, i32) {
    %c0_i32 = arith.constant 0 : i32
    %c0_i32_0 = arith.constant 0 : i32
    return %arg0, %c0_i32 : i32, i32
  }
  func.func @transform_1(%arg0: i32) -> (i32, i32) {
    %c0_i32 = arith.constant 0 : i32
    %c0_i32_0 = arith.constant 0 : i32
    %c0_i32_1 = arith.constant 0 : i32
    return %c0_i32, %c0_i32_0 : i32, i32
  }
  func.func @transform_2(%arg0: i32) -> (i32, i32) {
    %c0_i32 = arith.constant 0 : i32
    %c0_i32_0 = arith.constant 0 : i32
    %c0_i32_1 = arith.constant 0 : i32
    return %c0_i32, %c0_i32_0 : i32, i32
  }
  func.func @transform_3(%arg0: i32) -> (i32, i32) {
    %c0_i32 = arith.constant 0 : i32
    %c0_i32_0 = arith.constant 0 : i32
    %c0_i32_1 = arith.constant 0 : i32
    return %c0_i32, %c0_i32_0 : i32, i32
  }
  func.func @transform_4(%arg0: i32) -> (i32, i32) {
    %c0_i32 = arith.constant 0 : i32
    %c0_i32_0 = arith.constant 0 : i32
    %c0_i32_1 = arith.constant 0 : i32
    return %c0_i32, %c0_i32_0 : i32, i32
  }
  func.func @transform_5(%arg0: i32) -> (i32, i32) {
    %c0_i32 = arith.constant 0 : i32
    %c0_i32_0 = arith.constant 0 : i32
    %c0_i32_1 = arith.constant 0 : i32
    return %c0_i32, %c0_i32_0 : i32, i32
  }
  func.func @transform_6(%arg0: i32) -> (i32, i32) {
    %c0_i32 = arith.constant 0 : i32
    %c0_i32_0 = arith.constant 0 : i32
    %c0_i32_1 = arith.constant 0 : i32
    return %c0_i32, %c0_i32_0 : i32, i32
  }
  func.func @transform_7(%arg0: i32) -> (i32, i32) {
    %c0_i32 = arith.constant 0 : i32
    %c0_i32_0 = arith.constant 0 : i32
    return %arg0, %c0_i32 : i32, i32
  }
}

</mosaic_0001>

<llo_original>
// kernel: cogdecoder_forward.2
$region0: #{cogdecoder_forward.2}
  #allocation0 [shape = 'u32[]', space=smem, size = 0x4, offset = 0x4, fixed_abs, tag = 'smem constant byte address 0x4 - core index']
  #allocation1 [shape = 'u32[144,128]{1,0:T(1,128)}', space=vmem, size = 0x12000, scoped, tag = 'internal scratch']
  %s0 = inlined_call_operand.vmem [shape: f32[64,256], index: 0, kind: input, shape index: {}]
  %s1 = inlined_call_operand.hbm [shape: f32[256,128], index: 1, kind: input, shape index: {}]
  %s2 = inlined_call_operand.vmem [shape: f32[64,128], index: 2, kind: output, shape index: {}]
  %s3 = sld [smem:[#allocation0]]
  $region45: #{cogdecoder_forward.2} parent=0
    _
  %s5 = ssub.s32 1, %s3
  %s6 = scalar_select 0, %s5, %s3
  $region1: #{cogdecoder_forward.2} parent=0
    #allocation2 [shape = 'u8[131072]{0}', space=vmem, size = 0x20000, scoped, tag = 'input window, operand 1, single buffered']
    #allocation3 [shape = 's32[2]{0}', space=sflag, size = 0x8, scoped, tag = 'scoped memory for cogdecoder_forward.2']
    %7 = vsyncpa [#allocation3], 0
    loop: start=0, step=1, limit=4
    $region2: #{cogdecoder_forward.2} parent=1 // loop_pre_header
      _
    $region3: #{cogdecoder_forward.2} parent=1 // loop_header
      %s9 = sphi 0, %s13
      %p10 = scmp.ge.s32.totalorder %s9, 4
      %s19 = sphi 0, %s21
      %s22 = sphi 0, %s19
      %s23 = sphi 0, %s22
      %s39 = sphi 0, %s23
      %s43 = sphi 0, %s43
      %s45 = sphi 0, %s43
      %s46 = sphi 0, %s45
      %s60 = sphi 0, %s46
      %s66 = sphi 0, %s68
      %s69 = sphi 0, %s66
      %s70 = sphi 0, %s69
      %s86 = sphi 0, %s70
    $region4: #{cogdecoder_forward.2} parent=1 // loop_header_branch
      %12 = sbr.rel (%p10) target = $region8
    $region5: #{cogdecoder_forward.2} parent=1 // loop_body
      %s14 = ssub.s32 %s9, 1
      %s15 = ssub.s32 %s9, 2
      %s16 = sadd.s32 %s9, 1
      %s17 = ssub.s32 %s9, %s16
      %p18 = scmp.eq.s32.totalorder %s17, 0
      %s20 = sadd.s32 %s19, 1
      %s21 = scalar_select %p18, %s19, %s20
      %p24 = pneg %p18
      %p25 = scmp.eq.s32.totalorder %s9, 1
      %p26 = por %p24, %p25
      %p27 = scmp.ne.s32.totalorder %s19, %s22
      %p28 = scmp.eq.s32.totalorder %s9, 0
      %p29 = por %p27, %p28
      %p30 = scmp.ne.s32.totalorder %s19, %s22
      %p31 = scmp.eq.s32.totalorder %s14, 1
      %p32 = por %p30, %p31
      %p33 = scmp.ne.s32.totalorder %s22, %s23
      %p34 = scmp.eq.s32.totalorder %s14, 0
      %p35 = por %p33, %p34
      %p36 = scmp.ne.s32.totalorder %s22, %s23
      %p37 = scmp.eq.s32.totalorder %s15, 1
      %p38 = por %p36, %p37
      %p40 = scmp.ne.s32.totalorder %s23, %s39
      %p41 = scmp.eq.s32.totalorder %s15, 0
      %p42 = por %p40, %p41
      %s44 = sadd.s32 %s43, 1
      %p47 = scmp.eq.s32.totalorder %s9, 1
      %p48 = scmp.ne.s32.totalorder %s43, %s45
      %p49 = scmp.eq.s32.totalorder %s9, 0
      %p50 = por %p48, %p49
      %p51 = scmp.ne.s32.totalorder %s43, %s45
      %p52 = scmp.eq.s32.totalorder %s14, 1
      %p53 = por %p51, %p52
      %p54 = scmp.ne.s32.totalorder %s45, %s46
      %p55 = scmp.eq.s32.totalorder %s14, 0
      %p56 = por %p54, %p55
      %p57 = scmp.ne.s32.totalorder %s45, %s46
      %p58 = scmp.eq.s32.totalorder %s15, 1
      %p59 = por %p57, %p58
      %p61 = scmp.ne.s32.totalorder %s46, %s60
      %p62 = scmp.eq.s32.totalorder %s15, 0
      %p63 = por %p61, %p62
      %s64 = ssub.s32 %s9, %s16
      %p65 = scmp.eq.s32.totalorder %s64, 0
      %s67 = sadd.s32 %s66, 1
      %s68 = scalar_select %p65, %s66, %s67
      %p71 = pneg %p65
      %p72 = scmp.eq.s32.totalorder %s9, 1
      %p73 = por %p71, %p72
      %p74 = scmp.ne.s32.totalorder %s66, %s69
      %p75 = scmp.eq.s32.totalorder %s9, 0
      %p76 = por %p74, %p75
      %p77 = scmp.ne.s32.totalorder %s66, %s69
      %p78 = scmp.eq.s32.totalorder %s14, 1
      %p79 = por %p77, %p78
      %p80 = scmp.ne.s32.totalorder %s69, %s70
      %p81 = scmp.eq.s32.totalorder %s14, 0
      %p82 = por %p80, %p81
      %p83 = scmp.ne.s32.totalorder %s69, %s70
      %p84 = scmp.eq.s32.totalorder %s15, 1
      %p85 = por %p83, %p84
      %p87 = scmp.ne.s32.totalorder %s70, %s86
      %p88 = scmp.eq.s32.totalorder %s15, 0
      %p89 = por %p87, %p88
      %p90 = scmp.le.s32.totalorder 1, %s9
      %p91 = scmp.lt.s32.totalorder %s9, 3
      %p92 = pnand %p90, %p91
      %p93 = pneg %p92
      // Predicated region
      $region9: #{cogdecoder_forward.2} parent=5 // pred_check
        _
      $region10: #{cogdecoder_forward.2} parent=5 // pred_check_branch
        %95 = sbr.rel (%p92) target = $region12
      $region11: #{cogdecoder_forward.2} parent=5 // pred_region
        %s96 = ssub.s32 %s9, 1
        // Predicated region
        $region13: #{cogdecoder_forward.2} parent=11 // pred_check
          %p97 = pneg %p56
        $region14: #{cogdecoder_forward.2} parent=11 // pred_check_branch
          %99 = sbr.rel (%p97) target = $region16
        $region15: #{cogdecoder_forward.2} parent=11 // pred_region
          %s101 = ssub.s32 4096, 4096
          %102 = vsyncadd [#allocation3], %s101
          %s103 = sshll.u32 [#allocation2], 4
          %s104 = int_to_ptr.vmem [resolvable:$true] %s103
          %109 = dma.hbm_to_vmem [thread:$0]  %s1, 4096, %s104, [#allocation3], 128, 128, 8
        $region16: #{cogdecoder_forward.2} parent=11 // pred_fallthru
          _
      $region12: #{cogdecoder_forward.2} parent=5 // pred_fallthru
        _
      %p110 = scmp.lt.s32.totalorder %s9, 2
      // Predicated region
      $region17: #{cogdecoder_forward.2} parent=5 // pred_check
        %p111 = pneg %p110
      $region18: #{cogdecoder_forward.2} parent=5 // pred_check_branch
        %113 = sbr.rel (%p111) target = $region20
      $region19: #{cogdecoder_forward.2} parent=5 // pred_region
        // Predicated region
        $region21: #{cogdecoder_forward.2} parent=19 // pred_check
          %p114 = pneg %p29
        $region22: #{cogdecoder_forward.2} parent=19 // pred_check_branch
          %116 = sbr.rel (%p114) target = $region24
        $region23: #{cogdecoder_forward.2} parent=19 // pred_region
          %s117 = smul.u32 4, %s9
          %p118 = scmp.lt.s32.totalorder %s117, 7
          %s119 = scalar_select %p118, %s117, 7
          %s120 = smul.addr %s119, 2
          %s121 = smul.addr %s120, 8
          %s122 = scalar_lea.vmem %s0, %s121
          %s123 = smul.u32 4, %s9
        $region24: #{cogdecoder_forward.2} parent=19 // pred_fallthru
          _
      $region20: #{cogdecoder_forward.2} parent=5 // pred_fallthru
        _
      %p124 = scmp.le.s32.totalorder 1, %s9
      %p125 = scmp.lt.s32.totalorder %s9, 3
      %p126 = pnand %p124, %p125
      %p127 = pneg %p126
      // Predicated region
      $region25: #{cogdecoder_forward.2} parent=5 // pred_check
        _
      $region26: #{cogdecoder_forward.2} parent=5 // pred_check_branch
        %129 = sbr.rel (%p126) target = $region28
      $region27: #{cogdecoder_forward.2} parent=5 // pred_region
        %s130 = ssub.s32 %s9, 1
        // Predicated region
        $region29: #{cogdecoder_forward.2} parent=27 // pred_check
          %p131 = pneg %p56
        $region30: #{cogdecoder_forward.2} parent=27 // pred_check_branch
          %133 = sbr.rel (%p131) target = $region32
        $region31: #{cogdecoder_forward.2} parent=27 // pred_region
          %134 = dma.done [#allocation3], 4096
        $region32: #{cogdecoder_forward.2} parent=27 // pred_fallthru
          _
        %s135 = smul.u32 4, %s14
        %p136 = scmp.lt.s32.totalorder %s135, 7
        %s137 = scalar_select %p136, %s135, 7
        %s138 = smul.addr %s137, 2
        %s139 = smul.addr %s138, 8
        %s140 = scalar_lea.vmem %s0, %s139
        %p141 = pneg %p35
        %p142 = pneg %p32
        %p143 = pneg %p56
        %p144 = pneg %p53
        %p145 = pneg %p82
        %p146 = pneg %p79
        %s147 = smul.u32 4, %s14
        %p148 = scmp.lt.s32.totalorder %s147, 7
        %s149 = scalar_select %p148, %s147, 7
        %s150 = smul.addr %s149, 8
        %s151 = scalar_lea.vmem %s2, %s150
        %s152 = smul.u32 4, %s14
        %p153 = scmp.lt.s32.totalorder %s152, 7
        %s154 = scalar_select %p153, %s152, 7
        %s155 = smul.addr %s154, 2
        %s156 = smul.addr %s155, 8
        %s157 = scalar_lea.vmem %s0, %s156
        %s158 = smul.u32 4, %s14
        %s159 = smul.u32 4, %s14
        %p160 = scmp.lt.s32.totalorder %s159, 7
        %s161 = scalar_select %p160, %s159, 7
        %s162 = smul.addr %s161, 8
        %s163 = scalar_lea.vmem %s2, %s162
        %s164 = smul.u32 4, %s14
        %v165 = vld [vmem:[%s157] sm:$0xff]
        %v166 = vld [vmem:[%s157 + $0x8] sm:$0xff]
        %v167 = vld [vmem:[%s157 + $0x10] sm:$0xff]
        %v168 = vld [vmem:[%s157 + $0x18] sm:$0xff]
        %v169 = vld [vmem:[%s157 + $0x20] sm:$0xff]
        %v170 = vld [vmem:[%s157 + $0x28] sm:$0xff]
        %v171 = vld [vmem:[%s157 + $0x30] sm:$0xff]
        %v172 = vld [vmem:[%s157 + $0x38] sm:$0xff]
        %v173 = vld [vmem:[#allocation2] sm:$0xff]
        %v174 = vld [vmem:[#allocation2 + $0x8] sm:$0xff]
        %v175 = vld [vmem:[#allocation2 + $0x10] sm:$0xff]
        %v176 = vld [vmem:[#allocation2 + $0x18] sm:$0xff]
        %v177 = vld [vmem:[#allocation2 + $0x20] sm:$0xff]
        %v178 = vld [vmem:[#allocation2 + $0x28] sm:$0xff]
        %v179 = vld [vmem:[#allocation2 + $0x30] sm:$0xff]
        %v180 = vld [vmem:[#allocation2 + $0x38] sm:$0xff]
        %v181 = vld [vmem:[#allocation2 + $0x40] sm:$0xff]
        %v182 = vld [vmem:[#allocation2 + $0x48] sm:$0xff]
        %v183 = vld [vmem:[#allocation2 + $0x50] sm:$0xff]
        %v184 = vld [vmem:[#allocation2 + $0x58] sm:$0xff]
        %v185 = vld [vmem:[#allocation2 + $0x60] sm:$0xff]
        %v186 = vld [vmem:[#allocation2 + $0x68] sm:$0xff]
        %v187 = vld [vmem:[#allocation2 + $0x70] sm:$0xff]
        %v188 = vld [vmem:[#allocation2 + $0x78] sm:$0xff]
        %v189 = vld [vmem:[#allocation2 + $0x80] sm:$0xff]
        %v190 = vld [vmem:[#allocation2 + $0x88] sm:$0xff]
        %v191 = vld [vmem:[#allocation2 + $0x90] sm:$0xff]
        %v192 = vld [vmem:[#allocation2 + $0x98] sm:$0xff]
        %v193 = vld [vmem:[#allocation2 + $0xa0] sm:$0xff]
        %v194 = vld [vmem:[#allocation2 + $0xa8] sm:$0xff]
        %v195 = vld [vmem:[#allocation2 + $0xb0] sm:$0xff]
        %v196 = vld [vmem:[#allocation2 + $0xb8] sm:$0xff]
        %v197 = vld [vmem:[#allocation2 + $0xc0] sm:$0xff]
        %v198 = vld [vmem:[#allocation2 + $0xc8] sm:$0xff]
        %v199 = vld [vmem:[#allocation2 + $0xd0] sm:$0xff]
        %v200 = vld [vmem:[#allocation2 + $0xd8] sm:$0xff]
        %v201 = vld [vmem:[#allocation2 + $0xe0] sm:$0xff]
        %v202 = vld [vmem:[#allocation2 + $0xe8] sm:$0xff]
        %v203 = vld [vmem:[#allocation2 + $0xf0] sm:$0xff]
        %v204 = vld [vmem:[#allocation2 + $0xf8] sm:$0xff]
        %205 = vmatprep.subr.mxu0 0.0
        %206 = vmatpush1.msra.mxu0 %v188
        %207 = vmatprep.subr.mxu0 0.0
        %208 = vmatpush1.msra.mxu0 %v187
        %209 = vmatprep.subr.mxu0 0.0
        %210 = vmatpush1.msra.mxu0 %v186
        %211 = vmatprep.subr.mxu0 0.0
        %212 = vmatpush1.msra.mxu0 %v185
        %213 = vmatprep.subr.mxu0 0.0
        %214 = vmatpush1.msra.mxu0 %v184
        %215 = vmatprep.subr.mxu0 0.0
        %216 = vmatpush1.msra.mxu0 %v183
        %217 = vmatprep.subr.mxu0 0.0
        %218 = vmatpush1.msra.mxu0 %v182
        %219 = vmatprep.subr.mxu0 0.0
        %220 = vmatpush1.msra.mxu0 %v181
        %221 = vmatprep.subr.mxu0 0.0
        %222 = vmatpush1.msra.mxu0 %v180
        %223 = vmatprep.subr.mxu0 0.0
        %224 = vmatpush1.msra.mxu0 %v179
        %225 = vmatprep.subr.mxu0 0.0
        %226 = vmatpush1.msra.mxu0 %v178
        %227 = vmatprep.subr.mxu0 0.0
        %228 = vmatpush1.msra.mxu0 %v177
        %229 = vmatprep.subr.mxu0 0.0
        %230 = vmatpush1.msra.mxu0 %v176
        %231 = vmatprep.subr.mxu0 0.0
        %232 = vmatpush1.msra.mxu0 %v175
        %233 = vmatprep.subr.mxu0 0.0
        %234 = vmatpush1.msra.mxu0 %v174
        %235 = vmatprep.subr.mxu0 0.0
        %236 = vmatpush1.msra.mxu0 %v173
        %237 = vmatprep.subr.mxu0 0.0
        %238 = vmatpush2.msra.mxu0 %v204
        %239 = vmatprep.subr.mxu0 0.0
        %240 = vmatpush2.msra.mxu0 %v203
        %241 = vmatprep.subr.mxu0 0.0
        %242 = vmatpush2.msra.mxu0 %v202
        %243 = vmatprep.subr.mxu0 0.0
        %244 = vmatpush2.msra.mxu0 %v201
        %245 = vmatprep.subr.mxu0 0.0
        %246 = vmatpush2.msra.mxu0 %v200
        %247 = vmatprep.subr.mxu0 0.0
        %248 = vmatpush2.msra.mxu0 %v199
        %249 = vmatprep.subr.mxu0 0.0
        %250 = vmatpush2.msra.mxu0 %v198
        %251 = vmatprep.subr.mxu0 0.0
        %252 = vmatpush2.msra.mxu0 %v197
        %253 = vmatprep.subr.mxu0 0.0
        %254 = vmatpush2.msra.mxu0 %v196
        %255 = vmatprep.subr.mxu0 0.0
        %256 = vmatpush2.msra.mxu0 %v195
        %257 = vmatprep.subr.mxu0 0.0
        %258 = vmatpush2.msra.mxu0 %v194
        %259 = vmatprep.subr.mxu0 0.0
        %260 = vmatpush2.msra.mxu0 %v193
        %261 = vmatprep.subr.mxu0 0.0
        %262 = vmatpush2.msra.mxu0 %v192
        %263 = vmatprep.subr.mxu0 0.0
        %264 = vmatpush2.msra.mxu0 %v191
        %265 = vmatprep.subr.mxu0 0.0
        %266 = vmatpush2.msra.mxu0 %v190
        %267 = vmatprep.subr.mxu0 0.0
        %268 = vmatpush2.msra.mxu0 %v189
        %269 = vmatprep.mubr.f32.mxu0 %v166
        %270 = vmatmul.mubr.f32.gmra.mxu0 %v165
        %v271 = vpop.f32.mrf.mxu0
        %v272 = vadd.f32 0.0, %v271
        %v273 = vpop.f32.mrf.mxu0
        %274 = vmatprep.mubr.f32.mxu0 %v168
        %275 = vmatmul.mubr.f32.gmra.mxu0 %v167
        %v276 = vpop.f32.mrf.mxu0
        %v277 = vadd.f32 0.0, %v276
        %v278 = vpop.f32.mrf.mxu0
        %279 = vmatprep.mubr.f32.mxu0 %v170
        %280 = vmatmul.mubr.f32.gmra.mxu0 %v169
        %v281 = vpop.f32.mrf.mxu0
        %v282 = vadd.f32 0.0, %v281
        %v283 = vpop.f32.mrf.mxu0
        %284 = vmatprep.mubr.f32.mxu0 %v172
        %285 = vmatmul.mubr.f32.gmra.mxu0 %v171
        %v286 = vpop.f32.mrf.mxu0
        %v287 = vadd.f32 0.0, %v286
        %v288 = vpop.f32.mrf.mxu0
        %289 = vdwg.mxu0
        %290 = vst [vmem:[%s163] sm:$0xff] %v272
        %291 = vst [vmem:[%s163 + $0x8] sm:$0xff] %v277
        %292 = vst [vmem:[%s163 + $0x10] sm:$0xff] %v282
        %293 = vst [vmem:[%s163 + $0x18] sm:$0xff] %v287
        %s294 = smul.u32 4, %s14
        %p295 = scmp.lt.s32.totalorder %s294, 7
        %s296 = scalar_select %p295, %s294, 7
        %s297 = smul.addr %s296, 8
        %s298 = scalar_lea.vmem %s2, %s297
        // Predicated region
        $region33: #{cogdecoder_forward.2} parent=27 // pred_check
          %p299 = pneg %p79
        $region34: #{cogdecoder_forward.2} parent=27 // pred_check_branch
          %301 = sbr.rel (%p299) target = $region36
        $region35: #{cogdecoder_forward.2} parent=27 // pred_region
          %s302 = smul.u32 4, %s14
        $region36: #{cogdecoder_forward.2} parent=27 // pred_fallthru
          _
      $region28: #{cogdecoder_forward.2} parent=5 // pred_fallthru
        _
      %p303 = scmp.le.s32.totalorder 2, %s9
      // Predicated region
      $region37: #{cogdecoder_forward.2} parent=5 // pred_check
        %p304 = pneg %p303
      $region38: #{cogdecoder_forward.2} parent=5 // pred_check_branch
        %306 = sbr.rel (%p304) target = $region40
      $region39: #{cogdecoder_forward.2} parent=5 // pred_region
        %s307 = ssub.s32 %s9, 2
        // Predicated region
        $region41: #{cogdecoder_forward.2} parent=39 // pred_check
          %p308 = pneg %p85
        $region42: #{cogdecoder_forward.2} parent=39 // pred_check_branch
          %310 = sbr.rel (%p308) target = $region44
        $region43: #{cogdecoder_forward.2} parent=39 // pred_region
          %s311 = smul.u32 4, %s15
          %p312 = scmp.lt.s32.totalorder %s311, 7
          %s313 = scalar_select %p312, %s311, 7
          %s314 = smul.addr %s313, 8
          %s315 = scalar_lea.vmem %s2, %s314
        $region44: #{cogdecoder_forward.2} parent=39 // pred_fallthru
          _
      $region40: #{cogdecoder_forward.2} parent=5 // pred_fallthru
        _
    $region6: #{cogdecoder_forward.2} parent=1 // loop_footer
      %s13 = sadd.s32 1, %s9
    $region7: #{cogdecoder_forward.2} parent=1 // loop_footer_branch
      %8 = sbr.rel target = $region3
    $region8: #{cogdecoder_forward.2} parent=1 // loop_exit
      _
    %316 = vsyncpa [#allocation3], 1
    %s317 = scalar_lea.sflag [#allocation3], 1
    %318 = vsyncpa %s317, 1

// kernel: cogdecoder_forward.3
$region0: #{cogdecoder_forward.3}
  #allocation0 [shape = 'u32[]', space=smem, size = 0x4, offset = 0x4, fixed_abs, tag = 'smem constant byte address 0x4 - core index']
  #allocation1 [shape = 'u32[144,128]{1,0:T(1,128)}', space=vmem, size = 0x12000, scoped, tag = 'internal scratch']
  %s0 = inlined_call_operand.vmem [shape: f32[8,512], index: 0, kind: input, shape index: {}]
  %s1 = inlined_call_operand.hbm [shape: bf16[512,768], index: 1, kind: input, shape index: {}]
  %s2 = inlined_call_operand.hbm [shape: f32[1,768], index: 2, kind: input, shape index: {}]
  %s3 = inlined_call_operand.vmem [shape: bf16[768,896], index: 3, kind: input, shape index: {}]
  %s4 = inlined_call_operand.hbm [shape: f32[1,896], index: 4, kind: input, shape index: {}]
  %s5 = inlined_call_operand.hbm [shape: bf16[896,1024], index: 5, kind: input, shape index: {}]
  %s6 = inlined_call_operand.hbm [shape: f32[1,1024], index: 6, kind: input, shape index: {}]
  %s7 = inlined_call_operand.vmem [shape: f32[8,1024], index: 7, kind: output, shape index: {}]
  %s8 = sld [smem:[#allocation0]]
  $region58: #{cogdecoder_forward.3} parent=0
    _
  %s10 = ssub.s32 1, %s8
  %s11 = scalar_select 0, %s10, %s8
  $region1: #{cogdecoder_forward.3} parent=0
    #allocation2 [shape = 'u8[786432]{0}', space=vmem, size = 0xc0000, scoped, tag = 'input window, operand 1, single buffered']
    #allocation3 [shape = 's32[1]{0}', space=sflag, size = 0x4, scoped, tag = 'scoped memory for cogdecoder_forward.3']
    #allocation4 [shape = 'u8[3072]{0}', space=vmem, size = 0xc00, scoped, tag = 'input window, operand 2, single buffered']
    #allocation5 [shape = 's32[1]{0}', space=sflag, size = 0x4, scoped, tag = 'scoped memory for cogdecoder_forward.3']
    #allocation6 [shape = 'u8[3584]{0}', space=vmem, size = 0x1000, scoped, tag = 'input window, operand 4, single buffered']
    #allocation7 [shape = 'u8[1835008]{0}', space=vmem, size = 0x1c0000, scoped, tag = 'input window, operand 5, single buffered']
    #allocation8 [shape = 's32[1]{0}', space=sflag, size = 0x4, scoped, tag = 'scoped memory for cogdecoder_forward.3']
    #allocation9 [shape = 'u8[4096]{0}', space=vmem, size = 0x1000, scoped, tag = 'input window, operand 6, single buffered']
    %12 = vsyncpa [#allocation3], 0
    %13 = vsyncpa [#allocation5], 0
    %14 = vsyncpa [#allocation8], 0
    // Predicated region
    $region2: #{cogdecoder_forward.3} parent=1 // pred_check
      _
    $region3: #{cogdecoder_forward.3} parent=1 // pred_check_branch
      %16 = sbr.rel (0) target = $region5
    $region4: #{cogdecoder_forward.3} parent=1 // pred_region
      _
    $region5: #{cogdecoder_forward.3} parent=1 // pred_fallthru
      _
    // Predicated region
    $region6: #{cogdecoder_forward.3} parent=1 // pred_check
      _
    $region7: #{cogdecoder_forward.3} parent=1 // pred_check_branch
      %18 = sbr.rel (0) target = $region9
    $region8: #{cogdecoder_forward.3} parent=1 // pred_region
      %s20 = ssub.s32 24576, 24576
      %21 = vsyncadd [#allocation3], %s20
      %s22 = sshll.u32 [#allocation2], 4
      %s23 = int_to_ptr.vmem [resolvable:$true] %s22
      %28 = dma.hbm_to_vmem [thread:$0]  %s1, 24576, %s23, [#allocation3], 384, 384, 24
    $region9: #{cogdecoder_forward.3} parent=1 // pred_fallthru
      _
    // Predicated region
    $region10: #{cogdecoder_forward.3} parent=1 // pred_check
      _
    $region11: #{cogdecoder_forward.3} parent=1 // pred_check_branch
      %30 = sbr.rel (0) target = $region13
    $region12: #{cogdecoder_forward.3} parent=1 // pred_region
      %s32 = ssub.s32 96, 96
      %33 = vsyncadd [#allocation5], %s32
      %s35 = sshll.u32 [#allocation4], 4
      %s36 = int_to_ptr.vmem [resolvable:$true] %s35
      %38 = dma.hbm_to_vmem [thread:$0]  %s2, 96, %s36, [#allocation5]
    $region13: #{cogdecoder_forward.3} parent=1 // pred_fallthru
      _
    // Predicated region
    $region14: #{cogdecoder_forward.3} parent=1 // pred_check
      _
    $region15: #{cogdecoder_forward.3} parent=1 // pred_check_branch
      %40 = sbr.rel (0) target = $region17
    $region16: #{cogdecoder_forward.3} parent=1 // pred_region
      _
    $region17: #{cogdecoder_forward.3} parent=1 // pred_fallthru
      _
    // Predicated region
    $region18: #{cogdecoder_forward.3} parent=1 // pred_check
      _
    $region19: #{cogdecoder_forward.3} parent=1 // pred_check_branch
      %42 = sbr.rel (0) target = $region21
    $region20: #{cogdecoder_forward.3} parent=1 // pred_region
      %s44 = ssub.s32 112, 112
      %45 = vsyncadd [#allocation5], %s44
      %s47 = sshll.u32 [#allocation6], 4
      %s48 = int_to_ptr.vmem [resolvable:$true] %s47
      %50 = dma.hbm_to_vmem [thread:$0]  %s4, 112, %s48, [#allocation5]
    $region21: #{cogdecoder_forward.3} parent=1 // pred_fallthru
      _
    // Predicated region
    $region22: #{cogdecoder_forward.3} parent=1 // pred_check
      _
    $region23: #{cogdecoder_forward.3} parent=1 // pred_check_branch
      %52 = sbr.rel (0) target = $region25
    $region24: #{cogdecoder_forward.3} parent=1 // pred_region
      %s54 = ssub.s32 57344, 57344
      %55 = vsyncadd [#allocation8], %s54
      %s56 = sshll.u32 [#allocation7], 4
      %s57 = int_to_ptr.vmem [resolvable:$true] %s56
      %62 = dma.hbm_to_vmem [thread:$0]  %s5, 57344, %s57, [#allocation8], 512, 512, 32
    $region25: #{cogdecoder_forward.3} parent=1 // pred_fallthru
      _
    // Predicated region
    $region26: #{cogdecoder_forward.3} parent=1 // pred_check
      _
    $region27: #{cogdecoder_forward.3} parent=1 // pred_check_branch
      %64 = sbr.rel (0) target = $region29
    $region28: #{cogdecoder_forward.3} parent=1 // pred_region
      %s66 = ssub.s32 128, 128
      %67 = vsyncadd [#allocation8], %s66
      %s69 = sshll.u32 [#allocation9], 4
      %s70 = int_to_ptr.vmem [resolvable:$true] %s69
      %72 = dma.hbm_to_vmem [thread:$0]  %s6, 128, %s70, [#allocation8]
    $region29: #{cogdecoder_forward.3} parent=1 // pred_fallthru
      _
    // Predicated region
    $region30: #{cogdecoder_forward.3} parent=1 // pred_check
      _
    $region31: #{cogdecoder_forward.3} parent=1 // pred_check_branch
      %74 = sbr.rel (0) target = $region33
    $region32: #{cogdecoder_forward.3} parent=1 // pred_region
      %75 = dma.done [#allocation3], 24576
    $region33: #{cogdecoder_forward.3} parent=1 // pred_fallthru
      _
    // Predicated region
    $region34: #{cogdecoder_forward.3} parent=1 // pred_check
      _
    $region35: #{cogdecoder_forward.3} parent=1 // pred_check_branch
      %77 = sbr.rel (0) target = $region37
    $region36: #{cogdecoder_forward.3} parent=1 // pred_region
      %78 = dma.done [#allocation5], 96
    $region37: #{cogdecoder_forward.3} parent=1 // pred_fallthru
      _
    // Predicated region
    $region38: #{cogdecoder_forward.3} parent=1 // pred_check
      _
    $region39: #{cogdecoder_forward.3} parent=1 // pred_check_branch
      %80 = sbr.rel (0) target = $region41
    $region40: #{cogdecoder_forward.3} parent=1 // pred_region
      %81 = dma.done [#allocation5], 112
    $region41: #{cogdecoder_forward.3} parent=1 // pred_fallthru
      _
    // Predicated region
    $region42: #{cogdecoder_forward.3} parent=1 // pred_check
      _
    $region43: #{cogdecoder_forward.3} parent=1 // pred_check_branch
      %83 = sbr.rel (0) target = $region45
    $region44: #{cogdecoder_forward.3} parent=1 // pred_region
      %84 = dma.done [#allocation8], 57344
    $region45: #{cogdecoder_forward.3} parent=1 // pred_fallthru
      _
    // Predicated region
    $region46: #{cogdecoder_forward.3} parent=1 // pred_check
      _
    $region47: #{cogdecoder_forward.3} parent=1 // pred_check_branch
      %86 = sbr.rel (0) target = $region49
    $region48: #{cogdecoder_forward.3} parent=1 // pred_region
      %87 = dma.done [#allocation8], 128
    $region49: #{cogdecoder_forward.3} parent=1 // pred_fallthru
      _
    %v89 = vld [vmem:[%s0] sm:$0xff]
    %v90 = vld [vmem:[%s0 + $0x8] sm:$0xff]
    %v91 = vld [vmem:[%s0 + $0x10] sm:$0xff]
    %v92 = vld [vmem:[%s0 + $0x18] sm:$0xff]
    %v93 = vpack.c.bf16 %v89, %v89
    %v94 = vpack.c.bf16 %v90, %v90
    %v95 = vpack.c.bf16 %v91, %v91
    %v96 = vpack.c.bf16 %v92, %v92
    %v97 = vld [vmem:[#allocation2] sm:$0xff]
    %v98 = vld [vmem:[#allocation2 + $0x8] sm:$0xff]
    %v99 = vld [vmem:[#allocation2 + $0x10] sm:$0xff]
    %v100 = vld [vmem:[#allocation2 + $0x18] sm:$0xff]
    %v101 = vld [vmem:[#allocation2 + $0x20] sm:$0xff]
    %v102 = vld [vmem:[#allocation2 + $0x28] sm:$0xff]
    %v103 = vld [vmem:[#allocation2 + $0x30] sm:$0xff]
    %v104 = vld [vmem:[#allocation2 + $0x38] sm:$0xff]
    %v105 = vld [vmem:[#allocation2 + $0x40] sm:$0xff]
    %v106 = vld [vmem:[#allocation2 + $0x48] sm:$0xff]
    %v107 = vld [vmem:[#allocation2 + $0x50] sm:$0xff]
    %v108 = vld [vmem:[#allocation2 + $0x58] sm:$0xff]
    %v109 = vld [vmem:[#allocation2 + $0x60] sm:$0xff]
    %v110 = vld [vmem:[#allocation2 + $0x68] sm:$0xff]
    %v111 = vld [vmem:[#allocation2 + $0x70] sm:$0xff]
    %v112 = vld [vmem:[#allocation2 + $0x78] sm:$0xff]
    %v113 = vld [vmem:[#allocation2 + $0x80] sm:$0xff]
    %v114 = vld [vmem:[#allocation2 + $0x88] sm:$0xff]
    %v115 = vld [vmem:[#allocation2 + $0x90] sm:$0xff]
    %v116 = vld [vmem:[#allocation2 + $0x98] sm:$0xff]
    %v117 = vld [vmem:[#allocation2 + $0xa0] sm:$0xff]
    %v118 = vld [vmem:[#allocation2 + $0xa8] sm:$0xff]
    %v119 = vld [vmem:[#allocation2 + $0xb0] sm:$0xff]
    %v120 = vld [vmem:[#allocation2 + $0xb8] sm:$0xff]
    %v121 = vld [vmem:[#allocation2 + $0xc0] sm:$0xff]
    %v122 = vld [vmem:[#allocation2 + $0xc8] sm:$0xff]
    %v123 = vld [vmem:[#allocation2 + $0xd0] sm:$0xff]
    %v124 = vld [vmem:[#allocation2 + $0xd8] sm:$0xff]
    %v125 = vld [vmem:[#allocation2 + $0xe0] sm:$0xff]
    %v126 = vld [vmem:[#allocation2 + $0xe8] sm:$0xff]
    %v127 = vld [vmem:[#allocation2 + $0xf0] sm:$0xff]
    %v128 = vld [vmem:[#allocation2 + $0xf8] sm:$0xff]
    %v129 = vld [vmem:[#allocation2 + $0x100] sm:$0xff]
    %v130 = vld [vmem:[#allocation2 + $0x108] sm:$0xff]
    %v131 = vld [vmem:[#allocation2 + $0x110] sm:$0xff]
    %v132 = vld [vmem:[#allocation2 + $0x118] sm:$0xff]
    %v133 = vld [vmem:[#allocation2 + $0x120] sm:$0xff]
    %v134 = vld [vmem:[#allocation2 + $0x128] sm:$0xff]
    %v135 = vld [vmem:[#allocation2 + $0x130] sm:$0xff]
    %v136 = vld [vmem:[#allocation2 + $0x138] sm:$0xff]
    %v137 = vld [vmem:[#allocation2 + $0x140] sm:$0xff]
    %v138 = vld [vmem:[#allocation2 + $0x148] sm:$0xff]
    %v139 = vld [vmem:[#allocation2 + $0x150] sm:$0xff]
    %v140 = vld [vmem:[#allocation2 + $0x158] sm:$0xff]
    %v141 = vld [vmem:[#allocation2 + $0x160] sm:$0xff]
    %v142 = vld [vmem:[#allocation2 + $0x168] sm:$0xff]
    %v143 = vld [vmem:[#allocation2 + $0x170] sm:$0xff]
    %v144 = vld [vmem:[#allocation2 + $0x178] sm:$0xff]
    %v145 = vld [vmem:[#allocation2 + $0x180] sm:$0xff]
    %v146 = vld [vmem:[#allocation2 + $0x188] sm:$0xff]
    %v147 = vld [vmem:[#allocation2 + $0x190] sm:$0xff]
    %v148 = vld [vmem:[#allocation2 + $0x198] sm:$0xff]
    %v149 = vld [vmem:[#allocation2 + $0x1a0] sm:$0xff]
    %v150 = vld [vmem:[#allocation2 + $0x1a8] sm:$0xff]
    %v151 = vld [vmem:[#allocation2 + $0x1b0] sm:$0xff]
    %v152 = vld [vmem:[#allocation2 + $0x1b8] sm:$0xff]
    %v153 = vld [vmem:[#allocation2 + $0x1c0] sm:$0xff]
    %v154 = vld [vmem:[#allocation2 + $0x1c8] sm:$0xff]
    %v155 = vld [vmem:[#allocation2 + $0x1d0] sm:$0xff]
    %v156 = vld [vmem:[#allocation2 + $0x1d8] sm:$0xff]
    %v157 = vld [vmem:[#allocation2 + $0x1e0] sm:$0xff]
    %v158 = vld [vmem:[#allocation2 + $0x1e8] sm:$0xff]
    %v159 = vld [vmem:[#allocation2 + $0x1f0] sm:$0xff]
    %v160 = vld [vmem:[#allocation2 + $0x1f8] sm:$0xff]
    %v161 = vld [vmem:[#allocation2 + $0x200] sm:$0xff]
    %v162 = vld [vmem:[#allocation2 + $0x208] sm:$0xff]
    %v163 = vld [vmem:[#allocation2 + $0x210] sm:$0xff]
    %v164 = vld [vmem:[#allocation2 + $0x218] sm:$0xff]
    %v165 = vld [vmem:[#allocation2 + $0x220] sm:$0xff]
    %v166 = vld [vmem:[#allocation2 + $0x228] sm:$0xff]
    %v167 = vld [vmem:[#allocation2 + $0x230] sm:$0xff]
    %v168 = vld [vmem:[#allocation2 + $0x238] sm:$0xff]
    %v169 = vld [vmem:[#allocation2 + $0x240] sm:$0xff]
    %v170 = vld [vmem:[#allocation2 + $0x248] sm:$0xff]
    %v171 = vld [vmem:[#allocation2 + $0x250] sm:$0xff]
    %v172 = vld [vmem:[#allocation2 + $0x258] sm:$0xff]
    %v173 = vld [vmem:[#allocation2 + $0x260] sm:$0xff]
    %v174 = vld [vmem:[#allocation2 + $0x268] sm:$0xff]
    %v175 = vld [vmem:[#allocation2 + $0x270] sm:$0xff]
    %v176 = vld [vmem:[#allocation2 + $0x278] sm:$0xff]
    %v177 = vld [vmem:[#allocation2 + $0x280] sm:$0xff]
    %v178 = vld [vmem:[#allocation2 + $0x288] sm:$0xff]
    %v179 = vld [vmem:[#allocation2 + $0x290] sm:$0xff]
    %v180 = vld [vmem:[#allocation2 + $0x298] sm:$0xff]
    %v181 = vld [vmem:[#allocation2 + $0x2a0] sm:$0xff]
    %v182 = vld [vmem:[#allocation2 + $0x2a8] sm:$0xff]
    %v183 = vld [vmem:[#allocation2 + $0x2b0] sm:$0xff]
    %v184 = vld [vmem:[#allocation2 + $0x2b8] sm:$0xff]
    %v185 = vld [vmem:[#allocation2 + $0x2c0] sm:$0xff]
    %v186 = vld [vmem:[#allocation2 + $0x2c8] sm:$0xff]
    %v187 = vld [vmem:[#allocation2 + $0x2d0] sm:$0xff]
    %v188 = vld [vmem:[#allocation2 + $0x2d8] sm:$0xff]
    %v189 = vld [vmem:[#allocation2 + $0x2e0] sm:$0xff]
    %v190 = vld [vmem:[#allocation2 + $0x2e8] sm:$0xff]
    %v191 = vld [vmem:[#allocation2 + $0x2f0] sm:$0xff]
    %v192 = vld [vmem:[#allocation2 + $0x2f8] sm:$0xff]
    %v193 = vld [vmem:[#allocation2 + $0x300] sm:$0xff]
    %v194 = vld [vmem:[#allocation2 + $0x308] sm:$0xff]
    %v195 = vld [vmem:[#allocation2 + $0x310] sm:$0xff]
    %v196 = vld [vmem:[#allocation2 + $0x318] sm:$0xff]
    %v197 = vld [vmem:[#allocation2 + $0x320] sm:$0xff]
    %v198 = vld [vmem:[#allocation2 + $0x328] sm:$0xff]
    %v199 = vld [vmem:[#allocation2 + $0x330] sm:$0xff]
    %v200 = vld [vmem:[#allocation2 + $0x338] sm:$0xff]
    %v201 = vld [vmem:[#allocation2 + $0x340] sm:$0xff]
    %v202 = vld [vmem:[#allocation2 + $0x348] sm:$0xff]
    %v203 = vld [vmem:[#allocation2 + $0x350] sm:$0xff]
    %v204 = vld [vmem:[#allocation2 + $0x358] sm:$0xff]
    %v205 = vld [vmem:[#allocation2 + $0x360] sm:$0xff]
    %v206 = vld [vmem:[#allocation2 + $0x368] sm:$0xff]
    %v207 = vld [vmem:[#allocation2 + $0x370] sm:$0xff]
    %v208 = vld [vmem:[#allocation2 + $0x378] sm:$0xff]
    %v209 = vld [vmem:[#allocation2 + $0x380] sm:$0xff]
    %v210 = vld [vmem:[#allocation2 + $0x388] sm:$0xff]
    %v211 = vld [vmem:[#allocation2 + $0x390] sm:$0xff]
    %v212 = vld [vmem:[#allocation2 + $0x398] sm:$0xff]
    %v213 = vld [vmem:[#allocation2 + $0x3a0] sm:$0xff]
    %v214 = vld [vmem:[#allocation2 + $0x3a8] sm:$0xff]
    %v215 = vld [vmem:[#allocation2 + $0x3b0] sm:$0xff]
    %v216 = vld [vmem:[#allocation2 + $0x3b8] sm:$0xff]
    %v217 = vld [vmem:[#allocation2 + $0x3c0] sm:$0xff]
    %v218 = vld [vmem:[#allocation2 + $0x3c8] sm:$0xff]
    %v219 = vld [vmem:[#allocation2 + $0x3d0] sm:$0xff]
    %v220 = vld [vmem:[#allocation2 + $0x3d8] sm:$0xff]
    %v221 = vld [vmem:[#allocation2 + $0x3e0] sm:$0xff]
    %v222 = vld [vmem:[#allocation2 + $0x3e8] sm:$0xff]
    %v223 = vld [vmem:[#allocation2 + $0x3f0] sm:$0xff]
    %v224 = vld [vmem:[#allocation2 + $0x3f8] sm:$0xff]
    %v225 = vld [vmem:[#allocation2 + $0x400] sm:$0xff]
    %v226 = vld [vmem:[#allocation2 + $0x408] sm:$0xff]
    %v227 = vld [vmem:[#allocation2 + $0x410] sm:$0xff]
    %v228 = vld [vmem:[#allocation2 + $0x418] sm:$0xff]
    %v229 = vld [vmem:[#allocation2 + $0x420] sm:$0xff]
    %v230 = vld [vmem:[#allocation2 + $0x428] sm:$0xff]
    %v231 = vld [vmem:[#allocation2 + $0x430] sm:$0xff]
    %v232 = vld [vmem:[#allocation2 + $0x438] sm:$0xff]
    %v233 = vld [vmem:[#allocation2 + $0x440] sm:$0xff]
    %v234 = vld [vmem:[#allocation2 + $0x448] sm:$0xff]
    %v235 = vld [vmem:[#allocation2 + $0x450] sm:$0xff]
    %v236 = vld [vmem:[#allocation2 + $0x458] sm:$0xff]
    %v237 = vld [vmem:[#allocation2 + $0x460] sm:$0xff]
    %v238 = vld [vmem:[#allocation2 + $0x468] sm:$0xff]
    %v239 = vld [vmem:[#allocation2 + $0x470] sm:$0xff]
    %v240 = vld [vmem:[#allocation2 + $0x478] sm:$0xff]
    %v241 = vld [vmem:[#allocation2 + $0x480] sm:$0xff]
    %v242 = vld [vmem:[#allocation2 + $0x488] sm:$0xff]
    %v243 = vld [vmem:[#allocation2 + $0x490] sm:$0xff]
    %v244 = vld [vmem:[#allocation2 + $0x498] sm:$0xff]
    %v245 = vld [vmem:[#allocation2 + $0x4a0] sm:$0xff]
    %v246 = vld [vmem:[#allocation2 + $0x4a8] sm:$0xff]
    %v247 = vld [vmem:[#allocation2 + $0x4b0] sm:$0xff]
    %v248 = vld [vmem:[#allocation2 + $0x4b8] sm:$0xff]
    %v249 = vld [vmem:[#allocation2 + $0x4c0] sm:$0xff]
    %v250 = vld [vmem:[#allocation2 + $0x4c8] sm:$0xff]
    %v251 = vld [vmem:[#allocation2 + $0x4d0] sm:$0xff]
    %v252 = vld [vmem:[#allocation2 + $0x4d8] sm:$0xff]
    %v253 = vld [vmem:[#allocation2 + $0x4e0] sm:$0xff]
    %v254 = vld [vmem:[#allocation2 + $0x4e8] sm:$0xff]
    %v255 = vld [vmem:[#allocation2 + $0x4f0] sm:$0xff]
    %v256 = vld [vmem:[#allocation2 + $0x4f8] sm:$0xff]
    %v257 = vld [vmem:[#allocation2 + $0x500] sm:$0xff]
    %v258 = vld [vmem:[#allocation2 + $0x508] sm:$0xff]
    %v259 = vld [vmem:[#allocation2 + $0x510] sm:$0xff]
    %v260 = vld [vmem:[#allocation2 + $0x518] sm:$0xff]
    %v261 = vld [vmem:[#allocation2 + $0x520] sm:$0xff]
    %v262 = vld [vmem:[#allocation2 + $0x528] sm:$0xff]
    %v263 = vld [vmem:[#allocation2 + $0x530] sm:$0xff]
    %v264 = vld [vmem:[#allocation2 + $0x538] sm:$0xff]
    %v265 = vld [vmem:[#allocation2 + $0x540] sm:$0xff]
    %v266 = vld [vmem:[#allocation2 + $0x548] sm:$0xff]
    %v267 = vld [vmem:[#allocation2 + $0x550] sm:$0xff]
    %v268 = vld [vmem:[#allocation2 + $0x558] sm:$0xff]
    %v269 = vld [vmem:[#allocation2 + $0x560] sm:$0xff]
    %v270 = vld [vmem:[#allocation2 + $0x568] sm:$0xff]
    %v271 = vld [vmem:[#allocation2 + $0x570] sm:$0xff]
    %v272 = vld [vmem:[#allocation2 + $0x578] sm:$0xff]
    %v273 = vld [vmem:[#allocation2 + $0x580] sm:$0xff]
    %v274 = vld [vmem:[#allocation2 + $0x588] sm:$0xff]
    %v275 = vld [vmem:[#allocation2 + $0x590] sm:$0xff]
    %v276 = vld [vmem:[#allocation2 + $0x598] sm:$0xff]
    %v277 = vld [vmem:[#allocation2 + $0x5a0] sm:$0xff]
    %v278 = vld [vmem:[#allocation2 + $0x5a8] sm:$0xff]
    %v279 = vld [vmem:[#allocation2 + $0x5b0] sm:$0xff]
    %v280 = vld [vmem:[#allocation2 + $0x5b8] sm:$0xff]
    %v281 = vld [vmem:[#allocation2 + $0x5c0] sm:$0xff]
    %v282 = vld [vmem:[#allocation2 + $0x5c8] sm:$0xff]
    %v283 = vld [vmem:[#allocation2 + $0x5d0] sm:$0xff]
    %v284 = vld [vmem:[#allocation2 + $0x5d8] sm:$0xff]
    %v285 = vld [vmem:[#allocation2 + $0x5e0] sm:$0xff]
    %v286 = vld [vmem:[#allocation2 + $0x5e8] sm:$0xff]
    %v287 = vld [vmem:[#allocation2 + $0x5f0] sm:$0xff]
    %v288 = vld [vmem:[#allocation2 + $0x5f8] sm:$0xff]
    %v289 = vld [vmem:[#allocation4] sm:$0x3f]
    %v291 = vlaneseq
    %v292 = vshrl.u32 %v291, 7
    %v293 = vsub.s32 0, %v292
    %v294 = vrot.slane %v289, %v293
    %v295 = vlaneseq
    %v296 = vshrl.u32 %v295, 7
    %v297 = vsub.s32 1, %v296
    %v298 = vrot.slane %v289, %v297
    %v299 = vlaneseq
    %v300 = vshrl.u32 %v299, 7
    %v301 = vsub.s32 2, %v300
    %v302 = vrot.slane %v289, %v301
    %v303 = vlaneseq
    %v304 = vshrl.u32 %v303, 7
    %v305 = vsub.s32 3, %v304
    %v306 = vrot.slane %v289, %v305
    %v307 = vlaneseq
    %v308 = vshrl.u32 %v307, 7
    %v309 = vsub.s32 4, %v308
    %v310 = vrot.slane %v289, %v309
    %v311 = vlaneseq
    %v312 = vshrl.u32 %v311, 7
    %v313 = vsub.s32 5, %v312
    %v314 = vrot.slane %v289, %v313
    %v513 = vunpack.c.l.b16 %v97
    %v514 = vunpack.c.h.b16 %v97
    %v515 = vunpack.c.l.b16 %v98
    %v516 = vunpack.c.h.b16 %v98
    %v517 = vunpack.c.l.b16 %v99
    %v518 = vunpack.c.h.b16 %v99
    %v519 = vunpack.c.l.b16 %v100
    %v520 = vunpack.c.h.b16 %v100
    %v521 = vunpack.c.l.b16 %v101
    %v522 = vunpack.c.h.b16 %v101
    %v523 = vunpack.c.l.b16 %v102
    %v524 = vunpack.c.h.b16 %v102
    %v525 = vunpack.c.l.b16 %v103
    %v526 = vunpack.c.h.b16 %v103
    %v527 = vunpack.c.l.b16 %v104
    %v528 = vunpack.c.h.b16 %v104
    %v529 = vunpack.c.l.b16 %v105
    %v530 = vunpack.c.h.b16 %v105
    %v531 = vunpack.c.l.b16 %v106
    %v532 = vunpack.c.h.b16 %v106
    %v533 = vunpack.c.l.b16 %v107
    %v534 = vunpack.c.h.b16 %v107
    %v535 = vunpack.c.l.b16 %v108
    %v536 = vunpack.c.h.b16 %v108
    %v537 = vunpack.c.l.b16 %v109
    %v538 = vunpack.c.h.b16 %v109
    %v539 = vunpack.c.l.b16 %v110
    %v540 = vunpack.c.h.b16 %v110
    %v541 = vunpack.c.l.b16 %v111
    %v542 = vunpack.c.h.b16 %v111
    %v543 = vunpack.c.l.b16 %v112
    %v544 = vunpack.c.h.b16 %v112
    %v545 = vunpack.c.l.b16 %v113
    %v546 = vunpack.c.h.b16 %v113
    %v547 = vunpack.c.l.b16 %v114
    %v548 = vunpack.c.h.b16 %v114
    %v549 = vunpack.c.l.b16 %v115
    %v550 = vunpack.c.h.b16 %v115
    %v551 = vunpack.c.l.b16 %v116
    %v552 = vunpack.c.h.b16 %v116
    %v553 = vunpack.c.l.b16 %v117
    %v554 = vunpack.c.h.b16 %v117
    %v555 = vunpack.c.l.b16 %v118
    %v556 = vunpack.c.h.b16 %v118
    %v557 = vunpack.c.l.b16 %v119
    %v558 = vunpack.c.h.b16 %v119
    %v559 = vunpack.c.l.b16 %v120
    %v560 = vunpack.c.h.b16 %v120
    %v561 = vunpack.c.l.b16 %v121
    %v562 = vunpack.c.h.b16 %v121
    %v563 = vunpack.c.l.b16 %v122
    %v564 = vunpack.c.h.b16 %v122
    %v565 = vunpack.c.l.b16 %v123
    %v566 = vunpack.c.h.b16 %v123
    %v567 = vunpack.c.l.b16 %v124
    %v568 = vunpack.c.h.b16 %v124
    %v569 = vunpack.c.l.b16 %v125
    %v570 = vunpack.c.h.b16 %v125
    %v571 = vunpack.c.l.b16 %v126
    %v572 = vunpack.c.h.b16 %v126
    %v573 = vunpack.c.l.b16 %v127
    %v574 = vunpack.c.h.b16 %v127
    %v575 = vunpack.c.l.b16 %v128
    %v576 = vunpack.c.h.b16 %v128
    %v577 = vunpack.c.l.b16 %v129
    %v578 = vunpack.c.h.b16 %v129
    %v579 = vunpack.c.l.b16 %v130
    %v580 = vunpack.c.h.b16 %v130
    %v581 = vunpack.c.l.b16 %v131
    %v582 = vunpack.c.h.b16 %v131
    %v583 = vunpack.c.l.b16 %v132
    %v584 = vunpack.c.h.b16 %v132
    %v585 = vunpack.c.l.b16 %v133
    %v586 = vunpack.c.h.b16 %v133
    %v587 = vunpack.c.l.b16 %v134
    %v588 = vunpack.c.h.b16 %v134
    %v589 = vunpack.c.l.b16 %v135
    %v590 = vunpack.c.h.b16 %v135
    %v591 = vunpack.c.l.b16 %v136
    %v592 = vunpack.c.h.b16 %v136
    %v593 = vunpack.c.l.b16 %v137
    %v594 = vunpack.c.h.b16 %v137
    %v595 = vunpack.c.l.b16 %v138
    %v596 = vunpack.c.h.b16 %v138
    %v597 = vunpack.c.l.b16 %v139
    %v598 = vunpack.c.h.b16 %v139
    %v599 = vunpack.c.l.b16 %v140
    %v600 = vunpack.c.h.b16 %v140
    %v601 = vunpack.c.l.b16 %v141
    %v602 = vunpack.c.h.b16 %v141
    %v603 = vunpack.c.l.b16 %v142
    %v604 = vunpack.c.h.b16 %v142
    %v605 = vunpack.c.l.b16 %v143
    %v606 = vunpack.c.h.b16 %v143
    %v607 = vunpack.c.l.b16 %v144
    %v608 = vunpack.c.h.b16 %v144
    %v609 = vunpack.c.l.b16 %v145
    %v610 = vunpack.c.h.b16 %v145
    %v611 = vunpack.c.l.b16 %v146
    %v612 = vunpack.c.h.b16 %v146
    %v613 = vunpack.c.l.b16 %v147
    %v614 = vunpack.c.h.b16 %v147
    %v615 = vunpack.c.l.b16 %v148
    %v616 = vunpack.c.h.b16 %v148
    %v617 = vunpack.c.l.b16 %v149
    %v618 = vunpack.c.h.b16 %v149
    %v619 = vunpack.c.l.b16 %v150
    %v620 = vunpack.c.h.b16 %v150
    %v621 = vunpack.c.l.b16 %v151
    %v622 = vunpack.c.h.b16 %v151
    %v623 = vunpack.c.l.b16 %v152
    %v624 = vunpack.c.h.b16 %v152
    %v625 = vunpack.c.l.b16 %v153
    %v626 = vunpack.c.h.b16 %v153
    %v627 = vunpack.c.l.b16 %v154
    %v628 = vunpack.c.h.b16 %v154
    %v629 = vunpack.c.l.b16 %v155
    %v630 = vunpack.c.h.b16 %v155
    %v631 = vunpack.c.l.b16 %v156
    %v632 = vunpack.c.h.b16 %v156
    %v633 = vunpack.c.l.b16 %v157
    %v634 = vunpack.c.h.b16 %v157
    %v635 = vunpack.c.l.b16 %v158
    %v636 = vunpack.c.h.b16 %v158
    %v637 = vunpack.c.l.b16 %v159
    %v638 = vunpack.c.h.b16 %v159
    %v639 = vunpack.c.l.b16 %v160
    %v640 = vunpack.c.h.b16 %v160
    %v641 = vunpack.c.l.b16 %v161
    %v642 = vunpack.c.h.b16 %v161
    %v643 = vunpack.c.l.b16 %v162
    %v644 = vunpack.c.h.b16 %v162
    %v645 = vunpack.c.l.b16 %v163
    %v646 = vunpack.c.h.b16 %v163
    %v647 = vunpack.c.l.b16 %v164
    %v648 = vunpack.c.h.b16 %v164
    %v649 = vunpack.c.l.b16 %v165
    %v650 = vunpack.c.h.b16 %v165
    %v651 = vunpack.c.l.b16 %v166
    %v652 = vunpack.c.h.b16 %v166
    %v653 = vunpack.c.l.b16 %v167
    %v654 = vunpack.c.h.b16 %v167
    %v655 = vunpack.c.l.b16 %v168
    %v656 = vunpack.c.h.b16 %v168
    %v657 = vunpack.c.l.b16 %v169
    %v658 = vunpack.c.h.b16 %v169
    %v659 = vunpack.c.l.b16 %v170
    %v660 = vunpack.c.h.b16 %v170
    %v661 = vunpack.c.l.b16 %v171
    %v662 = vunpack.c.h.b16 %v171
    %v663 = vunpack.c.l.b16 %v172
    %v664 = vunpack.c.h.b16 %v172
    %v665 = vunpack.c.l.b16 %v173
    %v666 = vunpack.c.h.b16 %v173
    %v667 = vunpack.c.l.b16 %v174
    %v668 = vunpack.c.h.b16 %v174
    %v669 = vunpack.c.l.b16 %v175
    %v670 = vunpack.c.h.b16 %v175
    %v671 = vunpack.c.l.b16 %v176
    %v672 = vunpack.c.h.b16 %v176
    %v673 = vunpack.c.l.b16 %v177
    %v674 = vunpack.c.h.b16 %v177
    %v675 = vunpack.c.l.b16 %v178
    %v676 = vunpack.c.h.b16 %v178
    %v677 = vunpack.c.l.b16 %v179
    %v678 = vunpack.c.h.b16 %v179
    %v679 = vunpack.c.l.b16 %v180
    %v680 = vunpack.c.h.b16 %v180
    %v681 = vunpack.c.l.b16 %v181
    %v682 = vunpack.c.h.b16 %v181
    %v683 = vunpack.c.l.b16 %v182
    %v684 = vunpack.c.h.b16 %v182
    %v685 = vunpack.c.l.b16 %v183
    %v686 = vunpack.c.h.b16 %v183
    %v687 = vunpack.c.l.b16 %v184
    %v688 = vunpack.c.h.b16 %v184
    %v689 = vunpack.c.l.b16 %v185
    %v690 = vunpack.c.h.b16 %v185
    %v691 = vunpack.c.l.b16 %v186
    %v692 = vunpack.c.h.b16 %v186
    %v693 = vunpack.c.l.b16 %v187
    %v694 = vunpack.c.h.b16 %v187
    %v695 = vunpack.c.l.b16 %v188
    %v696 = vunpack.c.h.b16 %v188
    %v697 = vunpack.c.l.b16 %v189
    %v698 = vunpack.c.h.b16 %v189
    %v699 = vunpack.c.l.b16 %v190
    %v700 = vunpack.c.h.b16 %v190
    %v701 = vunpack.c.l.b16 %v191
    %v702 = vunpack.c.h.b16 %v191
    %v703 = vunpack.c.l.b16 %v192
    %v704 = vunpack.c.h.b16 %v192
    %v705 = vunpack.c.l.b16 %v193
    %v706 = vunpack.c.h.b16 %v193
    %v707 = vunpack.c.l.b16 %v194
    %v708 = vunpack.c.h.b16 %v194
    %v709 = vunpack.c.l.b16 %v195
    %v710 = vunpack.c.h.b16 %v195
    %v711 = vunpack.c.l.b16 %v196
    %v712 = vunpack.c.h.b16 %v196
    %v713 = vunpack.c.l.b16 %v197
    %v714 = vunpack.c.h.b16 %v197
    %v715 = vunpack.c.l.b16 %v198
    %v716 = vunpack.c.h.b16 %v198
    %v717 = vunpack.c.l.b16 %v199
    %v718 = vunpack.c.h.b16 %v199
    %v719 = vunpack.c.l.b16 %v200
    %v720 = vunpack.c.h.b16 %v200
    %v721 = vunpack.c.l.b16 %v201
    %v722 = vunpack.c.h.b16 %v201
    %v723 = vunpack.c.l.b16 %v202
    %v724 = vunpack.c.h.b16 %v202
    %v725 = vunpack.c.l.b16 %v203
    %v726 = vunpack.c.h.b16 %v203
    %v727 = vunpack.c.l.b16 %v204
    %v728 = vunpack.c.h.b16 %v204
    %v729 = vunpack.c.l.b16 %v205
    %v730 = vunpack.c.h.b16 %v205
    %v731 = vunpack.c.l.b16 %v206
    %v732 = vunpack.c.h.b16 %v206
    %v733 = vunpack.c.l.b16 %v207
    %v734 = vunpack.c.h.b16 %v207
    %v735 = vunpack.c.l.b16 %v208
    %v736 = vunpack.c.h.b16 %v208
    %v737 = vunpack.c.l.b16 %v209
    %v738 = vunpack.c.h.b16 %v209
    %v739 = vunpack.c.l.b16 %v210
    %v740 = vunpack.c.h.b16 %v210
    %v741 = vunpack.c.l.b16 %v211
    %v742 = vunpack.c.h.b16 %v211
    %v743 = vunpack.c.l.b16 %v212
    %v744 = vunpack.c.h.b16 %v212
    %v745 = vunpack.c.l.b16 %v213
    %v746 = vunpack.c.h.b16 %v213
    %v747 = vunpack.c.l.b16 %v214
    %v748 = vunpack.c.h.b16 %v214
    %v749 = vunpack.c.l.b16 %v215
    %v750 = vunpack.c.h.b16 %v215
    %v751 = vunpack.c.l.b16 %v216
    %v752 = vunpack.c.h.b16 %v216
    %v753 = vunpack.c.l.b16 %v217
    %v754 = vunpack.c.h.b16 %v217
    %v755 = vunpack.c.l.b16 %v218
    %v756 = vunpack.c.h.b16 %v218
    %v757 = vunpack.c.l.b16 %v219
    %v758 = vunpack.c.h.b16 %v219
    %v759 = vunpack.c.l.b16 %v220
    %v760 = vunpack.c.h.b16 %v220
    %v761 = vunpack.c.l.b16 %v221
    %v762 = vunpack.c.h.b16 %v221
    %v763 = vunpack.c.l.b16 %v222
    %v764 = vunpack.c.h.b16 %v222
    %v765 = vunpack.c.l.b16 %v223
    %v766 = vunpack.c.h.b16 %v223
    %v767 = vunpack.c.l.b16 %v224
    %v768 = vunpack.c.h.b16 %v224
    %v769 = vunpack.c.l.b16 %v225
    %v770 = vunpack.c.h.b16 %v225
    %v771 = vunpack.c.l.b16 %v226
    %v772 = vunpack.c.h.b16 %v226
    %v773 = vunpack.c.l.b16 %v227
    %v774 = vunpack.c.h.b16 %v227
    %v775 = vunpack.c.l.b16 %v228
    %v776 = vunpack.c.h.b16 %v228
    %v777 = vunpack.c.l.b16 %v229
    %v778 = vunpack.c.h.b16 %v229
    %v779 = vunpack.c.l.b16 %v230
    %v780 = vunpack.c.h.b16 %v230
    %v781 = vunpack.c.l.b16 %v231
    %v782 = vunpack.c.h.b16 %v231
    %v783 = vunpack.c.l.b16 %v232
    %v784 = vunpack.c.h.b16 %v232
    %v785 = vunpack.c.l.b16 %v233
    %v786 = vunpack.c.h.b16 %v233
    %v787 = vunpack.c.l.b16 %v234
    %v788 = vunpack.c.h.b16 %v234
    %v789 = vunpack.c.l.b16 %v235
    %v790 = vunpack.c.h.b16 %v235
    %v791 = vunpack.c.l.b16 %v236
    %v792 = vunpack.c.h.b16 %v236
    %v793 = vunpack.c.l.b16 %v237
    %v794 = vunpack.c.h.b16 %v237
    %v795 = vunpack.c.l.b16 %v238
    %v796 = vunpack.c.h.b16 %v238
    %v797 = vunpack.c.l.b16 %v239
    %v798 = vunpack.c.h.b16 %v239
    %v799 = vunpack.c.l.b16 %v240
    %v800 = vunpack.c.h.b16 %v240
    %v801 = vunpack.c.l.b16 %v241
    %v802 = vunpack.c.h.b16 %v241
    %v803 = vunpack.c.l.b16 %v242
    %v804 = vunpack.c.h.b16 %v242
    %v805 = vunpack.c.l.b16 %v243
    %v806 = vunpack.c.h.b16 %v243
    %v807 = vunpack.c.l.b16 %v244
    %v808 = vunpack.c.h.b16 %v244
    %v809 = vunpack.c.l.b16 %v245
    %v810 = vunpack.c.h.b16 %v245
    %v811 = vunpack.c.l.b16 %v246
    %v812 = vunpack.c.h.b16 %v246
    %v813 = vunpack.c.l.b16 %v247
    %v814 = vunpack.c.h.b16 %v247
    %v815 = vunpack.c.l.b16 %v248
    %v816 = vunpack.c.h.b16 %v248
    %v817 = vunpack.c.l.b16 %v249
    %v818 = vunpack.c.h.b16 %v249
    %v819 = vunpack.c.l.b16 %v250
    %v820 = vunpack.c.h.b16 %v250
    %v821 = vunpack.c.l.b16 %v251
    %v822 = vunpack.c.h.b16 %v251
    %v823 = vunpack.c.l.b16 %v252
    %v824 = vunpack.c.h.b16 %v252
    %v825 = vunpack.c.l.b16 %v253
    %v826 = vunpack.c.h.b16 %v253
    %v827 = vunpack.c.l.b16 %v254
    %v828 = vunpack.c.h.b16 %v254
    %v829 = vunpack.c.l.b16 %v255
    %v830 = vunpack.c.h.b16 %v255
    %v831 = vunpack.c.l.b16 %v256
    %v832 = vunpack.c.h.b16 %v256
    %v833 = vunpack.c.l.b16 %v257
    %v834 = vunpack.c.h.b16 %v257
    %v835 = vunpack.c.l.b16 %v258
    %v836 = vunpack.c.h.b16 %v258
    %v837 = vunpack.c.l.b16 %v259
    %v838 = vunpack.c.h.b16 %v259
    %v839 = vunpack.c.l.b16 %v260
    %v840 = vunpack.c.h.b16 %v260
    %v841 = vunpack.c.l.b16 %v261
    %v842 = vunpack.c.h.b16 %v261
    %v843 = vunpack.c.l.b16 %v262
    %v844 = vunpack.c.h.b16 %v262
    %v845 = vunpack.c.l.b16 %v263
    %v846 = vunpack.c.h.b16 %v263
    %v847 = vunpack.c.l.b16 %v264
    %v848 = vunpack.c.h.b16 %v264
    %v849 = vunpack.c.l.b16 %v265
    %v850 = vunpack.c.h.b16 %v265
    %v851 = vunpack.c.l.b16 %v266
    %v852 = vunpack.c.h.b16 %v266
    %v853 = vunpack.c.l.b16 %v267
    %v854 = vunpack.c.h.b16 %v267
    %v855 = vunpack.c.l.b16 %v268
    %v856 = vunpack.c.h.b16 %v268
    %v857 = vunpack.c.l.b16 %v269
    %v858 = vunpack.c.h.b16 %v269
    %v859 = vunpack.c.l.b16 %v270
    %v860 = vunpack.c.h.b16 %v270
    %v861 = vunpack.c.l.b16 %v271
    %v862 = vunpack.c.h.b16 %v271
    %v863 = vunpack.c.l.b16 %v272
    %v864 = vunpack.c.h.b16 %v272
    %v865 = vunpack.c.l.b16 %v273
    %v866 = vunpack.c.h.b16 %v273
    %v867 = vunpack.c.l.b16 %v274
    %v868 = vunpack.c.h.b16 %v274
    %v869 = vunpack.c.l.b16 %v275
    %v870 = vunpack.c.h.b16 %v275
    %v871 = vunpack.c.l.b16 %v276
    %v872 = vunpack.c.h.b16 %v276
    %v873 = vunpack.c.l.b16 %v277
    %v874 = vunpack.c.h.b16 %v277
    %v875 = vunpack.c.l.b16 %v278
    %v876 = vunpack.c.h.b16 %v278
    %v877 = vunpack.c.l.b16 %v279
    %v878 = vunpack.c.h.b16 %v279
    %v879 = vunpack.c.l.b16 %v280
    %v880 = vunpack.c.h.b16 %v280
    %v881 = vunpack.c.l.b16 %v281
    %v882 = vunpack.c.h.b16 %v281
    %v883 = vunpack.c.l.b16 %v282
    %v884 = vunpack.c.h.b16 %v282
    %v885 = vunpack.c.l.b16 %v283
    %v886 = vunpack.c.h.b16 %v283
    %v887 = vunpack.c.l.b16 %v284
    %v888 = vunpack.c.h.b16 %v284
    %v889 = vunpack.c.l.b16 %v285
    %v890 = vunpack.c.h.b16 %v285
    %v891 = vunpack.c.l.b16 %v286
    %v892 = vunpack.c.h.b16 %v286
    %v893 = vunpack.c.l.b16 %v287
    %v894 = vunpack.c.h.b16 %v287
    %v895 = vunpack.c.l.b16 %v288
    %v896 = vunpack.c.h.b16 %v288
    %v897 = vpack.c.b16 %v519, %v513
    %v898 = vpack.c.b16 %v520, %v514
    %v899 = vpack.c.b16 %v521, %v515
    %v900 = vpack.c.b16 %v522, %v516
    %v901 = vpack.c.b16 %v523, %v517
    %v902 = vpack.c.b16 %v524, %v518
    %v903 = vpack.c.b16 %v531, %v525
    %v904 = vpack.c.b16 %v532, %v526
    %v905 = vpack.c.b16 %v533, %v527
    %v906 = vpack.c.b16 %v534, %v528
    %v907 = vpack.c.b16 %v535, %v529
    %v908 = vpack.c.b16 %v536, %v530
    %v909 = vpack.c.b16 %v543, %v537
    %v910 = vpack.c.b16 %v544, %v538
    %v911 = vpack.c.b16 %v545, %v539
    %v912 = vpack.c.b16 %v546, %v540
    %v913 = vpack.c.b16 %v547, %v541
    %v914 = vpack.c.b16 %v548, %v542
    %v915 = vpack.c.b16 %v555, %v549
    %v916 = vpack.c.b16 %v556, %v550
    %v917 = vpack.c.b16 %v557, %v551
    %v918 = vpack.c.b16 %v558, %v552
    %v919 = vpack.c.b16 %v559, %v553
    %v920 = vpack.c.b16 %v560, %v554
    %v921 = vpack.c.b16 %v567, %v561
    %v922 = vpack.c.b16 %v568, %v562
    %v923 = vpack.c.b16 %v569, %v563
    %v924 = vpack.c.b16 %v570, %v564
    %v925 = vpack.c.b16 %v571, %v565
    %v926 = vpack.c.b16 %v572, %v566
    %v927 = vpack.c.b16 %v579, %v573
    %v928 = vpack.c.b16 %v580, %v574
    %v929 = vpack.c.b16 %v581, %v575
    %v930 = vpack.c.b16 %v582, %v576
    %v931 = vpack.c.b16 %v583, %v577
    %v932 = vpack.c.b16 %v584, %v578
    %v933 = vpack.c.b16 %v591, %v585
    %v934 = vpack.c.b16 %v592, %v586
    %v935 = vpack.c.b16 %v593, %v587
    %v936 = vpack.c.b16 %v594, %v588
    %v937 = vpack.c.b16 %v595, %v589
    %v938 = vpack.c.b16 %v596, %v590
    %v939 = vpack.c.b16 %v603, %v597
    %v940 = vpack.c.b16 %v604, %v598
    %v941 = vpack.c.b16 %v605, %v599
    %v942 = vpack.c.b16 %v606, %v600
    %v943 = vpack.c.b16 %v607, %v601
    %v944 = vpack.c.b16 %v608, %v602
    %v945 = vpack.c.b16 %v615, %v609
    %v946 = vpack.c.b16 %v616, %v610
    %v947 = vpack.c.b16 %v617, %v611
    %v948 = vpack.c.b16 %v618, %v612
    %v949 = vpack.c.b16 %v619, %v613
    %v950 = vpack.c.b16 %v620, %v614
    %v951 = vpack.c.b16 %v627, %v621
    %v952 = vpack.c.b16 %v628, %v622
    %v953 = vpack.c.b16 %v629, %v623
    %v954 = vpack.c.b16 %v630, %v624
    %v955 = vpack.c.b16 %v631, %v625
    %v956 = vpack.c.b16 %v632, %v626
    %v957 = vpack.c.b16 %v639, %v633
    %v958 = vpack.c.b16 %v640, %v634
    %v959 = vpack.c.b16 %v641, %v635
    %v960 = vpack.c.b16 %v642, %v636
    %v961 = vpack.c.b16 %v643, %v637
    %v962 = vpack.c.b16 %v644, %v638
    %v963 = vpack.c.b16 %v651, %v645
    %v964 = vpack.c.b16 %v652, %v646
    %v965 = vpack.c.b16 %v653, %v647
    %v966 = vpack.c.b16 %v654, %v648
    %v967 = vpack.c.b16 %v655, %v649
    %v968 = vpack.c.b16 %v656, %v650
    %v969 = vpack.c.b16 %v663, %v657
    %v970 = vpack.c.b16 %v664, %v658
    %v971 = vpack.c.b16 %v665, %v659
    %v972 = vpack.c.b16 %v666, %v660
    %v973 = vpack.c.b16 %v667, %v661
    %v974 = vpack.c.b16 %v668, %v662
    %v975 = vpack.c.b16 %v675, %v669
    %v976 = vpack.c.b16 %v676, %v670
    %v977 = vpack.c.b16 %v677, %v671
    %v978 = vpack.c.b16 %v678, %v672
    %v979 = vpack.c.b16 %v679, %v673
    %v980 = vpack.c.b16 %v680, %v674
    %v981 = vpack.c.b16 %v687, %v681
    %v982 = vpack.c.b16 %v688, %v682
    %v983 = vpack.c.b16 %v689, %v683
    %v984 = vpack.c.b16 %v690, %v684
    %v985 = vpack.c.b16 %v691, %v685
    %v986 = vpack.c.b16 %v692, %v686
    %v987 = vpack.c.b16 %v699, %v693
    %v988 = vpack.c.b16 %v700, %v694
    %v989 = vpack.c.b16 %v701, %v695
    %v990 = vpack.c.b16 %v702, %v696
    %v991 = vpack.c.b16 %v703, %v697
    %v992 = vpack.c.b16 %v704, %v698
    %v993 = vpack.c.b16 %v711, %v705
    %v994 = vpack.c.b16 %v712, %v706
    %v995 = vpack.c.b16 %v713, %v707
    %v996 = vpack.c.b16 %v714, %v708
    %v997 = vpack.c.b16 %v715, %v709
    %v998 = vpack.c.b16 %v716, %v710
    %v999 = vpack.c.b16 %v723, %v717
    %v1000 = vpack.c.b16 %v724, %v718
    %v1001 = vpack.c.b16 %v725, %v719
    %v1002 = vpack.c.b16 %v726, %v720
    %v1003 = vpack.c.b16 %v727, %v721
    %v1004 = vpack.c.b16 %v728, %v722
    %v1005 = vpack.c.b16 %v735, %v729
    %v1006 = vpack.c.b16 %v736, %v730
    %v1007 = vpack.c.b16 %v737, %v731
    %v1008 = vpack.c.b16 %v738, %v732
    %v1009 = vpack.c.b16 %v739, %v733
    %v1010 = vpack.c.b16 %v740, %v734
    %v1011 = vpack.c.b16 %v747, %v741
    %v1012 = vpack.c.b16 %v748, %v742
    %v1013 = vpack.c.b16 %v749, %v743
    %v1014 = vpack.c.b16 %v750, %v744
    %v1015 = vpack.c.b16 %v751, %v745
    %v1016 = vpack.c.b16 %v752, %v746
    %v1017 = vpack.c.b16 %v759, %v753
    %v1018 = vpack.c.b16 %v760, %v754
    %v1019 = vpack.c.b16 %v761, %v755
    %v1020 = vpack.c.b16 %v762, %v756
    %v1021 = vpack.c.b16 %v763, %v757
    %v1022 = vpack.c.b16 %v764, %v758
    %v1023 = vpack.c.b16 %v771, %v765
    %v1024 = vpack.c.b16 %v772, %v766
    %v1025 = vpack.c.b16 %v773, %v767
    %v1026 = vpack.c.b16 %v774, %v768
    %v1027 = vpack.c.b16 %v775, %v769
    %v1028 = vpack.c.b16 %v776, %v770
    %v1029 = vpack.c.b16 %v783, %v777
    %v1030 = vpack.c.b16 %v784, %v778
    %v1031 = vpack.c.b16 %v785, %v779
    %v1032 = vpack.c.b16 %v786, %v780
    %v1033 = vpack.c.b16 %v787, %v781
    %v1034 = vpack.c.b16 %v788, %v782
    %v1035 = vpack.c.b16 %v795, %v789
    %v1036 = vpack.c.b16 %v796, %v790
    %v1037 = vpack.c.b16 %v797, %v791
    %v1038 = vpack.c.b16 %v798, %v792
    %v1039 = vpack.c.b16 %v799, %v793
    %v1040 = vpack.c.b16 %v800, %v794
    %v1041 = vpack.c.b16 %v807, %v801
    %v1042 = vpack.c.b16 %v808, %v802
    %v1043 = vpack.c.b16 %v809, %v803
    %v1044 = vpack.c.b16 %v810, %v804
    %v1045 = vpack.c.b16 %v811, %v805
    %v1046 = vpack.c.b16 %v812, %v806
    %v1047 = vpack.c.b16 %v819, %v813
    %v1048 = vpack.c.b16 %v820, %v814
    %v1049 = vpack.c.b16 %v821, %v815
    %v1050 = vpack.c.b16 %v822, %v816
    %v1051 = vpack.c.b16 %v823, %v817
    %v1052 = vpack.c.b16 %v824, %v818
    %v1053 = vpack.c.b16 %v831, %v825
    %v1054 = vpack.c.b16 %v832, %v826
    %v1055 = vpack.c.b16 %v833, %v827
    %v1056 = vpack.c.b16 %v834, %v828
    %v1057 = vpack.c.b16 %v835, %v829
    %v1058 = vpack.c.b16 %v836, %v830
    %v1059 = vpack.c.b16 %v843, %v837
    %v1060 = vpack.c.b16 %v844, %v838
    %v1061 = vpack.c.b16 %v845, %v839
    %v1062 = vpack.c.b16 %v846, %v840
    %v1063 = vpack.c.b16 %v847, %v841
    %v1064 = vpack.c.b16 %v848, %v842
    %v1065 = vpack.c.b16 %v855, %v849
    %v1066 = vpack.c.b16 %v856, %v850
    %v1067 = vpack.c.b16 %v857, %v851
    %v1068 = vpack.c.b16 %v858, %v852
    %v1069 = vpack.c.b16 %v859, %v853
    %v1070 = vpack.c.b16 %v860, %v854
    %v1071 = vpack.c.b16 %v867, %v861
    %v1072 = vpack.c.b16 %v868, %v862
    %v1073 = vpack.c.b16 %v869, %v863
    %v1074 = vpack.c.b16 %v870, %v864
    %v1075 = vpack.c.b16 %v871, %v865
    %v1076 = vpack.c.b16 %v872, %v866
    %v1077 = vpack.c.b16 %v879, %v873
    %v1078 = vpack.c.b16 %v880, %v874
    %v1079 = vpack.c.b16 %v881, %v875
    %v1080 = vpack.c.b16 %v882, %v876
    %v1081 = vpack.c.b16 %v883, %v877
    %v1082 = vpack.c.b16 %v884, %v878
    %v1083 = vpack.c.b16 %v891, %v885
    %v1084 = vpack.c.b16 %v892, %v886
    %v1085 = vpack.c.b16 %v893, %v887
    %v1086 = vpack.c.b16 %v894, %v888
    %v1087 = vpack.c.b16 %v895, %v889
    %v1088 = vpack.c.b16 %v896, %v890
    %1281 = vmatprep.subr.bf16.mxu0 %v940
    %1282 = vmatpush1.bf16.msra.mxu0 %v939
    %1283 = vmatprep.subr.bf16.mxu0 %v934
    %1284 = vmatpush1.bf16.msra.mxu0 %v933
    %1285 = vmatprep.subr.bf16.mxu0 %v928
    %1286 = vmatpush1.bf16.msra.mxu0 %v927
    %1287 = vmatprep.subr.bf16.mxu0 %v922
    %1288 = vmatpush1.bf16.msra.mxu0 %v921
    %1289 = vmatprep.subr.bf16.mxu0 %v916
    %1290 = vmatpush1.bf16.msra.mxu0 %v915
    %1291 = vmatprep.subr.bf16.mxu0 %v910
    %1292 = vmatpush1.bf16.msra.mxu0 %v909
    %1293 = vmatprep.subr.bf16.mxu0 %v904
    %1294 = vmatpush1.bf16.msra.mxu0 %v903
    %1295 = vmatprep.subr.bf16.mxu0 %v898
    %1296 = vmatpush1.bf16.msra.mxu0 %v897
    %1297 = vmatprep.subr.bf16.mxu0 %v988
    %1298 = vmatpush2.bf16.msra.mxu0 %v987
    %1299 = vmatprep.subr.bf16.mxu0 %v982
    %1300 = vmatpush2.bf16.msra.mxu0 %v981
    %1301 = vmatprep.subr.bf16.mxu0 %v976
    %1302 = vmatpush2.bf16.msra.mxu0 %v975
    %1303 = vmatprep.subr.bf16.mxu0 %v970
    %1304 = vmatpush2.bf16.msra.mxu0 %v969
    %1305 = vmatprep.subr.bf16.mxu0 %v964
    %1306 = vmatpush2.bf16.msra.mxu0 %v963
    %1307 = vmatprep.subr.bf16.mxu0 %v958
    %1308 = vmatpush2.bf16.msra.mxu0 %v957
    %1309 = vmatprep.subr.bf16.mxu0 %v952
    %1310 = vmatpush2.bf16.msra.mxu0 %v951
    %1311 = vmatprep.subr.bf16.mxu0 %v946
    %1312 = vmatpush2.bf16.msra.mxu0 %v945
    %1313 = vmatprep.mubr.bf16.mxu0 %v94
    %1314 = vmatmul.mubr.bf16.gmra.mxu0 %v93
    %v1315 = vpop.f32.mrf.mxu0
    %v1316 = vadd.f32 %v294, %v1315
    %v1317 = vpop.f32.mrf.mxu0
    %v1318 = vadd.f32 %v298, %v1317
    %v1319 = vpop.f32.mrf.mxu0
    %v1320 = vpop.f32.mrf.mxu0
    %1321 = vdwg.mxu0
    %1322 = vmatprep.subr.bf16.mxu0 %v1036
    %1323 = vmatpush1.bf16.msra.mxu0 %v1035
    %1324 = vmatprep.subr.bf16.mxu0 %v1030
    %1325 = vmatpush1.bf16.msra.mxu0 %v1029
    %1326 = vmatprep.subr.bf16.mxu0 %v1024
    %1327 = vmatpush1.bf16.msra.mxu0 %v1023
    %1328 = vmatprep.subr.bf16.mxu0 %v1018
    %1329 = vmatpush1.bf16.msra.mxu0 %v1017
    %1330 = vmatprep.subr.bf16.mxu0 %v1012
    %1331 = vmatpush1.bf16.msra.mxu0 %v1011
    %1332 = vmatprep.subr.bf16.mxu0 %v1006
    %1333 = vmatpush1.bf16.msra.mxu0 %v1005
    %1334 = vmatprep.subr.bf16.mxu0 %v1000
    %1335 = vmatpush1.bf16.msra.mxu0 %v999
    %1336 = vmatprep.subr.bf16.mxu0 %v994
    %1337 = vmatpush1.bf16.msra.mxu0 %v993
    %1338 = vmatprep.subr.bf16.mxu0 %v1084
    %1339 = vmatpush2.bf16.msra.mxu0 %v1083
    %1340 = vmatprep.subr.bf16.mxu0 %v1078
    %1341 = vmatpush2.bf16.msra.mxu0 %v1077
    %1342 = vmatprep.subr.bf16.mxu0 %v1072
    %1343 = vmatpush2.bf16.msra.mxu0 %v1071
    %1344 = vmatprep.subr.bf16.mxu0 %v1066
    %1345 = vmatpush2.bf16.msra.mxu0 %v1065
    %1346 = vmatprep.subr.bf16.mxu0 %v1060
    %1347 = vmatpush2.bf16.msra.mxu0 %v1059
    %1348 = vmatprep.subr.bf16.mxu0 %v1054
    %1349 = vmatpush2.bf16.msra.mxu0 %v1053
    %1350 = vmatprep.subr.bf16.mxu0 %v1048
    %1351 = vmatpush2.bf16.msra.mxu0 %v1047
    %1352 = vmatprep.subr.bf16.mxu0 %v1042
    %1353 = vmatpush2.bf16.msra.mxu0 %v1041
    %1354 = vmatprep.mubr.bf16.mxu0 %v96
    %1355 = vmatmul.mubr.bf16.gmra.mxu0 %v95
    %v1356 = vpop.f32.mrf.mxu0
    %v1357 = vadd.f32 %v1316, %v1356
    %v1358 = vpop.f32.mrf.mxu0
    %v1359 = vadd.f32 %v1318, %v1358
    %v1360 = vpop.f32.mrf.mxu0
    %v1361 = vpop.f32.mrf.mxu0
    %1362 = vdwg.mxu0
    %1363 = vmatprep.subr.bf16.mxu0 %v942
    %1364 = vmatpush1.bf16.msra.mxu0 %v941
    %1365 = vmatprep.subr.bf16.mxu0 %v936
    %1366 = vmatpush1.bf16.msra.mxu0 %v935
    %1367 = vmatprep.subr.bf16.mxu0 %v930
    %1368 = vmatpush1.bf16.msra.mxu0 %v929
    %1369 = vmatprep.subr.bf16.mxu0 %v924
    %1370 = vmatpush1.bf16.msra.mxu0 %v923
    %1371 = vmatprep.subr.bf16.mxu0 %v918
    %1372 = vmatpush1.bf16.msra.mxu0 %v917
    %1373 = vmatprep.subr.bf16.mxu0 %v912
    %1374 = vmatpush1.bf16.msra.mxu0 %v911
    %1375 = vmatprep.subr.bf16.mxu0 %v906
    %1376 = vmatpush1.bf16.msra.mxu0 %v905
    %1377 = vmatprep.subr.bf16.mxu0 %v900
    %1378 = vmatpush1.bf16.msra.mxu0 %v899
    %1379 = vmatprep.subr.bf16.mxu0 %v990
    %1380 = vmatpush2.bf16.msra.mxu0 %v989
    %1381 = vmatprep.subr.bf16.mxu0 %v984
    %1382 = vmatpush2.bf16.msra.mxu0 %v983
    %1383 = vmatprep.subr.bf16.mxu0 %v978
    %1384 = vmatpush2.bf16.msra.mxu0 %v977
    %1385 = vmatprep.subr.bf16.mxu0 %v972
    %1386 = vmatpush2.bf16.msra.mxu0 %v971
    %1387 = vmatprep.subr.bf16.mxu0 %v966
    %1388 = vmatpush2.bf16.msra.mxu0 %v965
    %1389 = vmatprep.subr.bf16.mxu0 %v960
    %1390 = vmatpush2.bf16.msra.mxu0 %v959
    %1391 = vmatprep.subr.bf16.mxu0 %v954
    %1392 = vmatpush2.bf16.msra.mxu0 %v953
    %1393 = vmatprep.subr.bf16.mxu0 %v948
    %1394 = vmatpush2.bf16.msra.mxu0 %v947
    %1395 = vmatprep.mubr.bf16.mxu0 %v94
    %1396 = vmatmul.mubr.bf16.gmra.mxu0 %v93
    %v1397 = vpop.f32.mrf.mxu0
    %v1398 = vadd.f32 %v302, %v1397
    %v1399 = vpop.f32.mrf.mxu0
    %v1400 = vadd.f32 %v306, %v1399
    %v1401 = vpop.f32.mrf.mxu0
    %v1402 = vpop.f32.mrf.mxu0
    %1403 = vdwg.mxu0
    %1404 = vmatprep.subr.bf16.mxu0 %v1038
    %1405 = vmatpush1.bf16.msra.mxu0 %v1037
    %1406 = vmatprep.subr.bf16.mxu0 %v1032
    %1407 = vmatpush1.bf16.msra.mxu0 %v1031
    %1408 = vmatprep.subr.bf16.mxu0 %v1026
    %1409 = vmatpush1.bf16.msra.mxu0 %v1025
    %1410 = vmatprep.subr.bf16.mxu0 %v1020
    %1411 = vmatpush1.bf16.msra.mxu0 %v1019
    %1412 = vmatprep.subr.bf16.mxu0 %v1014
    %1413 = vmatpush1.bf16.msra.mxu0 %v1013
    %1414 = vmatprep.subr.bf16.mxu0 %v1008
    %1415 = vmatpush1.bf16.msra.mxu0 %v1007
    %1416 = vmatprep.subr.bf16.mxu0 %v1002
    %1417 = vmatpush1.bf16.msra.mxu0 %v1001
    %1418 = vmatprep.subr.bf16.mxu0 %v996
    %1419 = vmatpush1.bf16.msra.mxu0 %v995
    %1420 = vmatprep.subr.bf16.mxu0 %v1086
    %1421 = vmatpush2.bf16.msra.mxu0 %v1085
    %1422 = vmatprep.subr.bf16.mxu0 %v1080
    %1423 = vmatpush2.bf16.msra.mxu0 %v1079
    %1424 = vmatprep.subr.bf16.mxu0 %v1074
    %1425 = vmatpush2.bf16.msra.mxu0 %v1073
    %1426 = vmatprep.subr.bf16.mxu0 %v1068
    %1427 = vmatpush2.bf16.msra.mxu0 %v1067
    %1428 = vmatprep.subr.bf16.mxu0 %v1062
    %1429 = vmatpush2.bf16.msra.mxu0 %v1061
    %1430 = vmatprep.subr.bf16.mxu0 %v1056
    %1431 = vmatpush2.bf16.msra.mxu0 %v1055
    %1432 = vmatprep.subr.bf16.mxu0 %v1050
    %1433 = vmatpush2.bf16.msra.mxu0 %v1049
    %1434 = vmatprep.subr.bf16.mxu0 %v1044
    %1435 = vmatpush2.bf16.msra.mxu0 %v1043
    %1436 = vmatprep.mubr.bf16.mxu0 %v96
    %1437 = vmatmul.mubr.bf16.gmra.mxu0 %v95
    %v1438 = vpop.f32.mrf.mxu0
    %v1439 = vadd.f32 %v1398, %v1438
    %v1440 = vpop.f32.mrf.mxu0
    %v1441 = vadd.f32 %v1400, %v1440
    %v1442 = vpop.f32.mrf.mxu0
    %v1443 = vpop.f32.mrf.mxu0
    %1444 = vdwg.mxu0
    %1445 = vmatprep.subr.bf16.mxu0 %v944
    %1446 = vmatpush1.bf16.msra.mxu0 %v943
    %1447 = vmatprep.subr.bf16.mxu0 %v938
    %1448 = vmatpush1.bf16.msra.mxu0 %v937
    %1449 = vmatprep.subr.bf16.mxu0 %v932
    %1450 = vmatpush1.bf16.msra.mxu0 %v931
    %1451 = vmatprep.subr.bf16.mxu0 %v926
    %1452 = vmatpush1.bf16.msra.mxu0 %v925
    %1453 = vmatprep.subr.bf16.mxu0 %v920
    %1454 = vmatpush1.bf16.msra.mxu0 %v919
    %1455 = vmatprep.subr.bf16.mxu0 %v914
    %1456 = vmatpush1.bf16.msra.mxu0 %v913
    %1457 = vmatprep.subr.bf16.mxu0 %v908
    %1458 = vmatpush1.bf16.msra.mxu0 %v907
    %1459 = vmatprep.subr.bf16.mxu0 %v902
    %1460 = vmatpush1.bf16.msra.mxu0 %v901
    %1461 = vmatprep.subr.bf16.mxu0 %v992
    %1462 = vmatpush2.bf16.msra.mxu0 %v991
    %1463 = vmatprep.subr.bf16.mxu0 %v986
    %1464 = vmatpush2.bf16.msra.mxu0 %v985
    %1465 = vmatprep.subr.bf16.mxu0 %v980
    %1466 = vmatpush2.bf16.msra.mxu0 %v979
    %1467 = vmatprep.subr.bf16.mxu0 %v974
    %1468 = vmatpush2.bf16.msra.mxu0 %v973
    %1469 = vmatprep.subr.bf16.mxu0 %v968
    %1470 = vmatpush2.bf16.msra.mxu0 %v967
    %1471 = vmatprep.subr.bf16.mxu0 %v962
    %1472 = vmatpush2.bf16.msra.mxu0 %v961
    %1473 = vmatprep.subr.bf16.mxu0 %v956
    %1474 = vmatpush2.bf16.msra.mxu0 %v955
    %1475 = vmatprep.subr.bf16.mxu0 %v950
    %1476 = vmatpush2.bf16.msra.mxu0 %v949
    %1477 = vmatprep.mubr.bf16.mxu0 %v94
    %1478 = vmatmul.mubr.bf16.gmra.mxu0 %v93
    %v1479 = vpop.f32.mrf.mxu0
    %v1480 = vadd.f32 %v310, %v1479
    %v1481 = vpop.f32.mrf.mxu0
    %v1482 = vadd.f32 %v314, %v1481
    %v1483 = vpop.f32.mrf.mxu0
    %v1484 = vpop.f32.mrf.mxu0
    %1485 = vdwg.mxu0
    %1486 = vmatprep.subr.bf16.mxu0 %v1040
    %1487 = vmatpush1.bf16.msra.mxu0 %v1039
    %1488 = vmatprep.subr.bf16.mxu0 %v1034
    %1489 = vmatpush1.bf16.msra.mxu0 %v1033
    %1490 = vmatprep.subr.bf16.mxu0 %v1028
    %1491 = vmatpush1.bf16.msra.mxu0 %v1027
    %1492 = vmatprep.subr.bf16.mxu0 %v1022
    %1493 = vmatpush1.bf16.msra.mxu0 %v1021
    %1494 = vmatprep.subr.bf16.mxu0 %v1016
    %1495 = vmatpush1.bf16.msra.mxu0 %v1015
    %1496 = vmatprep.subr.bf16.mxu0 %v1010
    %1497 = vmatpush1.bf16.msra.mxu0 %v1009
    %1498 = vmatprep.subr.bf16.mxu0 %v1004
    %1499 = vmatpush1.bf16.msra.mxu0 %v1003
    %1500 = vmatprep.subr.bf16.mxu0 %v998
    %1501 = vmatpush1.bf16.msra.mxu0 %v997
    %1502 = vmatprep.subr.bf16.mxu0 %v1088
    %1503 = vmatpush2.bf16.msra.mxu0 %v1087
    %1504 = vmatprep.subr.bf16.mxu0 %v1082
    %1505 = vmatpush2.bf16.msra.mxu0 %v1081
    %1506 = vmatprep.subr.bf16.mxu0 %v1076
    %1507 = vmatpush2.bf16.msra.mxu0 %v1075
    %1508 = vmatprep.subr.bf16.mxu0 %v1070
    %1509 = vmatpush2.bf16.msra.mxu0 %v1069
    %1510 = vmatprep.subr.bf16.mxu0 %v1064
    %1511 = vmatpush2.bf16.msra.mxu0 %v1063
    %1512 = vmatprep.subr.bf16.mxu0 %v1058
    %1513 = vmatpush2.bf16.msra.mxu0 %v1057
    %1514 = vmatprep.subr.bf16.mxu0 %v1052
    %1515 = vmatpush2.bf16.msra.mxu0 %v1051
    %1516 = vmatprep.subr.bf16.mxu0 %v1046
    %1517 = vmatpush2.bf16.msra.mxu0 %v1045
    %1518 = vmatprep.mubr.bf16.mxu0 %v96
    %1519 = vmatmul.mubr.bf16.gmra.mxu0 %v95
    %v1520 = vpop.f32.mrf.mxu0
    %v1521 = vadd.f32 %v1480, %v1520
    %v1522 = vpop.f32.mrf.mxu0
    %v1523 = vadd.f32 %v1482, %v1522
    %v1524 = vpop.f32.mrf.mxu0
    %v1525 = vpop.f32.mrf.mxu0
    %1526 = vdwg.mxu0
    %v1527 = vmax.f32 %v1357, 0.0
    %v1528 = vmax.f32 %v1359, 0.0
    %v1529 = vmax.f32 %v1439, 0.0
    %v1530 = vmax.f32 %v1441, 0.0
    %v1531 = vmax.f32 %v1521, 0.0
    %v1532 = vmax.f32 %v1523, 0.0
    %v1533 = vpack.c.bf16 %v1527, %v1527
    %v1534 = vpack.c.bf16 %v1528, %v1528
    %v1535 = vpack.c.bf16 %v1529, %v1529
    %v1536 = vpack.c.bf16 %v1530, %v1530
    %v1537 = vpack.c.bf16 %v1531, %v1531
    %v1538 = vpack.c.bf16 %v1532, %v1532
    %v1539 = vld [vmem:[%s3] sm:$0xff]
    %v1540 = vld [vmem:[%s3 + $0x8] sm:$0xff]
    %v1541 = vld [vmem:[%s3 + $0x10] sm:$0xff]
    %v1542 = vld [vmem:[%s3 + $0x18] sm:$0xf]
    %v1543 = vld [vmem:[%s3 + $0x1c] sm:$0xff]
    %v1544 = vld [vmem:[%s3 + $0x24] sm:$0xff]
    %v1545 = vld [vmem:[%s3 + $0x2c] sm:$0xff]
    %v1546 = vld [vmem:[%s3 + $0x34] sm:$0xf]
    %v1547 = vld [vmem:[%s3 + $0x38] sm:$0xff]
    %v1548 = vld [vmem:[%s3 + $0x40] sm:$0xff]
    %v1549 = vld [vmem:[%s3 + $0x48] sm:$0xff]
    %v1550 = vld [vmem:[%s3 + $0x50] sm:$0xf]
    %v1551 = vld [vmem:[%s3 + $0x54] sm:$0xff]
    %v1552 = vld [vmem:[%s3 + $0x5c] sm:$0xff]
    %v1553 = vld [vmem:[%s3 + $0x64] sm:$0xff]
    %v1554 = vld [vmem:[%s3 + $0x6c] sm:$0xf]
    %v1555 = vld [vmem:[%s3 + $0x70] sm:$0xff]
    %v1556 = vld [vmem:[%s3 + $0x78] sm:$0xff]
    %v1557 = vld [vmem:[%s3 + $0x80] sm:$0xff]
    %v1558 = vld [vmem:[%s3 + $0x88] sm:$0xf]
    %v1559 = vld [vmem:[%s3 + $0x8c] sm:$0xff]
    %v1560 = vld [vmem:[%s3 + $0x94] sm:$0xff]
    %v1561 = vld [vmem:[%s3 + $0x9c] sm:$0xff]
    %v1562 = vld [vmem:[%s3 + $0xa4] sm:$0xf]
    %v1563 = vld [vmem:[%s3 + $0xa8] sm:$0xff]
    %v1564 = vld [vmem:[%s3 + $0xb0] sm:$0xff]
    %v1565 = vld [vmem:[%s3 + $0xb8] sm:$0xff]
    %v1566 = vld [vmem:[%s3 + $0xc0] sm:$0xf]
    %v1567 = vld [vmem:[%s3 + $0xc4] sm:$0xff]
    %v1568 = vld [vmem:[%s3 + $0xcc] sm:$0xff]
    %v1569 = vld [vmem:[%s3 + $0xd4] sm:$0xff]
    %v1570 = vld [vmem:[%s3 + $0xdc] sm:$0xf]
    %v1571 = vld [vmem:[%s3 + $0xe0] sm:$0xff]
    %v1572 = vld [vmem:[%s3 + $0xe8] sm:$0xff]
    %v1573 = vld [vmem:[%s3 + $0xf0] sm:$0xff]
    %v1574 = vld [vmem:[%s3 + $0xf8] sm:$0xf]
    %v1575 = vld [vmem:[%s3 + $0xfc] sm:$0xff]
    %v1576 = vld [vmem:[%s3 + $0x104] sm:$0xff]
    %v1577 = vld [vmem:[%s3 + $0x10c] sm:$0xff]
    %v1578 = vld [vmem:[%s3 + $0x114] sm:$0xf]
    %v1579 = vld [vmem:[%s3 + $0x118] sm:$0xff]
    %v1580 = vld [vmem:[%s3 + $0x120] sm:$0xff]
    %v1581 = vld [vmem:[%s3 + $0x128] sm:$0xff]
    %v1582 = vld [vmem:[%s3 + $0x130] sm:$0xf]
    %v1583 = vld [vmem:[%s3 + $0x134] sm:$0xff]
    %v1584 = vld [vmem:[%s3 + $0x13c] sm:$0xff]
    %v1585 = vld [vmem:[%s3 + $0x144] sm:$0xff]
    %v1586 = vld [vmem:[%s3 + $0x14c] sm:$0xf]
    %v1587 = vld [vmem:[%s3 + $0x150] sm:$0xff]
    %v1588 = vld [vmem:[%s3 + $0x158] sm:$0xff]
    %v1589 = vld [vmem:[%s3 + $0x160] sm:$0xff]
    %v1590 = vld [vmem:[%s3 + $0x168] sm:$0xf]
    %v1591 = vld [vmem:[%s3 + $0x16c] sm:$0xff]
    %v1592 = vld [vmem:[%s3 + $0x174] sm:$0xff]
    %v1593 = vld [vmem:[%s3 + $0x17c] sm:$0xff]
    %v1594 = vld [vmem:[%s3 + $0x184] sm:$0xf]
    %v1595 = vld [vmem:[%s3 + $0x188] sm:$0xff]
    %v1596 = vld [vmem:[%s3 + $0x190] sm:$0xff]
    %v1597 = vld [vmem:[%s3 + $0x198] sm:$0xff]
    %v1598 = vld [vmem:[%s3 + $0x1a0] sm:$0xf]
    %v1599 = vld [vmem:[%s3 + $0x1a4] sm:$0xff]
    %v1600 = vld [vmem:[%s3 + $0x1ac] sm:$0xff]
    %v1601 = vld [vmem:[%s3 + $0x1b4] sm:$0xff]
    %v1602 = vld [vmem:[%s3 + $0x1bc] sm:$0xf]
    %v1603 = vld [vmem:[%s3 + $0x1c0] sm:$0xff]
    %v1604 = vld [vmem:[%s3 + $0x1c8] sm:$0xff]
    %v1605 = vld [vmem:[%s3 + $0x1d0] sm:$0xff]
    %v1606 = vld [vmem:[%s3 + $0x1d8] sm:$0xf]
    %v1607 = vld [vmem:[%s3 + $0x1dc] sm:$0xff]
    %v1608 = vld [vmem:[%s3 + $0x1e4] sm:$0xff]
    %v1609 = vld [vmem:[%s3 + $0x1ec] sm:$0xff]
    %v1610 = vld [vmem:[%s3 + $0x1f4] sm:$0xf]
    %v1611 = vld [vmem:[%s3 + $0x1f8] sm:$0xff]
    %v1612 = vld [vmem:[%s3 + $0x200] sm:$0xff]
    %v1613 = vld [vmem:[%s3 + $0x208] sm:$0xff]
    %v1614 = vld [vmem:[%s3 + $0x210] sm:$0xf]
    %v1615 = vld [vmem:[%s3 + $0x214] sm:$0xff]
    %v1616 = vld [vmem:[%s3 + $0x21c] sm:$0xff]
    %v1617 = vld [vmem:[%s3 + $0x224] sm:$0xff]
    %v1618 = vld [vmem:[%s3 + $0x22c] sm:$0xf]
    %v1619 = vld [vmem:[%s3 + $0x230] sm:$0xff]
    %v1620 = vld [vmem:[%s3 + $0x238] sm:$0xff]
    %v1621 = vld [vmem:[%s3 + $0x240] sm:$0xff]
    %v1622 = vld [vmem:[%s3 + $0x248] sm:$0xf]
    %v1623 = vld [vmem:[%s3 + $0x24c] sm:$0xff]
    %v1624 = vld [vmem:[%s3 + $0x254] sm:$0xff]
    %v1625 = vld [vmem:[%s3 + $0x25c] sm:$0xff]
    %v1626 = vld [vmem:[%s3 + $0x264] sm:$0xf]
    %v1627 = vld [vmem:[%s3 + $0x268] sm:$0xff]
    %v1628 = vld [vmem:[%s3 + $0x270] sm:$0xff]
    %v1629 = vld [vmem:[%s3 + $0x278] sm:$0xff]
    %v1630 = vld [vmem:[%s3 + $0x280] sm:$0xf]
    %v1631 = vld [vmem:[%s3 + $0x284] sm:$0xff]
    %v1632 = vld [vmem:[%s3 + $0x28c] sm:$0xff]
    %v1633 = vld [vmem:[%s3 + $0x294] sm:$0xff]
    %v1634 = vld [vmem:[%s3 + $0x29c] sm:$0xf]
    %v1635 = vld [vmem:[%s3 + $0x2a0] sm:$0xff]
    %v1636 = vld [vmem:[%s3 + $0x2a8] sm:$0xff]
    %v1637 = vld [vmem:[%s3 + $0x2b0] sm:$0xff]
    %v1638 = vld [vmem:[%s3 + $0x2b8] sm:$0xf]
    %v1639 = vld [vmem:[%s3 + $0x2bc] sm:$0xff]
    %v1640 = vld [vmem:[%s3 + $0x2c4] sm:$0xff]
    %v1641 = vld [vmem:[%s3 + $0x2cc] sm:$0xff]
    %v1642 = vld [vmem:[%s3 + $0x2d4] sm:$0xf]
    %v1643 = vld [vmem:[%s3 + $0x2d8] sm:$0xff]
    %v1644 = vld [vmem:[%s3 + $0x2e0] sm:$0xff]
    %v1645 = vld [vmem:[%s3 + $0x2e8] sm:$0xff]
    %v1646 = vld [vmem:[%s3 + $0x2f0] sm:$0xf]
    %v1647 = vld [vmem:[%s3 + $0x2f4] sm:$0xff]
    %v1648 = vld [vmem:[%s3 + $0x2fc] sm:$0xff]
    %v1649 = vld [vmem:[%s3 + $0x304] sm:$0xff]
    %v1650 = vld [vmem:[%s3 + $0x30c] sm:$0xf]
    %v1651 = vld [vmem:[%s3 + $0x310] sm:$0xff]
    %v1652 = vld [vmem:[%s3 + $0x318] sm:$0xff]
    %v1653 = vld [vmem:[%s3 + $0x320] sm:$0xff]
    %v1654 = vld [vmem:[%s3 + $0x328] sm:$0xf]
    %v1655 = vld [vmem:[%s3 + $0x32c] sm:$0xff]
    %v1656 = vld [vmem:[%s3 + $0x334] sm:$0xff]
    %v1657 = vld [vmem:[%s3 + $0x33c] sm:$0xff]
    %v1658 = vld [vmem:[%s3 + $0x344] sm:$0xf]
    %v1659 = vld [vmem:[%s3 + $0x348] sm:$0xff]
    %v1660 = vld [vmem:[%s3 + $0x350] sm:$0xff]
    %v1661 = vld [vmem:[%s3 + $0x358] sm:$0xff]
    %v1662 = vld [vmem:[%s3 + $0x360] sm:$0xf]
    %v1663 = vld [vmem:[%s3 + $0x364] sm:$0xff]
    %v1664 = vld [vmem:[%s3 + $0x36c] sm:$0xff]
    %v1665 = vld [vmem:[%s3 + $0x374] sm:$0xff]
    %v1666 = vld [vmem:[%s3 + $0x37c] sm:$0xf]
    %v1667 = vld [vmem:[%s3 + $0x380] sm:$0xff]
    %v1668 = vld [vmem:[%s3 + $0x388] sm:$0xff]
    %v1669 = vld [vmem:[%s3 + $0x390] sm:$0xff]
    %v1670 = vld [vmem:[%s3 + $0x398] sm:$0xf]
    %v1671 = vld [vmem:[%s3 + $0x39c] sm:$0xff]
    %v1672 = vld [vmem:[%s3 + $0x3a4] sm:$0xff]
    %v1673 = vld [vmem:[%s3 + $0x3ac] sm:$0xff]
    %v1674 = vld [vmem:[%s3 + $0x3b4] sm:$0xf]
    %v1675 = vld [vmem:[%s3 + $0x3b8] sm:$0xff]
    %v1676 = vld [vmem:[%s3 + $0x3c0] sm:$0xff]
    %v1677 = vld [vmem:[%s3 + $0x3c8] sm:$0xff]
    %v1678 = vld [vmem:[%s3 + $0x3d0] sm:$0xf]
    %v1679 = vld [vmem:[%s3 + $0x3d4] sm:$0xff]
    %v1680 = vld [vmem:[%s3 + $0x3dc] sm:$0xff]
    %v1681 = vld [vmem:[%s3 + $0x3e4] sm:$0xff]
    %v1682 = vld [vmem:[%s3 + $0x3ec] sm:$0xf]
    %v1683 = vld [vmem:[%s3 + $0x3f0] sm:$0xff]
    %v1684 = vld [vmem:[%s3 + $0x3f8] sm:$0xff]
    %v1685 = vld [vmem:[%s3 + $0x400] sm:$0xff]
    %v1686 = vld [vmem:[%s3 + $0x408] sm:$0xf]
    %v1687 = vld [vmem:[%s3 + $0x40c] sm:$0xff]
    %v1688 = vld [vmem:[%s3 + $0x414] sm:$0xff]
    %v1689 = vld [vmem:[%s3 + $0x41c] sm:$0xff]
    %v1690 = vld [vmem:[%s3 + $0x424] sm:$0xf]
    %v1691 = vld [vmem:[%s3 + $0x428] sm:$0xff]
    %v1692 = vld [vmem:[%s3 + $0x430] sm:$0xff]
    %v1693 = vld [vmem:[%s3 + $0x438] sm:$0xff]
    %v1694 = vld [vmem:[%s3 + $0x440] sm:$0xf]
    %v1695 = vld [vmem:[%s3 + $0x444] sm:$0xff]
    %v1696 = vld [vmem:[%s3 + $0x44c] sm:$0xff]
    %v1697 = vld [vmem:[%s3 + $0x454] sm:$0xff]
    %v1698 = vld [vmem:[%s3 + $0x45c] sm:$0xf]
    %v1699 = vld [vmem:[%s3 + $0x460] sm:$0xff]
    %v1700 = vld [vmem:[%s3 + $0x468] sm:$0xff]
    %v1701 = vld [vmem:[%s3 + $0x470] sm:$0xff]
    %v1702 = vld [vmem:[%s3 + $0x478] sm:$0xf]
    %v1703 = vld [vmem:[%s3 + $0x47c] sm:$0xff]
    %v1704 = vld [vmem:[%s3 + $0x484] sm:$0xff]
    %v1705 = vld [vmem:[%s3 + $0x48c] sm:$0xff]
    %v1706 = vld [vmem:[%s3 + $0x494] sm:$0xf]
    %v1707 = vld [vmem:[%s3 + $0x498] sm:$0xff]
    %v1708 = vld [vmem:[%s3 + $0x4a0] sm:$0xff]
    %v1709 = vld [vmem:[%s3 + $0x4a8] sm:$0xff]
    %v1710 = vld [vmem:[%s3 + $0x4b0] sm:$0xf]
    %v1711 = vld [vmem:[%s3 + $0x4b4] sm:$0xff]
    %v1712 = vld [vmem:[%s3 + $0x4bc] sm:$0xff]
    %v1713 = vld [vmem:[%s3 + $0x4c4] sm:$0xff]
    %v1714 = vld [vmem:[%s3 + $0x4cc] sm:$0xf]
    %v1715 = vld [vmem:[%s3 + $0x4d0] sm:$0xff]
    %v1716 = vld [vmem:[%s3 + $0x4d8] sm:$0xff]
    %v1717 = vld [vmem:[%s3 + $0x4e0] sm:$0xff]
    %v1718 = vld [vmem:[%s3 + $0x4e8] sm:$0xf]
    %v1719 = vld [vmem:[%s3 + $0x4ec] sm:$0xff]
    %v1720 = vld [vmem:[%s3 + $0x4f4] sm:$0xff]
    %v1721 = vld [vmem:[%s3 + $0x4fc] sm:$0xff]
    %v1722 = vld [vmem:[%s3 + $0x504] sm:$0xf]
    %v1723 = vld [vmem:[%s3 + $0x508] sm:$0xff]
    %v1724 = vld [vmem:[%s3 + $0x510] sm:$0xff]
    %v1725 = vld [vmem:[%s3 + $0x518] sm:$0xff]
    %v1726 = vld [vmem:[%s3 + $0x520] sm:$0xf]
    %v1727 = vld [vmem:[%s3 + $0x524] sm:$0xff]
    %v1728 = vld [vmem:[%s3 + $0x52c] sm:$0xff]
    %v1729 = vld [vmem:[%s3 + $0x534] sm:$0xff]
    %v1730 = vld [vmem:[%s3 + $0x53c] sm:$0xf]
    %v1731 = vld [vmem:[%s3 + $0x540] sm:$0xff]
    %v1732 = vld [vmem:[%s3 + $0x548] sm:$0xff]
    %v1733 = vld [vmem:[%s3 + $0x550] sm:$0xff]
    %v1734 = vld [vmem:[%s3 + $0x558] sm:$0xf]
    %v1735 = vld [vmem:[%s3 + $0x55c] sm:$0xff]
    %v1736 = vld [vmem:[%s3 + $0x564] sm:$0xff]
    %v1737 = vld [vmem:[%s3 + $0x56c] sm:$0xff]
    %v1738 = vld [vmem:[%s3 + $0x574] sm:$0xf]
    %v1739 = vld [vmem:[%s3 + $0x578] sm:$0xff]
    %v1740 = vld [vmem:[%s3 + $0x580] sm:$0xff]
    %v1741 = vld [vmem:[%s3 + $0x588] sm:$0xff]
    %v1742 = vld [vmem:[%s3 + $0x590] sm:$0xf]
    %v1743 = vld [vmem:[%s3 + $0x594] sm:$0xff]
    %v1744 = vld [vmem:[%s3 + $0x59c] sm:$0xff]
    %v1745 = vld [vmem:[%s3 + $0x5a4] sm:$0xff]
    %v1746 = vld [vmem:[%s3 + $0x5ac] sm:$0xf]
    %v1747 = vld [vmem:[%s3 + $0x5b0] sm:$0xff]
    %v1748 = vld [vmem:[%s3 + $0x5b8] sm:$0xff]
    %v1749 = vld [vmem:[%s3 + $0x5c0] sm:$0xff]
    %v1750 = vld [vmem:[%s3 + $0x5c8] sm:$0xf]
    %v1751 = vld [vmem:[%s3 + $0x5cc] sm:$0xff]
    %v1752 = vld [vmem:[%s3 + $0x5d4] sm:$0xff]
    %v1753 = vld [vmem:[%s3 + $0x5dc] sm:$0xff]
    %v1754 = vld [vmem:[%s3 + $0x5e4] sm:$0xf]
    %v1755 = vld [vmem:[%s3 + $0x5e8] sm:$0xff]
    %v1756 = vld [vmem:[%s3 + $0x5f0] sm:$0xff]
    %v1757 = vld [vmem:[%s3 + $0x5f8] sm:$0xff]
    %v1758 = vld [vmem:[%s3 + $0x600] sm:$0xf]
    %v1759 = vld [vmem:[%s3 + $0x604] sm:$0xff]
    %v1760 = vld [vmem:[%s3 + $0x60c] sm:$0xff]
    %v1761 = vld [vmem:[%s3 + $0x614] sm:$0xff]
    %v1762 = vld [vmem:[%s3 + $0x61c] sm:$0xf]
    %v1763 = vld [vmem:[%s3 + $0x620] sm:$0xff]
    %v1764 = vld [vmem:[%s3 + $0x628] sm:$0xff]
    %v1765 = vld [vmem:[%s3 + $0x630] sm:$0xff]
    %v1766 = vld [vmem:[%s3 + $0x638] sm:$0xf]
    %v1767 = vld [vmem:[%s3 + $0x63c] sm:$0xff]
    %v1768 = vld [vmem:[%s3 + $0x644] sm:$0xff]
    %v1769 = vld [vmem:[%s3 + $0x64c] sm:$0xff]
    %v1770 = vld [vmem:[%s3 + $0x654] sm:$0xf]
    %v1771 = vld [vmem:[%s3 + $0x658] sm:$0xff]
    %v1772 = vld [vmem:[%s3 + $0x660] sm:$0xff]
    %v1773 = vld [vmem:[%s3 + $0x668] sm:$0xff]
    %v1774 = vld [vmem:[%s3 + $0x670] sm:$0xf]
    %v1775 = vld [vmem:[%s3 + $0x674] sm:$0xff]
    %v1776 = vld [vmem:[%s3 + $0x67c] sm:$0xff]
    %v1777 = vld [vmem:[%s3 + $0x684] sm:$0xff]
    %v1778 = vld [vmem:[%s3 + $0x68c] sm:$0xf]
    %v1779 = vld [vmem:[%s3 + $0x690] sm:$0xff]
    %v1780 = vld [vmem:[%s3 + $0x698] sm:$0xff]
    %v1781 = vld [vmem:[%s3 + $0x6a0] sm:$0xff]
    %v1782 = vld [vmem:[%s3 + $0x6a8] sm:$0xf]
    %v1783 = vld [vmem:[%s3 + $0x6ac] sm:$0xff]
    %v1784 = vld [vmem:[%s3 + $0x6b4] sm:$0xff]
    %v1785 = vld [vmem:[%s3 + $0x6bc] sm:$0xff]
    %v1786 = vld [vmem:[%s3 + $0x6c4] sm:$0xf]
    %v1787 = vld [vmem:[%s3 + $0x6c8] sm:$0xff]
    %v1788 = vld [vmem:[%s3 + $0x6d0] sm:$0xff]
    %v1789 = vld [vmem:[%s3 + $0x6d8] sm:$0xff]
    %v1790 = vld [vmem:[%s3 + $0x6e0] sm:$0xf]
    %v1791 = vld [vmem:[%s3 + $0x6e4] sm:$0xff]
    %v1792 = vld [vmem:[%s3 + $0x6ec] sm:$0xff]
    %v1793 = vld [vmem:[%s3 + $0x6f4] sm:$0xff]
    %v1794 = vld [vmem:[%s3 + $0x6fc] sm:$0xf]
    %v1795 = vld [vmem:[%s3 + $0x700] sm:$0xff]
    %v1796 = vld [vmem:[%s3 + $0x708] sm:$0xff]
    %v1797 = vld [vmem:[%s3 + $0x710] sm:$0xff]
    %v1798 = vld [vmem:[%s3 + $0x718] sm:$0xf]
    %v1799 = vld [vmem:[%s3 + $0x71c] sm:$0xff]
    %v1800 = vld [vmem:[%s3 + $0x724] sm:$0xff]
    %v1801 = vld [vmem:[%s3 + $0x72c] sm:$0xff]
    %v1802 = vld [vmem:[%s3 + $0x734] sm:$0xf]
    %v1803 = vld [vmem:[%s3 + $0x738] sm:$0xff]
    %v1804 = vld [vmem:[%s3 + $0x740] sm:$0xff]
    %v1805 = vld [vmem:[%s3 + $0x748] sm:$0xff]
    %v1806 = vld [vmem:[%s3 + $0x750] sm:$0xf]
    %v1807 = vld [vmem:[%s3 + $0x754] sm:$0xff]
    %v1808 = vld [vmem:[%s3 + $0x75c] sm:$0xff]
    %v1809 = vld [vmem:[%s3 + $0x764] sm:$0xff]
    %v1810 = vld [vmem:[%s3 + $0x76c] sm:$0xf]
    %v1811 = vld [vmem:[%s3 + $0x770] sm:$0xff]
    %v1812 = vld [vmem:[%s3 + $0x778] sm:$0xff]
    %v1813 = vld [vmem:[%s3 + $0x780] sm:$0xff]
    %v1814 = vld [vmem:[%s3 + $0x788] sm:$0xf]
    %v1815 = vld [vmem:[%s3 + $0x78c] sm:$0xff]
    %v1816 = vld [vmem:[%s3 + $0x794] sm:$0xff]
    %v1817 = vld [vmem:[%s3 + $0x79c] sm:$0xff]
    %v1818 = vld [vmem:[%s3 + $0x7a4] sm:$0xf]
    %v1819 = vld [vmem:[%s3 + $0x7a8] sm:$0xff]
    %v1820 = vld [vmem:[%s3 + $0x7b0] sm:$0xff]
    %v1821 = vld [vmem:[%s3 + $0x7b8] sm:$0xff]
    %v1822 = vld [vmem:[%s3 + $0x7c0] sm:$0xf]
    %v1823 = vld [vmem:[%s3 + $0x7c4] sm:$0xff]
    %v1824 = vld [vmem:[%s3 + $0x7cc] sm:$0xff]
    %v1825 = vld [vmem:[%s3 + $0x7d4] sm:$0xff]
    %v1826 = vld [vmem:[%s3 + $0x7dc] sm:$0xf]
    %v1827 = vld [vmem:[%s3 + $0x7e0] sm:$0xff]
    %v1828 = vld [vmem:[%s3 + $0x7e8] sm:$0xff]
    %v1829 = vld [vmem:[%s3 + $0x7f0] sm:$0xff]
    %v1830 = vld [vmem:[%s3 + $0x7f8] sm:$0xf]
    %v1831 = vld [vmem:[%s3 + $0x7fc] sm:$0xff]
    %v1832 = vld [vmem:[%s3 + $0x804] sm:$0xff]
    %v1833 = vld [vmem:[%s3 + $0x80c] sm:$0xff]
    %v1834 = vld [vmem:[%s3 + $0x814] sm:$0xf]
    %v1835 = vld [vmem:[%s3 + $0x818] sm:$0xff]
    %v1836 = vld [vmem:[%s3 + $0x820] sm:$0xff]
    %v1837 = vld [vmem:[%s3 + $0x828] sm:$0xff]
    %v1838 = vld [vmem:[%s3 + $0x830] sm:$0xf]
    %v1839 = vld [vmem:[%s3 + $0x834] sm:$0xff]
    %v1840 = vld [vmem:[%s3 + $0x83c] sm:$0xff]
    %v1841 = vld [vmem:[%s3 + $0x844] sm:$0xff]
    %v1842 = vld [vmem:[%s3 + $0x84c] sm:$0xf]
    %v1843 = vld [vmem:[%s3 + $0x850] sm:$0xff]
    %v1844 = vld [vmem:[%s3 + $0x858] sm:$0xff]
    %v1845 = vld [vmem:[%s3 + $0x860] sm:$0xff]
    %v1846 = vld [vmem:[%s3 + $0x868] sm:$0xf]
    %v1847 = vld [vmem:[%s3 + $0x86c] sm:$0xff]
    %v1848 = vld [vmem:[%s3 + $0x874] sm:$0xff]
    %v1849 = vld [vmem:[%s3 + $0x87c] sm:$0xff]
    %v1850 = vld [vmem:[%s3 + $0x884] sm:$0xf]
    %v1851 = vld [vmem:[%s3 + $0x888] sm:$0xff]
    %v1852 = vld [vmem:[%s3 + $0x890] sm:$0xff]
    %v1853 = vld [vmem:[%s3 + $0x898] sm:$0xff]
    %v1854 = vld [vmem:[%s3 + $0x8a0] sm:$0xf]
    %v1855 = vld [vmem:[%s3 + $0x8a4] sm:$0xff]
    %v1856 = vld [vmem:[%s3 + $0x8ac] sm:$0xff]
    %v1857 = vld [vmem:[%s3 + $0x8b4] sm:$0xff]
    %v1858 = vld [vmem:[%s3 + $0x8bc] sm:$0xf]
    %v1859 = vld [vmem:[%s3 + $0x8c0] sm:$0xff]
    %v1860 = vld [vmem:[%s3 + $0x8c8] sm:$0xff]
    %v1861 = vld [vmem:[%s3 + $0x8d0] sm:$0xff]
    %v1862 = vld [vmem:[%s3 + $0x8d8] sm:$0xf]
    %v1863 = vld [vmem:[%s3 + $0x8dc] sm:$0xff]
    %v1864 = vld [vmem:[%s3 + $0x8e4] sm:$0xff]
    %v1865 = vld [vmem:[%s3 + $0x8ec] sm:$0xff]
    %v1866 = vld [vmem:[%s3 + $0x8f4] sm:$0xf]
    %v1867 = vld [vmem:[%s3 + $0x8f8] sm:$0xff]
    %v1868 = vld [vmem:[%s3 + $0x900] sm:$0xff]
    %v1869 = vld [vmem:[%s3 + $0x908] sm:$0xff]
    %v1870 = vld [vmem:[%s3 + $0x910] sm:$0xf]
    %v1871 = vld [vmem:[%s3 + $0x914] sm:$0xff]
    %v1872 = vld [vmem:[%s3 + $0x91c] sm:$0xff]
    %v1873 = vld [vmem:[%s3 + $0x924] sm:$0xff]
    %v1874 = vld [vmem:[%s3 + $0x92c] sm:$0xf]
    %v1875 = vld [vmem:[%s3 + $0x930] sm:$0xff]
    %v1876 = vld [vmem:[%s3 + $0x938] sm:$0xff]
    %v1877 = vld [vmem:[%s3 + $0x940] sm:$0xff]
    %v1878 = vld [vmem:[%s3 + $0x948] sm:$0xf]
    %v1879 = vld [vmem:[%s3 + $0x94c] sm:$0xff]
    %v1880 = vld [vmem:[%s3 + $0x954] sm:$0xff]
    %v1881 = vld [vmem:[%s3 + $0x95c] sm:$0xff]
    %v1882 = vld [vmem:[%s3 + $0x964] sm:$0xf]
    %v1883 = vld [vmem:[%s3 + $0x968] sm:$0xff]
    %v1884 = vld [vmem:[%s3 + $0x970] sm:$0xff]
    %v1885 = vld [vmem:[%s3 + $0x978] sm:$0xff]
    %v1886 = vld [vmem:[%s3 + $0x980] sm:$0xf]
    %v1887 = vld [vmem:[%s3 + $0x984] sm:$0xff]
    %v1888 = vld [vmem:[%s3 + $0x98c] sm:$0xff]
    %v1889 = vld [vmem:[%s3 + $0x994] sm:$0xff]
    %v1890 = vld [vmem:[%s3 + $0x99c] sm:$0xf]
    %v1891 = vld [vmem:[%s3 + $0x9a0] sm:$0xff]
    %v1892 = vld [vmem:[%s3 + $0x9a8] sm:$0xff]
    %v1893 = vld [vmem:[%s3 + $0x9b0] sm:$0xff]
    %v1894 = vld [vmem:[%s3 + $0x9b8] sm:$0xf]
    %v1895 = vld [vmem:[%s3 + $0x9bc] sm:$0xff]
    %v1896 = vld [vmem:[%s3 + $0x9c4] sm:$0xff]
    %v1897 = vld [vmem:[%s3 + $0x9cc] sm:$0xff]
    %v1898 = vld [vmem:[%s3 + $0x9d4] sm:$0xf]
    %v1899 = vld [vmem:[%s3 + $0x9d8] sm:$0xff]
    %v1900 = vld [vmem:[%s3 + $0x9e0] sm:$0xff]
    %v1901 = vld [vmem:[%s3 + $0x9e8] sm:$0xff]
    %v1902 = vld [vmem:[%s3 + $0x9f0] sm:$0xf]
    %v1903 = vld [vmem:[%s3 + $0x9f4] sm:$0xff]
    %v1904 = vld [vmem:[%s3 + $0x9fc] sm:$0xff]
    %v1905 = vld [vmem:[%s3 + $0xa04] sm:$0xff]
    %v1906 = vld [vmem:[%s3 + $0xa0c] sm:$0xf]
    %v1907 = vld [vmem:[%s3 + $0xa10] sm:$0xff]
    %v1908 = vld [vmem:[%s3 + $0xa18] sm:$0xff]
    %v1909 = vld [vmem:[%s3 + $0xa20] sm:$0xff]
    %v1910 = vld [vmem:[%s3 + $0xa28] sm:$0xf]
    %v1911 = vld [vmem:[%s3 + $0xa2c] sm:$0xff]
    %v1912 = vld [vmem:[%s3 + $0xa34] sm:$0xff]
    %v1913 = vld [vmem:[%s3 + $0xa3c] sm:$0xff]
    %v1914 = vld [vmem:[%s3 + $0xa44] sm:$0xf]
    %v1915 = vld [vmem:[%s3 + $0xa48] sm:$0xff]
    %v1916 = vld [vmem:[%s3 + $0xa50] sm:$0xff]
    %v1917 = vld [vmem:[%s3 + $0xa58] sm:$0xff]
    %v1918 = vld [vmem:[%s3 + $0xa60] sm:$0xf]
    %v1919 = vld [vmem:[%s3 + $0xa64] sm:$0xff]
    %v1920 = vld [vmem:[%s3 + $0xa6c] sm:$0xff]
    %v1921 = vld [vmem:[%s3 + $0xa74] sm:$0xff]
    %v1922 = vld [vmem:[%s3 + $0xa7c] sm:$0xf]
    %v1923 = vld [vmem:[#allocation6] sm:$0xff]
    %v1925 = vlaneseq
    %v1926 = vshrl.u32 %v1925, 7
    %v1927 = vsub.s32 0, %v1926
    %v1928 = vrot.slane %v1923, %v1927
    %v1929 = vlaneseq
    %v1930 = vshrl.u32 %v1929, 7
    %v1931 = vsub.s32 1, %v1930
    %v1932 = vrot.slane %v1923, %v1931
    %v1933 = vlaneseq
    %v1934 = vshrl.u32 %v1933, 7
    %v1935 = vsub.s32 2, %v1934
    %v1936 = vrot.slane %v1923, %v1935
    %v1937 = vlaneseq
    %v1938 = vshrl.u32 %v1937, 7
    %v1939 = vsub.s32 3, %v1938
    %v1940 = vrot.slane %v1923, %v1939
    %v1941 = vlaneseq
    %v1942 = vshrl.u32 %v1941, 7
    %v1943 = vsub.s32 4, %v1942
    %v1944 = vrot.slane %v1923, %v1943
    %v1945 = vlaneseq
    %v1946 = vshrl.u32 %v1945, 7
    %v1947 = vsub.s32 5, %v1946
    %v1948 = vrot.slane %v1923, %v1947
    %v1949 = vlaneseq
    %v1950 = vshrl.u32 %v1949, 7
    %v1951 = vsub.s32 6, %v1950
    %v1952 = vrot.slane %v1923, %v1951
    %v2344 = vunpack.c.l.b16 %v1539
    %v2345 = vunpack.c.h.b16 %v1539
    %v2346 = vunpack.c.l.b16 %v1540
    %v2347 = vunpack.c.h.b16 %v1540
    %v2348 = vunpack.c.l.b16 %v1541
    %v2349 = vunpack.c.h.b16 %v1541
    %v2350 = vunpack.c.l.b16 %v1542
    %v2351 = vunpack.c.l.b16 %v1543
    %v2352 = vunpack.c.h.b16 %v1543
    %v2353 = vunpack.c.l.b16 %v1544
    %v2354 = vunpack.c.h.b16 %v1544
    %v2355 = vunpack.c.l.b16 %v1545
    %v2356 = vunpack.c.h.b16 %v1545
    %v2357 = vunpack.c.l.b16 %v1546
    %v2358 = vunpack.c.l.b16 %v1547
    %v2359 = vunpack.c.h.b16 %v1547
    %v2360 = vunpack.c.l.b16 %v1548
    %v2361 = vunpack.c.h.b16 %v1548
    %v2362 = vunpack.c.l.b16 %v1549
    %v2363 = vunpack.c.h.b16 %v1549
    %v2364 = vunpack.c.l.b16 %v1550
    %v2365 = vunpack.c.l.b16 %v1551
    %v2366 = vunpack.c.h.b16 %v1551
    %v2367 = vunpack.c.l.b16 %v1552
    %v2368 = vunpack.c.h.b16 %v1552
    %v2369 = vunpack.c.l.b16 %v1553
    %v2370 = vunpack.c.h.b16 %v1553
    %v2371 = vunpack.c.l.b16 %v1554
    %v2372 = vunpack.c.l.b16 %v1555
    %v2373 = vunpack.c.h.b16 %v1555
    %v2374 = vunpack.c.l.b16 %v1556
    %v2375 = vunpack.c.h.b16 %v1556
    %v2376 = vunpack.c.l.b16 %v1557
    %v2377 = vunpack.c.h.b16 %v1557
    %v2378 = vunpack.c.l.b16 %v1558
    %v2379 = vunpack.c.l.b16 %v1559
    %v2380 = vunpack.c.h.b16 %v1559
    %v2381 = vunpack.c.l.b16 %v1560
    %v2382 = vunpack.c.h.b16 %v1560
    %v2383 = vunpack.c.l.b16 %v1561
    %v2384 = vunpack.c.h.b16 %v1561
    %v2385 = vunpack.c.l.b16 %v1562
    %v2386 = vunpack.c.l.b16 %v1563
    %v2387 = vunpack.c.h.b16 %v1563
    %v2388 = vunpack.c.l.b16 %v1564
    %v2389 = vunpack.c.h.b16 %v1564
    %v2390 = vunpack.c.l.b16 %v1565
    %v2391 = vunpack.c.h.b16 %v1565
    %v2392 = vunpack.c.l.b16 %v1566
    %v2393 = vunpack.c.l.b16 %v1567
    %v2394 = vunpack.c.h.b16 %v1567
    %v2395 = vunpack.c.l.b16 %v1568
    %v2396 = vunpack.c.h.b16 %v1568
    %v2397 = vunpack.c.l.b16 %v1569
    %v2398 = vunpack.c.h.b16 %v1569
    %v2399 = vunpack.c.l.b16 %v1570
    %v2400 = vunpack.c.l.b16 %v1571
    %v2401 = vunpack.c.h.b16 %v1571
    %v2402 = vunpack.c.l.b16 %v1572
    %v2403 = vunpack.c.h.b16 %v1572
    %v2404 = vunpack.c.l.b16 %v1573
    %v2405 = vunpack.c.h.b16 %v1573
    %v2406 = vunpack.c.l.b16 %v1574
    %v2407 = vunpack.c.l.b16 %v1575
    %v2408 = vunpack.c.h.b16 %v1575
    %v2409 = vunpack.c.l.b16 %v1576
    %v2410 = vunpack.c.h.b16 %v1576
    %v2411 = vunpack.c.l.b16 %v1577
    %v2412 = vunpack.c.h.b16 %v1577
    %v2413 = vunpack.c.l.b16 %v1578
    %v2414 = vunpack.c.l.b16 %v1579
    %v2415 = vunpack.c.h.b16 %v1579
    %v2416 = vunpack.c.l.b16 %v1580
    %v2417 = vunpack.c.h.b16 %v1580
    %v2418 = vunpack.c.l.b16 %v1581
    %v2419 = vunpack.c.h.b16 %v1581
    %v2420 = vunpack.c.l.b16 %v1582
    %v2421 = vunpack.c.l.b16 %v1583
    %v2422 = vunpack.c.h.b16 %v1583
    %v2423 = vunpack.c.l.b16 %v1584
    %v2424 = vunpack.c.h.b16 %v1584
    %v2425 = vunpack.c.l.b16 %v1585
    %v2426 = vunpack.c.h.b16 %v1585
    %v2427 = vunpack.c.l.b16 %v1586
    %v2428 = vunpack.c.l.b16 %v1587
    %v2429 = vunpack.c.h.b16 %v1587
    %v2430 = vunpack.c.l.b16 %v1588
    %v2431 = vunpack.c.h.b16 %v1588
    %v2432 = vunpack.c.l.b16 %v1589
    %v2433 = vunpack.c.h.b16 %v1589
    %v2434 = vunpack.c.l.b16 %v1590
    %v2435 = vunpack.c.l.b16 %v1591
    %v2436 = vunpack.c.h.b16 %v1591
    %v2437 = vunpack.c.l.b16 %v1592
    %v2438 = vunpack.c.h.b16 %v1592
    %v2439 = vunpack.c.l.b16 %v1593
    %v2440 = vunpack.c.h.b16 %v1593
    %v2441 = vunpack.c.l.b16 %v1594
    %v2442 = vunpack.c.l.b16 %v1595
    %v2443 = vunpack.c.h.b16 %v1595
    %v2444 = vunpack.c.l.b16 %v1596
    %v2445 = vunpack.c.h.b16 %v1596
    %v2446 = vunpack.c.l.b16 %v1597
    %v2447 = vunpack.c.h.b16 %v1597
    %v2448 = vunpack.c.l.b16 %v1598
    %v2449 = vunpack.c.l.b16 %v1599
    %v2450 = vunpack.c.h.b16 %v1599
    %v2451 = vunpack.c.l.b16 %v1600
    %v2452 = vunpack.c.h.b16 %v1600
    %v2453 = vunpack.c.l.b16 %v1601
    %v2454 = vunpack.c.h.b16 %v1601
    %v2455 = vunpack.c.l.b16 %v1602
    %v2456 = vunpack.c.l.b16 %v1603
    %v2457 = vunpack.c.h.b16 %v1603
    %v2458 = vunpack.c.l.b16 %v1604
    %v2459 = vunpack.c.h.b16 %v1604
    %v2460 = vunpack.c.l.b16 %v1605
    %v2461 = vunpack.c.h.b16 %v1605
    %v2462 = vunpack.c.l.b16 %v1606
    %v2463 = vunpack.c.l.b16 %v1607
    %v2464 = vunpack.c.h.b16 %v1607
    %v2465 = vunpack.c.l.b16 %v1608
    %v2466 = vunpack.c.h.b16 %v1608
    %v2467 = vunpack.c.l.b16 %v1609
    %v2468 = vunpack.c.h.b16 %v1609
    %v2469 = vunpack.c.l.b16 %v1610
    %v2470 = vunpack.c.l.b16 %v1611
    %v2471 = vunpack.c.h.b16 %v1611
    %v2472 = vunpack.c.l.b16 %v1612
    %v2473 = vunpack.c.h.b16 %v1612
    %v2474 = vunpack.c.l.b16 %v1613
    %v2475 = vunpack.c.h.b16 %v1613
    %v2476 = vunpack.c.l.b16 %v1614
    %v2477 = vunpack.c.l.b16 %v1615
    %v2478 = vunpack.c.h.b16 %v1615
    %v2479 = vunpack.c.l.b16 %v1616
    %v2480 = vunpack.c.h.b16 %v1616
    %v2481 = vunpack.c.l.b16 %v1617
    %v2482 = vunpack.c.h.b16 %v1617
    %v2483 = vunpack.c.l.b16 %v1618
    %v2484 = vunpack.c.l.b16 %v1619
    %v2485 = vunpack.c.h.b16 %v1619
    %v2486 = vunpack.c.l.b16 %v1620
    %v2487 = vunpack.c.h.b16 %v1620
    %v2488 = vunpack.c.l.b16 %v1621
    %v2489 = vunpack.c.h.b16 %v1621
    %v2490 = vunpack.c.l.b16 %v1622
    %v2491 = vunpack.c.l.b16 %v1623
    %v2492 = vunpack.c.h.b16 %v1623
    %v2493 = vunpack.c.l.b16 %v1624
    %v2494 = vunpack.c.h.b16 %v1624
    %v2495 = vunpack.c.l.b16 %v1625
    %v2496 = vunpack.c.h.b16 %v1625
    %v2497 = vunpack.c.l.b16 %v1626
    %v2498 = vunpack.c.l.b16 %v1627
    %v2499 = vunpack.c.h.b16 %v1627
    %v2500 = vunpack.c.l.b16 %v1628
    %v2501 = vunpack.c.h.b16 %v1628
    %v2502 = vunpack.c.l.b16 %v1629
    %v2503 = vunpack.c.h.b16 %v1629
    %v2504 = vunpack.c.l.b16 %v1630
    %v2505 = vunpack.c.l.b16 %v1631
    %v2506 = vunpack.c.h.b16 %v1631
    %v2507 = vunpack.c.l.b16 %v1632
    %v2508 = vunpack.c.h.b16 %v1632
    %v2509 = vunpack.c.l.b16 %v1633
    %v2510 = vunpack.c.h.b16 %v1633
    %v2511 = vunpack.c.l.b16 %v1634
    %v2512 = vunpack.c.l.b16 %v1635
    %v2513 = vunpack.c.h.b16 %v1635
    %v2514 = vunpack.c.l.b16 %v1636
    %v2515 = vunpack.c.h.b16 %v1636
    %v2516 = vunpack.c.l.b16 %v1637
    %v2517 = vunpack.c.h.b16 %v1637
    %v2518 = vunpack.c.l.b16 %v1638
    %v2519 = vunpack.c.l.b16 %v1639
    %v2520 = vunpack.c.h.b16 %v1639
    %v2521 = vunpack.c.l.b16 %v1640
    %v2522 = vunpack.c.h.b16 %v1640
    %v2523 = vunpack.c.l.b16 %v1641
    %v2524 = vunpack.c.h.b16 %v1641
    %v2525 = vunpack.c.l.b16 %v1642
    %v2526 = vunpack.c.l.b16 %v1643
    %v2527 = vunpack.c.h.b16 %v1643
    %v2528 = vunpack.c.l.b16 %v1644
    %v2529 = vunpack.c.h.b16 %v1644
    %v2530 = vunpack.c.l.b16 %v1645
    %v2531 = vunpack.c.h.b16 %v1645
    %v2532 = vunpack.c.l.b16 %v1646
    %v2533 = vunpack.c.l.b16 %v1647
    %v2534 = vunpack.c.h.b16 %v1647
    %v2535 = vunpack.c.l.b16 %v1648
    %v2536 = vunpack.c.h.b16 %v1648
    %v2537 = vunpack.c.l.b16 %v1649
    %v2538 = vunpack.c.h.b16 %v1649
    %v2539 = vunpack.c.l.b16 %v1650
    %v2540 = vunpack.c.l.b16 %v1651
    %v2541 = vunpack.c.h.b16 %v1651
    %v2542 = vunpack.c.l.b16 %v1652
    %v2543 = vunpack.c.h.b16 %v1652
    %v2544 = vunpack.c.l.b16 %v1653
    %v2545 = vunpack.c.h.b16 %v1653
    %v2546 = vunpack.c.l.b16 %v1654
    %v2547 = vunpack.c.l.b16 %v1655
    %v2548 = vunpack.c.h.b16 %v1655
    %v2549 = vunpack.c.l.b16 %v1656
    %v2550 = vunpack.c.h.b16 %v1656
    %v2551 = vunpack.c.l.b16 %v1657
    %v2552 = vunpack.c.h.b16 %v1657
    %v2553 = vunpack.c.l.b16 %v1658
    %v2554 = vunpack.c.l.b16 %v1659
    %v2555 = vunpack.c.h.b16 %v1659
    %v2556 = vunpack.c.l.b16 %v1660
    %v2557 = vunpack.c.h.b16 %v1660
    %v2558 = vunpack.c.l.b16 %v1661
    %v2559 = vunpack.c.h.b16 %v1661
    %v2560 = vunpack.c.l.b16 %v1662
    %v2561 = vunpack.c.l.b16 %v1663
    %v2562 = vunpack.c.h.b16 %v1663
    %v2563 = vunpack.c.l.b16 %v1664
    %v2564 = vunpack.c.h.b16 %v1664
    %v2565 = vunpack.c.l.b16 %v1665
    %v2566 = vunpack.c.h.b16 %v1665
    %v2567 = vunpack.c.l.b16 %v1666
    %v2568 = vunpack.c.l.b16 %v1667
    %v2569 = vunpack.c.h.b16 %v1667
    %v2570 = vunpack.c.l.b16 %v1668
    %v2571 = vunpack.c.h.b16 %v1668
    %v2572 = vunpack.c.l.b16 %v1669
    %v2573 = vunpack.c.h.b16 %v1669
    %v2574 = vunpack.c.l.b16 %v1670
    %v2575 = vunpack.c.l.b16 %v1671
    %v2576 = vunpack.c.h.b16 %v1671
    %v2577 = vunpack.c.l.b16 %v1672
    %v2578 = vunpack.c.h.b16 %v1672
    %v2579 = vunpack.c.l.b16 %v1673
    %v2580 = vunpack.c.h.b16 %v1673
    %v2581 = vunpack.c.l.b16 %v1674
    %v2582 = vunpack.c.l.b16 %v1675
    %v2583 = vunpack.c.h.b16 %v1675
    %v2584 = vunpack.c.l.b16 %v1676
    %v2585 = vunpack.c.h.b16 %v1676
    %v2586 = vunpack.c.l.b16 %v1677
    %v2587 = vunpack.c.h.b16 %v1677
    %v2588 = vunpack.c.l.b16 %v1678
    %v2589 = vunpack.c.l.b16 %v1679
    %v2590 = vunpack.c.h.b16 %v1679
    %v2591 = vunpack.c.l.b16 %v1680
    %v2592 = vunpack.c.h.b16 %v1680
    %v2593 = vunpack.c.l.b16 %v1681
    %v2594 = vunpack.c.h.b16 %v1681
    %v2595 = vunpack.c.l.b16 %v1682
    %v2596 = vunpack.c.l.b16 %v1683
    %v2597 = vunpack.c.h.b16 %v1683
    %v2598 = vunpack.c.l.b16 %v1684
    %v2599 = vunpack.c.h.b16 %v1684
    %v2600 = vunpack.c.l.b16 %v1685
    %v2601 = vunpack.c.h.b16 %v1685
    %v2602 = vunpack.c.l.b16 %v1686
    %v2603 = vunpack.c.l.b16 %v1687
    %v2604 = vunpack.c.h.b16 %v1687
    %v2605 = vunpack.c.l.b16 %v1688
    %v2606 = vunpack.c.h.b16 %v1688
    %v2607 = vunpack.c.l.b16 %v1689
    %v2608 = vunpack.c.h.b16 %v1689
    %v2609 = vunpack.c.l.b16 %v1690
    %v2610 = vunpack.c.l.b16 %v1691
    %v2611 = vunpack.c.h.b16 %v1691
    %v2612 = vunpack.c.l.b16 %v1692
    %v2613 = vunpack.c.h.b16 %v1692
    %v2614 = vunpack.c.l.b16 %v1693
    %v2615 = vunpack.c.h.b16 %v1693
    %v2616 = vunpack.c.l.b16 %v1694
    %v2617 = vunpack.c.l.b16 %v1695
    %v2618 = vunpack.c.h.b16 %v1695
    %v2619 = vunpack.c.l.b16 %v1696
    %v2620 = vunpack.c.h.b16 %v1696
    %v2621 = vunpack.c.l.b16 %v1697
    %v2622 = vunpack.c.h.b16 %v1697
    %v2623 = vunpack.c.l.b16 %v1698
    %v2624 = vunpack.c.l.b16 %v1699
    %v2625 = vunpack.c.h.b16 %v1699
    %v2626 = vunpack.c.l.b16 %v1700
    %v2627 = vunpack.c.h.b16 %v1700
    %v2628 = vunpack.c.l.b16 %v1701
    %v2629 = vunpack.c.h.b16 %v1701
    %v2630 = vunpack.c.l.b16 %v1702
    %v2631 = vunpack.c.l.b16 %v1703
    %v2632 = vunpack.c.h.b16 %v1703
    %v2633 = vunpack.c.l.b16 %v1704
    %v2634 = vunpack.c.h.b16 %v1704
    %v2635 = vunpack.c.l.b16 %v1705
    %v2636 = vunpack.c.h.b16 %v1705
    %v2637 = vunpack.c.l.b16 %v1706
    %v2638 = vunpack.c.l.b16 %v1707
    %v2639 = vunpack.c.h.b16 %v1707
    %v2640 = vunpack.c.l.b16 %v1708
    %v2641 = vunpack.c.h.b16 %v1708
    %v2642 = vunpack.c.l.b16 %v1709
    %v2643 = vunpack.c.h.b16 %v1709
    %v2644 = vunpack.c.l.b16 %v1710
    %v2645 = vunpack.c.l.b16 %v1711
    %v2646 = vunpack.c.h.b16 %v1711
    %v2647 = vunpack.c.l.b16 %v1712
    %v2648 = vunpack.c.h.b16 %v1712
    %v2649 = vunpack.c.l.b16 %v1713
    %v2650 = vunpack.c.h.b16 %v1713
    %v2651 = vunpack.c.l.b16 %v1714
    %v2652 = vunpack.c.l.b16 %v1715
    %v2653 = vunpack.c.h.b16 %v1715
    %v2654 = vunpack.c.l.b16 %v1716
    %v2655 = vunpack.c.h.b16 %v1716
    %v2656 = vunpack.c.l.b16 %v1717
    %v2657 = vunpack.c.h.b16 %v1717
    %v2658 = vunpack.c.l.b16 %v1718
    %v2659 = vunpack.c.l.b16 %v1719
    %v2660 = vunpack.c.h.b16 %v1719
    %v2661 = vunpack.c.l.b16 %v1720
    %v2662 = vunpack.c.h.b16 %v1720
    %v2663 = vunpack.c.l.b16 %v1721
    %v2664 = vunpack.c.h.b16 %v1721
    %v2665 = vunpack.c.l.b16 %v1722
    %v2666 = vunpack.c.l.b16 %v1723
    %v2667 = vunpack.c.h.b16 %v1723
    %v2668 = vunpack.c.l.b16 %v1724
    %v2669 = vunpack.c.h.b16 %v1724
    %v2670 = vunpack.c.l.b16 %v1725
    %v2671 = vunpack.c.h.b16 %v1725
    %v2672 = vunpack.c.l.b16 %v1726
    %v2673 = vunpack.c.l.b16 %v1727
    %v2674 = vunpack.c.h.b16 %v1727
    %v2675 = vunpack.c.l.b16 %v1728
    %v2676 = vunpack.c.h.b16 %v1728
    %v2677 = vunpack.c.l.b16 %v1729
    %v2678 = vunpack.c.h.b16 %v1729
    %v2679 = vunpack.c.l.b16 %v1730
    %v2680 = vunpack.c.l.b16 %v1731
    %v2681 = vunpack.c.h.b16 %v1731
    %v2682 = vunpack.c.l.b16 %v1732
    %v2683 = vunpack.c.h.b16 %v1732
    %v2684 = vunpack.c.l.b16 %v1733
    %v2685 = vunpack.c.h.b16 %v1733
    %v2686 = vunpack.c.l.b16 %v1734
    %v2687 = vunpack.c.l.b16 %v1735
    %v2688 = vunpack.c.h.b16 %v1735
    %v2689 = vunpack.c.l.b16 %v1736
    %v2690 = vunpack.c.h.b16 %v1736
    %v2691 = vunpack.c.l.b16 %v1737
    %v2692 = vunpack.c.h.b16 %v1737
    %v2693 = vunpack.c.l.b16 %v1738
    %v2694 = vunpack.c.l.b16 %v1739
    %v2695 = vunpack.c.h.b16 %v1739
    %v2696 = vunpack.c.l.b16 %v1740
    %v2697 = vunpack.c.h.b16 %v1740
    %v2698 = vunpack.c.l.b16 %v1741
    %v2699 = vunpack.c.h.b16 %v1741
    %v2700 = vunpack.c.l.b16 %v1742
    %v2701 = vunpack.c.l.b16 %v1743
    %v2702 = vunpack.c.h.b16 %v1743
    %v2703 = vunpack.c.l.b16 %v1744
    %v2704 = vunpack.c.h.b16 %v1744
    %v2705 = vunpack.c.l.b16 %v1745
    %v2706 = vunpack.c.h.b16 %v1745
    %v2707 = vunpack.c.l.b16 %v1746
    %v2708 = vunpack.c.l.b16 %v1747
    %v2709 = vunpack.c.h.b16 %v1747
    %v2710 = vunpack.c.l.b16 %v1748
    %v2711 = vunpack.c.h.b16 %v1748
    %v2712 = vunpack.c.l.b16 %v1749
    %v2713 = vunpack.c.h.b16 %v1749
    %v2714 = vunpack.c.l.b16 %v1750
    %v2715 = vunpack.c.l.b16 %v1751
    %v2716 = vunpack.c.h.b16 %v1751
    %v2717 = vunpack.c.l.b16 %v1752
    %v2718 = vunpack.c.h.b16 %v1752
    %v2719 = vunpack.c.l.b16 %v1753
    %v2720 = vunpack.c.h.b16 %v1753
    %v2721 = vunpack.c.l.b16 %v1754
    %v2722 = vunpack.c.l.b16 %v1755
    %v2723 = vunpack.c.h.b16 %v1755
    %v2724 = vunpack.c.l.b16 %v1756
    %v2725 = vunpack.c.h.b16 %v1756
    %v2726 = vunpack.c.l.b16 %v1757
    %v2727 = vunpack.c.h.b16 %v1757
    %v2728 = vunpack.c.l.b16 %v1758
    %v2729 = vunpack.c.l.b16 %v1759
    %v2730 = vunpack.c.h.b16 %v1759
    %v2731 = vunpack.c.l.b16 %v1760
    %v2732 = vunpack.c.h.b16 %v1760
    %v2733 = vunpack.c.l.b16 %v1761
    %v2734 = vunpack.c.h.b16 %v1761
    %v2735 = vunpack.c.l.b16 %v1762
    %v2736 = vunpack.c.l.b16 %v1763
    %v2737 = vunpack.c.h.b16 %v1763
    %v2738 = vunpack.c.l.b16 %v1764
    %v2739 = vunpack.c.h.b16 %v1764
    %v2740 = vunpack.c.l.b16 %v1765
    %v2741 = vunpack.c.h.b16 %v1765
    %v2742 = vunpack.c.l.b16 %v1766
    %v2743 = vunpack.c.l.b16 %v1767
    %v2744 = vunpack.c.h.b16 %v1767
    %v2745 = vunpack.c.l.b16 %v1768
    %v2746 = vunpack.c.h.b16 %v1768
    %v2747 = vunpack.c.l.b16 %v1769
    %v2748 = vunpack.c.h.b16 %v1769
    %v2749 = vunpack.c.l.b16 %v1770
    %v2750 = vunpack.c.l.b16 %v1771
    %v2751 = vunpack.c.h.b16 %v1771
    %v2752 = vunpack.c.l.b16 %v1772
    %v2753 = vunpack.c.h.b16 %v1772
    %v2754 = vunpack.c.l.b16 %v1773
    %v2755 = vunpack.c.h.b16 %v1773
    %v2756 = vunpack.c.l.b16 %v1774
    %v2757 = vunpack.c.l.b16 %v1775
    %v2758 = vunpack.c.h.b16 %v1775
    %v2759 = vunpack.c.l.b16 %v1776
    %v2760 = vunpack.c.h.b16 %v1776
    %v2761 = vunpack.c.l.b16 %v1777
    %v2762 = vunpack.c.h.b16 %v1777
    %v2763 = vunpack.c.l.b16 %v1778
    %v2764 = vunpack.c.l.b16 %v1779
    %v2765 = vunpack.c.h.b16 %v1779
    %v2766 = vunpack.c.l.b16 %v1780
    %v2767 = vunpack.c.h.b16 %v1780
    %v2768 = vunpack.c.l.b16 %v1781
    %v2769 = vunpack.c.h.b16 %v1781
    %v2770 = vunpack.c.l.b16 %v1782
    %v2771 = vunpack.c.l.b16 %v1783
    %v2772 = vunpack.c.h.b16 %v1783
    %v2773 = vunpack.c.l.b16 %v1784
    %v2774 = vunpack.c.h.b16 %v1784
    %v2775 = vunpack.c.l.b16 %v1785
    %v2776 = vunpack.c.h.b16 %v1785
    %v2777 = vunpack.c.l.b16 %v1786
    %v2778 = vunpack.c.l.b16 %v1787
    %v2779 = vunpack.c.h.b16 %v1787
    %v2780 = vunpack.c.l.b16 %v1788
    %v2781 = vunpack.c.h.b16 %v1788
    %v2782 = vunpack.c.l.b16 %v1789
    %v2783 = vunpack.c.h.b16 %v1789
    %v2784 = vunpack.c.l.b16 %v1790
    %v2785 = vunpack.c.l.b16 %v1791
    %v2786 = vunpack.c.h.b16 %v1791
    %v2787 = vunpack.c.l.b16 %v1792
    %v2788 = vunpack.c.h.b16 %v1792
    %v2789 = vunpack.c.l.b16 %v1793
    %v2790 = vunpack.c.h.b16 %v1793
    %v2791 = vunpack.c.l.b16 %v1794
    %v2792 = vunpack.c.l.b16 %v1795
    %v2793 = vunpack.c.h.b16 %v1795
    %v2794 = vunpack.c.l.b16 %v1796
    %v2795 = vunpack.c.h.b16 %v1796
    %v2796 = vunpack.c.l.b16 %v1797
    %v2797 = vunpack.c.h.b16 %v1797
    %v2798 = vunpack.c.l.b16 %v1798
    %v2799 = vunpack.c.l.b16 %v1799
    %v2800 = vunpack.c.h.b16 %v1799
    %v2801 = vunpack.c.l.b16 %v1800
    %v2802 = vunpack.c.h.b16 %v1800
    %v2803 = vunpack.c.l.b16 %v1801
    %v2804 = vunpack.c.h.b16 %v1801
    %v2805 = vunpack.c.l.b16 %v1802
    %v2806 = vunpack.c.l.b16 %v1803
    %v2807 = vunpack.c.h.b16 %v1803
    %v2808 = vunpack.c.l.b16 %v1804
    %v2809 = vunpack.c.h.b16 %v1804
    %v2810 = vunpack.c.l.b16 %v1805
    %v2811 = vunpack.c.h.b16 %v1805
    %v2812 = vunpack.c.l.b16 %v1806
    %v2813 = vunpack.c.l.b16 %v1807
    %v2814 = vunpack.c.h.b16 %v1807
    %v2815 = vunpack.c.l.b16 %v1808
    %v2816 = vunpack.c.h.b16 %v1808
    %v2817 = vunpack.c.l.b16 %v1809
    %v2818 = vunpack.c.h.b16 %v1809
    %v2819 = vunpack.c.l.b16 %v1810
    %v2820 = vunpack.c.l.b16 %v1811
    %v2821 = vunpack.c.h.b16 %v1811
    %v2822 = vunpack.c.l.b16 %v1812
    %v2823 = vunpack.c.h.b16 %v1812
    %v2824 = vunpack.c.l.b16 %v1813
    %v2825 = vunpack.c.h.b16 %v1813
    %v2826 = vunpack.c.l.b16 %v1814
    %v2827 = vunpack.c.l.b16 %v1815
    %v2828 = vunpack.c.h.b16 %v1815
    %v2829 = vunpack.c.l.b16 %v1816
    %v2830 = vunpack.c.h.b16 %v1816
    %v2831 = vunpack.c.l.b16 %v1817
    %v2832 = vunpack.c.h.b16 %v1817
    %v2833 = vunpack.c.l.b16 %v1818
    %v2834 = vunpack.c.l.b16 %v1819
    %v2835 = vunpack.c.h.b16 %v1819
    %v2836 = vunpack.c.l.b16 %v1820
    %v2837 = vunpack.c.h.b16 %v1820
    %v2838 = vunpack.c.l.b16 %v1821
    %v2839 = vunpack.c.h.b16 %v1821
    %v2840 = vunpack.c.l.b16 %v1822
    %v2841 = vunpack.c.l.b16 %v1823
    %v2842 = vunpack.c.h.b16 %v1823
    %v2843 = vunpack.c.l.b16 %v1824
    %v2844 = vunpack.c.h.b16 %v1824
    %v2845 = vunpack.c.l.b16 %v1825
    %v2846 = vunpack.c.h.b16 %v1825
    %v2847 = vunpack.c.l.b16 %v1826
    %v2848 = vunpack.c.l.b16 %v1827
    %v2849 = vunpack.c.h.b16 %v1827
    %v2850 = vunpack.c.l.b16 %v1828
    %v2851 = vunpack.c.h.b16 %v1828
    %v2852 = vunpack.c.l.b16 %v1829
    %v2853 = vunpack.c.h.b16 %v1829
    %v2854 = vunpack.c.l.b16 %v1830
    %v2855 = vunpack.c.l.b16 %v1831
    %v2856 = vunpack.c.h.b16 %v1831
    %v2857 = vunpack.c.l.b16 %v1832
    %v2858 = vunpack.c.h.b16 %v1832
    %v2859 = vunpack.c.l.b16 %v1833
    %v2860 = vunpack.c.h.b16 %v1833
    %v2861 = vunpack.c.l.b16 %v1834
    %v2862 = vunpack.c.l.b16 %v1835
    %v2863 = vunpack.c.h.b16 %v1835
    %v2864 = vunpack.c.l.b16 %v1836
    %v2865 = vunpack.c.h.b16 %v1836
    %v2866 = vunpack.c.l.b16 %v1837
    %v2867 = vunpack.c.h.b16 %v1837
    %v2868 = vunpack.c.l.b16 %v1838
    %v2869 = vunpack.c.l.b16 %v1839
    %v2870 = vunpack.c.h.b16 %v1839
    %v2871 = vunpack.c.l.b16 %v1840
    %v2872 = vunpack.c.h.b16 %v1840
    %v2873 = vunpack.c.l.b16 %v1841
    %v2874 = vunpack.c.h.b16 %v1841
    %v2875 = vunpack.c.l.b16 %v1842
    %v2876 = vunpack.c.l.b16 %v1843
    %v2877 = vunpack.c.h.b16 %v1843
    %v2878 = vunpack.c.l.b16 %v1844
    %v2879 = vunpack.c.h.b16 %v1844
    %v2880 = vunpack.c.l.b16 %v1845
    %v2881 = vunpack.c.h.b16 %v1845
    %v2882 = vunpack.c.l.b16 %v1846
    %v2883 = vunpack.c.l.b16 %v1847
    %v2884 = vunpack.c.h.b16 %v1847
    %v2885 = vunpack.c.l.b16 %v1848
    %v2886 = vunpack.c.h.b16 %v1848
    %v2887 = vunpack.c.l.b16 %v1849
    %v2888 = vunpack.c.h.b16 %v1849
    %v2889 = vunpack.c.l.b16 %v1850
    %v2890 = vunpack.c.l.b16 %v1851
    %v2891 = vunpack.c.h.b16 %v1851
    %v2892 = vunpack.c.l.b16 %v1852
    %v2893 = vunpack.c.h.b16 %v1852
    %v2894 = vunpack.c.l.b16 %v1853
    %v2895 = vunpack.c.h.b16 %v1853
    %v2896 = vunpack.c.l.b16 %v1854
    %v2897 = vunpack.c.l.b16 %v1855
    %v2898 = vunpack.c.h.b16 %v1855
    %v2899 = vunpack.c.l.b16 %v1856
    %v2900 = vunpack.c.h.b16 %v1856
    %v2901 = vunpack.c.l.b16 %v1857
    %v2902 = vunpack.c.h.b16 %v1857
    %v2903 = vunpack.c.l.b16 %v1858
    %v2904 = vunpack.c.l.b16 %v1859
    %v2905 = vunpack.c.h.b16 %v1859
    %v2906 = vunpack.c.l.b16 %v1860
    %v2907 = vunpack.c.h.b16 %v1860
    %v2908 = vunpack.c.l.b16 %v1861
    %v2909 = vunpack.c.h.b16 %v1861
    %v2910 = vunpack.c.l.b16 %v1862
    %v2911 = vunpack.c.l.b16 %v1863
    %v2912 = vunpack.c.h.b16 %v1863
    %v2913 = vunpack.c.l.b16 %v1864
    %v2914 = vunpack.c.h.b16 %v1864
    %v2915 = vunpack.c.l.b16 %v1865
    %v2916 = vunpack.c.h.b16 %v1865
    %v2917 = vunpack.c.l.b16 %v1866
    %v2918 = vunpack.c.l.b16 %v1867
    %v2919 = vunpack.c.h.b16 %v1867
    %v2920 = vunpack.c.l.b16 %v1868
    %v2921 = vunpack.c.h.b16 %v1868
    %v2922 = vunpack.c.l.b16 %v1869
    %v2923 = vunpack.c.h.b16 %v1869
    %v2924 = vunpack.c.l.b16 %v1870
    %v2925 = vunpack.c.l.b16 %v1871
    %v2926 = vunpack.c.h.b16 %v1871
    %v2927 = vunpack.c.l.b16 %v1872
    %v2928 = vunpack.c.h.b16 %v1872
    %v2929 = vunpack.c.l.b16 %v1873
    %v2930 = vunpack.c.h.b16 %v1873
    %v2931 = vunpack.c.l.b16 %v1874
    %v2932 = vunpack.c.l.b16 %v1875
    %v2933 = vunpack.c.h.b16 %v1875
    %v2934 = vunpack.c.l.b16 %v1876
    %v2935 = vunpack.c.h.b16 %v1876
    %v2936 = vunpack.c.l.b16 %v1877
    %v2937 = vunpack.c.h.b16 %v1877
    %v2938 = vunpack.c.l.b16 %v1878
    %v2939 = vunpack.c.l.b16 %v1879
    %v2940 = vunpack.c.h.b16 %v1879
    %v2941 = vunpack.c.l.b16 %v1880
    %v2942 = vunpack.c.h.b16 %v1880
    %v2943 = vunpack.c.l.b16 %v1881
    %v2944 = vunpack.c.h.b16 %v1881
    %v2945 = vunpack.c.l.b16 %v1882
    %v2946 = vunpack.c.l.b16 %v1883
    %v2947 = vunpack.c.h.b16 %v1883
    %v2948 = vunpack.c.l.b16 %v1884
    %v2949 = vunpack.c.h.b16 %v1884
    %v2950 = vunpack.c.l.b16 %v1885
    %v2951 = vunpack.c.h.b16 %v1885
    %v2952 = vunpack.c.l.b16 %v1886
    %v2953 = vunpack.c.l.b16 %v1887
    %v2954 = vunpack.c.h.b16 %v1887
    %v2955 = vunpack.c.l.b16 %v1888
    %v2956 = vunpack.c.h.b16 %v1888
    %v2957 = vunpack.c.l.b16 %v1889
    %v2958 = vunpack.c.h.b16 %v1889
    %v2959 = vunpack.c.l.b16 %v1890
    %v2960 = vunpack.c.l.b16 %v1891
    %v2961 = vunpack.c.h.b16 %v1891
    %v2962 = vunpack.c.l.b16 %v1892
    %v2963 = vunpack.c.h.b16 %v1892
    %v2964 = vunpack.c.l.b16 %v1893
    %v2965 = vunpack.c.h.b16 %v1893
    %v2966 = vunpack.c.l.b16 %v1894
    %v2967 = vunpack.c.l.b16 %v1895
    %v2968 = vunpack.c.h.b16 %v1895
    %v2969 = vunpack.c.l.b16 %v1896
    %v2970 = vunpack.c.h.b16 %v1896
    %v2971 = vunpack.c.l.b16 %v1897
    %v2972 = vunpack.c.h.b16 %v1897
    %v2973 = vunpack.c.l.b16 %v1898
    %v2974 = vunpack.c.l.b16 %v1899
    %v2975 = vunpack.c.h.b16 %v1899
    %v2976 = vunpack.c.l.b16 %v1900
    %v2977 = vunpack.c.h.b16 %v1900
    %v2978 = vunpack.c.l.b16 %v1901
    %v2979 = vunpack.c.h.b16 %v1901
    %v2980 = vunpack.c.l.b16 %v1902
    %v2981 = vunpack.c.l.b16 %v1903
    %v2982 = vunpack.c.h.b16 %v1903
    %v2983 = vunpack.c.l.b16 %v1904
    %v2984 = vunpack.c.h.b16 %v1904
    %v2985 = vunpack.c.l.b16 %v1905
    %v2986 = vunpack.c.h.b16 %v1905
    %v2987 = vunpack.c.l.b16 %v1906
    %v2988 = vunpack.c.l.b16 %v1907
    %v2989 = vunpack.c.h.b16 %v1907
    %v2990 = vunpack.c.l.b16 %v1908
    %v2991 = vunpack.c.h.b16 %v1908
    %v2992 = vunpack.c.l.b16 %v1909
    %v2993 = vunpack.c.h.b16 %v1909
    %v2994 = vunpack.c.l.b16 %v1910
    %v2995 = vunpack.c.l.b16 %v1911
    %v2996 = vunpack.c.h.b16 %v1911
    %v2997 = vunpack.c.l.b16 %v1912
    %v2998 = vunpack.c.h.b16 %v1912
    %v2999 = vunpack.c.l.b16 %v1913
    %v3000 = vunpack.c.h.b16 %v1913
    %v3001 = vunpack.c.l.b16 %v1914
    %v3002 = vunpack.c.l.b16 %v1915
    %v3003 = vunpack.c.h.b16 %v1915
    %v3004 = vunpack.c.l.b16 %v1916
    %v3005 = vunpack.c.h.b16 %v1916
    %v3006 = vunpack.c.l.b16 %v1917
    %v3007 = vunpack.c.h.b16 %v1917
    %v3008 = vunpack.c.l.b16 %v1918
    %v3009 = vunpack.c.l.b16 %v1919
    %v3010 = vunpack.c.h.b16 %v1919
    %v3011 = vunpack.c.l.b16 %v1920
    %v3012 = vunpack.c.h.b16 %v1920
    %v3013 = vunpack.c.l.b16 %v1921
    %v3014 = vunpack.c.h.b16 %v1921
    %v3015 = vunpack.c.l.b16 %v1922
    %v3016 = vpack.c.b16 %v2351, %v2344
    %v3017 = vpack.c.b16 %v2352, %v2345
    %v3018 = vpack.c.b16 %v2353, %v2346
    %v3019 = vpack.c.b16 %v2354, %v2347
    %v3020 = vpack.c.b16 %v2355, %v2348
    %v3021 = vpack.c.b16 %v2356, %v2349
    %v3022 = vpack.c.b16 %v2357, %v2350
    %v3023 = vpack.c.b16 %v2365, %v2358
    %v3024 = vpack.c.b16 %v2366, %v2359
    %v3025 = vpack.c.b16 %v2367, %v2360
    %v3026 = vpack.c.b16 %v2368, %v2361
    %v3027 = vpack.c.b16 %v2369, %v2362
    %v3028 = vpack.c.b16 %v2370, %v2363
    %v3029 = vpack.c.b16 %v2371, %v2364
    %v3030 = vpack.c.b16 %v2379, %v2372
    %v3031 = vpack.c.b16 %v2380, %v2373
    %v3032 = vpack.c.b16 %v2381, %v2374
    %v3033 = vpack.c.b16 %v2382, %v2375
    %v3034 = vpack.c.b16 %v2383, %v2376
    %v3035 = vpack.c.b16 %v2384, %v2377
    %v3036 = vpack.c.b16 %v2385, %v2378
    %v3037 = vpack.c.b16 %v2393, %v2386
    %v3038 = vpack.c.b16 %v2394, %v2387
    %v3039 = vpack.c.b16 %v2395, %v2388
    %v3040 = vpack.c.b16 %v2396, %v2389
    %v3041 = vpack.c.b16 %v2397, %v2390
    %v3042 = vpack.c.b16 %v2398, %v2391
    %v3043 = vpack.c.b16 %v2399, %v2392
    %v3044 = vpack.c.b16 %v2407, %v2400
    %v3045 = vpack.c.b16 %v2408, %v2401
    %v3046 = vpack.c.b16 %v2409, %v2402
    %v3047 = vpack.c.b16 %v2410, %v2403
    %v3048 = vpack.c.b16 %v2411, %v2404
    %v3049 = vpack.c.b16 %v2412, %v2405
    %v3050 = vpack.c.b16 %v2413, %v2406
    %v3051 = vpack.c.b16 %v2421, %v2414
    %v3052 = vpack.c.b16 %v2422, %v2415
    %v3053 = vpack.c.b16 %v2423, %v2416
    %v3054 = vpack.c.b16 %v2424, %v2417
    %v3055 = vpack.c.b16 %v2425, %v2418
    %v3056 = vpack.c.b16 %v2426, %v2419
    %v3057 = vpack.c.b16 %v2427, %v2420
    %v3058 = vpack.c.b16 %v2435, %v2428
    %v3059 = vpack.c.b16 %v2436, %v2429
    %v3060 = vpack.c.b16 %v2437, %v2430
    %v3061 = vpack.c.b16 %v2438, %v2431
    %v3062 = vpack.c.b16 %v2439, %v2432
    %v3063 = vpack.c.b16 %v2440, %v2433
    %v3064 = vpack.c.b16 %v2441, %v2434
    %v3065 = vpack.c.b16 %v2449, %v2442
    %v3066 = vpack.c.b16 %v2450, %v2443
    %v3067 = vpack.c.b16 %v2451, %v2444
    %v3068 = vpack.c.b16 %v2452, %v2445
    %v3069 = vpack.c.b16 %v2453, %v2446
    %v3070 = vpack.c.b16 %v2454, %v2447
    %v3071 = vpack.c.b16 %v2455, %v2448
    %v3072 = vpack.c.b16 %v2463, %v2456
    %v3073 = vpack.c.b16 %v2464, %v2457
    %v3074 = vpack.c.b16 %v2465, %v2458
    %v3075 = vpack.c.b16 %v2466, %v2459
    %v3076 = vpack.c.b16 %v2467, %v2460
    %v3077 = vpack.c.b16 %v2468, %v2461
    %v3078 = vpack.c.b16 %v2469, %v2462
    %v3079 = vpack.c.b16 %v2477, %v2470
    %v3080 = vpack.c.b16 %v2478, %v2471
    %v3081 = vpack.c.b16 %v2479, %v2472
    %v3082 = vpack.c.b16 %v2480, %v2473
    %v3083 = vpack.c.b16 %v2481, %v2474
    %v3084 = vpack.c.b16 %v2482, %v2475
    %v3085 = vpack.c.b16 %v2483, %v2476
    %v3086 = vpack.c.b16 %v2491, %v2484
    %v3087 = vpack.c.b16 %v2492, %v2485
    %v3088 = vpack.c.b16 %v2493, %v2486
    %v3089 = vpack.c.b16 %v2494, %v2487
    %v3090 = vpack.c.b16 %v2495, %v2488
    %v3091 = vpack.c.b16 %v2496, %v2489
    %v3092 = vpack.c.b16 %v2497, %v2490
    %v3093 = vpack.c.b16 %v2505, %v2498
    %v3094 = vpack.c.b16 %v2506, %v2499
    %v3095 = vpack.c.b16 %v2507, %v2500
    %v3096 = vpack.c.b16 %v2508, %v2501
    %v3097 = vpack.c.b16 %v2509, %v2502
    %v3098 = vpack.c.b16 %v2510, %v2503
    %v3099 = vpack.c.b16 %v2511, %v2504
    %v3100 = vpack.c.b16 %v2519, %v2512
    %v3101 = vpack.c.b16 %v2520, %v2513
    %v3102 = vpack.c.b16 %v2521, %v2514
    %v3103 = vpack.c.b16 %v2522, %v2515
    %v3104 = vpack.c.b16 %v2523, %v2516
    %v3105 = vpack.c.b16 %v2524, %v2517
    %v3106 = vpack.c.b16 %v2525, %v2518
    %v3107 = vpack.c.b16 %v2533, %v2526
    %v3108 = vpack.c.b16 %v2534, %v2527
    %v3109 = vpack.c.b16 %v2535, %v2528
    %v3110 = vpack.c.b16 %v2536, %v2529
    %v3111 = vpack.c.b16 %v2537, %v2530
    %v3112 = vpack.c.b16 %v2538, %v2531
    %v3113 = vpack.c.b16 %v2539, %v2532
    %v3114 = vpack.c.b16 %v2547, %v2540
    %v3115 = vpack.c.b16 %v2548, %v2541
    %v3116 = vpack.c.b16 %v2549, %v2542
    %v3117 = vpack.c.b16 %v2550, %v2543
    %v3118 = vpack.c.b16 %v2551, %v2544
    %v3119 = vpack.c.b16 %v2552, %v2545
    %v3120 = vpack.c.b16 %v2553, %v2546
    %v3121 = vpack.c.b16 %v2561, %v2554
    %v3122 = vpack.c.b16 %v2562, %v2555
    %v3123 = vpack.c.b16 %v2563, %v2556
    %v3124 = vpack.c.b16 %v2564, %v2557
    %v3125 = vpack.c.b16 %v2565, %v2558
    %v3126 = vpack.c.b16 %v2566, %v2559
    %v3127 = vpack.c.b16 %v2567, %v2560
    %v3128 = vpack.c.b16 %v2575, %v2568
    %v3129 = vpack.c.b16 %v2576, %v2569
    %v3130 = vpack.c.b16 %v2577, %v2570
    %v3131 = vpack.c.b16 %v2578, %v2571
    %v3132 = vpack.c.b16 %v2579, %v2572
    %v3133 = vpack.c.b16 %v2580, %v2573
    %v3134 = vpack.c.b16 %v2581, %v2574
    %v3135 = vpack.c.b16 %v2589, %v2582
    %v3136 = vpack.c.b16 %v2590, %v2583
    %v3137 = vpack.c.b16 %v2591, %v2584
    %v3138 = vpack.c.b16 %v2592, %v2585
    %v3139 = vpack.c.b16 %v2593, %v2586
    %v3140 = vpack.c.b16 %v2594, %v2587
    %v3141 = vpack.c.b16 %v2595, %v2588
    %v3142 = vpack.c.b16 %v2603, %v2596
    %v3143 = vpack.c.b16 %v2604, %v2597
    %v3144 = vpack.c.b16 %v2605, %v2598
    %v3145 = vpack.c.b16 %v2606, %v2599
    %v3146 = vpack.c.b16 %v2607, %v2600
    %v3147 = vpack.c.b16 %v2608, %v2601
    %v3148 = vpack.c.b16 %v2609, %v2602
    %v3149 = vpack.c.b16 %v2617, %v2610
    %v3150 = vpack.c.b16 %v2618, %v2611
    %v3151 = vpack.c.b16 %v2619, %v2612
    %v3152 = vpack.c.b16 %v2620, %v2613
    %v3153 = vpack.c.b16 %v2621, %v2614
    %v3154 = vpack.c.b16 %v2622, %v2615
    %v3155 = vpack.c.b16 %v2623, %v2616
    %v3156 = vpack.c.b16 %v2631, %v2624
    %v3157 = vpack.c.b16 %v2632, %v2625
    %v3158 = vpack.c.b16 %v2633, %v2626
    %v3159 = vpack.c.b16 %v2634, %v2627
    %v3160 = vpack.c.b16 %v2635, %v2628
    %v3161 = vpack.c.b16 %v2636, %v2629
    %v3162 = vpack.c.b16 %v2637, %v2630
    %v3163 = vpack.c.b16 %v2645, %v2638
    %v3164 = vpack.c.b16 %v2646, %v2639
    %v3165 = vpack.c.b16 %v2647, %v2640
    %v3166 = vpack.c.b16 %v2648, %v2641
    %v3167 = vpack.c.b16 %v2649, %v2642
    %v3168 = vpack.c.b16 %v2650, %v2643
    %v3169 = vpack.c.b16 %v2651, %v2644
    %v3170 = vpack.c.b16 %v2659, %v2652
    %v3171 = vpack.c.b16 %v2660, %v2653
    %v3172 = vpack.c.b16 %v2661, %v2654
    %v3173 = vpack.c.b16 %v2662, %v2655
    %v3174 = vpack.c.b16 %v2663, %v2656
    %v3175 = vpack.c.b16 %v2664, %v2657
    %v3176 = vpack.c.b16 %v2665, %v2658
    %v3177 = vpack.c.b16 %v2673, %v2666
    %v3178 = vpack.c.b16 %v2674, %v2667
    %v3179 = vpack.c.b16 %v2675, %v2668
    %v3180 = vpack.c.b16 %v2676, %v2669
    %v3181 = vpack.c.b16 %v2677, %v2670
    %v3182 = vpack.c.b16 %v2678, %v2671
    %v3183 = vpack.c.b16 %v2679, %v2672
    %v3184 = vpack.c.b16 %v2687, %v2680
    %v3185 = vpack.c.b16 %v2688, %v2681
    %v3186 = vpack.c.b16 %v2689, %v2682
    %v3187 = vpack.c.b16 %v2690, %v2683
    %v3188 = vpack.c.b16 %v2691, %v2684
    %v3189 = vpack.c.b16 %v2692, %v2685
    %v3190 = vpack.c.b16 %v2693, %v2686
    %v3191 = vpack.c.b16 %v2701, %v2694
    %v3192 = vpack.c.b16 %v2702, %v2695
    %v3193 = vpack.c.b16 %v2703, %v2696
    %v3194 = vpack.c.b16 %v2704, %v2697
    %v3195 = vpack.c.b16 %v2705, %v2698
    %v3196 = vpack.c.b16 %v2706, %v2699
    %v3197 = vpack.c.b16 %v2707, %v2700
    %v3198 = vpack.c.b16 %v2715, %v2708
    %v3199 = vpack.c.b16 %v2716, %v2709
    %v3200 = vpack.c.b16 %v2717, %v2710
    %v3201 = vpack.c.b16 %v2718, %v2711
    %v3202 = vpack.c.b16 %v2719, %v2712
    %v3203 = vpack.c.b16 %v2720, %v2713
    %v3204 = vpack.c.b16 %v2721, %v2714
    %v3205 = vpack.c.b16 %v2729, %v2722
    %v3206 = vpack.c.b16 %v2730, %v2723
    %v3207 = vpack.c.b16 %v2731, %v2724
    %v3208 = vpack.c.b16 %v2732, %v2725
    %v3209 = vpack.c.b16 %v2733, %v2726
    %v3210 = vpack.c.b16 %v2734, %v2727
    %v3211 = vpack.c.b16 %v2735, %v2728
    %v3212 = vpack.c.b16 %v2743, %v2736
    %v3213 = vpack.c.b16 %v2744, %v2737
    %v3214 = vpack.c.b16 %v2745, %v2738
    %v3215 = vpack.c.b16 %v2746, %v2739
    %v3216 = vpack.c.b16 %v2747, %v2740
    %v3217 = vpack.c.b16 %v2748, %v2741
    %v3218 = vpack.c.b16 %v2749, %v2742
    %v3219 = vpack.c.b16 %v2757, %v2750
    %v3220 = vpack.c.b16 %v2758, %v2751
    %v3221 = vpack.c.b16 %v2759, %v2752
    %v3222 = vpack.c.b16 %v2760, %v2753
    %v3223 = vpack.c.b16 %v2761, %v2754
    %v3224 = vpack.c.b16 %v2762, %v2755
    %v3225 = vpack.c.b16 %v2763, %v2756
    %v3226 = vpack.c.b16 %v2771, %v2764
    %v3227 = vpack.c.b16 %v2772, %v2765
    %v3228 = vpack.c.b16 %v2773, %v2766
    %v3229 = vpack.c.b16 %v2774, %v2767
    %v3230 = vpack.c.b16 %v2775, %v2768
    %v3231 = vpack.c.b16 %v2776, %v2769
    %v3232 = vpack.c.b16 %v2777, %v2770
    %v3233 = vpack.c.b16 %v2785, %v2778
    %v3234 = vpack.c.b16 %v2786, %v2779
    %v3235 = vpack.c.b16 %v2787, %v2780
    %v3236 = vpack.c.b16 %v2788, %v2781
    %v3237 = vpack.c.b16 %v2789, %v2782
    %v3238 = vpack.c.b16 %v2790, %v2783
    %v3239 = vpack.c.b16 %v2791, %v2784
    %v3240 = vpack.c.b16 %v2799, %v2792
    %v3241 = vpack.c.b16 %v2800, %v2793
    %v3242 = vpack.c.b16 %v2801, %v2794
    %v3243 = vpack.c.b16 %v2802, %v2795
    %v3244 = vpack.c.b16 %v2803, %v2796
    %v3245 = vpack.c.b16 %v2804, %v2797
    %v3246 = vpack.c.b16 %v2805, %v2798
    %v3247 = vpack.c.b16 %v2813, %v2806
    %v3248 = vpack.c.b16 %v2814, %v2807
    %v3249 = vpack.c.b16 %v2815, %v2808
    %v3250 = vpack.c.b16 %v2816, %v2809
    %v3251 = vpack.c.b16 %v2817, %v2810
    %v3252 = vpack.c.b16 %v2818, %v2811
    %v3253 = vpack.c.b16 %v2819, %v2812
    %v3254 = vpack.c.b16 %v2827, %v2820
    %v3255 = vpack.c.b16 %v2828, %v2821
    %v3256 = vpack.c.b16 %v2829, %v2822
    %v3257 = vpack.c.b16 %v2830, %v2823
    %v3258 = vpack.c.b16 %v2831, %v2824
    %v3259 = vpack.c.b16 %v2832, %v2825
    %v3260 = vpack.c.b16 %v2833, %v2826
    %v3261 = vpack.c.b16 %v2841, %v2834
    %v3262 = vpack.c.b16 %v2842, %v2835
    %v3263 = vpack.c.b16 %v2843, %v2836
    %v3264 = vpack.c.b16 %v2844, %v2837
    %v3265 = vpack.c.b16 %v2845, %v2838
    %v3266 = vpack.c.b16 %v2846, %v2839
    %v3267 = vpack.c.b16 %v2847, %v2840
    %v3268 = vpack.c.b16 %v2855, %v2848
    %v3269 = vpack.c.b16 %v2856, %v2849
    %v3270 = vpack.c.b16 %v2857, %v2850
    %v3271 = vpack.c.b16 %v2858, %v2851
    %v3272 = vpack.c.b16 %v2859, %v2852
    %v3273 = vpack.c.b16 %v2860, %v2853
    %v3274 = vpack.c.b16 %v2861, %v2854
    %v3275 = vpack.c.b16 %v2869, %v2862
    %v3276 = vpack.c.b16 %v2870, %v2863
    %v3277 = vpack.c.b16 %v2871, %v2864
    %v3278 = vpack.c.b16 %v2872, %v2865
    %v3279 = vpack.c.b16 %v2873, %v2866
    %v3280 = vpack.c.b16 %v2874, %v2867
    %v3281 = vpack.c.b16 %v2875, %v2868
    %v3282 = vpack.c.b16 %v2883, %v2876
    %v3283 = vpack.c.b16 %v2884, %v2877
    %v3284 = vpack.c.b16 %v2885, %v2878
    %v3285 = vpack.c.b16 %v2886, %v2879
    %v3286 = vpack.c.b16 %v2887, %v2880
    %v3287 = vpack.c.b16 %v2888, %v2881
    %v3288 = vpack.c.b16 %v2889, %v2882
    %v3289 = vpack.c.b16 %v2897, %v2890
    %v3290 = vpack.c.b16 %v2898, %v2891
    %v3291 = vpack.c.b16 %v2899, %v2892
    %v3292 = vpack.c.b16 %v2900, %v2893
    %v3293 = vpack.c.b16 %v2901, %v2894
    %v3294 = vpack.c.b16 %v2902, %v2895
    %v3295 = vpack.c.b16 %v2903, %v2896
    %v3296 = vpack.c.b16 %v2911, %v2904
    %v3297 = vpack.c.b16 %v2912, %v2905
    %v3298 = vpack.c.b16 %v2913, %v2906
    %v3299 = vpack.c.b16 %v2914, %v2907
    %v3300 = vpack.c.b16 %v2915, %v2908
    %v3301 = vpack.c.b16 %v2916, %v2909
    %v3302 = vpack.c.b16 %v2917, %v2910
    %v3303 = vpack.c.b16 %v2925, %v2918
    %v3304 = vpack.c.b16 %v2926, %v2919
    %v3305 = vpack.c.b16 %v2927, %v2920
    %v3306 = vpack.c.b16 %v2928, %v2921
    %v3307 = vpack.c.b16 %v2929, %v2922
    %v3308 = vpack.c.b16 %v2930, %v2923
    %v3309 = vpack.c.b16 %v2931, %v2924
    %v3310 = vpack.c.b16 %v2939, %v2932
    %v3311 = vpack.c.b16 %v2940, %v2933
    %v3312 = vpack.c.b16 %v2941, %v2934
    %v3313 = vpack.c.b16 %v2942, %v2935
    %v3314 = vpack.c.b16 %v2943, %v2936
    %v3315 = vpack.c.b16 %v2944, %v2937
    %v3316 = vpack.c.b16 %v2945, %v2938
    %v3317 = vpack.c.b16 %v2953, %v2946
    %v3318 = vpack.c.b16 %v2954, %v2947
    %v3319 = vpack.c.b16 %v2955, %v2948
    %v3320 = vpack.c.b16 %v2956, %v2949
    %v3321 = vpack.c.b16 %v2957, %v2950
    %v3322 = vpack.c.b16 %v2958, %v2951
    %v3323 = vpack.c.b16 %v2959, %v2952
    %v3324 = vpack.c.b16 %v2967, %v2960
    %v3325 = vpack.c.b16 %v2968, %v2961
    %v3326 = vpack.c.b16 %v2969, %v2962
    %v3327 = vpack.c.b16 %v2970, %v2963
    %v3328 = vpack.c.b16 %v2971, %v2964
    %v3329 = vpack.c.b16 %v2972, %v2965
    %v3330 = vpack.c.b16 %v2973, %v2966
    %v3331 = vpack.c.b16 %v2981, %v2974
    %v3332 = vpack.c.b16 %v2982, %v2975
    %v3333 = vpack.c.b16 %v2983, %v2976
    %v3334 = vpack.c.b16 %v2984, %v2977
    %v3335 = vpack.c.b16 %v2985, %v2978
    %v3336 = vpack.c.b16 %v2986, %v2979
    %v3337 = vpack.c.b16 %v2987, %v2980
    %v3338 = vpack.c.b16 %v2995, %v2988
    %v3339 = vpack.c.b16 %v2996, %v2989
    %v3340 = vpack.c.b16 %v2997, %v2990
    %v3341 = vpack.c.b16 %v2998, %v2991
    %v3342 = vpack.c.b16 %v2999, %v2992
    %v3343 = vpack.c.b16 %v3000, %v2993
    %v3344 = vpack.c.b16 %v3001, %v2994
    %v3345 = vpack.c.b16 %v3009, %v3002
    %v3346 = vpack.c.b16 %v3010, %v3003
    %v3347 = vpack.c.b16 %v3011, %v3004
    %v3348 = vpack.c.b16 %v3012, %v3005
    %v3349 = vpack.c.b16 %v3013, %v3006
    %v3350 = vpack.c.b16 %v3014, %v3007
    %v3351 = vpack.c.b16 %v3015, %v3008
    %3688 = vmatprep.subr.bf16.mxu0 %v3066
    %3689 = vmatpush1.bf16.msra.mxu0 %v3065
    %3690 = vmatprep.subr.bf16.mxu0 %v3059
    %3691 = vmatpush1.bf16.msra.mxu0 %v3058
    %3692 = vmatprep.subr.bf16.mxu0 %v3052
    %3693 = vmatpush1.bf16.msra.mxu0 %v3051
    %3694 = vmatprep.subr.bf16.mxu0 %v3045
    %3695 = vmatpush1.bf16.msra.mxu0 %v3044
    %3696 = vmatprep.subr.bf16.mxu0 %v3038
    %3697 = vmatpush1.bf16.msra.mxu0 %v3037
    %3698 = vmatprep.subr.bf16.mxu0 %v3031
    %3699 = vmatpush1.bf16.msra.mxu0 %v3030
    %3700 = vmatprep.subr.bf16.mxu0 %v3024
    %3701 = vmatpush1.bf16.msra.mxu0 %v3023
    %3702 = vmatprep.subr.bf16.mxu0 %v3017
    %3703 = vmatpush1.bf16.msra.mxu0 %v3016
    %3704 = vmatprep.subr.bf16.mxu0 %v3122
    %3705 = vmatpush2.bf16.msra.mxu0 %v3121
    %3706 = vmatprep.subr.bf16.mxu0 %v3115
    %3707 = vmatpush2.bf16.msra.mxu0 %v3114
    %3708 = vmatprep.subr.bf16.mxu0 %v3108
    %3709 = vmatpush2.bf16.msra.mxu0 %v3107
    %3710 = vmatprep.subr.bf16.mxu0 %v3101
    %3711 = vmatpush2.bf16.msra.mxu0 %v3100
    %3712 = vmatprep.subr.bf16.mxu0 %v3094
    %3713 = vmatpush2.bf16.msra.mxu0 %v3093
    %3714 = vmatprep.subr.bf16.mxu0 %v3087
    %3715 = vmatpush2.bf16.msra.mxu0 %v3086
    %3716 = vmatprep.subr.bf16.mxu0 %v3080
    %3717 = vmatpush2.bf16.msra.mxu0 %v3079
    %3718 = vmatprep.subr.bf16.mxu0 %v3073
    %3719 = vmatpush2.bf16.msra.mxu0 %v3072
    %3720 = vmatprep.mubr.bf16.mxu0 %v1534
    %3721 = vmatmul.mubr.bf16.gmra.mxu0 %v1533
    %v3722 = vpop.f32.mrf.mxu0
    %v3723 = vadd.f32 %v1928, %v3722
    %v3724 = vpop.f32.mrf.mxu0
    %v3725 = vadd.f32 %v1932, %v3724
    %v3726 = vpop.f32.mrf.mxu0
    %v3727 = vpop.f32.mrf.mxu0
    %3728 = vdwg.mxu0
    %3729 = vmatprep.subr.bf16.mxu0 %v3178
    %3730 = vmatpush1.bf16.msra.mxu0 %v3177
    %3731 = vmatprep.subr.bf16.mxu0 %v3171
    %3732 = vmatpush1.bf16.msra.mxu0 %v3170
    %3733 = vmatprep.subr.bf16.mxu0 %v3164
    %3734 = vmatpush1.bf16.msra.mxu0 %v3163
    %3735 = vmatprep.subr.bf16.mxu0 %v3157
    %3736 = vmatpush1.bf16.msra.mxu0 %v3156
    %3737 = vmatprep.subr.bf16.mxu0 %v3150
    %3738 = vmatpush1.bf16.msra.mxu0 %v3149
    %3739 = vmatprep.subr.bf16.mxu0 %v3143
    %3740 = vmatpush1.bf16.msra.mxu0 %v3142
    %3741 = vmatprep.subr.bf16.mxu0 %v3136
    %3742 = vmatpush1.bf16.msra.mxu0 %v3135
    %3743 = vmatprep.subr.bf16.mxu0 %v3129
    %3744 = vmatpush1.bf16.msra.mxu0 %v3128
    %3745 = vmatprep.subr.bf16.mxu0 %v3234
    %3746 = vmatpush2.bf16.msra.mxu0 %v3233
    %3747 = vmatprep.subr.bf16.mxu0 %v3227
    %3748 = vmatpush2.bf16.msra.mxu0 %v3226
    %3749 = vmatprep.subr.bf16.mxu0 %v3220
    %3750 = vmatpush2.bf16.msra.mxu0 %v3219
    %3751 = vmatprep.subr.bf16.mxu0 %v3213
    %3752 = vmatpush2.bf16.msra.mxu0 %v3212
    %3753 = vmatprep.subr.bf16.mxu0 %v3206
    %3754 = vmatpush2.bf16.msra.mxu0 %v3205
    %3755 = vmatprep.subr.bf16.mxu0 %v3199
    %3756 = vmatpush2.bf16.msra.mxu0 %v3198
    %3757 = vmatprep.subr.bf16.mxu0 %v3192
    %3758 = vmatpush2.bf16.msra.mxu0 %v3191
    %3759 = vmatprep.subr.bf16.mxu0 %v3185
    %3760 = vmatpush2.bf16.msra.mxu0 %v3184
    %3761 = vmatprep.mubr.bf16.mxu0 %v1536
    %3762 = vmatmul.mubr.bf16.gmra.mxu0 %v1535
    %v3763 = vpop.f32.mrf.mxu0
    %v3764 = vadd.f32 %v3723, %v3763
    %v3765 = vpop.f32.mrf.mxu0
    %v3766 = vadd.f32 %v3725, %v3765
    %v3767 = vpop.f32.mrf.mxu0
    %v3768 = vpop.f32.mrf.mxu0
    %3769 = vdwg.mxu0
    %3770 = vmatprep.subr.bf16.mxu0 %v3290
    %3771 = vmatpush1.bf16.msra.mxu0 %v3289
    %3772 = vmatprep.subr.bf16.mxu0 %v3283
    %3773 = vmatpush1.bf16.msra.mxu0 %v3282
    %3774 = vmatprep.subr.bf16.mxu0 %v3276
    %3775 = vmatpush1.bf16.msra.mxu0 %v3275
    %3776 = vmatprep.subr.bf16.mxu0 %v3269
    %3777 = vmatpush1.bf16.msra.mxu0 %v3268
    %3778 = vmatprep.subr.bf16.mxu0 %v3262
    %3779 = vmatpush1.bf16.msra.mxu0 %v3261
    %3780 = vmatprep.subr.bf16.mxu0 %v3255
    %3781 = vmatpush1.bf16.msra.mxu0 %v3254
    %3782 = vmatprep.subr.bf16.mxu0 %v3248
    %3783 = vmatpush1.bf16.msra.mxu0 %v3247
    %3784 = vmatprep.subr.bf16.mxu0 %v3241
    %3785 = vmatpush1.bf16.msra.mxu0 %v3240
    %3786 = vmatprep.subr.bf16.mxu0 %v3346
    %3787 = vmatpush2.bf16.msra.mxu0 %v3345
    %3788 = vmatprep.subr.bf16.mxu0 %v3339
    %3789 = vmatpush2.bf16.msra.mxu0 %v3338
    %3790 = vmatprep.subr.bf16.mxu0 %v3332
    %3791 = vmatpush2.bf16.msra.mxu0 %v3331
    %3792 = vmatprep.subr.bf16.mxu0 %v3325
    %3793 = vmatpush2.bf16.msra.mxu0 %v3324
    %3794 = vmatprep.subr.bf16.mxu0 %v3318
    %3795 = vmatpush2.bf16.msra.mxu0 %v3317
    %3796 = vmatprep.subr.bf16.mxu0 %v3311
    %3797 = vmatpush2.bf16.msra.mxu0 %v3310
    %3798 = vmatprep.subr.bf16.mxu0 %v3304
    %3799 = vmatpush2.bf16.msra.mxu0 %v3303
    %3800 = vmatprep.subr.bf16.mxu0 %v3297
    %3801 = vmatpush2.bf16.msra.mxu0 %v3296
    %3802 = vmatprep.mubr.bf16.mxu0 %v1538
    %3803 = vmatmul.mubr.bf16.gmra.mxu0 %v1537
    %v3804 = vpop.f32.mrf.mxu0
    %v3805 = vadd.f32 %v3764, %v3804
    %v3806 = vpop.f32.mrf.mxu0
    %v3807 = vadd.f32 %v3766, %v3806
    %v3808 = vpop.f32.mrf.mxu0
    %v3809 = vpop.f32.mrf.mxu0
    %3810 = vdwg.mxu0
    %3811 = vmatprep.subr.bf16.mxu0 %v3068
    %3812 = vmatpush1.bf16.msra.mxu0 %v3067
    %3813 = vmatprep.subr.bf16.mxu0 %v3061
    %3814 = vmatpush1.bf16.msra.mxu0 %v3060
    %3815 = vmatprep.subr.bf16.mxu0 %v3054
    %3816 = vmatpush1.bf16.msra.mxu0 %v3053
    %3817 = vmatprep.subr.bf16.mxu0 %v3047
    %3818 = vmatpush1.bf16.msra.mxu0 %v3046
    %3819 = vmatprep.subr.bf16.mxu0 %v3040
    %3820 = vmatpush1.bf16.msra.mxu0 %v3039
    %3821 = vmatprep.subr.bf16.mxu0 %v3033
    %3822 = vmatpush1.bf16.msra.mxu0 %v3032
    %3823 = vmatprep.subr.bf16.mxu0 %v3026
    %3824 = vmatpush1.bf16.msra.mxu0 %v3025
    %3825 = vmatprep.subr.bf16.mxu0 %v3019
    %3826 = vmatpush1.bf16.msra.mxu0 %v3018
    %3827 = vmatprep.subr.bf16.mxu0 %v3124
    %3828 = vmatpush2.bf16.msra.mxu0 %v3123
    %3829 = vmatprep.subr.bf16.mxu0 %v3117
    %3830 = vmatpush2.bf16.msra.mxu0 %v3116
    %3831 = vmatprep.subr.bf16.mxu0 %v3110
    %3832 = vmatpush2.bf16.msra.mxu0 %v3109
    %3833 = vmatprep.subr.bf16.mxu0 %v3103
    %3834 = vmatpush2.bf16.msra.mxu0 %v3102
    %3835 = vmatprep.subr.bf16.mxu0 %v3096
    %3836 = vmatpush2.bf16.msra.mxu0 %v3095
    %3837 = vmatprep.subr.bf16.mxu0 %v3089
    %3838 = vmatpush2.bf16.msra.mxu0 %v3088
    %3839 = vmatprep.subr.bf16.mxu0 %v3082
    %3840 = vmatpush2.bf16.msra.mxu0 %v3081
    %3841 = vmatprep.subr.bf16.mxu0 %v3075
    %3842 = vmatpush2.bf16.msra.mxu0 %v3074
    %3843 = vmatprep.mubr.bf16.mxu0 %v1534
    %3844 = vmatmul.mubr.bf16.gmra.mxu0 %v1533
    %v3845 = vpop.f32.mrf.mxu0
    %v3846 = vadd.f32 %v1936, %v3845
    %v3847 = vpop.f32.mrf.mxu0
    %v3848 = vadd.f32 %v1940, %v3847
    %v3849 = vpop.f32.mrf.mxu0
    %v3850 = vpop.f32.mrf.mxu0
    %3851 = vdwg.mxu0
    %3852 = vmatprep.subr.bf16.mxu0 %v3180
    %3853 = vmatpush1.bf16.msra.mxu0 %v3179
    %3854 = vmatprep.subr.bf16.mxu0 %v3173
    %3855 = vmatpush1.bf16.msra.mxu0 %v3172
    %3856 = vmatprep.subr.bf16.mxu0 %v3166
    %3857 = vmatpush1.bf16.msra.mxu0 %v3165
    %3858 = vmatprep.subr.bf16.mxu0 %v3159
    %3859 = vmatpush1.bf16.msra.mxu0 %v3158
    %3860 = vmatprep.subr.bf16.mxu0 %v3152
    %3861 = vmatpush1.bf16.msra.mxu0 %v3151
    %3862 = vmatprep.subr.bf16.mxu0 %v3145
    %3863 = vmatpush1.bf16.msra.mxu0 %v3144
    %3864 = vmatprep.subr.bf16.mxu0 %v3138
    %3865 = vmatpush1.bf16.msra.mxu0 %v3137
    %3866 = vmatprep.subr.bf16.mxu0 %v3131
    %3867 = vmatpush1.bf16.msra.mxu0 %v3130
    %3868 = vmatprep.subr.bf16.mxu0 %v3236
    %3869 = vmatpush2.bf16.msra.mxu0 %v3235
    %3870 = vmatprep.subr.bf16.mxu0 %v3229
    %3871 = vmatpush2.bf16.msra.mxu0 %v3228
    %3872 = vmatprep.subr.bf16.mxu0 %v3222
    %3873 = vmatpush2.bf16.msra.mxu0 %v3221
    %3874 = vmatprep.subr.bf16.mxu0 %v3215
    %3875 = vmatpush2.bf16.msra.mxu0 %v3214
    %3876 = vmatprep.subr.bf16.mxu0 %v3208
    %3877 = vmatpush2.bf16.msra.mxu0 %v3207
    %3878 = vmatprep.subr.bf16.mxu0 %v3201
    %3879 = vmatpush2.bf16.msra.mxu0 %v3200
    %3880 = vmatprep.subr.bf16.mxu0 %v3194
    %3881 = vmatpush2.bf16.msra.mxu0 %v3193
    %3882 = vmatprep.subr.bf16.mxu0 %v3187
    %3883 = vmatpush2.bf16.msra.mxu0 %v3186
    %3884 = vmatprep.mubr.bf16.mxu0 %v1536
    %3885 = vmatmul.mubr.bf16.gmra.mxu0 %v1535
    %v3886 = vpop.f32.mrf.mxu0
    %v3887 = vadd.f32 %v3846, %v3886
    %v3888 = vpop.f32.mrf.mxu0
    %v3889 = vadd.f32 %v3848, %v3888
    %v3890 = vpop.f32.mrf.mxu0
    %v3891 = vpop.f32.mrf.mxu0
    %3892 = vdwg.mxu0
    %3893 = vmatprep.subr.bf16.mxu0 %v3292
    %3894 = vmatpush1.bf16.msra.mxu0 %v3291
    %3895 = vmatprep.subr.bf16.mxu0 %v3285
    %3896 = vmatpush1.bf16.msra.mxu0 %v3284
    %3897 = vmatprep.subr.bf16.mxu0 %v3278
    %3898 = vmatpush1.bf16.msra.mxu0 %v3277
    %3899 = vmatprep.subr.bf16.mxu0 %v3271
    %3900 = vmatpush1.bf16.msra.mxu0 %v3270
    %3901 = vmatprep.subr.bf16.mxu0 %v3264
    %3902 = vmatpush1.bf16.msra.mxu0 %v3263
    %3903 = vmatprep.subr.bf16.mxu0 %v3257
    %3904 = vmatpush1.bf16.msra.mxu0 %v3256
    %3905 = vmatprep.subr.bf16.mxu0 %v3250
    %3906 = vmatpush1.bf16.msra.mxu0 %v3249
    %3907 = vmatprep.subr.bf16.mxu0 %v3243
    %3908 = vmatpush1.bf16.msra.mxu0 %v3242
    %3909 = vmatprep.subr.bf16.mxu0 %v3348
    %3910 = vmatpush2.bf16.msra.mxu0 %v3347
    %3911 = vmatprep.subr.bf16.mxu0 %v3341
    %3912 = vmatpush2.bf16.msra.mxu0 %v3340
    %3913 = vmatprep.subr.bf16.mxu0 %v3334
    %3914 = vmatpush2.bf16.msra.mxu0 %v3333
    %3915 = vmatprep.subr.bf16.mxu0 %v3327
    %3916 = vmatpush2.bf16.msra.mxu0 %v3326
    %3917 = vmatprep.subr.bf16.mxu0 %v3320
    %3918 = vmatpush2.bf16.msra.mxu0 %v3319
    %3919 = vmatprep.subr.bf16.mxu0 %v3313
    %3920 = vmatpush2.bf16.msra.mxu0 %v3312
    %3921 = vmatprep.subr.bf16.mxu0 %v3306
    %3922 = vmatpush2.bf16.msra.mxu0 %v3305
    %3923 = vmatprep.subr.bf16.mxu0 %v3299
    %3924 = vmatpush2.bf16.msra.mxu0 %v3298
    %3925 = vmatprep.mubr.bf16.mxu0 %v1538
    %3926 = vmatmul.mubr.bf16.gmra.mxu0 %v1537
    %v3927 = vpop.f32.mrf.mxu0
    %v3928 = vadd.f32 %v3887, %v3927
    %v3929 = vpop.f32.mrf.mxu0
    %v3930 = vadd.f32 %v3889, %v3929
    %v3931 = vpop.f32.mrf.mxu0
    %v3932 = vpop.f32.mrf.mxu0
    %3933 = vdwg.mxu0
    %3934 = vmatprep.subr.bf16.mxu0 %v3070
    %3935 = vmatpush1.bf16.msra.mxu0 %v3069
    %3936 = vmatprep.subr.bf16.mxu0 %v3063
    %3937 = vmatpush1.bf16.msra.mxu0 %v3062
    %3938 = vmatprep.subr.bf16.mxu0 %v3056
    %3939 = vmatpush1.bf16.msra.mxu0 %v3055
    %3940 = vmatprep.subr.bf16.mxu0 %v3049
    %3941 = vmatpush1.bf16.msra.mxu0 %v3048
    %3942 = vmatprep.subr.bf16.mxu0 %v3042
    %3943 = vmatpush1.bf16.msra.mxu0 %v3041
    %3944 = vmatprep.subr.bf16.mxu0 %v3035
    %3945 = vmatpush1.bf16.msra.mxu0 %v3034
    %3946 = vmatprep.subr.bf16.mxu0 %v3028
    %3947 = vmatpush1.bf16.msra.mxu0 %v3027
    %3948 = vmatprep.subr.bf16.mxu0 %v3021
    %3949 = vmatpush1.bf16.msra.mxu0 %v3020
    %3950 = vmatprep.subr.bf16.mxu0 %v3126
    %3951 = vmatpush2.bf16.msra.mxu0 %v3125
    %3952 = vmatprep.subr.bf16.mxu0 %v3119
    %3953 = vmatpush2.bf16.msra.mxu0 %v3118
    %3954 = vmatprep.subr.bf16.mxu0 %v3112
    %3955 = vmatpush2.bf16.msra.mxu0 %v3111
    %3956 = vmatprep.subr.bf16.mxu0 %v3105
    %3957 = vmatpush2.bf16.msra.mxu0 %v3104
    %3958 = vmatprep.subr.bf16.mxu0 %v3098
    %3959 = vmatpush2.bf16.msra.mxu0 %v3097
    %3960 = vmatprep.subr.bf16.mxu0 %v3091
    %3961 = vmatpush2.bf16.msra.mxu0 %v3090
    %3962 = vmatprep.subr.bf16.mxu0 %v3084
    %3963 = vmatpush2.bf16.msra.mxu0 %v3083
    %3964 = vmatprep.subr.bf16.mxu0 %v3077
    %3965 = vmatpush2.bf16.msra.mxu0 %v3076
    %3966 = vmatprep.mubr.bf16.mxu0 %v1534
    %3967 = vmatmul.mubr.bf16.gmra.mxu0 %v1533
    %v3968 = vpop.f32.mrf.mxu0
    %v3969 = vadd.f32 %v1944, %v3968
    %v3970 = vpop.f32.mrf.mxu0
    %v3971 = vadd.f32 %v1948, %v3970
    %v3972 = vpop.f32.mrf.mxu0
    %v3973 = vpop.f32.mrf.mxu0
    %3974 = vdwg.mxu0
    %3975 = vmatprep.subr.bf16.mxu0 %v3182
    %3976 = vmatpush1.bf16.msra.mxu0 %v3181
    %3977 = vmatprep.subr.bf16.mxu0 %v3175
    %3978 = vmatpush1.bf16.msra.mxu0 %v3174
    %3979 = vmatprep.subr.bf16.mxu0 %v3168
    %3980 = vmatpush1.bf16.msra.mxu0 %v3167
    %3981 = vmatprep.subr.bf16.mxu0 %v3161
    %3982 = vmatpush1.bf16.msra.mxu0 %v3160
    %3983 = vmatprep.subr.bf16.mxu0 %v3154
    %3984 = vmatpush1.bf16.msra.mxu0 %v3153
    %3985 = vmatprep.subr.bf16.mxu0 %v3147
    %3986 = vmatpush1.bf16.msra.mxu0 %v3146
    %3987 = vmatprep.subr.bf16.mxu0 %v3140
    %3988 = vmatpush1.bf16.msra.mxu0 %v3139
    %3989 = vmatprep.subr.bf16.mxu0 %v3133
    %3990 = vmatpush1.bf16.msra.mxu0 %v3132
    %3991 = vmatprep.subr.bf16.mxu0 %v3238
    %3992 = vmatpush2.bf16.msra.mxu0 %v3237
    %3993 = vmatprep.subr.bf16.mxu0 %v3231
    %3994 = vmatpush2.bf16.msra.mxu0 %v3230
    %3995 = vmatprep.subr.bf16.mxu0 %v3224
    %3996 = vmatpush2.bf16.msra.mxu0 %v3223
    %3997 = vmatprep.subr.bf16.mxu0 %v3217
    %3998 = vmatpush2.bf16.msra.mxu0 %v3216
    %3999 = vmatprep.subr.bf16.mxu0 %v3210
    %4000 = vmatpush2.bf16.msra.mxu0 %v3209
    %4001 = vmatprep.subr.bf16.mxu0 %v3203
    %4002 = vmatpush2.bf16.msra.mxu0 %v3202
    %4003 = vmatprep.subr.bf16.mxu0 %v3196
    %4004 = vmatpush2.bf16.msra.mxu0 %v3195
    %4005 = vmatprep.subr.bf16.mxu0 %v3189
    %4006 = vmatpush2.bf16.msra.mxu0 %v3188
    %4007 = vmatprep.mubr.bf16.mxu0 %v1536
    %4008 = vmatmul.mubr.bf16.gmra.mxu0 %v1535
    %v4009 = vpop.f32.mrf.mxu0
    %v4010 = vadd.f32 %v3969, %v4009
    %v4011 = vpop.f32.mrf.mxu0
    %v4012 = vadd.f32 %v3971, %v4011
    %v4013 = vpop.f32.mrf.mxu0
    %v4014 = vpop.f32.mrf.mxu0
    %4015 = vdwg.mxu0
    %4016 = vmatprep.subr.bf16.mxu0 %v3294
    %4017 = vmatpush1.bf16.msra.mxu0 %v3293
    %4018 = vmatprep.subr.bf16.mxu0 %v3287
    %4019 = vmatpush1.bf16.msra.mxu0 %v3286
    %4020 = vmatprep.subr.bf16.mxu0 %v3280
    %4021 = vmatpush1.bf16.msra.mxu0 %v3279
    %4022 = vmatprep.subr.bf16.mxu0 %v3273
    %4023 = vmatpush1.bf16.msra.mxu0 %v3272
    %4024 = vmatprep.subr.bf16.mxu0 %v3266
    %4025 = vmatpush1.bf16.msra.mxu0 %v3265
    %4026 = vmatprep.subr.bf16.mxu0 %v3259
    %4027 = vmatpush1.bf16.msra.mxu0 %v3258
    %4028 = vmatprep.subr.bf16.mxu0 %v3252
    %4029 = vmatpush1.bf16.msra.mxu0 %v3251
    %4030 = vmatprep.subr.bf16.mxu0 %v3245
    %4031 = vmatpush1.bf16.msra.mxu0 %v3244
    %4032 = vmatprep.subr.bf16.mxu0 %v3350
    %4033 = vmatpush2.bf16.msra.mxu0 %v3349
    %4034 = vmatprep.subr.bf16.mxu0 %v3343
    %4035 = vmatpush2.bf16.msra.mxu0 %v3342
    %4036 = vmatprep.subr.bf16.mxu0 %v3336
    %4037 = vmatpush2.bf16.msra.mxu0 %v3335
    %4038 = vmatprep.subr.bf16.mxu0 %v3329
    %4039 = vmatpush2.bf16.msra.mxu0 %v3328
    %4040 = vmatprep.subr.bf16.mxu0 %v3322
    %4041 = vmatpush2.bf16.msra.mxu0 %v3321
    %4042 = vmatprep.subr.bf16.mxu0 %v3315
    %4043 = vmatpush2.bf16.msra.mxu0 %v3314
    %4044 = vmatprep.subr.bf16.mxu0 %v3308
    %4045 = vmatpush2.bf16.msra.mxu0 %v3307
    %4046 = vmatprep.subr.bf16.mxu0 %v3301
    %4047 = vmatpush2.bf16.msra.mxu0 %v3300
    %4048 = vmatprep.mubr.bf16.mxu0 %v1538
    %4049 = vmatmul.mubr.bf16.gmra.mxu0 %v1537
    %v4050 = vpop.f32.mrf.mxu0
    %v4051 = vadd.f32 %v4010, %v4050
    %v4052 = vpop.f32.mrf.mxu0
    %v4053 = vadd.f32 %v4012, %v4052
    %v4054 = vpop.f32.mrf.mxu0
    %v4055 = vpop.f32.mrf.mxu0
    %4056 = vdwg.mxu0
    %4057 = vmatprep.subr.bf16.mxu0 0
    %4058 = vmatpush1.bf16.msra.mxu0 %v3071
    %4059 = vmatprep.subr.bf16.mxu0 0
    %4060 = vmatpush1.bf16.msra.mxu0 %v3064
    %4061 = vmatprep.subr.bf16.mxu0 0
    %4062 = vmatpush1.bf16.msra.mxu0 %v3057
    %4063 = vmatprep.subr.bf16.mxu0 0
    %4064 = vmatpush1.bf16.msra.mxu0 %v3050
    %4065 = vmatprep.subr.bf16.mxu0 0
    %4066 = vmatpush1.bf16.msra.mxu0 %v3043
    %4067 = vmatprep.subr.bf16.mxu0 0
    %4068 = vmatpush1.bf16.msra.mxu0 %v3036
    %4069 = vmatprep.subr.bf16.mxu0 0
    %4070 = vmatpush1.bf16.msra.mxu0 %v3029
    %4071 = vmatprep.subr.bf16.mxu0 0
    %4072 = vmatpush1.bf16.msra.mxu0 %v3022
    %4073 = vmatprep.subr.bf16.mxu0 0
    %4074 = vmatpush2.bf16.msra.mxu0 %v3127
    %4075 = vmatprep.subr.bf16.mxu0 0
    %4076 = vmatpush2.bf16.msra.mxu0 %v3120
    %4077 = vmatprep.subr.bf16.mxu0 0
    %4078 = vmatpush2.bf16.msra.mxu0 %v3113
    %4079 = vmatprep.subr.bf16.mxu0 0
    %4080 = vmatpush2.bf16.msra.mxu0 %v3106
    %4081 = vmatprep.subr.bf16.mxu0 0
    %4082 = vmatpush2.bf16.msra.mxu0 %v3099
    %4083 = vmatprep.subr.bf16.mxu0 0
    %4084 = vmatpush2.bf16.msra.mxu0 %v3092
    %4085 = vmatprep.subr.bf16.mxu0 0
    %4086 = vmatpush2.bf16.msra.mxu0 %v3085
    %4087 = vmatprep.subr.bf16.mxu0 0
    %4088 = vmatpush2.bf16.msra.mxu0 %v3078
    %4089 = vmatprep.mubr.bf16.mxu0 %v1534
    %4090 = vmatmul.mubr.bf16.gmra.mxu0 %v1533
    %v4091 = vpop.f32.mrf.mxu0
    %v4092 = vadd.f32 %v1952, %v4091
    %v4093 = vpop.f32.mrf.mxu0
    %v4094 = vpop.f32.mrf.mxu0
    %v4095 = vpop.f32.mrf.mxu0
    %4096 = vdwg.mxu0
    %4097 = vmatprep.subr.bf16.mxu0 0
    %4098 = vmatpush1.bf16.msra.mxu0 %v3183
    %4099 = vmatprep.subr.bf16.mxu0 0
    %4100 = vmatpush1.bf16.msra.mxu0 %v3176
    %4101 = vmatprep.subr.bf16.mxu0 0
    %4102 = vmatpush1.bf16.msra.mxu0 %v3169
    %4103 = vmatprep.subr.bf16.mxu0 0
    %4104 = vmatpush1.bf16.msra.mxu0 %v3162
    %4105 = vmatprep.subr.bf16.mxu0 0
    %4106 = vmatpush1.bf16.msra.mxu0 %v3155
    %4107 = vmatprep.subr.bf16.mxu0 0
    %4108 = vmatpush1.bf16.msra.mxu0 %v3148
    %4109 = vmatprep.subr.bf16.mxu0 0
    %4110 = vmatpush1.bf16.msra.mxu0 %v3141
    %4111 = vmatprep.subr.bf16.mxu0 0
    %4112 = vmatpush1.bf16.msra.mxu0 %v3134
    %4113 = vmatprep.subr.bf16.mxu0 0
    %4114 = vmatpush2.bf16.msra.mxu0 %v3239
    %4115 = vmatprep.subr.bf16.mxu0 0
    %4116 = vmatpush2.bf16.msra.mxu0 %v3232
    %4117 = vmatprep.subr.bf16.mxu0 0
    %4118 = vmatpush2.bf16.msra.mxu0 %v3225
    %4119 = vmatprep.subr.bf16.mxu0 0
    %4120 = vmatpush2.bf16.msra.mxu0 %v3218
    %4121 = vmatprep.subr.bf16.mxu0 0
    %4122 = vmatpush2.bf16.msra.mxu0 %v3211
    %4123 = vmatprep.subr.bf16.mxu0 0
    %4124 = vmatpush2.bf16.msra.mxu0 %v3204
    %4125 = vmatprep.subr.bf16.mxu0 0
    %4126 = vmatpush2.bf16.msra.mxu0 %v3197
    %4127 = vmatprep.subr.bf16.mxu0 0
    %4128 = vmatpush2.bf16.msra.mxu0 %v3190
    %4129 = vmatprep.mubr.bf16.mxu0 %v1536
    %4130 = vmatmul.mubr.bf16.gmra.mxu0 %v1535
    %v4131 = vpop.f32.mrf.mxu0
    %v4132 = vadd.f32 %v4092, %v4131
    %v4133 = vpop.f32.mrf.mxu0
    %v4134 = vpop.f32.mrf.mxu0
    %v4135 = vpop.f32.mrf.mxu0
    %4136 = vdwg.mxu0
    %4137 = vmatprep.subr.bf16.mxu0 0
    %4138 = vmatpush1.bf16.msra.mxu0 %v3295
    %4139 = vmatprep.subr.bf16.mxu0 0
    %4140 = vmatpush1.bf16.msra.mxu0 %v3288
    %4141 = vmatprep.subr.bf16.mxu0 0
    %4142 = vmatpush1.bf16.msra.mxu0 %v3281
    %4143 = vmatprep.subr.bf16.mxu0 0
    %4144 = vmatpush1.bf16.msra.mxu0 %v3274
    %4145 = vmatprep.subr.bf16.mxu0 0
    %4146 = vmatpush1.bf16.msra.mxu0 %v3267
    %4147 = vmatprep.subr.bf16.mxu0 0
    %4148 = vmatpush1.bf16.msra.mxu0 %v3260
    %4149 = vmatprep.subr.bf16.mxu0 0
    %4150 = vmatpush1.bf16.msra.mxu0 %v3253
    %4151 = vmatprep.subr.bf16.mxu0 0
    %4152 = vmatpush1.bf16.msra.mxu0 %v3246
    %4153 = vmatprep.subr.bf16.mxu0 0
    %4154 = vmatpush2.bf16.msra.mxu0 %v3351
    %4155 = vmatprep.subr.bf16.mxu0 0
    %4156 = vmatpush2.bf16.msra.mxu0 %v3344
    %4157 = vmatprep.subr.bf16.mxu0 0
    %4158 = vmatpush2.bf16.msra.mxu0 %v3337
    %4159 = vmatprep.subr.bf16.mxu0 0
    %4160 = vmatpush2.bf16.msra.mxu0 %v3330
    %4161 = vmatprep.subr.bf16.mxu0 0
    %4162 = vmatpush2.bf16.msra.mxu0 %v3323
    %4163 = vmatprep.subr.bf16.mxu0 0
    %4164 = vmatpush2.bf16.msra.mxu0 %v3316
    %4165 = vmatprep.subr.bf16.mxu0 0
    %4166 = vmatpush2.bf16.msra.mxu0 %v3309
    %4167 = vmatprep.subr.bf16.mxu0 0
    %4168 = vmatpush2.bf16.msra.mxu0 %v3302
    %4169 = vmatprep.mubr.bf16.mxu0 %v1538
    %4170 = vmatmul.mubr.bf16.gmra.mxu0 %v1537
    %v4171 = vpop.f32.mrf.mxu0
    %v4172 = vadd.f32 %v4132, %v4171
    %v4173 = vpop.f32.mrf.mxu0
    %v4174 = vpop.f32.mrf.mxu0
    %v4175 = vpop.f32.mrf.mxu0
    %4176 = vdwg.mxu0
    %v4177 = vmax.f32 %v3805, 0.0
    %v4178 = vmax.f32 %v3807, 0.0
    %v4179 = vmax.f32 %v3928, 0.0
    %v4180 = vmax.f32 %v3930, 0.0
    %v4181 = vmax.f32 %v4051, 0.0
    %v4182 = vmax.f32 %v4053, 0.0
    %v4183 = vmax.f32 %v4172, 0.0
    %v4184 = vpack.c.bf16 %v4177, %v4177
    %v4185 = vpack.c.bf16 %v4178, %v4178
    %v4186 = vpack.c.bf16 %v4179, %v4179
    %v4187 = vpack.c.bf16 %v4180, %v4180
    %v4188 = vpack.c.bf16 %v4181, %v4181
    %v4189 = vpack.c.bf16 %v4182, %v4182
    %v4190 = vpack.c.bf16 %v4183, %v4183
    %v4191 = vld [vmem:[#allocation7] sm:$0xff]
    %v4192 = vld [vmem:[#allocation7 + $0x8] sm:$0xff]
    %v4193 = vld [vmem:[#allocation7 + $0x10] sm:$0xff]
    %v4194 = vld [vmem:[#allocation7 + $0x18] sm:$0xff]
    %v4195 = vld [vmem:[#allocation7 + $0x20] sm:$0xff]
    %v4196 = vld [vmem:[#allocation7 + $0x28] sm:$0xff]
    %v4197 = vld [vmem:[#allocation7 + $0x30] sm:$0xff]
    %v4198 = vld [vmem:[#allocation7 + $0x38] sm:$0xff]
    %v4199 = vld [vmem:[#allocation7 + $0x40] sm:$0xff]
    %v4200 = vld [vmem:[#allocation7 + $0x48] sm:$0xff]
    %v4201 = vld [vmem:[#allocation7 + $0x50] sm:$0xff]
    %v4202 = vld [vmem:[#allocation7 + $0x58] sm:$0xff]
    %v4203 = vld [vmem:[#allocation7 + $0x60] sm:$0xff]
    %v4204 = vld [vmem:[#allocation7 + $0x68] sm:$0xff]
    %v4205 = vld [vmem:[#allocation7 + $0x70] sm:$0xff]
    %v4206 = vld [vmem:[#allocation7 + $0x78] sm:$0xff]
    %v4207 = vld [vmem:[#allocation7 + $0x80] sm:$0xff]
    %v4208 = vld [vmem:[#allocation7 + $0x88] sm:$0xff]
    %v4209 = vld [vmem:[#allocation7 + $0x90] sm:$0xff]
    %v4210 = vld [vmem:[#allocation7 + $0x98] sm:$0xff]
    %v4211 = vld [vmem:[#allocation7 + $0xa0] sm:$0xff]
    %v4212 = vld [vmem:[#allocation7 + $0xa8] sm:$0xff]
    %v4213 = vld [vmem:[#allocation7 + $0xb0] sm:$0xff]
    %v4214 = vld [vmem:[#allocation7 + $0xb8] sm:$0xff]
    %v4215 = vld [vmem:[#allocation7 + $0xc0] sm:$0xff]
    %v4216 = vld [vmem:[#allocation7 + $0xc8] sm:$0xff]
    %v4217 = vld [vmem:[#allocation7 + $0xd0] sm:$0xff]
    %v4218 = vld [vmem:[#allocation7 + $0xd8] sm:$0xff]
    %v4219 = vld [vmem:[#allocation7 + $0xe0] sm:$0xff]
    %v4220 = vld [vmem:[#allocation7 + $0xe8] sm:$0xff]
    %v4221 = vld [vmem:[#allocation7 + $0xf0] sm:$0xff]
    %v4222 = vld [vmem:[#allocation7 + $0xf8] sm:$0xff]
    %v4223 = vld [vmem:[#allocation7 + $0x100] sm:$0xff]
    %v4224 = vld [vmem:[#allocation7 + $0x108] sm:$0xff]
    %v4225 = vld [vmem:[#allocation7 + $0x110] sm:$0xff]
    %v4226 = vld [vmem:[#allocation7 + $0x118] sm:$0xff]
    %v4227 = vld [vmem:[#allocation7 + $0x120] sm:$0xff]
    %v4228 = vld [vmem:[#allocation7 + $0x128] sm:$0xff]
    %v4229 = vld [vmem:[#allocation7 + $0x130] sm:$0xff]
    %v4230 = vld [vmem:[#allocation7 + $0x138] sm:$0xff]
    %v4231 = vld [vmem:[#allocation7 + $0x140] sm:$0xff]
    %v4232 = vld [vmem:[#allocation7 + $0x148] sm:$0xff]
    %v4233 = vld [vmem:[#allocation7 + $0x150] sm:$0xff]
    %v4234 = vld [vmem:[#allocation7 + $0x158] sm:$0xff]
    %v4235 = vld [vmem:[#allocation7 + $0x160] sm:$0xff]
    %v4236 = vld [vmem:[#allocation7 + $0x168] sm:$0xff]
    %v4237 = vld [vmem:[#allocation7 + $0x170] sm:$0xff]
    %v4238 = vld [vmem:[#allocation7 + $0x178] sm:$0xff]
    %v4239 = vld [vmem:[#allocation7 + $0x180] sm:$0xff]
    %v4240 = vld [vmem:[#allocation7 + $0x188] sm:$0xff]
    %v4241 = vld [vmem:[#allocation7 + $0x190] sm:$0xff]
    %v4242 = vld [vmem:[#allocation7 + $0x198] sm:$0xff]
    %v4243 = vld [vmem:[#allocation7 + $0x1a0] sm:$0xff]
    %v4244 = vld [vmem:[#allocation7 + $0x1a8] sm:$0xff]
    %v4245 = vld [vmem:[#allocation7 + $0x1b0] sm:$0xff]
    %v4246 = vld [vmem:[#allocation7 + $0x1b8] sm:$0xff]
    %v4247 = vld [vmem:[#allocation7 + $0x1c0] sm:$0xff]
    %v4248 = vld [vmem:[#allocation7 + $0x1c8] sm:$0xff]
    %v4249 = vld [vmem:[#allocation7 + $0x1d0] sm:$0xff]
    %v4250 = vld [vmem:[#allocation7 + $0x1d8] sm:$0xff]
    %v4251 = vld [vmem:[#allocation7 + $0x1e0] sm:$0xff]
    %v4252 = vld [vmem:[#allocation7 + $0x1e8] sm:$0xff]
    %v4253 = vld [vmem:[#allocation7 + $0x1f0] sm:$0xff]
    %v4254 = vld [vmem:[#allocation7 + $0x1f8] sm:$0xff]
    %v4255 = vld [vmem:[#allocation7 + $0x200] sm:$0xff]
    %v4256 = vld [vmem:[#allocation7 + $0x208] sm:$0xff]
    %v4257 = vld [vmem:[#allocation7 + $0x210] sm:$0xff]
    %v4258 = vld [vmem:[#allocation7 + $0x218] sm:$0xff]
    %v4259 = vld [vmem:[#allocation7 + $0x220] sm:$0xff]
    %v4260 = vld [vmem:[#allocation7 + $0x228] sm:$0xff]
    %v4261 = vld [vmem:[#allocation7 + $0x230] sm:$0xff]
    %v4262 = vld [vmem:[#allocation7 + $0x238] sm:$0xff]
    %v4263 = vld [vmem:[#allocation7 + $0x240] sm:$0xff]
    %v4264 = vld [vmem:[#allocation7 + $0x248] sm:$0xff]
    %v4265 = vld [vmem:[#allocation7 + $0x250] sm:$0xff]
    %v4266 = vld [vmem:[#allocation7 + $0x258] sm:$0xff]
    %v4267 = vld [vmem:[#allocation7 + $0x260] sm:$0xff]
    %v4268 = vld [vmem:[#allocation7 + $0x268] sm:$0xff]
    %v4269 = vld [vmem:[#allocation7 + $0x270] sm:$0xff]
    %v4270 = vld [vmem:[#allocation7 + $0x278] sm:$0xff]
    %v4271 = vld [vmem:[#allocation7 + $0x280] sm:$0xff]
    %v4272 = vld [vmem:[#allocation7 + $0x288] sm:$0xff]
    %v4273 = vld [vmem:[#allocation7 + $0x290] sm:$0xff]
    %v4274 = vld [vmem:[#allocation7 + $0x298] sm:$0xff]
    %v4275 = vld [vmem:[#allocation7 + $0x2a0] sm:$0xff]
    %v4276 = vld [vmem:[#allocation7 + $0x2a8] sm:$0xff]
    %v4277 = vld [vmem:[#allocation7 + $0x2b0] sm:$0xff]
    %v4278 = vld [vmem:[#allocation7 + $0x2b8] sm:$0xff]
    %v4279 = vld [vmem:[#allocation7 + $0x2c0] sm:$0xff]
    %v4280 = vld [vmem:[#allocation7 + $0x2c8] sm:$0xff]
    %v4281 = vld [vmem:[#allocation7 + $0x2d0] sm:$0xff]
    %v4282 = vld [vmem:[#allocation7 + $0x2d8] sm:$0xff]
    %v4283 = vld [vmem:[#allocation7 + $0x2e0] sm:$0xff]
    %v4284 = vld [vmem:[#allocation7 + $0x2e8] sm:$0xff]
    %v4285 = vld [vmem:[#allocation7 + $0x2f0] sm:$0xff]
    %v4286 = vld [vmem:[#allocation7 + $0x2f8] sm:$0xff]
    %v4287 = vld [vmem:[#allocation7 + $0x300] sm:$0xff]
    %v4288 = vld [vmem:[#allocation7 + $0x308] sm:$0xff]
    %v4289 = vld [vmem:[#allocation7 + $0x310] sm:$0xff]
    %v4290 = vld [vmem:[#allocation7 + $0x318] sm:$0xff]
    %v4291 = vld [vmem:[#allocation7 + $0x320] sm:$0xff]
    %v4292 = vld [vmem:[#allocation7 + $0x328] sm:$0xff]
    %v4293 = vld [vmem:[#allocation7 + $0x330] sm:$0xff]
    %v4294 = vld [vmem:[#allocation7 + $0x338] sm:$0xff]
    %v4295 = vld [vmem:[#allocation7 + $0x340] sm:$0xff]
    %v4296 = vld [vmem:[#allocation7 + $0x348] sm:$0xff]
    %v4297 = vld [vmem:[#allocation7 + $0x350] sm:$0xff]
    %v4298 = vld [vmem:[#allocation7 + $0x358] sm:$0xff]
    %v4299 = vld [vmem:[#allocation7 + $0x360] sm:$0xff]
    %v4300 = vld [vmem:[#allocation7 + $0x368] sm:$0xff]
    %v4301 = vld [vmem:[#allocation7 + $0x370] sm:$0xff]
    %v4302 = vld [vmem:[#allocation7 + $0x378] sm:$0xff]
    %v4303 = vld [vmem:[#allocation7 + $0x380] sm:$0xff]
    %v4304 = vld [vmem:[#allocation7 + $0x388] sm:$0xff]
    %v4305 = vld [vmem:[#allocation7 + $0x390] sm:$0xff]
    %v4306 = vld [vmem:[#allocation7 + $0x398] sm:$0xff]
    %v4307 = vld [vmem:[#allocation7 + $0x3a0] sm:$0xff]
    %v4308 = vld [vmem:[#allocation7 + $0x3a8] sm:$0xff]
    %v4309 = vld [vmem:[#allocation7 + $0x3b0] sm:$0xff]
    %v4310 = vld [vmem:[#allocation7 + $0x3b8] sm:$0xff]
    %v4311 = vld [vmem:[#allocation7 + $0x3c0] sm:$0xff]
    %v4312 = vld [vmem:[#allocation7 + $0x3c8] sm:$0xff]
    %v4313 = vld [vmem:[#allocation7 + $0x3d0] sm:$0xff]
    %v4314 = vld [vmem:[#allocation7 + $0x3d8] sm:$0xff]
    %v4315 = vld [vmem:[#allocation7 + $0x3e0] sm:$0xff]
    %v4316 = vld [vmem:[#allocation7 + $0x3e8] sm:$0xff]
    %v4317 = vld [vmem:[#allocation7 + $0x3f0] sm:$0xff]
    %v4318 = vld [vmem:[#allocation7 + $0x3f8] sm:$0xff]
    %v4319 = vld [vmem:[#allocation7 + $0x400] sm:$0xff]
    %v4320 = vld [vmem:[#allocation7 + $0x408] sm:$0xff]
    %v4321 = vld [vmem:[#allocation7 + $0x410] sm:$0xff]
    %v4322 = vld [vmem:[#allocation7 + $0x418] sm:$0xff]
    %v4323 = vld [vmem:[#allocation7 + $0x420] sm:$0xff]
    %v4324 = vld [vmem:[#allocation7 + $0x428] sm:$0xff]
    %v4325 = vld [vmem:[#allocation7 + $0x430] sm:$0xff]
    %v4326 = vld [vmem:[#allocation7 + $0x438] sm:$0xff]
    %v4327 = vld [vmem:[#allocation7 + $0x440] sm:$0xff]
    %v4328 = vld [vmem:[#allocation7 + $0x448] sm:$0xff]
    %v4329 = vld [vmem:[#allocation7 + $0x450] sm:$0xff]
    %v4330 = vld [vmem:[#allocation7 + $0x458] sm:$0xff]
    %v4331 = vld [vmem:[#allocation7 + $0x460] sm:$0xff]
    %v4332 = vld [vmem:[#allocation7 + $0x468] sm:$0xff]
    %v4333 = vld [vmem:[#allocation7 + $0x470] sm:$0xff]
    %v4334 = vld [vmem:[#allocation7 + $0x478] sm:$0xff]
    %v4335 = vld [vmem:[#allocation7 + $0x480] sm:$0xff]
    %v4336 = vld [vmem:[#allocation7 + $0x488] sm:$0xff]
    %v4337 = vld [vmem:[#allocation7 + $0x490] sm:$0xff]
    %v4338 = vld [vmem:[#allocation7 + $0x498] sm:$0xff]
    %v4339 = vld [vmem:[#allocation7 + $0x4a0] sm:$0xff]
    %v4340 = vld [vmem:[#allocation7 + $0x4a8] sm:$0xff]
    %v4341 = vld [vmem:[#allocation7 + $0x4b0] sm:$0xff]
    %v4342 = vld [vmem:[#allocation7 + $0x4b8] sm:$0xff]
    %v4343 = vld [vmem:[#allocation7 + $0x4c0] sm:$0xff]
    %v4344 = vld [vmem:[#allocation7 + $0x4c8] sm:$0xff]
    %v4345 = vld [vmem:[#allocation7 + $0x4d0] sm:$0xff]
    %v4346 = vld [vmem:[#allocation7 + $0x4d8] sm:$0xff]
    %v4347 = vld [vmem:[#allocation7 + $0x4e0] sm:$0xff]
    %v4348 = vld [vmem:[#allocation7 + $0x4e8] sm:$0xff]
    %v4349 = vld [vmem:[#allocation7 + $0x4f0] sm:$0xff]
    %v4350 = vld [vmem:[#allocation7 + $0x4f8] sm:$0xff]
    %v4351 = vld [vmem:[#allocation7 + $0x500] sm:$0xff]
    %v4352 = vld [vmem:[#allocation7 + $0x508] sm:$0xff]
    %v4353 = vld [vmem:[#allocation7 + $0x510] sm:$0xff]
    %v4354 = vld [vmem:[#allocation7 + $0x518] sm:$0xff]
    %v4355 = vld [vmem:[#allocation7 + $0x520] sm:$0xff]
    %v4356 = vld [vmem:[#allocation7 + $0x528] sm:$0xff]
    %v4357 = vld [vmem:[#allocation7 + $0x530] sm:$0xff]
    %v4358 = vld [vmem:[#allocation7 + $0x538] sm:$0xff]
    %v4359 = vld [vmem:[#allocation7 + $0x540] sm:$0xff]
    %v4360 = vld [vmem:[#allocation7 + $0x548] sm:$0xff]
    %v4361 = vld [vmem:[#allocation7 + $0x550] sm:$0xff]
    %v4362 = vld [vmem:[#allocation7 + $0x558] sm:$0xff]
    %v4363 = vld [vmem:[#allocation7 + $0x560] sm:$0xff]
    %v4364 = vld [vmem:[#allocation7 + $0x568] sm:$0xff]
    %v4365 = vld [vmem:[#allocation7 + $0x570] sm:$0xff]
    %v4366 = vld [vmem:[#allocation7 + $0x578] sm:$0xff]
    %v4367 = vld [vmem:[#allocation7 + $0x580] sm:$0xff]
    %v4368 = vld [vmem:[#allocation7 + $0x588] sm:$0xff]
    %v4369 = vld [vmem:[#allocation7 + $0x590] sm:$0xff]
    %v4370 = vld [vmem:[#allocation7 + $0x598] sm:$0xff]
    %v4371 = vld [vmem:[#allocation7 + $0x5a0] sm:$0xff]
    %v4372 = vld [vmem:[#allocation7 + $0x5a8] sm:$0xff]
    %v4373 = vld [vmem:[#allocation7 + $0x5b0] sm:$0xff]
    %v4374 = vld [vmem:[#allocation7 + $0x5b8] sm:$0xff]
    %v4375 = vld [vmem:[#allocation7 + $0x5c0] sm:$0xff]
    %v4376 = vld [vmem:[#allocation7 + $0x5c8] sm:$0xff]
    %v4377 = vld [vmem:[#allocation7 + $0x5d0] sm:$0xff]
    %v4378 = vld [vmem:[#allocation7 + $0x5d8] sm:$0xff]
    %v4379 = vld [vmem:[#allocation7 + $0x5e0] sm:$0xff]
    %v4380 = vld [vmem:[#allocation7 + $0x5e8] sm:$0xff]
    %v4381 = vld [vmem:[#allocation7 + $0x5f0] sm:$0xff]
    %v4382 = vld [vmem:[#allocation7 + $0x5f8] sm:$0xff]
    %v4383 = vld [vmem:[#allocation7 + $0x600] sm:$0xff]
    %v4384 = vld [vmem:[#allocation7 + $0x608] sm:$0xff]
    %v4385 = vld [vmem:[#allocation7 + $0x610] sm:$0xff]
    %v4386 = vld [vmem:[#allocation7 + $0x618] sm:$0xff]
    %v4387 = vld [vmem:[#allocation7 + $0x620] sm:$0xff]
    %v4388 = vld [vmem:[#allocation7 + $0x628] sm:$0xff]
    %v4389 = vld [vmem:[#allocation7 + $0x630] sm:$0xff]
    %v4390 = vld [vmem:[#allocation7 + $0x638] sm:$0xff]
    %v4391 = vld [vmem:[#allocation7 + $0x640] sm:$0xff]
    %v4392 = vld [vmem:[#allocation7 + $0x648] sm:$0xff]
    %v4393 = vld [vmem:[#allocation7 + $0x650] sm:$0xff]
    %v4394 = vld [vmem:[#allocation7 + $0x658] sm:$0xff]
    %v4395 = vld [vmem:[#allocation7 + $0x660] sm:$0xff]
    %v4396 = vld [vmem:[#allocation7 + $0x668] sm:$0xff]
    %v4397 = vld [vmem:[#allocation7 + $0x670] sm:$0xff]
    %v4398 = vld [vmem:[#allocation7 + $0x678] sm:$0xff]
    %v4399 = vld [vmem:[#allocation7 + $0x680] sm:$0xff]
    %v4400 = vld [vmem:[#allocation7 + $0x688] sm:$0xff]
    %v4401 = vld [vmem:[#allocation7 + $0x690] sm:$0xff]
    %v4402 = vld [vmem:[#allocation7 + $0x698] sm:$0xff]
    %v4403 = vld [vmem:[#allocation7 + $0x6a0] sm:$0xff]
    %v4404 = vld [vmem:[#allocation7 + $0x6a8] sm:$0xff]
    %v4405 = vld [vmem:[#allocation7 + $0x6b0] sm:$0xff]
    %v4406 = vld [vmem:[#allocation7 + $0x6b8] sm:$0xff]
    %v4407 = vld [vmem:[#allocation7 + $0x6c0] sm:$0xff]
    %v4408 = vld [vmem:[#allocation7 + $0x6c8] sm:$0xff]
    %v4409 = vld [vmem:[#allocation7 + $0x6d0] sm:$0xff]
    %v4410 = vld [vmem:[#allocation7 + $0x6d8] sm:$0xff]
    %v4411 = vld [vmem:[#allocation7 + $0x6e0] sm:$0xff]
    %v4412 = vld [vmem:[#allocation7 + $0x6e8] sm:$0xff]
    %v4413 = vld [vmem:[#allocation7 + $0x6f0] sm:$0xff]
    %v4414 = vld [vmem:[#allocation7 + $0x6f8] sm:$0xff]
    %v4415 = vld [vmem:[#allocation7 + $0x700] sm:$0xff]
    %v4416 = vld [vmem:[#allocation7 + $0x708] sm:$0xff]
    %v4417 = vld [vmem:[#allocation7 + $0x710] sm:$0xff]
    %v4418 = vld [vmem:[#allocation7 + $0x718] sm:$0xff]
    %v4419 = vld [vmem:[#allocation7 + $0x720] sm:$0xff]
    %v4420 = vld [vmem:[#allocation7 + $0x728] sm:$0xff]
    %v4421 = vld [vmem:[#allocation7 + $0x730] sm:$0xff]
    %v4422 = vld [vmem:[#allocation7 + $0x738] sm:$0xff]
    %v4423 = vld [vmem:[#allocation7 + $0x740] sm:$0xff]
    %v4424 = vld [vmem:[#allocation7 + $0x748] sm:$0xff]
    %v4425 = vld [vmem:[#allocation7 + $0x750] sm:$0xff]
    %v4426 = vld [vmem:[#allocation7 + $0x758] sm:$0xff]
    %v4427 = vld [vmem:[#allocation7 + $0x760] sm:$0xff]
    %v4428 = vld [vmem:[#allocation7 + $0x768] sm:$0xff]
    %v4429 = vld [vmem:[#allocation7 + $0x770] sm:$0xff]
    %v4430 = vld [vmem:[#allocation7 + $0x778] sm:$0xff]
    %v4431 = vld [vmem:[#allocation7 + $0x780] sm:$0xff]
    %v4432 = vld [vmem:[#allocation7 + $0x788] sm:$0xff]
    %v4433 = vld [vmem:[#allocation7 + $0x790] sm:$0xff]
    %v4434 = vld [vmem:[#allocation7 + $0x798] sm:$0xff]
    %v4435 = vld [vmem:[#allocation7 + $0x7a0] sm:$0xff]
    %v4436 = vld [vmem:[#allocation7 + $0x7a8] sm:$0xff]
    %v4437 = vld [vmem:[#allocation7 + $0x7b0] sm:$0xff]
    %v4438 = vld [vmem:[#allocation7 + $0x7b8] sm:$0xff]
    %v4439 = vld [vmem:[#allocation7 + $0x7c0] sm:$0xff]
    %v4440 = vld [vmem:[#allocation7 + $0x7c8] sm:$0xff]
    %v4441 = vld [vmem:[#allocation7 + $0x7d0] sm:$0xff]
    %v4442 = vld [vmem:[#allocation7 + $0x7d8] sm:$0xff]
    %v4443 = vld [vmem:[#allocation7 + $0x7e0] sm:$0xff]
    %v4444 = vld [vmem:[#allocation7 + $0x7e8] sm:$0xff]
    %v4445 = vld [vmem:[#allocation7 + $0x7f0] sm:$0xff]
    %v4446 = vld [vmem:[#allocation7 + $0x7f8] sm:$0xff]
    %v4447 = vld [vmem:[#allocation7 + $0x800] sm:$0xff]
    %v4448 = vld [vmem:[#allocation7 + $0x808] sm:$0xff]
    %v4449 = vld [vmem:[#allocation7 + $0x810] sm:$0xff]
    %v4450 = vld [vmem:[#allocation7 + $0x818] sm:$0xff]
    %v4451 = vld [vmem:[#allocation7 + $0x820] sm:$0xff]
    %v4452 = vld [vmem:[#allocation7 + $0x828] sm:$0xff]
    %v4453 = vld [vmem:[#allocation7 + $0x830] sm:$0xff]
    %v4454 = vld [vmem:[#allocation7 + $0x838] sm:$0xff]
    %v4455 = vld [vmem:[#allocation7 + $0x840] sm:$0xff]
    %v4456 = vld [vmem:[#allocation7 + $0x848] sm:$0xff]
    %v4457 = vld [vmem:[#allocation7 + $0x850] sm:$0xff]
    %v4458 = vld [vmem:[#allocation7 + $0x858] sm:$0xff]
    %v4459 = vld [vmem:[#allocation7 + $0x860] sm:$0xff]
    %v4460 = vld [vmem:[#allocation7 + $0x868] sm:$0xff]
    %v4461 = vld [vmem:[#allocation7 + $0x870] sm:$0xff]
    %v4462 = vld [vmem:[#allocation7 + $0x878] sm:$0xff]
    %v4463 = vld [vmem:[#allocation7 + $0x880] sm:$0xff]
    %v4464 = vld [vmem:[#allocation7 + $0x888] sm:$0xff]
    %v4465 = vld [vmem:[#allocation7 + $0x890] sm:$0xff]
    %v4466 = vld [vmem:[#allocation7 + $0x898] sm:$0xff]
    %v4467 = vld [vmem:[#allocation7 + $0x8a0] sm:$0xff]
    %v4468 = vld [vmem:[#allocation7 + $0x8a8] sm:$0xff]
    %v4469 = vld [vmem:[#allocation7 + $0x8b0] sm:$0xff]
    %v4470 = vld [vmem:[#allocation7 + $0x8b8] sm:$0xff]
    %v4471 = vld [vmem:[#allocation7 + $0x8c0] sm:$0xff]
    %v4472 = vld [vmem:[#allocation7 + $0x8c8] sm:$0xff]
    %v4473 = vld [vmem:[#allocation7 + $0x8d0] sm:$0xff]
    %v4474 = vld [vmem:[#allocation7 + $0x8d8] sm:$0xff]
    %v4475 = vld [vmem:[#allocation7 + $0x8e0] sm:$0xff]
    %v4476 = vld [vmem:[#allocation7 + $0x8e8] sm:$0xff]
    %v4477 = vld [vmem:[#allocation7 + $0x8f0] sm:$0xff]
    %v4478 = vld [vmem:[#allocation7 + $0x8f8] sm:$0xff]
    %v4479 = vld [vmem:[#allocation7 + $0x900] sm:$0xff]
    %v4480 = vld [vmem:[#allocation7 + $0x908] sm:$0xff]
    %v4481 = vld [vmem:[#allocation7 + $0x910] sm:$0xff]
    %v4482 = vld [vmem:[#allocation7 + $0x918] sm:$0xff]
    %v4483 = vld [vmem:[#allocation7 + $0x920] sm:$0xff]
    %v4484 = vld [vmem:[#allocation7 + $0x928] sm:$0xff]
    %v4485 = vld [vmem:[#allocation7 + $0x930] sm:$0xff]
    %v4486 = vld [vmem:[#allocation7 + $0x938] sm:$0xff]
    %v4487 = vld [vmem:[#allocation7 + $0x940] sm:$0xff]
    %v4488 = vld [vmem:[#allocation7 + $0x948] sm:$0xff]
    %v4489 = vld [vmem:[#allocation7 + $0x950] sm:$0xff]
    %v4490 = vld [vmem:[#allocation7 + $0x958] sm:$0xff]
    %v4491 = vld [vmem:[#allocation7 + $0x960] sm:$0xff]
    %v4492 = vld [vmem:[#allocation7 + $0x968] sm:$0xff]
    %v4493 = vld [vmem:[#allocation7 + $0x970] sm:$0xff]
    %v4494 = vld [vmem:[#allocation7 + $0x978] sm:$0xff]
    %v4495 = vld [vmem:[#allocation7 + $0x980] sm:$0xff]
    %v4496 = vld [vmem:[#allocation7 + $0x988] sm:$0xff]
    %v4497 = vld [vmem:[#allocation7 + $0x990] sm:$0xff]
    %v4498 = vld [vmem:[#allocation7 + $0x998] sm:$0xff]
    %v4499 = vld [vmem:[#allocation7 + $0x9a0] sm:$0xff]
    %v4500 = vld [vmem:[#allocation7 + $0x9a8] sm:$0xff]
    %v4501 = vld [vmem:[#allocation7 + $0x9b0] sm:$0xff]
    %v4502 = vld [vmem:[#allocation7 + $0x9b8] sm:$0xff]
    %v4503 = vld [vmem:[#allocation7 + $0x9c0] sm:$0xff]
    %v4504 = vld [vmem:[#allocation7 + $0x9c8] sm:$0xff]
    %v4505 = vld [vmem:[#allocation7 + $0x9d0] sm:$0xff]
    %v4506 = vld [vmem:[#allocation7 + $0x9d8] sm:$0xff]
    %v4507 = vld [vmem:[#allocation7 + $0x9e0] sm:$0xff]
    %v4508 = vld [vmem:[#allocation7 + $0x9e8] sm:$0xff]
    %v4509 = vld [vmem:[#allocation7 + $0x9f0] sm:$0xff]
    %v4510 = vld [vmem:[#allocation7 + $0x9f8] sm:$0xff]
    %v4511 = vld [vmem:[#allocation7 + $0xa00] sm:$0xff]
    %v4512 = vld [vmem:[#allocation7 + $0xa08] sm:$0xff]
    %v4513 = vld [vmem:[#allocation7 + $0xa10] sm:$0xff]
    %v4514 = vld [vmem:[#allocation7 + $0xa18] sm:$0xff]
    %v4515 = vld [vmem:[#allocation7 + $0xa20] sm:$0xff]
    %v4516 = vld [vmem:[#allocation7 + $0xa28] sm:$0xff]
    %v4517 = vld [vmem:[#allocation7 + $0xa30] sm:$0xff]
    %v4518 = vld [vmem:[#allocation7 + $0xa38] sm:$0xff]
    %v4519 = vld [vmem:[#allocation7 + $0xa40] sm:$0xff]
    %v4520 = vld [vmem:[#allocation7 + $0xa48] sm:$0xff]
    %v4521 = vld [vmem:[#allocation7 + $0xa50] sm:$0xff]
    %v4522 = vld [vmem:[#allocation7 + $0xa58] sm:$0xff]
    %v4523 = vld [vmem:[#allocation7 + $0xa60] sm:$0xff]
    %v4524 = vld [vmem:[#allocation7 + $0xa68] sm:$0xff]
    %v4525 = vld [vmem:[#allocation7 + $0xa70] sm:$0xff]
    %v4526 = vld [vmem:[#allocation7 + $0xa78] sm:$0xff]
    %v4527 = vld [vmem:[#allocation7 + $0xa80] sm:$0xff]
    %v4528 = vld [vmem:[#allocation7 + $0xa88] sm:$0xff]
    %v4529 = vld [vmem:[#allocation7 + $0xa90] sm:$0xff]
    %v4530 = vld [vmem:[#allocation7 + $0xa98] sm:$0xff]
    %v4531 = vld [vmem:[#allocation7 + $0xaa0] sm:$0xff]
    %v4532 = vld [vmem:[#allocation7 + $0xaa8] sm:$0xff]
    %v4533 = vld [vmem:[#allocation7 + $0xab0] sm:$0xff]
    %v4534 = vld [vmem:[#allocation7 + $0xab8] sm:$0xff]
    %v4535 = vld [vmem:[#allocation7 + $0xac0] sm:$0xff]
    %v4536 = vld [vmem:[#allocation7 + $0xac8] sm:$0xff]
    %v4537 = vld [vmem:[#allocation7 + $0xad0] sm:$0xff]
    %v4538 = vld [vmem:[#allocation7 + $0xad8] sm:$0xff]
    %v4539 = vld [vmem:[#allocation7 + $0xae0] sm:$0xff]
    %v4540 = vld [vmem:[#allocation7 + $0xae8] sm:$0xff]
    %v4541 = vld [vmem:[#allocation7 + $0xaf0] sm:$0xff]
    %v4542 = vld [vmem:[#allocation7 + $0xaf8] sm:$0xff]
    %v4543 = vld [vmem:[#allocation7 + $0xb00] sm:$0xff]
    %v4544 = vld [vmem:[#allocation7 + $0xb08] sm:$0xff]
    %v4545 = vld [vmem:[#allocation7 + $0xb10] sm:$0xff]
    %v4546 = vld [vmem:[#allocation7 + $0xb18] sm:$0xff]
    %v4547 = vld [vmem:[#allocation7 + $0xb20] sm:$0xff]
    %v4548 = vld [vmem:[#allocation7 + $0xb28] sm:$0xff]
    %v4549 = vld [vmem:[#allocation7 + $0xb30] sm:$0xff]
    %v4550 = vld [vmem:[#allocation7 + $0xb38] sm:$0xff]
    %v4551 = vld [vmem:[#allocation7 + $0xb40] sm:$0xff]
    %v4552 = vld [vmem:[#allocation7 + $0xb48] sm:$0xff]
    %v4553 = vld [vmem:[#allocation7 + $0xb50] sm:$0xff]
    %v4554 = vld [vmem:[#allocation7 + $0xb58] sm:$0xff]
    %v4555 = vld [vmem:[#allocation7 + $0xb60] sm:$0xff]
    %v4556 = vld [vmem:[#allocation7 + $0xb68] sm:$0xff]
    %v4557 = vld [vmem:[#allocation7 + $0xb70] sm:$0xff]
    %v4558 = vld [vmem:[#allocation7 + $0xb78] sm:$0xff]
    %v4559 = vld [vmem:[#allocation7 + $0xb80] sm:$0xff]
    %v4560 = vld [vmem:[#allocation7 + $0xb88] sm:$0xff]
    %v4561 = vld [vmem:[#allocation7 + $0xb90] sm:$0xff]
    %v4562 = vld [vmem:[#allocation7 + $0xb98] sm:$0xff]
    %v4563 = vld [vmem:[#allocation7 + $0xba0] sm:$0xff]
    %v4564 = vld [vmem:[#allocation7 + $0xba8] sm:$0xff]
    %v4565 = vld [vmem:[#allocation7 + $0xbb0] sm:$0xff]
    %v4566 = vld [vmem:[#allocation7 + $0xbb8] sm:$0xff]
    %v4567 = vld [vmem:[#allocation7 + $0xbc0] sm:$0xff]
    %v4568 = vld [vmem:[#allocation7 + $0xbc8] sm:$0xff]
    %v4569 = vld [vmem:[#allocation7 + $0xbd0] sm:$0xff]
    %v4570 = vld [vmem:[#allocation7 + $0xbd8] sm:$0xff]
    %v4571 = vld [vmem:[#allocation7 + $0xbe0] sm:$0xff]
    %v4572 = vld [vmem:[#allocation7 + $0xbe8] sm:$0xff]
    %v4573 = vld [vmem:[#allocation7 + $0xbf0] sm:$0xff]
    %v4574 = vld [vmem:[#allocation7 + $0xbf8] sm:$0xff]
    %v4575 = vld [vmem:[#allocation7 + $0xc00] sm:$0xff]
    %v4576 = vld [vmem:[#allocation7 + $0xc08] sm:$0xff]
    %v4577 = vld [vmem:[#allocation7 + $0xc10] sm:$0xff]
    %v4578 = vld [vmem:[#allocation7 + $0xc18] sm:$0xff]
    %v4579 = vld [vmem:[#allocation7 + $0xc20] sm:$0xff]
    %v4580 = vld [vmem:[#allocation7 + $0xc28] sm:$0xff]
    %v4581 = vld [vmem:[#allocation7 + $0xc30] sm:$0xff]
    %v4582 = vld [vmem:[#allocation7 + $0xc38] sm:$0xff]
    %v4583 = vld [vmem:[#allocation7 + $0xc40] sm:$0xff]
    %v4584 = vld [vmem:[#allocation7 + $0xc48] sm:$0xff]
    %v4585 = vld [vmem:[#allocation7 + $0xc50] sm:$0xff]
    %v4586 = vld [vmem:[#allocation7 + $0xc58] sm:$0xff]
    %v4587 = vld [vmem:[#allocation7 + $0xc60] sm:$0xff]
    %v4588 = vld [vmem:[#allocation7 + $0xc68] sm:$0xff]
    %v4589 = vld [vmem:[#allocation7 + $0xc70] sm:$0xff]
    %v4590 = vld [vmem:[#allocation7 + $0xc78] sm:$0xff]
    %v4591 = vld [vmem:[#allocation7 + $0xc80] sm:$0xff]
    %v4592 = vld [vmem:[#allocation7 + $0xc88] sm:$0xff]
    %v4593 = vld [vmem:[#allocation7 + $0xc90] sm:$0xff]
    %v4594 = vld [vmem:[#allocation7 + $0xc98] sm:$0xff]
    %v4595 = vld [vmem:[#allocation7 + $0xca0] sm:$0xff]
    %v4596 = vld [vmem:[#allocation7 + $0xca8] sm:$0xff]
    %v4597 = vld [vmem:[#allocation7 + $0xcb0] sm:$0xff]
    %v4598 = vld [vmem:[#allocation7 + $0xcb8] sm:$0xff]
    %v4599 = vld [vmem:[#allocation7 + $0xcc0] sm:$0xff]
    %v4600 = vld [vmem:[#allocation7 + $0xcc8] sm:$0xff]
    %v4601 = vld [vmem:[#allocation7 + $0xcd0] sm:$0xff]
    %v4602 = vld [vmem:[#allocation7 + $0xcd8] sm:$0xff]
    %v4603 = vld [vmem:[#allocation7 + $0xce0] sm:$0xff]
    %v4604 = vld [vmem:[#allocation7 + $0xce8] sm:$0xff]
    %v4605 = vld [vmem:[#allocation7 + $0xcf0] sm:$0xff]
    %v4606 = vld [vmem:[#allocation7 + $0xcf8] sm:$0xff]
    %v4607 = vld [vmem:[#allocation7 + $0xd00] sm:$0xff]
    %v4608 = vld [vmem:[#allocation7 + $0xd08] sm:$0xff]
    %v4609 = vld [vmem:[#allocation7 + $0xd10] sm:$0xff]
    %v4610 = vld [vmem:[#allocation7 + $0xd18] sm:$0xff]
    %v4611 = vld [vmem:[#allocation7 + $0xd20] sm:$0xff]
    %v4612 = vld [vmem:[#allocation7 + $0xd28] sm:$0xff]
    %v4613 = vld [vmem:[#allocation7 + $0xd30] sm:$0xff]
    %v4614 = vld [vmem:[#allocation7 + $0xd38] sm:$0xff]
    %v4615 = vld [vmem:[#allocation7 + $0xd40] sm:$0xff]
    %v4616 = vld [vmem:[#allocation7 + $0xd48] sm:$0xff]
    %v4617 = vld [vmem:[#allocation7 + $0xd50] sm:$0xff]
    %v4618 = vld [vmem:[#allocation7 + $0xd58] sm:$0xff]
    %v4619 = vld [vmem:[#allocation7 + $0xd60] sm:$0xff]
    %v4620 = vld [vmem:[#allocation7 + $0xd68] sm:$0xff]
    %v4621 = vld [vmem:[#allocation7 + $0xd70] sm:$0xff]
    %v4622 = vld [vmem:[#allocation7 + $0xd78] sm:$0xff]
    %v4623 = vld [vmem:[#allocation7 + $0xd80] sm:$0xff]
    %v4624 = vld [vmem:[#allocation7 + $0xd88] sm:$0xff]
    %v4625 = vld [vmem:[#allocation7 + $0xd90] sm:$0xff]
    %v4626 = vld [vmem:[#allocation7 + $0xd98] sm:$0xff]
    %v4627 = vld [vmem:[#allocation7 + $0xda0] sm:$0xff]
    %v4628 = vld [vmem:[#allocation7 + $0xda8] sm:$0xff]
    %v4629 = vld [vmem:[#allocation7 + $0xdb0] sm:$0xff]
    %v4630 = vld [vmem:[#allocation7 + $0xdb8] sm:$0xff]
    %v4631 = vld [vmem:[#allocation7 + $0xdc0] sm:$0xff]
    %v4632 = vld [vmem:[#allocation7 + $0xdc8] sm:$0xff]
    %v4633 = vld [vmem:[#allocation7 + $0xdd0] sm:$0xff]
    %v4634 = vld [vmem:[#allocation7 + $0xdd8] sm:$0xff]
    %v4635 = vld [vmem:[#allocation7 + $0xde0] sm:$0xff]
    %v4636 = vld [vmem:[#allocation7 + $0xde8] sm:$0xff]
    %v4637 = vld [vmem:[#allocation7 + $0xdf0] sm:$0xff]
    %v4638 = vld [vmem:[#allocation7 + $0xdf8] sm:$0xff]
    %v4639 = vld [vmem:[#allocation9] sm:$0xff]
    %v4641 = vlaneseq
    %v4642 = vshrl.u32 %v4641, 7
    %v4643 = vsub.s32 0, %v4642
    %v4644 = vrot.slane %v4639, %v4643
    %v4645 = vlaneseq
    %v4646 = vshrl.u32 %v4645, 7
    %v4647 = vsub.s32 1, %v4646
    %v4648 = vrot.slane %v4639, %v4647
    %v4649 = vlaneseq
    %v4650 = vshrl.u32 %v4649, 7
    %v4651 = vsub.s32 2, %v4650
    %v4652 = vrot.slane %v4639, %v4651
    %v4653 = vlaneseq
    %v4654 = vshrl.u32 %v4653, 7
    %v4655 = vsub.s32 3, %v4654
    %v4656 = vrot.slane %v4639, %v4655
    %v4657 = vlaneseq
    %v4658 = vshrl.u32 %v4657, 7
    %v4659 = vsub.s32 4, %v4658
    %v4660 = vrot.slane %v4639, %v4659
    %v4661 = vlaneseq
    %v4662 = vshrl.u32 %v4661, 7
    %v4663 = vsub.s32 5, %v4662
    %v4664 = vrot.slane %v4639, %v4663
    %v4665 = vlaneseq
    %v4666 = vshrl.u32 %v4665, 7
    %v4667 = vsub.s32 6, %v4666
    %v4668 = vrot.slane %v4639, %v4667
    %v4669 = vlaneseq
    %v4670 = vshrl.u32 %v4669, 7
    %v4671 = vsub.s32 7, %v4670
    %v4672 = vrot.slane %v4639, %v4671
    %v5129 = vunpack.c.l.b16 %v4191
    %v5130 = vunpack.c.h.b16 %v4191
    %v5131 = vunpack.c.l.b16 %v4192
    %v5132 = vunpack.c.h.b16 %v4192
    %v5133 = vunpack.c.l.b16 %v4193
    %v5134 = vunpack.c.h.b16 %v4193
    %v5135 = vunpack.c.l.b16 %v4194
    %v5136 = vunpack.c.h.b16 %v4194
    %v5137 = vunpack.c.l.b16 %v4195
    %v5138 = vunpack.c.h.b16 %v4195
    %v5139 = vunpack.c.l.b16 %v4196
    %v5140 = vunpack.c.h.b16 %v4196
    %v5141 = vunpack.c.l.b16 %v4197
    %v5142 = vunpack.c.h.b16 %v4197
    %v5143 = vunpack.c.l.b16 %v4198
    %v5144 = vunpack.c.h.b16 %v4198
    %v5145 = vunpack.c.l.b16 %v4199
    %v5146 = vunpack.c.h.b16 %v4199
    %v5147 = vunpack.c.l.b16 %v4200
    %v5148 = vunpack.c.h.b16 %v4200
    %v5149 = vunpack.c.l.b16 %v4201
    %v5150 = vunpack.c.h.b16 %v4201
    %v5151 = vunpack.c.l.b16 %v4202
    %v5152 = vunpack.c.h.b16 %v4202
    %v5153 = vunpack.c.l.b16 %v4203
    %v5154 = vunpack.c.h.b16 %v4203
    %v5155 = vunpack.c.l.b16 %v4204
    %v5156 = vunpack.c.h.b16 %v4204
    %v5157 = vunpack.c.l.b16 %v4205
    %v5158 = vunpack.c.h.b16 %v4205
    %v5159 = vunpack.c.l.b16 %v4206
    %v5160 = vunpack.c.h.b16 %v4206
    %v5161 = vunpack.c.l.b16 %v4207
    %v5162 = vunpack.c.h.b16 %v4207
    %v5163 = vunpack.c.l.b16 %v4208
    %v5164 = vunpack.c.h.b16 %v4208
    %v5165 = vunpack.c.l.b16 %v4209
    %v5166 = vunpack.c.h.b16 %v4209
    %v5167 = vunpack.c.l.b16 %v4210
    %v5168 = vunpack.c.h.b16 %v4210
    %v5169 = vunpack.c.l.b16 %v4211
    %v5170 = vunpack.c.h.b16 %v4211
    %v5171 = vunpack.c.l.b16 %v4212
    %v5172 = vunpack.c.h.b16 %v4212
    %v5173 = vunpack.c.l.b16 %v4213
    %v5174 = vunpack.c.h.b16 %v4213
    %v5175 = vunpack.c.l.b16 %v4214
    %v5176 = vunpack.c.h.b16 %v4214
    %v5177 = vunpack.c.l.b16 %v4215
    %v5178 = vunpack.c.h.b16 %v4215
    %v5179 = vunpack.c.l.b16 %v4216
    %v5180 = vunpack.c.h.b16 %v4216
    %v5181 = vunpack.c.l.b16 %v4217
    %v5182 = vunpack.c.h.b16 %v4217
    %v5183 = vunpack.c.l.b16 %v4218
    %v5184 = vunpack.c.h.b16 %v4218
    %v5185 = vunpack.c.l.b16 %v4219
    %v5186 = vunpack.c.h.b16 %v4219
    %v5187 = vunpack.c.l.b16 %v4220
    %v5188 = vunpack.c.h.b16 %v4220
    %v5189 = vunpack.c.l.b16 %v4221
    %v5190 = vunpack.c.h.b16 %v4221
    %v5191 = vunpack.c.l.b16 %v4222
    %v5192 = vunpack.c.h.b16 %v4222
    %v5193 = vunpack.c.l.b16 %v4223
    %v5194 = vunpack.c.h.b16 %v4223
    %v5195 = vunpack.c.l.b16 %v4224
    %v5196 = vunpack.c.h.b16 %v4224
    %v5197 = vunpack.c.l.b16 %v4225
    %v5198 = vunpack.c.h.b16 %v4225
    %v5199 = vunpack.c.l.b16 %v4226
    %v5200 = vunpack.c.h.b16 %v4226
    %v5201 = vunpack.c.l.b16 %v4227
    %v5202 = vunpack.c.h.b16 %v4227
    %v5203 = vunpack.c.l.b16 %v4228
    %v5204 = vunpack.c.h.b16 %v4228
    %v5205 = vunpack.c.l.b16 %v4229
    %v5206 = vunpack.c.h.b16 %v4229
    %v5207 = vunpack.c.l.b16 %v4230
    %v5208 = vunpack.c.h.b16 %v4230
    %v5209 = vunpack.c.l.b16 %v4231
    %v5210 = vunpack.c.h.b16 %v4231
    %v5211 = vunpack.c.l.b16 %v4232
    %v5212 = vunpack.c.h.b16 %v4232
    %v5213 = vunpack.c.l.b16 %v4233
    %v5214 = vunpack.c.h.b16 %v4233
    %v5215 = vunpack.c.l.b16 %v4234
    %v5216 = vunpack.c.h.b16 %v4234
    %v5217 = vunpack.c.l.b16 %v4235
    %v5218 = vunpack.c.h.b16 %v4235
    %v5219 = vunpack.c.l.b16 %v4236
    %v5220 = vunpack.c.h.b16 %v4236
    %v5221 = vunpack.c.l.b16 %v4237
    %v5222 = vunpack.c.h.b16 %v4237
    %v5223 = vunpack.c.l.b16 %v4238
    %v5224 = vunpack.c.h.b16 %v4238
    %v5225 = vunpack.c.l.b16 %v4239
    %v5226 = vunpack.c.h.b16 %v4239
    %v5227 = vunpack.c.l.b16 %v4240
    %v5228 = vunpack.c.h.b16 %v4240
    %v5229 = vunpack.c.l.b16 %v4241
    %v5230 = vunpack.c.h.b16 %v4241
    %v5231 = vunpack.c.l.b16 %v4242
    %v5232 = vunpack.c.h.b16 %v4242
    %v5233 = vunpack.c.l.b16 %v4243
    %v5234 = vunpack.c.h.b16 %v4243
    %v5235 = vunpack.c.l.b16 %v4244
    %v5236 = vunpack.c.h.b16 %v4244
    %v5237 = vunpack.c.l.b16 %v4245
    %v5238 = vunpack.c.h.b16 %v4245
    %v5239 = vunpack.c.l.b16 %v4246
    %v5240 = vunpack.c.h.b16 %v4246
    %v5241 = vunpack.c.l.b16 %v4247
    %v5242 = vunpack.c.h.b16 %v4247
    %v5243 = vunpack.c.l.b16 %v4248
    %v5244 = vunpack.c.h.b16 %v4248
    %v5245 = vunpack.c.l.b16 %v4249
    %v5246 = vunpack.c.h.b16 %v4249
    %v5247 = vunpack.c.l.b16 %v4250
    %v5248 = vunpack.c.h.b16 %v4250
    %v5249 = vunpack.c.l.b16 %v4251
    %v5250 = vunpack.c.h.b16 %v4251
    %v5251 = vunpack.c.l.b16 %v4252
    %v5252 = vunpack.c.h.b16 %v4252
    %v5253 = vunpack.c.l.b16 %v4253
    %v5254 = vunpack.c.h.b16 %v4253
    %v5255 = vunpack.c.l.b16 %v4254
    %v5256 = vunpack.c.h.b16 %v4254
    %v5257 = vunpack.c.l.b16 %v4255
    %v5258 = vunpack.c.h.b16 %v4255
    %v5259 = vunpack.c.l.b16 %v4256
    %v5260 = vunpack.c.h.b16 %v4256
    %v5261 = vunpack.c.l.b16 %v4257
    %v5262 = vunpack.c.h.b16 %v4257
    %v5263 = vunpack.c.l.b16 %v4258
    %v5264 = vunpack.c.h.b16 %v4258
    %v5265 = vunpack.c.l.b16 %v4259
    %v5266 = vunpack.c.h.b16 %v4259
    %v5267 = vunpack.c.l.b16 %v4260
    %v5268 = vunpack.c.h.b16 %v4260
    %v5269 = vunpack.c.l.b16 %v4261
    %v5270 = vunpack.c.h.b16 %v4261
    %v5271 = vunpack.c.l.b16 %v4262
    %v5272 = vunpack.c.h.b16 %v4262
    %v5273 = vunpack.c.l.b16 %v4263
    %v5274 = vunpack.c.h.b16 %v4263
    %v5275 = vunpack.c.l.b16 %v4264
    %v5276 = vunpack.c.h.b16 %v4264
    %v5277 = vunpack.c.l.b16 %v4265
    %v5278 = vunpack.c.h.b16 %v4265
    %v5279 = vunpack.c.l.b16 %v4266
    %v5280 = vunpack.c.h.b16 %v4266
    %v5281 = vunpack.c.l.b16 %v4267
    %v5282 = vunpack.c.h.b16 %v4267
    %v5283 = vunpack.c.l.b16 %v4268
    %v5284 = vunpack.c.h.b16 %v4268
    %v5285 = vunpack.c.l.b16 %v4269
    %v5286 = vunpack.c.h.b16 %v4269
    %v5287 = vunpack.c.l.b16 %v4270
    %v5288 = vunpack.c.h.b16 %v4270
    %v5289 = vunpack.c.l.b16 %v4271
    %v5290 = vunpack.c.h.b16 %v4271
    %v5291 = vunpack.c.l.b16 %v4272
    %v5292 = vunpack.c.h.b16 %v4272
    %v5293 = vunpack.c.l.b16 %v4273
    %v5294 = vunpack.c.h.b16 %v4273
    %v5295 = vunpack.c.l.b16 %v4274
    %v5296 = vunpack.c.h.b16 %v4274
    %v5297 = vunpack.c.l.b16 %v4275
    %v5298 = vunpack.c.h.b16 %v4275
    %v5299 = vunpack.c.l.b16 %v4276
    %v5300 = vunpack.c.h.b16 %v4276
    %v5301 = vunpack.c.l.b16 %v4277
    %v5302 = vunpack.c.h.b16 %v4277
    %v5303 = vunpack.c.l.b16 %v4278
    %v5304 = vunpack.c.h.b16 %v4278
    %v5305 = vunpack.c.l.b16 %v4279
    %v5306 = vunpack.c.h.b16 %v4279
    %v5307 = vunpack.c.l.b16 %v4280
    %v5308 = vunpack.c.h.b16 %v4280
    %v5309 = vunpack.c.l.b16 %v4281
    %v5310 = vunpack.c.h.b16 %v4281
    %v5311 = vunpack.c.l.b16 %v4282
    %v5312 = vunpack.c.h.b16 %v4282
    %v5313 = vunpack.c.l.b16 %v4283
    %v5314 = vunpack.c.h.b16 %v4283
    %v5315 = vunpack.c.l.b16 %v4284
    %v5316 = vunpack.c.h.b16 %v4284
    %v5317 = vunpack.c.l.b16 %v4285
    %v5318 = vunpack.c.h.b16 %v4285
    %v5319 = vunpack.c.l.b16 %v4286
    %v5320 = vunpack.c.h.b16 %v4286
    %v5321 = vunpack.c.l.b16 %v4287
    %v5322 = vunpack.c.h.b16 %v4287
    %v5323 = vunpack.c.l.b16 %v4288
    %v5324 = vunpack.c.h.b16 %v4288
    %v5325 = vunpack.c.l.b16 %v4289
    %v5326 = vunpack.c.h.b16 %v4289
    %v5327 = vunpack.c.l.b16 %v4290
    %v5328 = vunpack.c.h.b16 %v4290
    %v5329 = vunpack.c.l.b16 %v4291
    %v5330 = vunpack.c.h.b16 %v4291
    %v5331 = vunpack.c.l.b16 %v4292
    %v5332 = vunpack.c.h.b16 %v4292
    %v5333 = vunpack.c.l.b16 %v4293
    %v5334 = vunpack.c.h.b16 %v4293
    %v5335 = vunpack.c.l.b16 %v4294
    %v5336 = vunpack.c.h.b16 %v4294
    %v5337 = vunpack.c.l.b16 %v4295
    %v5338 = vunpack.c.h.b16 %v4295
    %v5339 = vunpack.c.l.b16 %v4296
    %v5340 = vunpack.c.h.b16 %v4296
    %v5341 = vunpack.c.l.b16 %v4297
    %v5342 = vunpack.c.h.b16 %v4297
    %v5343 = vunpack.c.l.b16 %v4298
    %v5344 = vunpack.c.h.b16 %v4298
    %v5345 = vunpack.c.l.b16 %v4299
    %v5346 = vunpack.c.h.b16 %v4299
    %v5347 = vunpack.c.l.b16 %v4300
    %v5348 = vunpack.c.h.b16 %v4300
    %v5349 = vunpack.c.l.b16 %v4301
    %v5350 = vunpack.c.h.b16 %v4301
    %v5351 = vunpack.c.l.b16 %v4302
    %v5352 = vunpack.c.h.b16 %v4302
    %v5353 = vunpack.c.l.b16 %v4303
    %v5354 = vunpack.c.h.b16 %v4303
    %v5355 = vunpack.c.l.b16 %v4304
    %v5356 = vunpack.c.h.b16 %v4304
    %v5357 = vunpack.c.l.b16 %v4305
    %v5358 = vunpack.c.h.b16 %v4305
    %v5359 = vunpack.c.l.b16 %v4306
    %v5360 = vunpack.c.h.b16 %v4306
    %v5361 = vunpack.c.l.b16 %v4307
    %v5362 = vunpack.c.h.b16 %v4307
    %v5363 = vunpack.c.l.b16 %v4308
    %v5364 = vunpack.c.h.b16 %v4308
    %v5365 = vunpack.c.l.b16 %v4309
    %v5366 = vunpack.c.h.b16 %v4309
    %v5367 = vunpack.c.l.b16 %v4310
    %v5368 = vunpack.c.h.b16 %v4310
    %v5369 = vunpack.c.l.b16 %v4311
    %v5370 = vunpack.c.h.b16 %v4311
    %v5371 = vunpack.c.l.b16 %v4312
    %v5372 = vunpack.c.h.b16 %v4312
    %v5373 = vunpack.c.l.b16 %v4313
    %v5374 = vunpack.c.h.b16 %v4313
    %v5375 = vunpack.c.l.b16 %v4314
    %v5376 = vunpack.c.h.b16 %v4314
    %v5377 = vunpack.c.l.b16 %v4315
    %v5378 = vunpack.c.h.b16 %v4315
    %v5379 = vunpack.c.l.b16 %v4316
    %v5380 = vunpack.c.h.b16 %v4316
    %v5381 = vunpack.c.l.b16 %v4317
    %v5382 = vunpack.c.h.b16 %v4317
    %v5383 = vunpack.c.l.b16 %v4318
    %v5384 = vunpack.c.h.b16 %v4318
    %v5385 = vunpack.c.l.b16 %v4319
    %v5386 = vunpack.c.h.b16 %v4319
    %v5387 = vunpack.c.l.b16 %v4320
    %v5388 = vunpack.c.h.b16 %v4320
    %v5389 = vunpack.c.l.b16 %v4321
    %v5390 = vunpack.c.h.b16 %v4321
    %v5391 = vunpack.c.l.b16 %v4322
    %v5392 = vunpack.c.h.b16 %v4322
    %v5393 = vunpack.c.l.b16 %v4323
    %v5394 = vunpack.c.h.b16 %v4323
    %v5395 = vunpack.c.l.b16 %v4324
    %v5396 = vunpack.c.h.b16 %v4324
    %v5397 = vunpack.c.l.b16 %v4325
    %v5398 = vunpack.c.h.b16 %v4325
    %v5399 = vunpack.c.l.b16 %v4326
    %v5400 = vunpack.c.h.b16 %v4326
    %v5401 = vunpack.c.l.b16 %v4327
    %v5402 = vunpack.c.h.b16 %v4327
    %v5403 = vunpack.c.l.b16 %v4328
    %v5404 = vunpack.c.h.b16 %v4328
    %v5405 = vunpack.c.l.b16 %v4329
    %v5406 = vunpack.c.h.b16 %v4329
    %v5407 = vunpack.c.l.b16 %v4330
    %v5408 = vunpack.c.h.b16 %v4330
    %v5409 = vunpack.c.l.b16 %v4331
    %v5410 = vunpack.c.h.b16 %v4331
    %v5411 = vunpack.c.l.b16 %v4332
    %v5412 = vunpack.c.h.b16 %v4332
    %v5413 = vunpack.c.l.b16 %v4333
    %v5414 = vunpack.c.h.b16 %v4333
    %v5415 = vunpack.c.l.b16 %v4334
    %v5416 = vunpack.c.h.b16 %v4334
    %v5417 = vunpack.c.l.b16 %v4335
    %v5418 = vunpack.c.h.b16 %v4335
    %v5419 = vunpack.c.l.b16 %v4336
    %v5420 = vunpack.c.h.b16 %v4336
    %v5421 = vunpack.c.l.b16 %v4337
    %v5422 = vunpack.c.h.b16 %v4337
    %v5423 = vunpack.c.l.b16 %v4338
    %v5424 = vunpack.c.h.b16 %v4338
    %v5425 = vunpack.c.l.b16 %v4339
    %v5426 = vunpack.c.h.b16 %v4339
    %v5427 = vunpack.c.l.b16 %v4340
    %v5428 = vunpack.c.h.b16 %v4340
    %v5429 = vunpack.c.l.b16 %v4341
    %v5430 = vunpack.c.h.b16 %v4341
    %v5431 = vunpack.c.l.b16 %v4342
    %v5432 = vunpack.c.h.b16 %v4342
    %v5433 = vunpack.c.l.b16 %v4343
    %v5434 = vunpack.c.h.b16 %v4343
    %v5435 = vunpack.c.l.b16 %v4344
    %v5436 = vunpack.c.h.b16 %v4344
    %v5437 = vunpack.c.l.b16 %v4345
    %v5438 = vunpack.c.h.b16 %v4345
    %v5439 = vunpack.c.l.b16 %v4346
    %v5440 = vunpack.c.h.b16 %v4346
    %v5441 = vunpack.c.l.b16 %v4347
    %v5442 = vunpack.c.h.b16 %v4347
    %v5443 = vunpack.c.l.b16 %v4348
    %v5444 = vunpack.c.h.b16 %v4348
    %v5445 = vunpack.c.l.b16 %v4349
    %v5446 = vunpack.c.h.b16 %v4349
    %v5447 = vunpack.c.l.b16 %v4350
    %v5448 = vunpack.c.h.b16 %v4350
    %v5449 = vunpack.c.l.b16 %v4351
    %v5450 = vunpack.c.h.b16 %v4351
    %v5451 = vunpack.c.l.b16 %v4352
    %v5452 = vunpack.c.h.b16 %v4352
    %v5453 = vunpack.c.l.b16 %v4353
    %v5454 = vunpack.c.h.b16 %v4353
    %v5455 = vunpack.c.l.b16 %v4354
    %v5456 = vunpack.c.h.b16 %v4354
    %v5457 = vunpack.c.l.b16 %v4355
    %v5458 = vunpack.c.h.b16 %v4355
    %v5459 = vunpack.c.l.b16 %v4356
    %v5460 = vunpack.c.h.b16 %v4356
    %v5461 = vunpack.c.l.b16 %v4357
    %v5462 = vunpack.c.h.b16 %v4357
    %v5463 = vunpack.c.l.b16 %v4358
    %v5464 = vunpack.c.h.b16 %v4358
    %v5465 = vunpack.c.l.b16 %v4359
    %v5466 = vunpack.c.h.b16 %v4359
    %v5467 = vunpack.c.l.b16 %v4360
    %v5468 = vunpack.c.h.b16 %v4360
    %v5469 = vunpack.c.l.b16 %v4361
    %v5470 = vunpack.c.h.b16 %v4361
    %v5471 = vunpack.c.l.b16 %v4362
    %v5472 = vunpack.c.h.b16 %v4362
    %v5473 = vunpack.c.l.b16 %v4363
    %v5474 = vunpack.c.h.b16 %v4363
    %v5475 = vunpack.c.l.b16 %v4364
    %v5476 = vunpack.c.h.b16 %v4364
    %v5477 = vunpack.c.l.b16 %v4365
    %v5478 = vunpack.c.h.b16 %v4365
    %v5479 = vunpack.c.l.b16 %v4366
    %v5480 = vunpack.c.h.b16 %v4366
    %v5481 = vunpack.c.l.b16 %v4367
    %v5482 = vunpack.c.h.b16 %v4367
    %v5483 = vunpack.c.l.b16 %v4368
    %v5484 = vunpack.c.h.b16 %v4368
    %v5485 = vunpack.c.l.b16 %v4369
    %v5486 = vunpack.c.h.b16 %v4369
    %v5487 = vunpack.c.l.b16 %v4370
    %v5488 = vunpack.c.h.b16 %v4370
    %v5489 = vunpack.c.l.b16 %v4371
    %v5490 = vunpack.c.h.b16 %v4371
    %v5491 = vunpack.c.l.b16 %v4372
    %v5492 = vunpack.c.h.b16 %v4372
    %v5493 = vunpack.c.l.b16 %v4373
    %v5494 = vunpack.c.h.b16 %v4373
    %v5495 = vunpack.c.l.b16 %v4374
    %v5496 = vunpack.c.h.b16 %v4374
    %v5497 = vunpack.c.l.b16 %v4375
    %v5498 = vunpack.c.h.b16 %v4375
    %v5499 = vunpack.c.l.b16 %v4376
    %v5500 = vunpack.c.h.b16 %v4376
    %v5501 = vunpack.c.l.b16 %v4377
    %v5502 = vunpack.c.h.b16 %v4377
    %v5503 = vunpack.c.l.b16 %v4378
    %v5504 = vunpack.c.h.b16 %v4378
    %v5505 = vunpack.c.l.b16 %v4379
    %v5506 = vunpack.c.h.b16 %v4379
    %v5507 = vunpack.c.l.b16 %v4380
    %v5508 = vunpack.c.h.b16 %v4380
    %v5509 = vunpack.c.l.b16 %v4381
    %v5510 = vunpack.c.h.b16 %v4381
    %v5511 = vunpack.c.l.b16 %v4382
    %v5512 = vunpack.c.h.b16 %v4382
    %v5513 = vunpack.c.l.b16 %v4383
    %v5514 = vunpack.c.h.b16 %v4383
    %v5515 = vunpack.c.l.b16 %v4384
    %v5516 = vunpack.c.h.b16 %v4384
    %v5517 = vunpack.c.l.b16 %v4385
    %v5518 = vunpack.c.h.b16 %v4385
    %v5519 = vunpack.c.l.b16 %v4386
    %v5520 = vunpack.c.h.b16 %v4386
    %v5521 = vunpack.c.l.b16 %v4387
    %v5522 = vunpack.c.h.b16 %v4387
    %v5523 = vunpack.c.l.b16 %v4388
    %v5524 = vunpack.c.h.b16 %v4388
    %v5525 = vunpack.c.l.b16 %v4389
    %v5526 = vunpack.c.h.b16 %v4389
    %v5527 = vunpack.c.l.b16 %v4390
    %v5528 = vunpack.c.h.b16 %v4390
    %v5529 = vunpack.c.l.b16 %v4391
    %v5530 = vunpack.c.h.b16 %v4391
    %v5531 = vunpack.c.l.b16 %v4392
    %v5532 = vunpack.c.h.b16 %v4392
    %v5533 = vunpack.c.l.b16 %v4393
    %v5534 = vunpack.c.h.b16 %v4393
    %v5535 = vunpack.c.l.b16 %v4394
    %v5536 = vunpack.c.h.b16 %v4394
    %v5537 = vunpack.c.l.b16 %v4395
    %v5538 = vunpack.c.h.b16 %v4395
    %v5539 = vunpack.c.l.b16 %v4396
    %v5540 = vunpack.c.h.b16 %v4396
    %v5541 = vunpack.c.l.b16 %v4397
    %v5542 = vunpack.c.h.b16 %v4397
    %v5543 = vunpack.c.l.b16 %v4398
    %v5544 = vunpack.c.h.b16 %v4398
    %v5545 = vunpack.c.l.b16 %v4399
    %v5546 = vunpack.c.h.b16 %v4399
    %v5547 = vunpack.c.l.b16 %v4400
    %v5548 = vunpack.c.h.b16 %v4400
    %v5549 = vunpack.c.l.b16 %v4401
    %v5550 = vunpack.c.h.b16 %v4401
    %v5551 = vunpack.c.l.b16 %v4402
    %v5552 = vunpack.c.h.b16 %v4402
    %v5553 = vunpack.c.l.b16 %v4403
    %v5554 = vunpack.c.h.b16 %v4403
    %v5555 = vunpack.c.l.b16 %v4404
    %v5556 = vunpack.c.h.b16 %v4404
    %v5557 = vunpack.c.l.b16 %v4405
    %v5558 = vunpack.c.h.b16 %v4405
    %v5559 = vunpack.c.l.b16 %v4406
    %v5560 = vunpack.c.h.b16 %v4406
    %v5561 = vunpack.c.l.b16 %v4407
    %v5562 = vunpack.c.h.b16 %v4407
    %v5563 = vunpack.c.l.b16 %v4408
    %v5564 = vunpack.c.h.b16 %v4408
    %v5565 = vunpack.c.l.b16 %v4409
    %v5566 = vunpack.c.h.b16 %v4409
    %v5567 = vunpack.c.l.b16 %v4410
    %v5568 = vunpack.c.h.b16 %v4410
    %v5569 = vunpack.c.l.b16 %v4411
    %v5570 = vunpack.c.h.b16 %v4411
    %v5571 = vunpack.c.l.b16 %v4412
    %v5572 = vunpack.c.h.b16 %v4412
    %v5573 = vunpack.c.l.b16 %v4413
    %v5574 = vunpack.c.h.b16 %v4413
    %v5575 = vunpack.c.l.b16 %v4414
    %v5576 = vunpack.c.h.b16 %v4414
    %v5577 = vunpack.c.l.b16 %v4415
    %v5578 = vunpack.c.h.b16 %v4415
    %v5579 = vunpack.c.l.b16 %v4416
    %v5580 = vunpack.c.h.b16 %v4416
    %v5581 = vunpack.c.l.b16 %v4417
    %v5582 = vunpack.c.h.b16 %v4417
    %v5583 = vunpack.c.l.b16 %v4418
    %v5584 = vunpack.c.h.b16 %v4418
    %v5585 = vunpack.c.l.b16 %v4419
    %v5586 = vunpack.c.h.b16 %v4419
    %v5587 = vunpack.c.l.b16 %v4420
    %v5588 = vunpack.c.h.b16 %v4420
    %v5589 = vunpack.c.l.b16 %v4421
    %v5590 = vunpack.c.h.b16 %v4421
    %v5591 = vunpack.c.l.b16 %v4422
    %v5592 = vunpack.c.h.b16 %v4422
    %v5593 = vunpack.c.l.b16 %v4423
    %v5594 = vunpack.c.h.b16 %v4423
    %v5595 = vunpack.c.l.b16 %v4424
    %v5596 = vunpack.c.h.b16 %v4424
    %v5597 = vunpack.c.l.b16 %v4425
    %v5598 = vunpack.c.h.b16 %v4425
    %v5599 = vunpack.c.l.b16 %v4426
    %v5600 = vunpack.c.h.b16 %v4426
    %v5601 = vunpack.c.l.b16 %v4427
    %v5602 = vunpack.c.h.b16 %v4427
    %v5603 = vunpack.c.l.b16 %v4428
    %v5604 = vunpack.c.h.b16 %v4428
    %v5605 = vunpack.c.l.b16 %v4429
    %v5606 = vunpack.c.h.b16 %v4429
    %v5607 = vunpack.c.l.b16 %v4430
    %v5608 = vunpack.c.h.b16 %v4430
    %v5609 = vunpack.c.l.b16 %v4431
    %v5610 = vunpack.c.h.b16 %v4431
    %v5611 = vunpack.c.l.b16 %v4432
    %v5612 = vunpack.c.h.b16 %v4432
    %v5613 = vunpack.c.l.b16 %v4433
    %v5614 = vunpack.c.h.b16 %v4433
    %v5615 = vunpack.c.l.b16 %v4434
    %v5616 = vunpack.c.h.b16 %v4434
    %v5617 = vunpack.c.l.b16 %v4435
    %v5618 = vunpack.c.h.b16 %v4435
    %v5619 = vunpack.c.l.b16 %v4436
    %v5620 = vunpack.c.h.b16 %v4436
    %v5621 = vunpack.c.l.b16 %v4437
    %v5622 = vunpack.c.h.b16 %v4437
    %v5623 = vunpack.c.l.b16 %v4438
    %v5624 = vunpack.c.h.b16 %v4438
    %v5625 = vunpack.c.l.b16 %v4439
    %v5626 = vunpack.c.h.b16 %v4439
    %v5627 = vunpack.c.l.b16 %v4440
    %v5628 = vunpack.c.h.b16 %v4440
    %v5629 = vunpack.c.l.b16 %v4441
    %v5630 = vunpack.c.h.b16 %v4441
    %v5631 = vunpack.c.l.b16 %v4442
    %v5632 = vunpack.c.h.b16 %v4442
    %v5633 = vunpack.c.l.b16 %v4443
    %v5634 = vunpack.c.h.b16 %v4443
    %v5635 = vunpack.c.l.b16 %v4444
    %v5636 = vunpack.c.h.b16 %v4444
    %v5637 = vunpack.c.l.b16 %v4445
    %v5638 = vunpack.c.h.b16 %v4445
    %v5639 = vunpack.c.l.b16 %v4446
    %v5640 = vunpack.c.h.b16 %v4446
    %v5641 = vunpack.c.l.b16 %v4447
    %v5642 = vunpack.c.h.b16 %v4447
    %v5643 = vunpack.c.l.b16 %v4448
    %v5644 = vunpack.c.h.b16 %v4448
    %v5645 = vunpack.c.l.b16 %v4449
    %v5646 = vunpack.c.h.b16 %v4449
    %v5647 = vunpack.c.l.b16 %v4450
    %v5648 = vunpack.c.h.b16 %v4450
    %v5649 = vunpack.c.l.b16 %v4451
    %v5650 = vunpack.c.h.b16 %v4451
    %v5651 = vunpack.c.l.b16 %v4452
    %v5652 = vunpack.c.h.b16 %v4452
    %v5653 = vunpack.c.l.b16 %v4453
    %v5654 = vunpack.c.h.b16 %v4453
    %v5655 = vunpack.c.l.b16 %v4454
    %v5656 = vunpack.c.h.b16 %v4454
    %v5657 = vunpack.c.l.b16 %v4455
    %v5658 = vunpack.c.h.b16 %v4455
    %v5659 = vunpack.c.l.b16 %v4456
    %v5660 = vunpack.c.h.b16 %v4456
    %v5661 = vunpack.c.l.b16 %v4457
    %v5662 = vunpack.c.h.b16 %v4457
    %v5663 = vunpack.c.l.b16 %v4458
    %v5664 = vunpack.c.h.b16 %v4458
    %v5665 = vunpack.c.l.b16 %v4459
    %v5666 = vunpack.c.h.b16 %v4459
    %v5667 = vunpack.c.l.b16 %v4460
    %v5668 = vunpack.c.h.b16 %v4460
    %v5669 = vunpack.c.l.b16 %v4461
    %v5670 = vunpack.c.h.b16 %v4461
    %v5671 = vunpack.c.l.b16 %v4462
    %v5672 = vunpack.c.h.b16 %v4462
    %v5673 = vunpack.c.l.b16 %v4463
    %v5674 = vunpack.c.h.b16 %v4463
    %v5675 = vunpack.c.l.b16 %v4464
    %v5676 = vunpack.c.h.b16 %v4464
    %v5677 = vunpack.c.l.b16 %v4465
    %v5678 = vunpack.c.h.b16 %v4465
    %v5679 = vunpack.c.l.b16 %v4466
    %v5680 = vunpack.c.h.b16 %v4466
    %v5681 = vunpack.c.l.b16 %v4467
    %v5682 = vunpack.c.h.b16 %v4467
    %v5683 = vunpack.c.l.b16 %v4468
    %v5684 = vunpack.c.h.b16 %v4468
    %v5685 = vunpack.c.l.b16 %v4469
    %v5686 = vunpack.c.h.b16 %v4469
    %v5687 = vunpack.c.l.b16 %v4470
    %v5688 = vunpack.c.h.b16 %v4470
    %v5689 = vunpack.c.l.b16 %v4471
    %v5690 = vunpack.c.h.b16 %v4471
    %v5691 = vunpack.c.l.b16 %v4472
    %v5692 = vunpack.c.h.b16 %v4472
    %v5693 = vunpack.c.l.b16 %v4473
    %v5694 = vunpack.c.h.b16 %v4473
    %v5695 = vunpack.c.l.b16 %v4474
    %v5696 = vunpack.c.h.b16 %v4474
    %v5697 = vunpack.c.l.b16 %v4475
    %v5698 = vunpack.c.h.b16 %v4475
    %v5699 = vunpack.c.l.b16 %v4476
    %v5700 = vunpack.c.h.b16 %v4476
    %v5701 = vunpack.c.l.b16 %v4477
    %v5702 = vunpack.c.h.b16 %v4477
    %v5703 = vunpack.c.l.b16 %v4478
    %v5704 = vunpack.c.h.b16 %v4478
    %v5705 = vunpack.c.l.b16 %v4479
    %v5706 = vunpack.c.h.b16 %v4479
    %v5707 = vunpack.c.l.b16 %v4480
    %v5708 = vunpack.c.h.b16 %v4480
    %v5709 = vunpack.c.l.b16 %v4481
    %v5710 = vunpack.c.h.b16 %v4481
    %v5711 = vunpack.c.l.b16 %v4482
    %v5712 = vunpack.c.h.b16 %v4482
    %v5713 = vunpack.c.l.b16 %v4483
    %v5714 = vunpack.c.h.b16 %v4483
    %v5715 = vunpack.c.l.b16 %v4484
    %v5716 = vunpack.c.h.b16 %v4484
    %v5717 = vunpack.c.l.b16 %v4485
    %v5718 = vunpack.c.h.b16 %v4485
    %v5719 = vunpack.c.l.b16 %v4486
    %v5720 = vunpack.c.h.b16 %v4486
    %v5721 = vunpack.c.l.b16 %v4487
    %v5722 = vunpack.c.h.b16 %v4487
    %v5723 = vunpack.c.l.b16 %v4488
    %v5724 = vunpack.c.h.b16 %v4488
    %v5725 = vunpack.c.l.b16 %v4489
    %v5726 = vunpack.c.h.b16 %v4489
    %v5727 = vunpack.c.l.b16 %v4490
    %v5728 = vunpack.c.h.b16 %v4490
    %v5729 = vunpack.c.l.b16 %v4491
    %v5730 = vunpack.c.h.b16 %v4491
    %v5731 = vunpack.c.l.b16 %v4492
    %v5732 = vunpack.c.h.b16 %v4492
    %v5733 = vunpack.c.l.b16 %v4493
    %v5734 = vunpack.c.h.b16 %v4493
    %v5735 = vunpack.c.l.b16 %v4494
    %v5736 = vunpack.c.h.b16 %v4494
    %v5737 = vunpack.c.l.b16 %v4495
    %v5738 = vunpack.c.h.b16 %v4495
    %v5739 = vunpack.c.l.b16 %v4496
    %v5740 = vunpack.c.h.b16 %v4496
    %v5741 = vunpack.c.l.b16 %v4497
    %v5742 = vunpack.c.h.b16 %v4497
    %v5743 = vunpack.c.l.b16 %v4498
    %v5744 = vunpack.c.h.b16 %v4498
    %v5745 = vunpack.c.l.b16 %v4499
    %v5746 = vunpack.c.h.b16 %v4499
    %v5747 = vunpack.c.l.b16 %v4500
    %v5748 = vunpack.c.h.b16 %v4500
    %v5749 = vunpack.c.l.b16 %v4501
    %v5750 = vunpack.c.h.b16 %v4501
    %v5751 = vunpack.c.l.b16 %v4502
    %v5752 = vunpack.c.h.b16 %v4502
    %v5753 = vunpack.c.l.b16 %v4503
    %v5754 = vunpack.c.h.b16 %v4503
    %v5755 = vunpack.c.l.b16 %v4504
    %v5756 = vunpack.c.h.b16 %v4504
    %v5757 = vunpack.c.l.b16 %v4505
    %v5758 = vunpack.c.h.b16 %v4505
    %v5759 = vunpack.c.l.b16 %v4506
    %v5760 = vunpack.c.h.b16 %v4506
    %v5761 = vunpack.c.l.b16 %v4507
    %v5762 = vunpack.c.h.b16 %v4507
    %v5763 = vunpack.c.l.b16 %v4508
    %v5764 = vunpack.c.h.b16 %v4508
    %v5765 = vunpack.c.l.b16 %v4509
    %v5766 = vunpack.c.h.b16 %v4509
    %v5767 = vunpack.c.l.b16 %v4510
    %v5768 = vunpack.c.h.b16 %v4510
    %v5769 = vunpack.c.l.b16 %v4511
    %v5770 = vunpack.c.h.b16 %v4511
    %v5771 = vunpack.c.l.b16 %v4512
    %v5772 = vunpack.c.h.b16 %v4512
    %v5773 = vunpack.c.l.b16 %v4513
    %v5774 = vunpack.c.h.b16 %v4513
    %v5775 = vunpack.c.l.b16 %v4514
    %v5776 = vunpack.c.h.b16 %v4514
    %v5777 = vunpack.c.l.b16 %v4515
    %v5778 = vunpack.c.h.b16 %v4515
    %v5779 = vunpack.c.l.b16 %v4516
    %v5780 = vunpack.c.h.b16 %v4516
    %v5781 = vunpack.c.l.b16 %v4517
    %v5782 = vunpack.c.h.b16 %v4517
    %v5783 = vunpack.c.l.b16 %v4518
    %v5784 = vunpack.c.h.b16 %v4518
    %v5785 = vunpack.c.l.b16 %v4519
    %v5786 = vunpack.c.h.b16 %v4519
    %v5787 = vunpack.c.l.b16 %v4520
    %v5788 = vunpack.c.h.b16 %v4520
    %v5789 = vunpack.c.l.b16 %v4521
    %v5790 = vunpack.c.h.b16 %v4521
    %v5791 = vunpack.c.l.b16 %v4522
    %v5792 = vunpack.c.h.b16 %v4522
    %v5793 = vunpack.c.l.b16 %v4523
    %v5794 = vunpack.c.h.b16 %v4523
    %v5795 = vunpack.c.l.b16 %v4524
    %v5796 = vunpack.c.h.b16 %v4524
    %v5797 = vunpack.c.l.b16 %v4525
    %v5798 = vunpack.c.h.b16 %v4525
    %v5799 = vunpack.c.l.b16 %v4526
    %v5800 = vunpack.c.h.b16 %v4526
    %v5801 = vunpack.c.l.b16 %v4527
    %v5802 = vunpack.c.h.b16 %v4527
    %v5803 = vunpack.c.l.b16 %v4528
    %v5804 = vunpack.c.h.b16 %v4528
    %v5805 = vunpack.c.l.b16 %v4529
    %v5806 = vunpack.c.h.b16 %v4529
    %v5807 = vunpack.c.l.b16 %v4530
    %v5808 = vunpack.c.h.b16 %v4530
    %v5809 = vunpack.c.l.b16 %v4531
    %v5810 = vunpack.c.h.b16 %v4531
    %v5811 = vunpack.c.l.b16 %v4532
    %v5812 = vunpack.c.h.b16 %v4532
    %v5813 = vunpack.c.l.b16 %v4533
    %v5814 = vunpack.c.h.b16 %v4533
    %v5815 = vunpack.c.l.b16 %v4534
    %v5816 = vunpack.c.h.b16 %v4534
    %v5817 = vunpack.c.l.b16 %v4535
    %v5818 = vunpack.c.h.b16 %v4535
    %v5819 = vunpack.c.l.b16 %v4536
    %v5820 = vunpack.c.h.b16 %v4536
    %v5821 = vunpack.c.l.b16 %v4537
    %v5822 = vunpack.c.h.b16 %v4537
    %v5823 = vunpack.c.l.b16 %v4538
    %v5824 = vunpack.c.h.b16 %v4538
    %v5825 = vunpack.c.l.b16 %v4539
    %v5826 = vunpack.c.h.b16 %v4539
    %v5827 = vunpack.c.l.b16 %v4540
    %v5828 = vunpack.c.h.b16 %v4540
    %v5829 = vunpack.c.l.b16 %v4541
    %v5830 = vunpack.c.h.b16 %v4541
    %v5831 = vunpack.c.l.b16 %v4542
    %v5832 = vunpack.c.h.b16 %v4542
    %v5833 = vunpack.c.l.b16 %v4543
    %v5834 = vunpack.c.h.b16 %v4543
    %v5835 = vunpack.c.l.b16 %v4544
    %v5836 = vunpack.c.h.b16 %v4544
    %v5837 = vunpack.c.l.b16 %v4545
    %v5838 = vunpack.c.h.b16 %v4545
    %v5839 = vunpack.c.l.b16 %v4546
    %v5840 = vunpack.c.h.b16 %v4546
    %v5841 = vunpack.c.l.b16 %v4547
    %v5842 = vunpack.c.h.b16 %v4547
    %v5843 = vunpack.c.l.b16 %v4548
    %v5844 = vunpack.c.h.b16 %v4548
    %v5845 = vunpack.c.l.b16 %v4549
    %v5846 = vunpack.c.h.b16 %v4549
    %v5847 = vunpack.c.l.b16 %v4550
    %v5848 = vunpack.c.h.b16 %v4550
    %v5849 = vunpack.c.l.b16 %v4551
    %v5850 = vunpack.c.h.b16 %v4551
    %v5851 = vunpack.c.l.b16 %v4552
    %v5852 = vunpack.c.h.b16 %v4552
    %v5853 = vunpack.c.l.b16 %v4553
    %v5854 = vunpack.c.h.b16 %v4553
    %v5855 = vunpack.c.l.b16 %v4554
    %v5856 = vunpack.c.h.b16 %v4554
    %v5857 = vunpack.c.l.b16 %v4555
    %v5858 = vunpack.c.h.b16 %v4555
    %v5859 = vunpack.c.l.b16 %v4556
    %v5860 = vunpack.c.h.b16 %v4556
    %v5861 = vunpack.c.l.b16 %v4557
    %v5862 = vunpack.c.h.b16 %v4557
    %v5863 = vunpack.c.l.b16 %v4558
    %v5864 = vunpack.c.h.b16 %v4558
    %v5865 = vunpack.c.l.b16 %v4559
    %v5866 = vunpack.c.h.b16 %v4559
    %v5867 = vunpack.c.l.b16 %v4560
    %v5868 = vunpack.c.h.b16 %v4560
    %v5869 = vunpack.c.l.b16 %v4561
    %v5870 = vunpack.c.h.b16 %v4561
    %v5871 = vunpack.c.l.b16 %v4562
    %v5872 = vunpack.c.h.b16 %v4562
    %v5873 = vunpack.c.l.b16 %v4563
    %v5874 = vunpack.c.h.b16 %v4563
    %v5875 = vunpack.c.l.b16 %v4564
    %v5876 = vunpack.c.h.b16 %v4564
    %v5877 = vunpack.c.l.b16 %v4565
    %v5878 = vunpack.c.h.b16 %v4565
    %v5879 = vunpack.c.l.b16 %v4566
    %v5880 = vunpack.c.h.b16 %v4566
    %v5881 = vunpack.c.l.b16 %v4567
    %v5882 = vunpack.c.h.b16 %v4567
    %v5883 = vunpack.c.l.b16 %v4568
    %v5884 = vunpack.c.h.b16 %v4568
    %v5885 = vunpack.c.l.b16 %v4569
    %v5886 = vunpack.c.h.b16 %v4569
    %v5887 = vunpack.c.l.b16 %v4570
    %v5888 = vunpack.c.h.b16 %v4570
    %v5889 = vunpack.c.l.b16 %v4571
    %v5890 = vunpack.c.h.b16 %v4571
    %v5891 = vunpack.c.l.b16 %v4572
    %v5892 = vunpack.c.h.b16 %v4572
    %v5893 = vunpack.c.l.b16 %v4573
    %v5894 = vunpack.c.h.b16 %v4573
    %v5895 = vunpack.c.l.b16 %v4574
    %v5896 = vunpack.c.h.b16 %v4574
    %v5897 = vunpack.c.l.b16 %v4575
    %v5898 = vunpack.c.h.b16 %v4575
    %v5899 = vunpack.c.l.b16 %v4576
    %v5900 = vunpack.c.h.b16 %v4576
    %v5901 = vunpack.c.l.b16 %v4577
    %v5902 = vunpack.c.h.b16 %v4577
    %v5903 = vunpack.c.l.b16 %v4578
    %v5904 = vunpack.c.h.b16 %v4578
    %v5905 = vunpack.c.l.b16 %v4579
    %v5906 = vunpack.c.h.b16 %v4579
    %v5907 = vunpack.c.l.b16 %v4580
    %v5908 = vunpack.c.h.b16 %v4580
    %v5909 = vunpack.c.l.b16 %v4581
    %v5910 = vunpack.c.h.b16 %v4581
    %v5911 = vunpack.c.l.b16 %v4582
    %v5912 = vunpack.c.h.b16 %v4582
    %v5913 = vunpack.c.l.b16 %v4583
    %v5914 = vunpack.c.h.b16 %v4583
    %v5915 = vunpack.c.l.b16 %v4584
    %v5916 = vunpack.c.h.b16 %v4584
    %v5917 = vunpack.c.l.b16 %v4585
    %v5918 = vunpack.c.h.b16 %v4585
    %v5919 = vunpack.c.l.b16 %v4586
    %v5920 = vunpack.c.h.b16 %v4586
    %v5921 = vunpack.c.l.b16 %v4587
    %v5922 = vunpack.c.h.b16 %v4587
    %v5923 = vunpack.c.l.b16 %v4588
    %v5924 = vunpack.c.h.b16 %v4588
    %v5925 = vunpack.c.l.b16 %v4589
    %v5926 = vunpack.c.h.b16 %v4589
    %v5927 = vunpack.c.l.b16 %v4590
    %v5928 = vunpack.c.h.b16 %v4590
    %v5929 = vunpack.c.l.b16 %v4591
    %v5930 = vunpack.c.h.b16 %v4591
    %v5931 = vunpack.c.l.b16 %v4592
    %v5932 = vunpack.c.h.b16 %v4592
    %v5933 = vunpack.c.l.b16 %v4593
    %v5934 = vunpack.c.h.b16 %v4593
    %v5935 = vunpack.c.l.b16 %v4594
    %v5936 = vunpack.c.h.b16 %v4594
    %v5937 = vunpack.c.l.b16 %v4595
    %v5938 = vunpack.c.h.b16 %v4595
    %v5939 = vunpack.c.l.b16 %v4596
    %v5940 = vunpack.c.h.b16 %v4596
    %v5941 = vunpack.c.l.b16 %v4597
    %v5942 = vunpack.c.h.b16 %v4597
    %v5943 = vunpack.c.l.b16 %v4598
    %v5944 = vunpack.c.h.b16 %v4598
    %v5945 = vunpack.c.l.b16 %v4599
    %v5946 = vunpack.c.h.b16 %v4599
    %v5947 = vunpack.c.l.b16 %v4600
    %v5948 = vunpack.c.h.b16 %v4600
    %v5949 = vunpack.c.l.b16 %v4601
    %v5950 = vunpack.c.h.b16 %v4601
    %v5951 = vunpack.c.l.b16 %v4602
    %v5952 = vunpack.c.h.b16 %v4602
    %v5953 = vunpack.c.l.b16 %v4603
    %v5954 = vunpack.c.h.b16 %v4603
    %v5955 = vunpack.c.l.b16 %v4604
    %v5956 = vunpack.c.h.b16 %v4604
    %v5957 = vunpack.c.l.b16 %v4605
    %v5958 = vunpack.c.h.b16 %v4605
    %v5959 = vunpack.c.l.b16 %v4606
    %v5960 = vunpack.c.h.b16 %v4606
    %v5961 = vunpack.c.l.b16 %v4607
    %v5962 = vunpack.c.h.b16 %v4607
    %v5963 = vunpack.c.l.b16 %v4608
    %v5964 = vunpack.c.h.b16 %v4608
    %v5965 = vunpack.c.l.b16 %v4609
    %v5966 = vunpack.c.h.b16 %v4609
    %v5967 = vunpack.c.l.b16 %v4610
    %v5968 = vunpack.c.h.b16 %v4610
    %v5969 = vunpack.c.l.b16 %v4611
    %v5970 = vunpack.c.h.b16 %v4611
    %v5971 = vunpack.c.l.b16 %v4612
    %v5972 = vunpack.c.h.b16 %v4612
    %v5973 = vunpack.c.l.b16 %v4613
    %v5974 = vunpack.c.h.b16 %v4613
    %v5975 = vunpack.c.l.b16 %v4614
    %v5976 = vunpack.c.h.b16 %v4614
    %v5977 = vunpack.c.l.b16 %v4615
    %v5978 = vunpack.c.h.b16 %v4615
    %v5979 = vunpack.c.l.b16 %v4616
    %v5980 = vunpack.c.h.b16 %v4616
    %v5981 = vunpack.c.l.b16 %v4617
    %v5982 = vunpack.c.h.b16 %v4617
    %v5983 = vunpack.c.l.b16 %v4618
    %v5984 = vunpack.c.h.b16 %v4618
    %v5985 = vunpack.c.l.b16 %v4619
    %v5986 = vunpack.c.h.b16 %v4619
    %v5987 = vunpack.c.l.b16 %v4620
    %v5988 = vunpack.c.h.b16 %v4620
    %v5989 = vunpack.c.l.b16 %v4621
    %v5990 = vunpack.c.h.b16 %v4621
    %v5991 = vunpack.c.l.b16 %v4622
    %v5992 = vunpack.c.h.b16 %v4622
    %v5993 = vunpack.c.l.b16 %v4623
    %v5994 = vunpack.c.h.b16 %v4623
    %v5995 = vunpack.c.l.b16 %v4624
    %v5996 = vunpack.c.h.b16 %v4624
    %v5997 = vunpack.c.l.b16 %v4625
    %v5998 = vunpack.c.h.b16 %v4625
    %v5999 = vunpack.c.l.b16 %v4626
    %v6000 = vunpack.c.h.b16 %v4626
    %v6001 = vunpack.c.l.b16 %v4627
    %v6002 = vunpack.c.h.b16 %v4627
    %v6003 = vunpack.c.l.b16 %v4628
    %v6004 = vunpack.c.h.b16 %v4628
    %v6005 = vunpack.c.l.b16 %v4629
    %v6006 = vunpack.c.h.b16 %v4629
    %v6007 = vunpack.c.l.b16 %v4630
    %v6008 = vunpack.c.h.b16 %v4630
    %v6009 = vunpack.c.l.b16 %v4631
    %v6010 = vunpack.c.h.b16 %v4631
    %v6011 = vunpack.c.l.b16 %v4632
    %v6012 = vunpack.c.h.b16 %v4632
    %v6013 = vunpack.c.l.b16 %v4633
    %v6014 = vunpack.c.h.b16 %v4633
    %v6015 = vunpack.c.l.b16 %v4634
    %v6016 = vunpack.c.h.b16 %v4634
    %v6017 = vunpack.c.l.b16 %v4635
    %v6018 = vunpack.c.h.b16 %v4635
    %v6019 = vunpack.c.l.b16 %v4636
    %v6020 = vunpack.c.h.b16 %v4636
    %v6021 = vunpack.c.l.b16 %v4637
    %v6022 = vunpack.c.h.b16 %v4637
    %v6023 = vunpack.c.l.b16 %v4638
    %v6024 = vunpack.c.h.b16 %v4638
    %v6025 = vpack.c.b16 %v5137, %v5129
    %v6026 = vpack.c.b16 %v5138, %v5130
    %v6027 = vpack.c.b16 %v5139, %v5131
    %v6028 = vpack.c.b16 %v5140, %v5132
    %v6029 = vpack.c.b16 %v5141, %v5133
    %v6030 = vpack.c.b16 %v5142, %v5134
    %v6031 = vpack.c.b16 %v5143, %v5135
    %v6032 = vpack.c.b16 %v5144, %v5136
    %v6033 = vpack.c.b16 %v5153, %v5145
    %v6034 = vpack.c.b16 %v5154, %v5146
    %v6035 = vpack.c.b16 %v5155, %v5147
    %v6036 = vpack.c.b16 %v5156, %v5148
    %v6037 = vpack.c.b16 %v5157, %v5149
    %v6038 = vpack.c.b16 %v5158, %v5150
    %v6039 = vpack.c.b16 %v5159, %v5151
    %v6040 = vpack.c.b16 %v5160, %v5152
    %v6041 = vpack.c.b16 %v5169, %v5161
    %v6042 = vpack.c.b16 %v5170, %v5162
    %v6043 = vpack.c.b16 %v5171, %v5163
    %v6044 = vpack.c.b16 %v5172, %v5164
    %v6045 = vpack.c.b16 %v5173, %v5165
    %v6046 = vpack.c.b16 %v5174, %v5166
    %v6047 = vpack.c.b16 %v5175, %v5167
    %v6048 = vpack.c.b16 %v5176, %v5168
    %v6049 = vpack.c.b16 %v5185, %v5177
    %v6050 = vpack.c.b16 %v5186, %v5178
    %v6051 = vpack.c.b16 %v5187, %v5179
    %v6052 = vpack.c.b16 %v5188, %v5180
    %v6053 = vpack.c.b16 %v5189, %v5181
    %v6054 = vpack.c.b16 %v5190, %v5182
    %v6055 = vpack.c.b16 %v5191, %v5183
    %v6056 = vpack.c.b16 %v5192, %v5184
    %v6057 = vpack.c.b16 %v5201, %v5193
    %v6058 = vpack.c.b16 %v5202, %v5194
    %v6059 = vpack.c.b16 %v5203, %v5195
    %v6060 = vpack.c.b16 %v5204, %v5196
    %v6061 = vpack.c.b16 %v5205, %v5197
    %v6062 = vpack.c.b16 %v5206, %v5198
    %v6063 = vpack.c.b16 %v5207, %v5199
    %v6064 = vpack.c.b16 %v5208, %v5200
    %v6065 = vpack.c.b16 %v5217, %v5209
    %v6066 = vpack.c.b16 %v5218, %v5210
    %v6067 = vpack.c.b16 %v5219, %v5211
    %v6068 = vpack.c.b16 %v5220, %v5212
    %v6069 = vpack.c.b16 %v5221, %v5213
    %v6070 = vpack.c.b16 %v5222, %v5214
    %v6071 = vpack.c.b16 %v5223, %v5215
    %v6072 = vpack.c.b16 %v5224, %v5216
    %v6073 = vpack.c.b16 %v5233, %v5225
    %v6074 = vpack.c.b16 %v5234, %v5226
    %v6075 = vpack.c.b16 %v5235, %v5227
    %v6076 = vpack.c.b16 %v5236, %v5228
    %v6077 = vpack.c.b16 %v5237, %v5229
    %v6078 = vpack.c.b16 %v5238, %v5230
    %v6079 = vpack.c.b16 %v5239, %v5231
    %v6080 = vpack.c.b16 %v5240, %v5232
    %v6081 = vpack.c.b16 %v5249, %v5241
    %v6082 = vpack.c.b16 %v5250, %v5242
    %v6083 = vpack.c.b16 %v5251, %v5243
    %v6084 = vpack.c.b16 %v5252, %v5244
    %v6085 = vpack.c.b16 %v5253, %v5245
    %v6086 = vpack.c.b16 %v5254, %v5246
    %v6087 = vpack.c.b16 %v5255, %v5247
    %v6088 = vpack.c.b16 %v5256, %v5248
    %v6089 = vpack.c.b16 %v5265, %v5257
    %v6090 = vpack.c.b16 %v5266, %v5258
    %v6091 = vpack.c.b16 %v5267, %v5259
    %v6092 = vpack.c.b16 %v5268, %v5260
    %v6093 = vpack.c.b16 %v5269, %v5261
    %v6094 = vpack.c.b16 %v5270, %v5262
    %v6095 = vpack.c.b16 %v5271, %v5263
    %v6096 = vpack.c.b16 %v5272, %v5264
    %v6097 = vpack.c.b16 %v5281, %v5273
    %v6098 = vpack.c.b16 %v5282, %v5274
    %v6099 = vpack.c.b16 %v5283, %v5275
    %v6100 = vpack.c.b16 %v5284, %v5276
    %v6101 = vpack.c.b16 %v5285, %v5277
    %v6102 = vpack.c.b16 %v5286, %v5278
    %v6103 = vpack.c.b16 %v5287, %v5279
    %v6104 = vpack.c.b16 %v5288, %v5280
    %v6105 = vpack.c.b16 %v5297, %v5289
    %v6106 = vpack.c.b16 %v5298, %v5290
    %v6107 = vpack.c.b16 %v5299, %v5291
    %v6108 = vpack.c.b16 %v5300, %v5292
    %v6109 = vpack.c.b16 %v5301, %v5293
    %v6110 = vpack.c.b16 %v5302, %v5294
    %v6111 = vpack.c.b16 %v5303, %v5295
    %v6112 = vpack.c.b16 %v5304, %v5296
    %v6113 = vpack.c.b16 %v5313, %v5305
    %v6114 = vpack.c.b16 %v5314, %v5306
    %v6115 = vpack.c.b16 %v5315, %v5307
    %v6116 = vpack.c.b16 %v5316, %v5308
    %v6117 = vpack.c.b16 %v5317, %v5309
    %v6118 = vpack.c.b16 %v5318, %v5310
    %v6119 = vpack.c.b16 %v5319, %v5311
    %v6120 = vpack.c.b16 %v5320, %v5312
    %v6121 = vpack.c.b16 %v5329, %v5321
    %v6122 = vpack.c.b16 %v5330, %v5322
    %v6123 = vpack.c.b16 %v5331, %v5323
    %v6124 = vpack.c.b16 %v5332, %v5324
    %v6125 = vpack.c.b16 %v5333, %v5325
    %v6126 = vpack.c.b16 %v5334, %v5326
    %v6127 = vpack.c.b16 %v5335, %v5327
    %v6128 = vpack.c.b16 %v5336, %v5328
    %v6129 = vpack.c.b16 %v5345, %v5337
    %v6130 = vpack.c.b16 %v5346, %v5338
    %v6131 = vpack.c.b16 %v5347, %v5339
    %v6132 = vpack.c.b16 %v5348, %v5340
    %v6133 = vpack.c.b16 %v5349, %v5341
    %v6134 = vpack.c.b16 %v5350, %v5342
    %v6135 = vpack.c.b16 %v5351, %v5343
    %v6136 = vpack.c.b16 %v5352, %v5344
    %v6137 = vpack.c.b16 %v5361, %v5353
    %v6138 = vpack.c.b16 %v5362, %v5354
    %v6139 = vpack.c.b16 %v5363, %v5355
    %v6140 = vpack.c.b16 %v5364, %v5356
    %v6141 = vpack.c.b16 %v5365, %v5357
    %v6142 = vpack.c.b16 %v5366, %v5358
    %v6143 = vpack.c.b16 %v5367, %v5359
    %v6144 = vpack.c.b16 %v5368, %v5360
    %v6145 = vpack.c.b16 %v5377, %v5369
    %v6146 = vpack.c.b16 %v5378, %v5370
    %v6147 = vpack.c.b16 %v5379, %v5371
    %v6148 = vpack.c.b16 %v5380, %v5372
    %v6149 = vpack.c.b16 %v5381, %v5373
    %v6150 = vpack.c.b16 %v5382, %v5374
    %v6151 = vpack.c.b16 %v5383, %v5375
    %v6152 = vpack.c.b16 %v5384, %v5376
    %v6153 = vpack.c.b16 %v5393, %v5385
    %v6154 = vpack.c.b16 %v5394, %v5386
    %v6155 = vpack.c.b16 %v5395, %v5387
    %v6156 = vpack.c.b16 %v5396, %v5388
    %v6157 = vpack.c.b16 %v5397, %v5389
    %v6158 = vpack.c.b16 %v5398, %v5390
    %v6159 = vpack.c.b16 %v5399, %v5391
    %v6160 = vpack.c.b16 %v5400, %v5392
    %v6161 = vpack.c.b16 %v5409, %v5401
    %v6162 = vpack.c.b16 %v5410, %v5402
    %v6163 = vpack.c.b16 %v5411, %v5403
    %v6164 = vpack.c.b16 %v5412, %v5404
    %v6165 = vpack.c.b16 %v5413, %v5405
    %v6166 = vpack.c.b16 %v5414, %v5406
    %v6167 = vpack.c.b16 %v5415, %v5407
    %v6168 = vpack.c.b16 %v5416, %v5408
    %v6169 = vpack.c.b16 %v5425, %v5417
    %v6170 = vpack.c.b16 %v5426, %v5418
    %v6171 = vpack.c.b16 %v5427, %v5419
    %v6172 = vpack.c.b16 %v5428, %v5420
    %v6173 = vpack.c.b16 %v5429, %v5421
    %v6174 = vpack.c.b16 %v5430, %v5422
    %v6175 = vpack.c.b16 %v5431, %v5423
    %v6176 = vpack.c.b16 %v5432, %v5424
    %v6177 = vpack.c.b16 %v5441, %v5433
    %v6178 = vpack.c.b16 %v5442, %v5434
    %v6179 = vpack.c.b16 %v5443, %v5435
    %v6180 = vpack.c.b16 %v5444, %v5436
    %v6181 = vpack.c.b16 %v5445, %v5437
    %v6182 = vpack.c.b16 %v5446, %v5438
    %v6183 = vpack.c.b16 %v5447, %v5439
    %v6184 = vpack.c.b16 %v5448, %v5440
    %v6185 = vpack.c.b16 %v5457, %v5449
    %v6186 = vpack.c.b16 %v5458, %v5450
    %v6187 = vpack.c.b16 %v5459, %v5451
    %v6188 = vpack.c.b16 %v5460, %v5452
    %v6189 = vpack.c.b16 %v5461, %v5453
    %v6190 = vpack.c.b16 %v5462, %v5454
    %v6191 = vpack.c.b16 %v5463, %v5455
    %v6192 = vpack.c.b16 %v5464, %v5456
    %v6193 = vpack.c.b16 %v5473, %v5465
    %v6194 = vpack.c.b16 %v5474, %v5466
    %v6195 = vpack.c.b16 %v5475, %v5467
    %v6196 = vpack.c.b16 %v5476, %v5468
    %v6197 = vpack.c.b16 %v5477, %v5469
    %v6198 = vpack.c.b16 %v5478, %v5470
    %v6199 = vpack.c.b16 %v5479, %v5471
    %v6200 = vpack.c.b16 %v5480, %v5472
    %v6201 = vpack.c.b16 %v5489, %v5481
    %v6202 = vpack.c.b16 %v5490, %v5482
    %v6203 = vpack.c.b16 %v5491, %v5483
    %v6204 = vpack.c.b16 %v5492, %v5484
    %v6205 = vpack.c.b16 %v5493, %v5485
    %v6206 = vpack.c.b16 %v5494, %v5486
    %v6207 = vpack.c.b16 %v5495, %v5487
    %v6208 = vpack.c.b16 %v5496, %v5488
    %v6209 = vpack.c.b16 %v5505, %v5497
    %v6210 = vpack.c.b16 %v5506, %v5498
    %v6211 = vpack.c.b16 %v5507, %v5499
    %v6212 = vpack.c.b16 %v5508, %v5500
    %v6213 = vpack.c.b16 %v5509, %v5501
    %v6214 = vpack.c.b16 %v5510, %v5502
    %v6215 = vpack.c.b16 %v5511, %v5503
    %v6216 = vpack.c.b16 %v5512, %v5504
    %v6217 = vpack.c.b16 %v5521, %v5513
    %v6218 = vpack.c.b16 %v5522, %v5514
    %v6219 = vpack.c.b16 %v5523, %v5515
    %v6220 = vpack.c.b16 %v5524, %v5516
    %v6221 = vpack.c.b16 %v5525, %v5517
    %v6222 = vpack.c.b16 %v5526, %v5518
    %v6223 = vpack.c.b16 %v5527, %v5519
    %v6224 = vpack.c.b16 %v5528, %v5520
    %v6225 = vpack.c.b16 %v5537, %v5529
    %v6226 = vpack.c.b16 %v5538, %v5530
    %v6227 = vpack.c.b16 %v5539, %v5531
    %v6228 = vpack.c.b16 %v5540, %v5532
    %v6229 = vpack.c.b16 %v5541, %v5533
    %v6230 = vpack.c.b16 %v5542, %v5534
    %v6231 = vpack.c.b16 %v5543, %v5535
    %v6232 = vpack.c.b16 %v5544, %v5536
    %v6233 = vpack.c.b16 %v5553, %v5545
    %v6234 = vpack.c.b16 %v5554, %v5546
    %v6235 = vpack.c.b16 %v5555, %v5547
    %v6236 = vpack.c.b16 %v5556, %v5548
    %v6237 = vpack.c.b16 %v5557, %v5549
    %v6238 = vpack.c.b16 %v5558, %v5550
    %v6239 = vpack.c.b16 %v5559, %v5551
    %v6240 = vpack.c.b16 %v5560, %v5552
    %v6241 = vpack.c.b16 %v5569, %v5561
    %v6242 = vpack.c.b16 %v5570, %v5562
    %v6243 = vpack.c.b16 %v5571, %v5563
    %v6244 = vpack.c.b16 %v5572, %v5564
    %v6245 = vpack.c.b16 %v5573, %v5565
    %v6246 = vpack.c.b16 %v5574, %v5566
    %v6247 = vpack.c.b16 %v5575, %v5567
    %v6248 = vpack.c.b16 %v5576, %v5568
    %v6249 = vpack.c.b16 %v5585, %v5577
    %v6250 = vpack.c.b16 %v5586, %v5578
    %v6251 = vpack.c.b16 %v5587, %v5579
    %v6252 = vpack.c.b16 %v5588, %v5580
    %v6253 = vpack.c.b16 %v5589, %v5581
    %v6254 = vpack.c.b16 %v5590, %v5582
    %v6255 = vpack.c.b16 %v5591, %v5583
    %v6256 = vpack.c.b16 %v5592, %v5584
    %v6257 = vpack.c.b16 %v5601, %v5593
    %v6258 = vpack.c.b16 %v5602, %v5594
    %v6259 = vpack.c.b16 %v5603, %v5595
    %v6260 = vpack.c.b16 %v5604, %v5596
    %v6261 = vpack.c.b16 %v5605, %v5597
    %v6262 = vpack.c.b16 %v5606, %v5598
    %v6263 = vpack.c.b16 %v5607, %v5599
    %v6264 = vpack.c.b16 %v5608, %v5600
    %v6265 = vpack.c.b16 %v5617, %v5609
    %v6266 = vpack.c.b16 %v5618, %v5610
    %v6267 = vpack.c.b16 %v5619, %v5611
    %v6268 = vpack.c.b16 %v5620, %v5612
    %v6269 = vpack.c.b16 %v5621, %v5613
    %v6270 = vpack.c.b16 %v5622, %v5614
    %v6271 = vpack.c.b16 %v5623, %v5615
    %v6272 = vpack.c.b16 %v5624, %v5616
    %v6273 = vpack.c.b16 %v5633, %v5625
    %v6274 = vpack.c.b16 %v5634, %v5626
    %v6275 = vpack.c.b16 %v5635, %v5627
    %v6276 = vpack.c.b16 %v5636, %v5628
    %v6277 = vpack.c.b16 %v5637, %v5629
    %v6278 = vpack.c.b16 %v5638, %v5630
    %v6279 = vpack.c.b16 %v5639, %v5631
    %v6280 = vpack.c.b16 %v5640, %v5632
    %v6281 = vpack.c.b16 %v5649, %v5641
    %v6282 = vpack.c.b16 %v5650, %v5642
    %v6283 = vpack.c.b16 %v5651, %v5643
    %v6284 = vpack.c.b16 %v5652, %v5644
    %v6285 = vpack.c.b16 %v5653, %v5645
    %v6286 = vpack.c.b16 %v5654, %v5646
    %v6287 = vpack.c.b16 %v5655, %v5647
    %v6288 = vpack.c.b16 %v5656, %v5648
    %v6289 = vpack.c.b16 %v5665, %v5657
    %v6290 = vpack.c.b16 %v5666, %v5658
    %v6291 = vpack.c.b16 %v5667, %v5659
    %v6292 = vpack.c.b16 %v5668, %v5660
    %v6293 = vpack.c.b16 %v5669, %v5661
    %v6294 = vpack.c.b16 %v5670, %v5662
    %v6295 = vpack.c.b16 %v5671, %v5663
    %v6296 = vpack.c.b16 %v5672, %v5664
    %v6297 = vpack.c.b16 %v5681, %v5673
    %v6298 = vpack.c.b16 %v5682, %v5674
    %v6299 = vpack.c.b16 %v5683, %v5675
    %v6300 = vpack.c.b16 %v5684, %v5676
    %v6301 = vpack.c.b16 %v5685, %v5677
    %v6302 = vpack.c.b16 %v5686, %v5678
    %v6303 = vpack.c.b16 %v5687, %v5679
    %v6304 = vpack.c.b16 %v5688, %v5680
    %v6305 = vpack.c.b16 %v5697, %v5689
    %v6306 = vpack.c.b16 %v5698, %v5690
    %v6307 = vpack.c.b16 %v5699, %v5691
    %v6308 = vpack.c.b16 %v5700, %v5692
    %v6309 = vpack.c.b16 %v5701, %v5693
    %v6310 = vpack.c.b16 %v5702, %v5694
    %v6311 = vpack.c.b16 %v5703, %v5695
    %v6312 = vpack.c.b16 %v5704, %v5696
    %v6313 = vpack.c.b16 %v5713, %v5705
    %v6314 = vpack.c.b16 %v5714, %v5706
    %v6315 = vpack.c.b16 %v5715, %v5707
    %v6316 = vpack.c.b16 %v5716, %v5708
    %v6317 = vpack.c.b16 %v5717, %v5709
    %v6318 = vpack.c.b16 %v5718, %v5710
    %v6319 = vpack.c.b16 %v5719, %v5711
    %v6320 = vpack.c.b16 %v5720, %v5712
    %v6321 = vpack.c.b16 %v5729, %v5721
    %v6322 = vpack.c.b16 %v5730, %v5722
    %v6323 = vpack.c.b16 %v5731, %v5723
    %v6324 = vpack.c.b16 %v5732, %v5724
    %v6325 = vpack.c.b16 %v5733, %v5725
    %v6326 = vpack.c.b16 %v5734, %v5726
    %v6327 = vpack.c.b16 %v5735, %v5727
    %v6328 = vpack.c.b16 %v5736, %v5728
    %v6329 = vpack.c.b16 %v5745, %v5737
    %v6330 = vpack.c.b16 %v5746, %v5738
    %v6331 = vpack.c.b16 %v5747, %v5739
    %v6332 = vpack.c.b16 %v5748, %v5740
    %v6333 = vpack.c.b16 %v5749, %v5741
    %v6334 = vpack.c.b16 %v5750, %v5742
    %v6335 = vpack.c.b16 %v5751, %v5743
    %v6336 = vpack.c.b16 %v5752, %v5744
    %v6337 = vpack.c.b16 %v5761, %v5753
    %v6338 = vpack.c.b16 %v5762, %v5754
    %v6339 = vpack.c.b16 %v5763, %v5755
    %v6340 = vpack.c.b16 %v5764, %v5756
    %v6341 = vpack.c.b16 %v5765, %v5757
    %v6342 = vpack.c.b16 %v5766, %v5758
    %v6343 = vpack.c.b16 %v5767, %v5759
    %v6344 = vpack.c.b16 %v5768, %v5760
    %v6345 = vpack.c.b16 %v5777, %v5769
    %v6346 = vpack.c.b16 %v5778, %v5770
    %v6347 = vpack.c.b16 %v5779, %v5771
    %v6348 = vpack.c.b16 %v5780, %v5772
    %v6349 = vpack.c.b16 %v5781, %v5773
    %v6350 = vpack.c.b16 %v5782, %v5774
    %v6351 = vpack.c.b16 %v5783, %v5775
    %v6352 = vpack.c.b16 %v5784, %v5776
    %v6353 = vpack.c.b16 %v5793, %v5785
    %v6354 = vpack.c.b16 %v5794, %v5786
    %v6355 = vpack.c.b16 %v5795, %v5787
    %v6356 = vpack.c.b16 %v5796, %v5788
    %v6357 = vpack.c.b16 %v5797, %v5789
    %v6358 = vpack.c.b16 %v5798, %v5790
    %v6359 = vpack.c.b16 %v5799, %v5791
    %v6360 = vpack.c.b16 %v5800, %v5792
    %v6361 = vpack.c.b16 %v5809, %v5801
    %v6362 = vpack.c.b16 %v5810, %v5802
    %v6363 = vpack.c.b16 %v5811, %v5803
    %v6364 = vpack.c.b16 %v5812, %v5804
    %v6365 = vpack.c.b16 %v5813, %v5805
    %v6366 = vpack.c.b16 %v5814, %v5806
    %v6367 = vpack.c.b16 %v5815, %v5807
    %v6368 = vpack.c.b16 %v5816, %v5808
    %v6369 = vpack.c.b16 %v5825, %v5817
    %v6370 = vpack.c.b16 %v5826, %v5818
    %v6371 = vpack.c.b16 %v5827, %v5819
    %v6372 = vpack.c.b16 %v5828, %v5820
    %v6373 = vpack.c.b16 %v5829, %v5821
    %v6374 = vpack.c.b16 %v5830, %v5822
    %v6375 = vpack.c.b16 %v5831, %v5823
    %v6376 = vpack.c.b16 %v5832, %v5824
    %v6377 = vpack.c.b16 %v5841, %v5833
    %v6378 = vpack.c.b16 %v5842, %v5834
    %v6379 = vpack.c.b16 %v5843, %v5835
    %v6380 = vpack.c.b16 %v5844, %v5836
    %v6381 = vpack.c.b16 %v5845, %v5837
    %v6382 = vpack.c.b16 %v5846, %v5838
    %v6383 = vpack.c.b16 %v5847, %v5839
    %v6384 = vpack.c.b16 %v5848, %v5840
    %v6385 = vpack.c.b16 %v5857, %v5849
    %v6386 = vpack.c.b16 %v5858, %v5850
    %v6387 = vpack.c.b16 %v5859, %v5851
    %v6388 = vpack.c.b16 %v5860, %v5852
    %v6389 = vpack.c.b16 %v5861, %v5853
    %v6390 = vpack.c.b16 %v5862, %v5854
    %v6391 = vpack.c.b16 %v5863, %v5855
    %v6392 = vpack.c.b16 %v5864, %v5856
    %v6393 = vpack.c.b16 %v5873, %v5865
    %v6394 = vpack.c.b16 %v5874, %v5866
    %v6395 = vpack.c.b16 %v5875, %v5867
    %v6396 = vpack.c.b16 %v5876, %v5868
    %v6397 = vpack.c.b16 %v5877, %v5869
    %v6398 = vpack.c.b16 %v5878, %v5870
    %v6399 = vpack.c.b16 %v5879, %v5871
    %v6400 = vpack.c.b16 %v5880, %v5872
    %v6401 = vpack.c.b16 %v5889, %v5881
    %v6402 = vpack.c.b16 %v5890, %v5882
    %v6403 = vpack.c.b16 %v5891, %v5883
    %v6404 = vpack.c.b16 %v5892, %v5884
    %v6405 = vpack.c.b16 %v5893, %v5885
    %v6406 = vpack.c.b16 %v5894, %v5886
    %v6407 = vpack.c.b16 %v5895, %v5887
    %v6408 = vpack.c.b16 %v5896, %v5888
    %v6409 = vpack.c.b16 %v5905, %v5897
    %v6410 = vpack.c.b16 %v5906, %v5898
    %v6411 = vpack.c.b16 %v5907, %v5899
    %v6412 = vpack.c.b16 %v5908, %v5900
    %v6413 = vpack.c.b16 %v5909, %v5901
    %v6414 = vpack.c.b16 %v5910, %v5902
    %v6415 = vpack.c.b16 %v5911, %v5903
    %v6416 = vpack.c.b16 %v5912, %v5904
    %v6417 = vpack.c.b16 %v5921, %v5913
    %v6418 = vpack.c.b16 %v5922, %v5914
    %v6419 = vpack.c.b16 %v5923, %v5915
    %v6420 = vpack.c.b16 %v5924, %v5916
    %v6421 = vpack.c.b16 %v5925, %v5917
    %v6422 = vpack.c.b16 %v5926, %v5918
    %v6423 = vpack.c.b16 %v5927, %v5919
    %v6424 = vpack.c.b16 %v5928, %v5920
    %v6425 = vpack.c.b16 %v5937, %v5929
    %v6426 = vpack.c.b16 %v5938, %v5930
    %v6427 = vpack.c.b16 %v5939, %v5931
    %v6428 = vpack.c.b16 %v5940, %v5932
    %v6429 = vpack.c.b16 %v5941, %v5933
    %v6430 = vpack.c.b16 %v5942, %v5934
    %v6431 = vpack.c.b16 %v5943, %v5935
    %v6432 = vpack.c.b16 %v5944, %v5936
    %v6433 = vpack.c.b16 %v5953, %v5945
    %v6434 = vpack.c.b16 %v5954, %v5946
    %v6435 = vpack.c.b16 %v5955, %v5947
    %v6436 = vpack.c.b16 %v5956, %v5948
    %v6437 = vpack.c.b16 %v5957, %v5949
    %v6438 = vpack.c.b16 %v5958, %v5950
    %v6439 = vpack.c.b16 %v5959, %v5951
    %v6440 = vpack.c.b16 %v5960, %v5952
    %v6441 = vpack.c.b16 %v5969, %v5961
    %v6442 = vpack.c.b16 %v5970, %v5962
    %v6443 = vpack.c.b16 %v5971, %v5963
    %v6444 = vpack.c.b16 %v5972, %v5964
    %v6445 = vpack.c.b16 %v5973, %v5965
    %v6446 = vpack.c.b16 %v5974, %v5966
    %v6447 = vpack.c.b16 %v5975, %v5967
    %v6448 = vpack.c.b16 %v5976, %v5968
    %v6449 = vpack.c.b16 %v5985, %v5977
    %v6450 = vpack.c.b16 %v5986, %v5978
    %v6451 = vpack.c.b16 %v5987, %v5979
    %v6452 = vpack.c.b16 %v5988, %v5980
    %v6453 = vpack.c.b16 %v5989, %v5981
    %v6454 = vpack.c.b16 %v5990, %v5982
    %v6455 = vpack.c.b16 %v5991, %v5983
    %v6456 = vpack.c.b16 %v5992, %v5984
    %v6457 = vpack.c.b16 %v6001, %v5993
    %v6458 = vpack.c.b16 %v6002, %v5994
    %v6459 = vpack.c.b16 %v6003, %v5995
    %v6460 = vpack.c.b16 %v6004, %v5996
    %v6461 = vpack.c.b16 %v6005, %v5997
    %v6462 = vpack.c.b16 %v6006, %v5998
    %v6463 = vpack.c.b16 %v6007, %v5999
    %v6464 = vpack.c.b16 %v6008, %v6000
    %v6465 = vpack.c.b16 %v6017, %v6009
    %v6466 = vpack.c.b16 %v6018, %v6010
    %v6467 = vpack.c.b16 %v6019, %v6011
    %v6468 = vpack.c.b16 %v6020, %v6012
    %v6469 = vpack.c.b16 %v6021, %v6013
    %v6470 = vpack.c.b16 %v6022, %v6014
    %v6471 = vpack.c.b16 %v6023, %v6015
    %v6472 = vpack.c.b16 %v6024, %v6016
    %6921 = vmatprep.subr.bf16.mxu0 %v6082
    %6922 = vmatpush1.bf16.msra.mxu0 %v6081
    %6923 = vmatprep.subr.bf16.mxu0 %v6074
    %6924 = vmatpush1.bf16.msra.mxu0 %v6073
    %6925 = vmatprep.subr.bf16.mxu0 %v6066
    %6926 = vmatpush1.bf16.msra.mxu0 %v6065
    %6927 = vmatprep.subr.bf16.mxu0 %v6058
    %6928 = vmatpush1.bf16.msra.mxu0 %v6057
    %6929 = vmatprep.subr.bf16.mxu0 %v6050
    %6930 = vmatpush1.bf16.msra.mxu0 %v6049
    %6931 = vmatprep.subr.bf16.mxu0 %v6042
    %6932 = vmatpush1.bf16.msra.mxu0 %v6041
    %6933 = vmatprep.subr.bf16.mxu0 %v6034
    %6934 = vmatpush1.bf16.msra.mxu0 %v6033
    %6935 = vmatprep.subr.bf16.mxu0 %v6026
    %6936 = vmatpush1.bf16.msra.mxu0 %v6025
    %6937 = vmatprep.subr.bf16.mxu0 %v6146
    %6938 = vmatpush2.bf16.msra.mxu0 %v6145
    %6939 = vmatprep.subr.bf16.mxu0 %v6138
    %6940 = vmatpush2.bf16.msra.mxu0 %v6137
    %6941 = vmatprep.subr.bf16.mxu0 %v6130
    %6942 = vmatpush2.bf16.msra.mxu0 %v6129
    %6943 = vmatprep.subr.bf16.mxu0 %v6122
    %6944 = vmatpush2.bf16.msra.mxu0 %v6121
    %6945 = vmatprep.subr.bf16.mxu0 %v6114
    %6946 = vmatpush2.bf16.msra.mxu0 %v6113
    %6947 = vmatprep.subr.bf16.mxu0 %v6106
    %6948 = vmatpush2.bf16.msra.mxu0 %v6105
    %6949 = vmatprep.subr.bf16.mxu0 %v6098
    %6950 = vmatpush2.bf16.msra.mxu0 %v6097
    %6951 = vmatprep.subr.bf16.mxu0 %v6090
    %6952 = vmatpush2.bf16.msra.mxu0 %v6089
    %6953 = vmatprep.mubr.bf16.mxu0 %v4185
    %6954 = vmatmul.mubr.bf16.gmra.mxu0 %v4184
    %v6955 = vpop.f32.mrf.mxu0
    %v6956 = vadd.f32 %v4644, %v6955
    %v6957 = vpop.f32.mrf.mxu0
    %v6958 = vadd.f32 %v4648, %v6957
    %v6959 = vpop.f32.mrf.mxu0
    %v6960 = vpop.f32.mrf.mxu0
    %6961 = vdwg.mxu0
    %6962 = vmatprep.subr.bf16.mxu0 %v6210
    %6963 = vmatpush1.bf16.msra.mxu0 %v6209
    %6964 = vmatprep.subr.bf16.mxu0 %v6202
    %6965 = vmatpush1.bf16.msra.mxu0 %v6201
    %6966 = vmatprep.subr.bf16.mxu0 %v6194
    %6967 = vmatpush1.bf16.msra.mxu0 %v6193
    %6968 = vmatprep.subr.bf16.mxu0 %v6186
    %6969 = vmatpush1.bf16.msra.mxu0 %v6185
    %6970 = vmatprep.subr.bf16.mxu0 %v6178
    %6971 = vmatpush1.bf16.msra.mxu0 %v6177
    %6972 = vmatprep.subr.bf16.mxu0 %v6170
    %6973 = vmatpush1.bf16.msra.mxu0 %v6169
    %6974 = vmatprep.subr.bf16.mxu0 %v6162
    %6975 = vmatpush1.bf16.msra.mxu0 %v6161
    %6976 = vmatprep.subr.bf16.mxu0 %v6154
    %6977 = vmatpush1.bf16.msra.mxu0 %v6153
    %6978 = vmatprep.subr.bf16.mxu0 %v6274
    %6979 = vmatpush2.bf16.msra.mxu0 %v6273
    %6980 = vmatprep.subr.bf16.mxu0 %v6266
    %6981 = vmatpush2.bf16.msra.mxu0 %v6265
    %6982 = vmatprep.subr.bf16.mxu0 %v6258
    %6983 = vmatpush2.bf16.msra.mxu0 %v6257
    %6984 = vmatprep.subr.bf16.mxu0 %v6250
    %6985 = vmatpush2.bf16.msra.mxu0 %v6249
    %6986 = vmatprep.subr.bf16.mxu0 %v6242
    %6987 = vmatpush2.bf16.msra.mxu0 %v6241
    %6988 = vmatprep.subr.bf16.mxu0 %v6234
    %6989 = vmatpush2.bf16.msra.mxu0 %v6233
    %6990 = vmatprep.subr.bf16.mxu0 %v6226
    %6991 = vmatpush2.bf16.msra.mxu0 %v6225
    %6992 = vmatprep.subr.bf16.mxu0 %v6218
    %6993 = vmatpush2.bf16.msra.mxu0 %v6217
    %6994 = vmatprep.mubr.bf16.mxu0 %v4187
    %6995 = vmatmul.mubr.bf16.gmra.mxu0 %v4186
    %v6996 = vpop.f32.mrf.mxu0
    %v6997 = vadd.f32 %v6956, %v6996
    %v6998 = vpop.f32.mrf.mxu0
    %v6999 = vadd.f32 %v6958, %v6998
    %v7000 = vpop.f32.mrf.mxu0
    %v7001 = vpop.f32.mrf.mxu0
    %7002 = vdwg.mxu0
    %7003 = vmatprep.subr.bf16.mxu0 %v6338
    %7004 = vmatpush1.bf16.msra.mxu0 %v6337
    %7005 = vmatprep.subr.bf16.mxu0 %v6330
    %7006 = vmatpush1.bf16.msra.mxu0 %v6329
    %7007 = vmatprep.subr.bf16.mxu0 %v6322
    %7008 = vmatpush1.bf16.msra.mxu0 %v6321
    %7009 = vmatprep.subr.bf16.mxu0 %v6314
    %7010 = vmatpush1.bf16.msra.mxu0 %v6313
    %7011 = vmatprep.subr.bf16.mxu0 %v6306
    %7012 = vmatpush1.bf16.msra.mxu0 %v6305
    %7013 = vmatprep.subr.bf16.mxu0 %v6298
    %7014 = vmatpush1.bf16.msra.mxu0 %v6297
    %7015 = vmatprep.subr.bf16.mxu0 %v6290
    %7016 = vmatpush1.bf16.msra.mxu0 %v6289
    %7017 = vmatprep.subr.bf16.mxu0 %v6282
    %7018 = vmatpush1.bf16.msra.mxu0 %v6281
    %7019 = vmatprep.subr.bf16.mxu0 %v6402
    %7020 = vmatpush2.bf16.msra.mxu0 %v6401
    %7021 = vmatprep.subr.bf16.mxu0 %v6394
    %7022 = vmatpush2.bf16.msra.mxu0 %v6393
    %7023 = vmatprep.subr.bf16.mxu0 %v6386
    %7024 = vmatpush2.bf16.msra.mxu0 %v6385
    %7025 = vmatprep.subr.bf16.mxu0 %v6378
    %7026 = vmatpush2.bf16.msra.mxu0 %v6377
    %7027 = vmatprep.subr.bf16.mxu0 %v6370
    %7028 = vmatpush2.bf16.msra.mxu0 %v6369
    %7029 = vmatprep.subr.bf16.mxu0 %v6362
    %7030 = vmatpush2.bf16.msra.mxu0 %v6361
    %7031 = vmatprep.subr.bf16.mxu0 %v6354
    %7032 = vmatpush2.bf16.msra.mxu0 %v6353
    %7033 = vmatprep.subr.bf16.mxu0 %v6346
    %7034 = vmatpush2.bf16.msra.mxu0 %v6345
    %7035 = vmatprep.mubr.bf16.mxu0 %v4189
    %7036 = vmatmul.mubr.bf16.gmra.mxu0 %v4188
    %v7037 = vpop.f32.mrf.mxu0
    %v7038 = vadd.f32 %v6997, %v7037
    %v7039 = vpop.f32.mrf.mxu0
    %v7040 = vadd.f32 %v6999, %v7039
    %v7041 = vpop.f32.mrf.mxu0
    %v7042 = vpop.f32.mrf.mxu0
    %7043 = vdwg.mxu0
    %7044 = vmatprep.subr.bf16.mxu0 %v6466
    %7045 = vmatpush1.bf16.msra.mxu0 %v6465
    %7046 = vmatprep.subr.bf16.mxu0 %v6458
    %7047 = vmatpush1.bf16.msra.mxu0 %v6457
    %7048 = vmatprep.subr.bf16.mxu0 %v6450
    %7049 = vmatpush1.bf16.msra.mxu0 %v6449
    %7050 = vmatprep.subr.bf16.mxu0 %v6442
    %7051 = vmatpush1.bf16.msra.mxu0 %v6441
    %7052 = vmatprep.subr.bf16.mxu0 %v6434
    %7053 = vmatpush1.bf16.msra.mxu0 %v6433
    %7054 = vmatprep.subr.bf16.mxu0 %v6426
    %7055 = vmatpush1.bf16.msra.mxu0 %v6425
    %7056 = vmatprep.subr.bf16.mxu0 %v6418
    %7057 = vmatpush1.bf16.msra.mxu0 %v6417
    %7058 = vmatprep.subr.bf16.mxu0 %v6410
    %7059 = vmatpush1.bf16.msra.mxu0 %v6409
    %7060 = vmatprep.subr.bf16.mxu0 0
    %7061 = vmatpush2.bf16.msra.mxu0 0
    %7062 = vmatprep.subr.bf16.mxu0 0
    %7063 = vmatpush2.bf16.msra.mxu0 0
    %7064 = vmatprep.subr.bf16.mxu0 0
    %7065 = vmatpush2.bf16.msra.mxu0 0
    %7066 = vmatprep.subr.bf16.mxu0 0
    %7067 = vmatpush2.bf16.msra.mxu0 0
    %7068 = vmatprep.subr.bf16.mxu0 0
    %7069 = vmatpush2.bf16.msra.mxu0 0
    %7070 = vmatprep.subr.bf16.mxu0 0
    %7071 = vmatpush2.bf16.msra.mxu0 0
    %7072 = vmatprep.subr.bf16.mxu0 0
    %7073 = vmatpush2.bf16.msra.mxu0 0
    %7074 = vmatprep.subr.bf16.mxu0 0
    %7075 = vmatpush2.bf16.msra.mxu0 0
    %7076 = vmatprep.mubr.bf16.mxu0 0
    %7077 = vmatmul.mubr.bf16.gmra.mxu0 %v4190
    %v7078 = vpop.f32.mrf.mxu0
    %v7079 = vadd.f32 %v7038, %v7078
    %v7080 = vpop.f32.mrf.mxu0
    %v7081 = vadd.f32 %v7040, %v7080
    %v7082 = vpop.f32.mrf.mxu0
    %v7083 = vpop.f32.mrf.mxu0
    %7084 = vdwg.mxu0
    %7085 = vmatprep.subr.bf16.mxu0 %v6084
    %7086 = vmatpush1.bf16.msra.mxu0 %v6083
    %7087 = vmatprep.subr.bf16.mxu0 %v6076
    %7088 = vmatpush1.bf16.msra.mxu0 %v6075
    %7089 = vmatprep.subr.bf16.mxu0 %v6068
    %7090 = vmatpush1.bf16.msra.mxu0 %v6067
    %7091 = vmatprep.subr.bf16.mxu0 %v6060
    %7092 = vmatpush1.bf16.msra.mxu0 %v6059
    %7093 = vmatprep.subr.bf16.mxu0 %v6052
    %7094 = vmatpush1.bf16.msra.mxu0 %v6051
    %7095 = vmatprep.subr.bf16.mxu0 %v6044
    %7096 = vmatpush1.bf16.msra.mxu0 %v6043
    %7097 = vmatprep.subr.bf16.mxu0 %v6036
    %7098 = vmatpush1.bf16.msra.mxu0 %v6035
    %7099 = vmatprep.subr.bf16.mxu0 %v6028
    %7100 = vmatpush1.bf16.msra.mxu0 %v6027
    %7101 = vmatprep.subr.bf16.mxu0 %v6148
    %7102 = vmatpush2.bf16.msra.mxu0 %v6147
    %7103 = vmatprep.subr.bf16.mxu0 %v6140
    %7104 = vmatpush2.bf16.msra.mxu0 %v6139
    %7105 = vmatprep.subr.bf16.mxu0 %v6132
    %7106 = vmatpush2.bf16.msra.mxu0 %v6131
    %7107 = vmatprep.subr.bf16.mxu0 %v6124
    %7108 = vmatpush2.bf16.msra.mxu0 %v6123
    %7109 = vmatprep.subr.bf16.mxu0 %v6116
    %7110 = vmatpush2.bf16.msra.mxu0 %v6115
    %7111 = vmatprep.subr.bf16.mxu0 %v6108
    %7112 = vmatpush2.bf16.msra.mxu0 %v6107
    %7113 = vmatprep.subr.bf16.mxu0 %v6100
    %7114 = vmatpush2.bf16.msra.mxu0 %v6099
    %7115 = vmatprep.subr.bf16.mxu0 %v6092
    %7116 = vmatpush2.bf16.msra.mxu0 %v6091
    %7117 = vmatprep.mubr.bf16.mxu0 %v4185
    %7118 = vmatmul.mubr.bf16.gmra.mxu0 %v4184
    %v7119 = vpop.f32.mrf.mxu0
    %v7120 = vadd.f32 %v4652, %v7119
    %v7121 = vpop.f32.mrf.mxu0
    %v7122 = vadd.f32 %v4656, %v7121
    %v7123 = vpop.f32.mrf.mxu0
    %v7124 = vpop.f32.mrf.mxu0
    %7125 = vdwg.mxu0
    %7126 = vmatprep.subr.bf16.mxu0 %v6212
    %7127 = vmatpush1.bf16.msra.mxu0 %v6211
    %7128 = vmatprep.subr.bf16.mxu0 %v6204
    %7129 = vmatpush1.bf16.msra.mxu0 %v6203
    %7130 = vmatprep.subr.bf16.mxu0 %v6196
    %7131 = vmatpush1.bf16.msra.mxu0 %v6195
    %7132 = vmatprep.subr.bf16.mxu0 %v6188
    %7133 = vmatpush1.bf16.msra.mxu0 %v6187
    %7134 = vmatprep.subr.bf16.mxu0 %v6180
    %7135 = vmatpush1.bf16.msra.mxu0 %v6179
    %7136 = vmatprep.subr.bf16.mxu0 %v6172
    %7137 = vmatpush1.bf16.msra.mxu0 %v6171
    %7138 = vmatprep.subr.bf16.mxu0 %v6164
    %7139 = vmatpush1.bf16.msra.mxu0 %v6163
    %7140 = vmatprep.subr.bf16.mxu0 %v6156
    %7141 = vmatpush1.bf16.msra.mxu0 %v6155
    %7142 = vmatprep.subr.bf16.mxu0 %v6276
    %7143 = vmatpush2.bf16.msra.mxu0 %v6275
    %7144 = vmatprep.subr.bf16.mxu0 %v6268
    %7145 = vmatpush2.bf16.msra.mxu0 %v6267
    %7146 = vmatprep.subr.bf16.mxu0 %v6260
    %7147 = vmatpush2.bf16.msra.mxu0 %v6259
    %7148 = vmatprep.subr.bf16.mxu0 %v6252
    %7149 = vmatpush2.bf16.msra.mxu0 %v6251
    %7150 = vmatprep.subr.bf16.mxu0 %v6244
    %7151 = vmatpush2.bf16.msra.mxu0 %v6243
    %7152 = vmatprep.subr.bf16.mxu0 %v6236
    %7153 = vmatpush2.bf16.msra.mxu0 %v6235
    %7154 = vmatprep.subr.bf16.mxu0 %v6228
    %7155 = vmatpush2.bf16.msra.mxu0 %v6227
    %7156 = vmatprep.subr.bf16.mxu0 %v6220
    %7157 = vmatpush2.bf16.msra.mxu0 %v6219
    %7158 = vmatprep.mubr.bf16.mxu0 %v4187
    %7159 = vmatmul.mubr.bf16.gmra.mxu0 %v4186
    %v7160 = vpop.f32.mrf.mxu0
    %v7161 = vadd.f32 %v7120, %v7160
    %v7162 = vpop.f32.mrf.mxu0
    %v7163 = vadd.f32 %v7122, %v7162
    %v7164 = vpop.f32.mrf.mxu0
    %v7165 = vpop.f32.mrf.mxu0
    %7166 = vdwg.mxu0
    %7167 = vmatprep.subr.bf16.mxu0 %v6340
    %7168 = vmatpush1.bf16.msra.mxu0 %v6339
    %7169 = vmatprep.subr.bf16.mxu0 %v6332
    %7170 = vmatpush1.bf16.msra.mxu0 %v6331
    %7171 = vmatprep.subr.bf16.mxu0 %v6324
    %7172 = vmatpush1.bf16.msra.mxu0 %v6323
    %7173 = vmatprep.subr.bf16.mxu0 %v6316
    %7174 = vmatpush1.bf16.msra.mxu0 %v6315
    %7175 = vmatprep.subr.bf16.mxu0 %v6308
    %7176 = vmatpush1.bf16.msra.mxu0 %v6307
    %7177 = vmatprep.subr.bf16.mxu0 %v6300
    %7178 = vmatpush1.bf16.msra.mxu0 %v6299
    %7179 = vmatprep.subr.bf16.mxu0 %v6292
    %7180 = vmatpush1.bf16.msra.mxu0 %v6291
    %7181 = vmatprep.subr.bf16.mxu0 %v6284
    %7182 = vmatpush1.bf16.msra.mxu0 %v6283
    %7183 = vmatprep.subr.bf16.mxu0 %v6404
    %7184 = vmatpush2.bf16.msra.mxu0 %v6403
    %7185 = vmatprep.subr.bf16.mxu0 %v6396
    %7186 = vmatpush2.bf16.msra.mxu0 %v6395
    %7187 = vmatprep.subr.bf16.mxu0 %v6388
    %7188 = vmatpush2.bf16.msra.mxu0 %v6387
    %7189 = vmatprep.subr.bf16.mxu0 %v6380
    %7190 = vmatpush2.bf16.msra.mxu0 %v6379
    %7191 = vmatprep.subr.bf16.mxu0 %v6372
    %7192 = vmatpush2.bf16.msra.mxu0 %v6371
    %7193 = vmatprep.subr.bf16.mxu0 %v6364
    %7194 = vmatpush2.bf16.msra.mxu0 %v6363
    %7195 = vmatprep.subr.bf16.mxu0 %v6356
    %7196 = vmatpush2.bf16.msra.mxu0 %v6355
    %7197 = vmatprep.subr.bf16.mxu0 %v6348
    %7198 = vmatpush2.bf16.msra.mxu0 %v6347
    %7199 = vmatprep.mubr.bf16.mxu0 %v4189
    %7200 = vmatmul.mubr.bf16.gmra.mxu0 %v4188
    %v7201 = vpop.f32.mrf.mxu0
    %v7202 = vadd.f32 %v7161, %v7201
    %v7203 = vpop.f32.mrf.mxu0
    %v7204 = vadd.f32 %v7163, %v7203
    %v7205 = vpop.f32.mrf.mxu0
    %v7206 = vpop.f32.mrf.mxu0
    %7207 = vdwg.mxu0
    %7208 = vmatprep.subr.bf16.mxu0 %v6468
    %7209 = vmatpush1.bf16.msra.mxu0 %v6467
    %7210 = vmatprep.subr.bf16.mxu0 %v6460
    %7211 = vmatpush1.bf16.msra.mxu0 %v6459
    %7212 = vmatprep.subr.bf16.mxu0 %v6452
    %7213 = vmatpush1.bf16.msra.mxu0 %v6451
    %7214 = vmatprep.subr.bf16.mxu0 %v6444
    %7215 = vmatpush1.bf16.msra.mxu0 %v6443
    %7216 = vmatprep.subr.bf16.mxu0 %v6436
    %7217 = vmatpush1.bf16.msra.mxu0 %v6435
    %7218 = vmatprep.subr.bf16.mxu0 %v6428
    %7219 = vmatpush1.bf16.msra.mxu0 %v6427
    %7220 = vmatprep.subr.bf16.mxu0 %v6420
    %7221 = vmatpush1.bf16.msra.mxu0 %v6419
    %7222 = vmatprep.subr.bf16.mxu0 %v6412
    %7223 = vmatpush1.bf16.msra.mxu0 %v6411
    %7224 = vmatprep.subr.bf16.mxu0 0
    %7225 = vmatpush2.bf16.msra.mxu0 0
    %7226 = vmatprep.subr.bf16.mxu0 0
    %7227 = vmatpush2.bf16.msra.mxu0 0
    %7228 = vmatprep.subr.bf16.mxu0 0
    %7229 = vmatpush2.bf16.msra.mxu0 0
    %7230 = vmatprep.subr.bf16.mxu0 0
    %7231 = vmatpush2.bf16.msra.mxu0 0
    %7232 = vmatprep.subr.bf16.mxu0 0
    %7233 = vmatpush2.bf16.msra.mxu0 0
    %7234 = vmatprep.subr.bf16.mxu0 0
    %7235 = vmatpush2.bf16.msra.mxu0 0
    %7236 = vmatprep.subr.bf16.mxu0 0
    %7237 = vmatpush2.bf16.msra.mxu0 0
    %7238 = vmatprep.subr.bf16.mxu0 0
    %7239 = vmatpush2.bf16.msra.mxu0 0
    %7240 = vmatprep.mubr.bf16.mxu0 0
    %7241 = vmatmul.mubr.bf16.gmra.mxu0 %v4190
    %v7242 = vpop.f32.mrf.mxu0
    %v7243 = vadd.f32 %v7202, %v7242
    %v7244 = vpop.f32.mrf.mxu0
    %v7245 = vadd.f32 %v7204, %v7244
    %v7246 = vpop.f32.mrf.mxu0
    %v7247 = vpop.f32.mrf.mxu0
    %7248 = vdwg.mxu0
    %7249 = vmatprep.subr.bf16.mxu0 %v6086
    %7250 = vmatpush1.bf16.msra.mxu0 %v6085
    %7251 = vmatprep.subr.bf16.mxu0 %v6078
    %7252 = vmatpush1.bf16.msra.mxu0 %v6077
    %7253 = vmatprep.subr.bf16.mxu0 %v6070
    %7254 = vmatpush1.bf16.msra.mxu0 %v6069
    %7255 = vmatprep.subr.bf16.mxu0 %v6062
    %7256 = vmatpush1.bf16.msra.mxu0 %v6061
    %7257 = vmatprep.subr.bf16.mxu0 %v6054
    %7258 = vmatpush1.bf16.msra.mxu0 %v6053
    %7259 = vmatprep.subr.bf16.mxu0 %v6046
    %7260 = vmatpush1.bf16.msra.mxu0 %v6045
    %7261 = vmatprep.subr.bf16.mxu0 %v6038
    %7262 = vmatpush1.bf16.msra.mxu0 %v6037
    %7263 = vmatprep.subr.bf16.mxu0 %v6030
    %7264 = vmatpush1.bf16.msra.mxu0 %v6029
    %7265 = vmatprep.subr.bf16.mxu0 %v6150
    %7266 = vmatpush2.bf16.msra.mxu0 %v6149
    %7267 = vmatprep.subr.bf16.mxu0 %v6142
    %7268 = vmatpush2.bf16.msra.mxu0 %v6141
    %7269 = vmatprep.subr.bf16.mxu0 %v6134
    %7270 = vmatpush2.bf16.msra.mxu0 %v6133
    %7271 = vmatprep.subr.bf16.mxu0 %v6126
    %7272 = vmatpush2.bf16.msra.mxu0 %v6125
    %7273 = vmatprep.subr.bf16.mxu0 %v6118
    %7274 = vmatpush2.bf16.msra.mxu0 %v6117
    %7275 = vmatprep.subr.bf16.mxu0 %v6110
    %7276 = vmatpush2.bf16.msra.mxu0 %v6109
    %7277 = vmatprep.subr.bf16.mxu0 %v6102
    %7278 = vmatpush2.bf16.msra.mxu0 %v6101
    %7279 = vmatprep.subr.bf16.mxu0 %v6094
    %7280 = vmatpush2.bf16.msra.mxu0 %v6093
    %7281 = vmatprep.mubr.bf16.mxu0 %v4185
    %7282 = vmatmul.mubr.bf16.gmra.mxu0 %v4184
    %v7283 = vpop.f32.mrf.mxu0
    %v7284 = vadd.f32 %v4660, %v7283
    %v7285 = vpop.f32.mrf.mxu0
    %v7286 = vadd.f32 %v4664, %v7285
    %v7287 = vpop.f32.mrf.mxu0
    %v7288 = vpop.f32.mrf.mxu0
    %7289 = vdwg.mxu0
    %7290 = vmatprep.subr.bf16.mxu0 %v6214
    %7291 = vmatpush1.bf16.msra.mxu0 %v6213
    %7292 = vmatprep.subr.bf16.mxu0 %v6206
    %7293 = vmatpush1.bf16.msra.mxu0 %v6205
    %7294 = vmatprep.subr.bf16.mxu0 %v6198
    %7295 = vmatpush1.bf16.msra.mxu0 %v6197
    %7296 = vmatprep.subr.bf16.mxu0 %v6190
    %7297 = vmatpush1.bf16.msra.mxu0 %v6189
    %7298 = vmatprep.subr.bf16.mxu0 %v6182
    %7299 = vmatpush1.bf16.msra.mxu0 %v6181
    %7300 = vmatprep.subr.bf16.mxu0 %v6174
    %7301 = vmatpush1.bf16.msra.mxu0 %v6173
    %7302 = vmatprep.subr.bf16.mxu0 %v6166
    %7303 = vmatpush1.bf16.msra.mxu0 %v6165
    %7304 = vmatprep.subr.bf16.mxu0 %v6158
    %7305 = vmatpush1.bf16.msra.mxu0 %v6157
    %7306 = vmatprep.subr.bf16.mxu0 %v6278
    %7307 = vmatpush2.bf16.msra.mxu0 %v6277
    %7308 = vmatprep.subr.bf16.mxu0 %v6270
    %7309 = vmatpush2.bf16.msra.mxu0 %v6269
    %7310 = vmatprep.subr.bf16.mxu0 %v6262
    %7311 = vmatpush2.bf16.msra.mxu0 %v6261
    %7312 = vmatprep.subr.bf16.mxu0 %v6254
    %7313 = vmatpush2.bf16.msra.mxu0 %v6253
    %7314 = vmatprep.subr.bf16.mxu0 %v6246
    %7315 = vmatpush2.bf16.msra.mxu0 %v6245
    %7316 = vmatprep.subr.bf16.mxu0 %v6238
    %7317 = vmatpush2.bf16.msra.mxu0 %v6237
    %7318 = vmatprep.subr.bf16.mxu0 %v6230
    %7319 = vmatpush2.bf16.msra.mxu0 %v6229
    %7320 = vmatprep.subr.bf16.mxu0 %v6222
    %7321 = vmatpush2.bf16.msra.mxu0 %v6221
    %7322 = vmatprep.mubr.bf16.mxu0 %v4187
    %7323 = vmatmul.mubr.bf16.gmra.mxu0 %v4186
    %v7324 = vpop.f32.mrf.mxu0
    %v7325 = vadd.f32 %v7284, %v7324
    %v7326 = vpop.f32.mrf.mxu0
    %v7327 = vadd.f32 %v7286, %v7326
    %v7328 = vpop.f32.mrf.mxu0
    %v7329 = vpop.f32.mrf.mxu0
    %7330 = vdwg.mxu0
    %7331 = vmatprep.subr.bf16.mxu0 %v6342
    %7332 = vmatpush1.bf16.msra.mxu0 %v6341
    %7333 = vmatprep.subr.bf16.mxu0 %v6334
    %7334 = vmatpush1.bf16.msra.mxu0 %v6333
    %7335 = vmatprep.subr.bf16.mxu0 %v6326
    %7336 = vmatpush1.bf16.msra.mxu0 %v6325
    %7337 = vmatprep.subr.bf16.mxu0 %v6318
    %7338 = vmatpush1.bf16.msra.mxu0 %v6317
    %7339 = vmatprep.subr.bf16.mxu0 %v6310
    %7340 = vmatpush1.bf16.msra.mxu0 %v6309
    %7341 = vmatprep.subr.bf16.mxu0 %v6302
    %7342 = vmatpush1.bf16.msra.mxu0 %v6301
    %7343 = vmatprep.subr.bf16.mxu0 %v6294
    %7344 = vmatpush1.bf16.msra.mxu0 %v6293
    %7345 = vmatprep.subr.bf16.mxu0 %v6286
    %7346 = vmatpush1.bf16.msra.mxu0 %v6285
    %7347 = vmatprep.subr.bf16.mxu0 %v6406
    %7348 = vmatpush2.bf16.msra.mxu0 %v6405
    %7349 = vmatprep.subr.bf16.mxu0 %v6398
    %7350 = vmatpush2.bf16.msra.mxu0 %v6397
    %7351 = vmatprep.subr.bf16.mxu0 %v6390
    %7352 = vmatpush2.bf16.msra.mxu0 %v6389
    %7353 = vmatprep.subr.bf16.mxu0 %v6382
    %7354 = vmatpush2.bf16.msra.mxu0 %v6381
    %7355 = vmatprep.subr.bf16.mxu0 %v6374
    %7356 = vmatpush2.bf16.msra.mxu0 %v6373
    %7357 = vmatprep.subr.bf16.mxu0 %v6366
    %7358 = vmatpush2.bf16.msra.mxu0 %v6365
    %7359 = vmatprep.subr.bf16.mxu0 %v6358
    %7360 = vmatpush2.bf16.msra.mxu0 %v6357
    %7361 = vmatprep.subr.bf16.mxu0 %v6350
    %7362 = vmatpush2.bf16.msra.mxu0 %v6349
    %7363 = vmatprep.mubr.bf16.mxu0 %v4189
    %7364 = vmatmul.mubr.bf16.gmra.mxu0 %v4188
    %v7365 = vpop.f32.mrf.mxu0
    %v7366 = vadd.f32 %v7325, %v7365
    %v7367 = vpop.f32.mrf.mxu0
    %v7368 = vadd.f32 %v7327, %v7367
    %v7369 = vpop.f32.mrf.mxu0
    %v7370 = vpop.f32.mrf.mxu0
    %7371 = vdwg.mxu0
    %7372 = vmatprep.subr.bf16.mxu0 %v6470
    %7373 = vmatpush1.bf16.msra.mxu0 %v6469
    %7374 = vmatprep.subr.bf16.mxu0 %v6462
    %7375 = vmatpush1.bf16.msra.mxu0 %v6461
    %7376 = vmatprep.subr.bf16.mxu0 %v6454
    %7377 = vmatpush1.bf16.msra.mxu0 %v6453
    %7378 = vmatprep.subr.bf16.mxu0 %v6446
    %7379 = vmatpush1.bf16.msra.mxu0 %v6445
    %7380 = vmatprep.subr.bf16.mxu0 %v6438
    %7381 = vmatpush1.bf16.msra.mxu0 %v6437
    %7382 = vmatprep.subr.bf16.mxu0 %v6430
    %7383 = vmatpush1.bf16.msra.mxu0 %v6429
    %7384 = vmatprep.subr.bf16.mxu0 %v6422
    %7385 = vmatpush1.bf16.msra.mxu0 %v6421
    %7386 = vmatprep.subr.bf16.mxu0 %v6414
    %7387 = vmatpush1.bf16.msra.mxu0 %v6413
    %7388 = vmatprep.subr.bf16.mxu0 0
    %7389 = vmatpush2.bf16.msra.mxu0 0
    %7390 = vmatprep.subr.bf16.mxu0 0
    %7391 = vmatpush2.bf16.msra.mxu0 0
    %7392 = vmatprep.subr.bf16.mxu0 0
    %7393 = vmatpush2.bf16.msra.mxu0 0
    %7394 = vmatprep.subr.bf16.mxu0 0
    %7395 = vmatpush2.bf16.msra.mxu0 0
    %7396 = vmatprep.subr.bf16.mxu0 0
    %7397 = vmatpush2.bf16.msra.mxu0 0
    %7398 = vmatprep.subr.bf16.mxu0 0
    %7399 = vmatpush2.bf16.msra.mxu0 0
    %7400 = vmatprep.subr.bf16.mxu0 0
    %7401 = vmatpush2.bf16.msra.mxu0 0
    %7402 = vmatprep.subr.bf16.mxu0 0
    %7403 = vmatpush2.bf16.msra.mxu0 0
    %7404 = vmatprep.mubr.bf16.mxu0 0
    %7405 = vmatmul.mubr.bf16.gmra.mxu0 %v4190
    %v7406 = vpop.f32.mrf.mxu0
    %v7407 = vadd.f32 %v7366, %v7406
    %v7408 = vpop.f32.mrf.mxu0
    %v7409 = vadd.f32 %v7368, %v7408
    %v7410 = vpop.f32.mrf.mxu0
    %v7411 = vpop.f32.mrf.mxu0
    %7412 = vdwg.mxu0
    %7413 = vmatprep.subr.bf16.mxu0 %v6088
    %7414 = vmatpush1.bf16.msra.mxu0 %v6087
    %7415 = vmatprep.subr.bf16.mxu0 %v6080
    %7416 = vmatpush1.bf16.msra.mxu0 %v6079
    %7417 = vmatprep.subr.bf16.mxu0 %v6072
    %7418 = vmatpush1.bf16.msra.mxu0 %v6071
    %7419 = vmatprep.subr.bf16.mxu0 %v6064
    %7420 = vmatpush1.bf16.msra.mxu0 %v6063
    %7421 = vmatprep.subr.bf16.mxu0 %v6056
    %7422 = vmatpush1.bf16.msra.mxu0 %v6055
    %7423 = vmatprep.subr.bf16.mxu0 %v6048
    %7424 = vmatpush1.bf16.msra.mxu0 %v6047
    %7425 = vmatprep.subr.bf16.mxu0 %v6040
    %7426 = vmatpush1.bf16.msra.mxu0 %v6039
    %7427 = vmatprep.subr.bf16.mxu0 %v6032
    %7428 = vmatpush1.bf16.msra.mxu0 %v6031
    %7429 = vmatprep.subr.bf16.mxu0 %v6152
    %7430 = vmatpush2.bf16.msra.mxu0 %v6151
    %7431 = vmatprep.subr.bf16.mxu0 %v6144
    %7432 = vmatpush2.bf16.msra.mxu0 %v6143
    %7433 = vmatprep.subr.bf16.mxu0 %v6136
    %7434 = vmatpush2.bf16.msra.mxu0 %v6135
    %7435 = vmatprep.subr.bf16.mxu0 %v6128
    %7436 = vmatpush2.bf16.msra.mxu0 %v6127
    %7437 = vmatprep.subr.bf16.mxu0 %v6120
    %7438 = vmatpush2.bf16.msra.mxu0 %v6119
    %7439 = vmatprep.subr.bf16.mxu0 %v6112
    %7440 = vmatpush2.bf16.msra.mxu0 %v6111
    %7441 = vmatprep.subr.bf16.mxu0 %v6104
    %7442 = vmatpush2.bf16.msra.mxu0 %v6103
    %7443 = vmatprep.subr.bf16.mxu0 %v6096
    %7444 = vmatpush2.bf16.msra.mxu0 %v6095
    %7445 = vmatprep.mubr.bf16.mxu0 %v4185
    %7446 = vmatmul.mubr.bf16.gmra.mxu0 %v4184
    %v7447 = vpop.f32.mrf.mxu0
    %v7448 = vadd.f32 %v4668, %v7447
    %v7449 = vpop.f32.mrf.mxu0
    %v7450 = vadd.f32 %v4672, %v7449
    %v7451 = vpop.f32.mrf.mxu0
    %v7452 = vpop.f32.mrf.mxu0
    %7453 = vdwg.mxu0
    %7454 = vmatprep.subr.bf16.mxu0 %v6216
    %7455 = vmatpush1.bf16.msra.mxu0 %v6215
    %7456 = vmatprep.subr.bf16.mxu0 %v6208
    %7457 = vmatpush1.bf16.msra.mxu0 %v6207
    %7458 = vmatprep.subr.bf16.mxu0 %v6200
    %7459 = vmatpush1.bf16.msra.mxu0 %v6199
    %7460 = vmatprep.subr.bf16.mxu0 %v6192
    %7461 = vmatpush1.bf16.msra.mxu0 %v6191
    %7462 = vmatprep.subr.bf16.mxu0 %v6184
    %7463 = vmatpush1.bf16.msra.mxu0 %v6183
    %7464 = vmatprep.subr.bf16.mxu0 %v6176
    %7465 = vmatpush1.bf16.msra.mxu0 %v6175
    %7466 = vmatprep.subr.bf16.mxu0 %v6168
    %7467 = vmatpush1.bf16.msra.mxu0 %v6167
    %7468 = vmatprep.subr.bf16.mxu0 %v6160
    %7469 = vmatpush1.bf16.msra.mxu0 %v6159
    %7470 = vmatprep.subr.bf16.mxu0 %v6280
    %7471 = vmatpush2.bf16.msra.mxu0 %v6279
    %7472 = vmatprep.subr.bf16.mxu0 %v6272
    %7473 = vmatpush2.bf16.msra.mxu0 %v6271
    %7474 = vmatprep.subr.bf16.mxu0 %v6264
    %7475 = vmatpush2.bf16.msra.mxu0 %v6263
    %7476 = vmatprep.subr.bf16.mxu0 %v6256
    %7477 = vmatpush2.bf16.msra.mxu0 %v6255
    %7478 = vmatprep.subr.bf16.mxu0 %v6248
    %7479 = vmatpush2.bf16.msra.mxu0 %v6247
    %7480 = vmatprep.subr.bf16.mxu0 %v6240
    %7481 = vmatpush2.bf16.msra.mxu0 %v6239
    %7482 = vmatprep.subr.bf16.mxu0 %v6232
    %7483 = vmatpush2.bf16.msra.mxu0 %v6231
    %7484 = vmatprep.subr.bf16.mxu0 %v6224
    %7485 = vmatpush2.bf16.msra.mxu0 %v6223
    %7486 = vmatprep.mubr.bf16.mxu0 %v4187
    %7487 = vmatmul.mubr.bf16.gmra.mxu0 %v4186
    %v7488 = vpop.f32.mrf.mxu0
    %v7489 = vadd.f32 %v7448, %v7488
    %v7490 = vpop.f32.mrf.mxu0
    %v7491 = vadd.f32 %v7450, %v7490
    %v7492 = vpop.f32.mrf.mxu0
    %v7493 = vpop.f32.mrf.mxu0
    %7494 = vdwg.mxu0
    %7495 = vmatprep.subr.bf16.mxu0 %v6344
    %7496 = vmatpush1.bf16.msra.mxu0 %v6343
    %7497 = vmatprep.subr.bf16.mxu0 %v6336
    %7498 = vmatpush1.bf16.msra.mxu0 %v6335
    %7499 = vmatprep.subr.bf16.mxu0 %v6328
    %7500 = vmatpush1.bf16.msra.mxu0 %v6327
    %7501 = vmatprep.subr.bf16.mxu0 %v6320
    %7502 = vmatpush1.bf16.msra.mxu0 %v6319
    %7503 = vmatprep.subr.bf16.mxu0 %v6312
    %7504 = vmatpush1.bf16.msra.mxu0 %v6311
    %7505 = vmatprep.subr.bf16.mxu0 %v6304
    %7506 = vmatpush1.bf16.msra.mxu0 %v6303
    %7507 = vmatprep.subr.bf16.mxu0 %v6296
    %7508 = vmatpush1.bf16.msra.mxu0 %v6295
    %7509 = vmatprep.subr.bf16.mxu0 %v6288
    %7510 = vmatpush1.bf16.msra.mxu0 %v6287
    %7511 = vmatprep.subr.bf16.mxu0 %v6408
    %7512 = vmatpush2.bf16.msra.mxu0 %v6407
    %7513 = vmatprep.subr.bf16.mxu0 %v6400
    %7514 = vmatpush2.bf16.msra.mxu0 %v6399
    %7515 = vmatprep.subr.bf16.mxu0 %v6392
    %7516 = vmatpush2.bf16.msra.mxu0 %v6391
    %7517 = vmatprep.subr.bf16.mxu0 %v6384
    %7518 = vmatpush2.bf16.msra.mxu0 %v6383
    %7519 = vmatprep.subr.bf16.mxu0 %v6376
    %7520 = vmatpush2.bf16.msra.mxu0 %v6375
    %7521 = vmatprep.subr.bf16.mxu0 %v6368
    %7522 = vmatpush2.bf16.msra.mxu0 %v6367
    %7523 = vmatprep.subr.bf16.mxu0 %v6360
    %7524 = vmatpush2.bf16.msra.mxu0 %v6359
    %7525 = vmatprep.subr.bf16.mxu0 %v6352
    %7526 = vmatpush2.bf16.msra.mxu0 %v6351
    %7527 = vmatprep.mubr.bf16.mxu0 %v4189
    %7528 = vmatmul.mubr.bf16.gmra.mxu0 %v4188
    %v7529 = vpop.f32.mrf.mxu0
    %v7530 = vadd.f32 %v7489, %v7529
    %v7531 = vpop.f32.mrf.mxu0
    %v7532 = vadd.f32 %v7491, %v7531
    %v7533 = vpop.f32.mrf.mxu0
    %v7534 = vpop.f32.mrf.mxu0
    %7535 = vdwg.mxu0
    %7536 = vmatprep.subr.bf16.mxu0 %v6472
    %7537 = vmatpush1.bf16.msra.mxu0 %v6471
    %7538 = vmatprep.subr.bf16.mxu0 %v6464
    %7539 = vmatpush1.bf16.msra.mxu0 %v6463
    %7540 = vmatprep.subr.bf16.mxu0 %v6456
    %7541 = vmatpush1.bf16.msra.mxu0 %v6455
    %7542 = vmatprep.subr.bf16.mxu0 %v6448
    %7543 = vmatpush1.bf16.msra.mxu0 %v6447
    %7544 = vmatprep.subr.bf16.mxu0 %v6440
    %7545 = vmatpush1.bf16.msra.mxu0 %v6439
    %7546 = vmatprep.subr.bf16.mxu0 %v6432
    %7547 = vmatpush1.bf16.msra.mxu0 %v6431
    %7548 = vmatprep.subr.bf16.mxu0 %v6424
    %7549 = vmatpush1.bf16.msra.mxu0 %v6423
    %7550 = vmatprep.subr.bf16.mxu0 %v6416
    %7551 = vmatpush1.bf16.msra.mxu0 %v6415
    %7552 = vmatprep.subr.bf16.mxu0 0
    %7553 = vmatpush2.bf16.msra.mxu0 0
    %7554 = vmatprep.subr.bf16.mxu0 0
    %7555 = vmatpush2.bf16.msra.mxu0 0
    %7556 = vmatprep.subr.bf16.mxu0 0
    %7557 = vmatpush2.bf16.msra.mxu0 0
    %7558 = vmatprep.subr.bf16.mxu0 0
    %7559 = vmatpush2.bf16.msra.mxu0 0
    %7560 = vmatprep.subr.bf16.mxu0 0
    %7561 = vmatpush2.bf16.msra.mxu0 0
    %7562 = vmatprep.subr.bf16.mxu0 0
    %7563 = vmatpush2.bf16.msra.mxu0 0
    %7564 = vmatprep.subr.bf16.mxu0 0
    %7565 = vmatpush2.bf16.msra.mxu0 0
    %7566 = vmatprep.subr.bf16.mxu0 0
    %7567 = vmatpush2.bf16.msra.mxu0 0
    %7568 = vmatprep.mubr.bf16.mxu0 0
    %7569 = vmatmul.mubr.bf16.gmra.mxu0 %v4190
    %v7570 = vpop.f32.mrf.mxu0
    %v7571 = vadd.f32 %v7530, %v7570
    %v7572 = vpop.f32.mrf.mxu0
    %v7573 = vadd.f32 %v7532, %v7572
    %v7574 = vpop.f32.mrf.mxu0
    %v7575 = vpop.f32.mrf.mxu0
    %7576 = vdwg.mxu0
    %7577 = vst [vmem:[%s7] sm:$0xff] %v7079
    %7578 = vst [vmem:[%s7 + $0x8] sm:$0xff] %v7081
    %7579 = vst [vmem:[%s7 + $0x10] sm:$0xff] %v7243
    %7580 = vst [vmem:[%s7 + $0x18] sm:$0xff] %v7245
    %7581 = vst [vmem:[%s7 + $0x20] sm:$0xff] %v7407
    %7582 = vst [vmem:[%s7 + $0x28] sm:$0xff] %v7409
    %7583 = vst [vmem:[%s7 + $0x30] sm:$0xff] %v7571
    %7584 = vst [vmem:[%s7 + $0x38] sm:$0xff] %v7573
    // Predicated region
    $region50: #{cogdecoder_forward.3} parent=1 // pred_check
      _
    $region51: #{cogdecoder_forward.3} parent=1 // pred_check_branch
      %7586 = sbr.rel (0) target = $region53
    $region52: #{cogdecoder_forward.3} parent=1 // pred_region
      _
    $region53: #{cogdecoder_forward.3} parent=1 // pred_fallthru
      _
    // Predicated region
    $region54: #{cogdecoder_forward.3} parent=1 // pred_check
      _
    $region55: #{cogdecoder_forward.3} parent=1 // pred_check_branch
      %7588 = sbr.rel (0) target = $region57
    $region56: #{cogdecoder_forward.3} parent=1 // pred_region
      _
    $region57: #{cogdecoder_forward.3} parent=1 // pred_fallthru
      _
    %7589 = vsyncpa [#allocation3], 1
    %7590 = vsyncpa [#allocation5], 1
    %7591 = vsyncpa [#allocation8], 1

</llo_original>
